<compile_context>
chip_gen: v7x
topology: tpu7x:2x2x1
jax: 0.10.0
libtpu: 0.0.40
codegen_flags: <defaults>
</compile_context>

<pallas_src>
import jax
import jax.numpy as jnp
from jax import lax
from jax.experimental import pallas as pl
from jax.experimental.pallas import tpu as pltpu

EPS = 1e-5
H1, H2 = 512, 2048


def gen_kernel(x_ref, scale_ref, shift_ref,
               w1_ref, b1_ref, w2_ref, b2_ref, w3_ref, b3_ref,
               out_ref):
    # x: (tm, D) f32 batch tile.  Weights bf16 (in, out); biases f32 (1, out).
    x = x_ref[...]

    # Fused BatchNorm affine: scale = gamma*rsqrt(var+eps), shift = beta - mean*scale
    xn = x * scale_ref[...] + shift_ref[...]
    raw = jnp.tanh(xn)

    # fc1 -> fc2 -> fc_flat (bf16 operands, f32 MXU accumulate) -> tanh
    h1 = jnp.dot(xn.astype(jnp.bfloat16), w1_ref[...],
                 preferred_element_type=jnp.float32) + b1_ref[...]
    h2 = jnp.dot(h1.astype(jnp.bfloat16), w2_ref[...],
                 preferred_element_type=jnp.float32) + b2_ref[...]
    h3 = jnp.dot(h2.astype(jnp.bfloat16), w3_ref[...],
                 preferred_element_type=jnp.float32) + b3_ref[...]

    # Lane-dense packed output slab: [ tanh(fc_flat(x)) | raw_feats ]  -> (tm, 2*D)
    out_ref[...] = jnp.concatenate([jnp.tanh(h3), raw], axis=-1)


def _vmem_capacity_bytes():
    """Physical VMEM of the local chip; conservative (v7x per-TC) fallback."""
    try:
        return int(pltpu.get_tpu_info().vmem_capacity_bytes)
    except Exception:
        return 64 << 20


def _pick_batch_tile(B, tm_cap):
    """Largest tile <= tm_cap that still leaves nb >= 2 (v7x megacore occupancy)."""
    if B < 128:
        return max(8, -(-B // 8) * 8)        # tiny batches: round up to sublane multiple
    for t in (1024, 512, 256):
        if t <= tm_cap and B >= 2 * t:
            return t
    return 128


def gen_forward(x, params):
    """x: (B, latent_dim) f32.  Returns (x_out, raw_feats), both (B, latent_dim) f32."""
    B, D = x.shape

    # ---- BatchNorm1d training-mode batch stats over the FULL batch (wrapper),
    #      folded into a single scale/shift so batch tiling in the kernel is correct.
    #      Two-pass variance (jnp.var) avoids E[x^2]-E[x]^2 cancellation/negatives.
    mean = jnp.mean(x, axis=0, keepdims=True)                       # (1, D)
    var = jnp.var(x, axis=0, keepdims=True)                         # (1, D), biased (as BN)
    scale = params["gamma"] * lax.rsqrt(var + EPS)                  # (1, D)
    shift = params["beta"] - mean * scale                           # (1, D)

    # ---- chip-aware tile / VMEM budget
    vmem_cap = _vmem_capacity_bytes()
    small_vmem = vmem_cap <= (64 << 20)          # v7x-like: 64 MiB per TC
    tm_cap = 512 if small_vmem else 1024         # h2 temporaries scale with tm
    vmem_limit = (48 << 20) if small_vmem else (64 << 20)

    tm = _pick_batch_tile(B, tm_cap)
    B_pad = -(-B // tm) * tm
    x_p = x if B_pad == B else jnp.pad(x, ((0, B_pad - B), (0, 0)))
    nb = B_pad // tm

    w1, b1 = params["w1t"], params["b1"]
    w2, b2 = params["w2t"], params["b2"]
    w3, b3 = params["w3t"], params["b3"]

    flops = 2 * B_pad * (D * H1 + H1 * H2 + H2 * D)
    transcendentals = 2 * B_pad * D                                  # two tanh layers
    bytes_accessed = ((w1.size + w2.size + w3.size) * 2              # bf16 weights
                      + (b1.size + b2.size + b3.size) * 4            # f32 biases
                      + (x_p.size + B_pad * 2 * D + 4 * D) * 4)      # acts + bn vectors
    cost = pl.CostEstimate(flops=flops, transcendentals=transcendentals,
                           bytes_accessed=bytes_accessed)

    def build(single_buffer_consts):
        # Constant operands (weights / biases / BN vectors) are identical on every
        # grid step: constant index_map keeps them VMEM-resident, and Buffered(1)
        # drops the useless second pipeline buffer (frees ~2.3 MB of VMEM).
        if single_buffer_consts:
            def const(shape):
                return pl.BlockSpec(shape, lambda i: (0, 0),
                                    pipeline_mode=pl.Buffered(1))
        else:
            def const(shape):
                return pl.BlockSpec(shape, lambda i: (0, 0))

        return pl.pallas_call(
            gen_kernel,
            out_shape=jax.ShapeDtypeStruct((B_pad, 2 * D), jnp.float32),
            grid=(nb,),
            in_specs=[
                pl.BlockSpec((tm, D), lambda i: (i, 0)),   # x tile streams over the grid
                const((1, D)), const((1, D)),              # bn scale / shift
                const((D, H1)), const((1, H1)),            # fc1
                const((H1, H2)), const((1, H2)),           # fc2
                const((H2, D)), const((1, D)),             # fc_flat
            ],
            out_specs=pl.BlockSpec((tm, 2 * D), lambda i: (i, 0)),
            compiler_params=pltpu.CompilerParams(
                dimension_semantics=("parallel",),
                vmem_limit_bytes=vmem_limit),
            cost_estimate=cost,
        )

    args = (x_p, scale, shift, w1, b1, w2, b2, w3, b3)
    try:
        packed = build(True)(*args)
    except Exception:
        # Defensive fallback: identical kernel with default (double) buffering.
        packed = build(False)(*args)

    packed = packed[:B]
    return packed[:, :D], packed[:, D:]


def init_params(key, latent_dim):
    """Synthetic init matching nn.Linear defaults; weights stored transposed + bf16."""
    def linear(key, fan_in, fan_out):
        k_w, k_b = jax.random.split(key)
        bound = 1.0 / jnp.sqrt(float(fan_in))
        # stored transposed (in, out) so the kernel computes x @ W_T + b
        w_t = jax.random.uniform(k_w, (fan_in, fan_out), jnp.float32, -bound, bound)
        b = jax.random.uniform(k_b, (1, fan_out), jnp.float32, -bound, bound)
        return w_t.astype(jnp.bfloat16), b

    k1, k2, k3 = jax.random.split(key, 3)
    w1t, b1 = linear(k1, latent_dim, H1)
    w2t, b2 = linear(k2, H1, H2)
    w3t, b3 = linear(k3, H2, latent_dim)
    return {
        "gamma": jnp.ones((1, latent_dim), jnp.float32),   # BatchNorm1d weight init = 1
        "beta": jnp.zeros((1, latent_dim), jnp.float32),   # BatchNorm1d bias init = 0
        "w1t": w1t, "b1": b1,
        "w2t": w2t, "b2": b2,
        "w3t": w3t, "b3": b3,
    }


if __name__ == "__main__":
    # small, module-consistent shapes: batch=8, latent_dim=64
    B, latent_dim = 8, 64
    key = jax.random.PRNGKey(0)
    k_x, k_p = jax.random.split(key)
    x = jax.random.normal(k_x, (B, latent_dim), jnp.float32)
    params = init_params(k_p, latent_dim)

    x_out, raw_feats = gen_forward(x, params)
    jax.block_until_ready((x_out, raw_feats))

    # pure-JAX reference with the same bf16 weights / f32 accumulation
    mean = jnp.mean(x, axis=0, keepdims=True)
    var = jnp.var(x, axis=0, keepdims=True)
    scale = params["gamma"] * lax.rsqrt(var + EPS)
    shift = params["beta"] - mean * scale
    xn = x * scale + shift
    raw_ref = jnp.tanh(xn)
    h = jnp.dot(xn.astype(jnp.bfloat16), params["w1t"],
                preferred_element_type=jnp.float32) + params["b1"]
    h = jnp.dot(h.astype(jnp.bfloat16), params["w2t"],
                preferred_element_type=jnp.float32) + params["b2"]
    out_ref = jnp.tanh(jnp.dot(h.astype(jnp.bfloat16), params["w3t"],
                               preferred_element_type=jnp.float32) + params["b3"])

    assert jnp.allclose(x_out, out_ref, atol=2e-2, rtol=2e-2)
    assert jnp.allclose(raw_feats, raw_ref, atol=2e-2, rtol=2e-2)

    print("KERNEL_OK")
</pallas_src>

<mosaic_0001>
module attributes {stable_mosaic.version = 11 : i64} {
  func.func @gen_kernel(%arg0: i32, %arg1: memref<8x64xf32, #tpu.memory_space<vmem>>, %arg2: memref<1x64xf32, #tpu.memory_space<vmem>>, %arg3: memref<1x64xf32, #tpu.memory_space<vmem>>, %arg4: memref<64x512xbf16, #tpu.memory_space<vmem>>, %arg5: memref<1x512xf32, #tpu.memory_space<vmem>>, %arg6: memref<512x2048xbf16, #tpu.memory_space<vmem>>, %arg7: memref<1x2048xf32, #tpu.memory_space<vmem>>, %arg8: memref<2048x64xbf16, #tpu.memory_space<vmem>>, %arg9: memref<1x64xf32, #tpu.memory_space<vmem>>, %arg10: memref<8x128xf32, #tpu.memory_space<vmem>>) attributes {dimension_semantics = [#tpu.dimension_semantics<parallel>], iteration_bounds = array<i64: 1>, scalar_prefetch = 0 : i64, scratch_operands = 0 : i64, tpu.core_type = #tpu.core_type<tc>, window_params = [{transform_indices = @transform_0, window_bounds = array<i64: 8, 64>}, {pipeline_mode = #tpu.pipeline_mode<synchronous>, transform_indices = @transform_1, window_bounds = array<i64: 1, 64>}, {pipeline_mode = #tpu.pipeline_mode<synchronous>, transform_indices = @transform_2, window_bounds = array<i64: 1, 64>}, {pipeline_mode = #tpu.pipeline_mode<synchronous>, transform_indices = @transform_3, window_bounds = array<i64: 64, 512>}, {pipeline_mode = #tpu.pipeline_mode<synchronous>, transform_indices = @transform_4, window_bounds = array<i64: 1, 512>}, {pipeline_mode = #tpu.pipeline_mode<synchronous>, transform_indices = @transform_5, window_bounds = array<i64: 512, 2048>}, {pipeline_mode = #tpu.pipeline_mode<synchronous>, transform_indices = @transform_6, window_bounds = array<i64: 1, 2048>}, {pipeline_mode = #tpu.pipeline_mode<synchronous>, transform_indices = @transform_7, window_bounds = array<i64: 2048, 64>}, {pipeline_mode = #tpu.pipeline_mode<synchronous>, transform_indices = @transform_8, window_bounds = array<i64: 1, 64>}, {transform_indices = @transform_9, window_bounds = array<i64: 8, 128>}]} {
    %c0 = arith.constant 0 : index
    %c0_0 = arith.constant 0 : index
    %0 = vector.load %arg1[%c0, %c0_0] : memref<8x64xf32, #tpu.memory_space<vmem>>, vector<8x64xf32>
    %c0_1 = arith.constant 0 : index
    %c0_2 = arith.constant 0 : index
    %1 = vector.load %arg2[%c0_1, %c0_2] : memref<1x64xf32, #tpu.memory_space<vmem>>, vector<1x64xf32>
    %2 = vector.broadcast %1 : vector<1x64xf32> to vector<8x64xf32>
    %3 = arith.mulf %0, %2 : vector<8x64xf32>
    %c0_3 = arith.constant 0 : index
    %c0_4 = arith.constant 0 : index
    %4 = vector.load %arg3[%c0_3, %c0_4] : memref<1x64xf32, #tpu.memory_space<vmem>>, vector<1x64xf32>
    %5 = vector.broadcast %4 : vector<1x64xf32> to vector<8x64xf32>
    %6 = arith.addf %3, %5 : vector<8x64xf32>
    %7 = math.tanh %6 : vector<8x64xf32>
    %8 = arith.truncf %6 : vector<8x64xf32> to vector<8x64xbf16>
    %c0_5 = arith.constant 0 : index
    %c0_6 = arith.constant 0 : index
    %9 = vector.load %arg4[%c0_5, %c0_6] : memref<64x512xbf16, #tpu.memory_space<vmem>>, vector<64x512xbf16>
    %cst = arith.constant dense<0.000000e+00> : vector<8x512xf32>
    %10 = tpu.matmul %8, %9, %cst {dimension_numbers = #tpu.dot_dimension_numbers<[1], [0], [0], [1], [0, 0, 1, 1], [], []>} : vector<8x64xbf16>, vector<64x512xbf16>, vector<8x512xf32> -> vector<8x512xf32>
    %c0_7 = arith.constant 0 : index
    %c0_8 = arith.constant 0 : index
    %11 = vector.load %arg5[%c0_7, %c0_8] : memref<1x512xf32, #tpu.memory_space<vmem>>, vector<1x512xf32>
    %12 = vector.broadcast %11 : vector<1x512xf32> to vector<8x512xf32>
    %13 = arith.addf %10, %12 : vector<8x512xf32>
    %14 = arith.truncf %13 : vector<8x512xf32> to vector<8x512xbf16>
    %c0_9 = arith.constant 0 : index
    %c0_10 = arith.constant 0 : index
    %15 = vector.load %arg6[%c0_9, %c0_10] : memref<512x2048xbf16, #tpu.memory_space<vmem>>, vector<512x2048xbf16>
    %cst_11 = arith.constant dense<0.000000e+00> : vector<8x2048xf32>
    %16 = tpu.matmul %14, %15, %cst_11 {dimension_numbers = #tpu.dot_dimension_numbers<[1], [0], [0], [1], [0, 0, 1, 1], [], []>} : vector<8x512xbf16>, vector<512x2048xbf16>, vector<8x2048xf32> -> vector<8x2048xf32>
    %c0_12 = arith.constant 0 : index
    %c0_13 = arith.constant 0 : index
    %17 = vector.load %arg7[%c0_12, %c0_13] : memref<1x2048xf32, #tpu.memory_space<vmem>>, vector<1x2048xf32>
    %18 = vector.broadcast %17 : vector<1x2048xf32> to vector<8x2048xf32>
    %19 = arith.addf %16, %18 : vector<8x2048xf32>
    %20 = arith.truncf %19 : vector<8x2048xf32> to vector<8x2048xbf16>
    %c0_14 = arith.constant 0 : index
    %c0_15 = arith.constant 0 : index
    %21 = vector.load %arg8[%c0_14, %c0_15] : memref<2048x64xbf16, #tpu.memory_space<vmem>>, vector<2048x64xbf16>
    %cst_16 = arith.constant dense<0.000000e+00> : vector<8x64xf32>
    %22 = tpu.matmul %20, %21, %cst_16 {dimension_numbers = #tpu.dot_dimension_numbers<[1], [0], [0], [1], [0, 0, 1, 1], [], []>} : vector<8x2048xbf16>, vector<2048x64xbf16>, vector<8x64xf32> -> vector<8x64xf32>
    %c0_17 = arith.constant 0 : index
    %c0_18 = arith.constant 0 : index
    %23 = vector.load %arg9[%c0_17, %c0_18] : memref<1x64xf32, #tpu.memory_space<vmem>>, vector<1x64xf32>
    %24 = vector.broadcast %23 : vector<1x64xf32> to vector<8x64xf32>
    %25 = arith.addf %22, %24 : vector<8x64xf32>
    %26 = math.tanh %25 : vector<8x64xf32>
    %27 = tpu.concatenate %26, %7 in 1 : vector<8x64xf32>, vector<8x64xf32> -> vector<8x128xf32>
    %c0_19 = arith.constant 0 : index
    %c0_20 = arith.constant 0 : index
    %28 = vector.load %arg10[%c0_19, %c0_20] : memref<8x128xf32, #tpu.memory_space<vmem>>, vector<8x128xf32>
    tpu.vector_store %arg10[%c0_19, %c0_20], %27 {strides = array<i32>} : memref<8x128xf32, #tpu.memory_space<vmem>>, vector<8x128xf32>,
    return
  }
  func.func @transform_0(%arg0: i32) -> (i32, i32) {
    %c0_i32 = arith.constant 0 : i32
    %c0_i32_0 = arith.constant 0 : i32
    return %arg0, %c0_i32 : i32, i32
  }
  func.func @transform_1(%arg0: i32) -> (i32, i32) {
    %c0_i32 = arith.constant 0 : i32
    %c0_i32_0 = arith.constant 0 : i32
    %c0_i32_1 = arith.constant 0 : i32
    return %c0_i32, %c0_i32_0 : i32, i32
  }
  func.func @transform_2(%arg0: i32) -> (i32, i32) {
    %c0_i32 = arith.constant 0 : i32
    %c0_i32_0 = arith.constant 0 : i32
    %c0_i32_1 = arith.constant 0 : i32
    return %c0_i32, %c0_i32_0 : i32, i32
  }
  func.func @transform_3(%arg0: i32) -> (i32, i32) {
    %c0_i32 = arith.constant 0 : i32
    %c0_i32_0 = arith.constant 0 : i32
    %c0_i32_1 = arith.constant 0 : i32
    return %c0_i32, %c0_i32_0 : i32, i32
  }
  func.func @transform_4(%arg0: i32) -> (i32, i32) {
    %c0_i32 = arith.constant 0 : i32
    %c0_i32_0 = arith.constant 0 : i32
    %c0_i32_1 = arith.constant 0 : i32
    return %c0_i32, %c0_i32_0 : i32, i32
  }
  func.func @transform_5(%arg0: i32) -> (i32, i32) {
    %c0_i32 = arith.constant 0 : i32
    %c0_i32_0 = arith.constant 0 : i32
    %c0_i32_1 = arith.constant 0 : i32
    return %c0_i32, %c0_i32_0 : i32, i32
  }
  func.func @transform_6(%arg0: i32) -> (i32, i32) {
    %c0_i32 = arith.constant 0 : i32
    %c0_i32_0 = arith.constant 0 : i32
    %c0_i32_1 = arith.constant 0 : i32
    return %c0_i32, %c0_i32_0 : i32, i32
  }
  func.func @transform_7(%arg0: i32) -> (i32, i32) {
    %c0_i32 = arith.constant 0 : i32
    %c0_i32_0 = arith.constant 0 : i32
    %c0_i32_1 = arith.constant 0 : i32
    return %c0_i32, %c0_i32_0 : i32, i32
  }
  func.func @transform_8(%arg0: i32) -> (i32, i32) {
    %c0_i32 = arith.constant 0 : i32
    %c0_i32_0 = arith.constant 0 : i32
    %c0_i32_1 = arith.constant 0 : i32
    return %c0_i32, %c0_i32_0 : i32, i32
  }
  func.func @transform_9(%arg0: i32) -> (i32, i32) {
    %c0_i32 = arith.constant 0 : i32
    %c0_i32_0 = arith.constant 0 : i32
    return %arg0, %c0_i32 : i32, i32
  }
}

module attributes {stable_mosaic.version = 11 : i64} {
  func.func @gen_kernel(%arg0: i32, %arg1: memref<8x64xf32, #tpu.memory_space<vmem>>, %arg2: memref<1x64xf32, #tpu.memory_space<vmem>>, %arg3: memref<1x64xf32, #tpu.memory_space<vmem>>, %arg4: memref<64x512xbf16, #tpu.memory_space<vmem>>, %arg5: memref<1x512xf32, #tpu.memory_space<vmem>>, %arg6: memref<512x2048xbf16, #tpu.memory_space<vmem>>, %arg7: memref<1x2048xf32, #tpu.memory_space<vmem>>, %arg8: memref<2048x64xbf16, #tpu.memory_space<vmem>>, %arg9: memref<1x64xf32, #tpu.memory_space<vmem>>, %arg10: memref<8x128xf32, #tpu.memory_space<vmem>>) attributes {dimension_semantics = [#tpu.dimension_semantics<parallel>], iteration_bounds = array<i64: 1>, scalar_prefetch = 0 : i64, scratch_operands = 0 : i64, tpu.core_type = #tpu.core_type<tc>, window_params = [{transform_indices = @transform_0, window_bounds = array<i64: 8, 64>}, {pipeline_mode = #tpu.pipeline_mode<synchronous>, transform_indices = @transform_1, window_bounds = array<i64: 1, 64>}, {pipeline_mode = #tpu.pipeline_mode<synchronous>, transform_indices = @transform_2, window_bounds = array<i64: 1, 64>}, {pipeline_mode = #tpu.pipeline_mode<synchronous>, transform_indices = @transform_3, window_bounds = array<i64: 64, 512>}, {pipeline_mode = #tpu.pipeline_mode<synchronous>, transform_indices = @transform_4, window_bounds = array<i64: 1, 512>}, {pipeline_mode = #tpu.pipeline_mode<synchronous>, transform_indices = @transform_5, window_bounds = array<i64: 512, 2048>}, {pipeline_mode = #tpu.pipeline_mode<synchronous>, transform_indices = @transform_6, window_bounds = array<i64: 1, 2048>}, {pipeline_mode = #tpu.pipeline_mode<synchronous>, transform_indices = @transform_7, window_bounds = array<i64: 2048, 64>}, {pipeline_mode = #tpu.pipeline_mode<synchronous>, transform_indices = @transform_8, window_bounds = array<i64: 1, 64>}, {transform_indices = @transform_9, window_bounds = array<i64: 8, 128>}]} {
    %c0 = arith.constant 0 : index
    %c0_0 = arith.constant 0 : index
    %0 = vector.load %arg1[%c0, %c0_0] : memref<8x64xf32, #tpu.memory_space<vmem>>, vector<8x64xf32>
    %c0_1 = arith.constant 0 : index
    %c0_2 = arith.constant 0 : index
    %1 = vector.load %arg2[%c0_1, %c0_2] : memref<1x64xf32, #tpu.memory_space<vmem>>, vector<1x64xf32>
    %2 = vector.broadcast %1 : vector<1x64xf32> to vector<8x64xf32>
    %3 = arith.mulf %0, %2 : vector<8x64xf32>
    %c0_3 = arith.constant 0 : index
    %c0_4 = arith.constant 0 : index
    %4 = vector.load %arg3[%c0_3, %c0_4] : memref<1x64xf32, #tpu.memory_space<vmem>>, vector<1x64xf32>
    %5 = vector.broadcast %4 : vector<1x64xf32> to vector<8x64xf32>
    %6 = arith.addf %3, %5 : vector<8x64xf32>
    %7 = math.tanh %6 : vector<8x64xf32>
    %8 = arith.truncf %6 : vector<8x64xf32> to vector<8x64xbf16>
    %c0_5 = arith.constant 0 : index
    %c0_6 = arith.constant 0 : index
    %9 = vector.load %arg4[%c0_5, %c0_6] : memref<64x512xbf16, #tpu.memory_space<vmem>>, vector<64x512xbf16>
    %cst = arith.constant dense<0.000000e+00> : vector<8x512xf32>
    %10 = tpu.matmul %8, %9, %cst {dimension_numbers = #tpu.dot_dimension_numbers<[1], [0], [0], [1], [0, 0, 1, 1], [], []>} : vector<8x64xbf16>, vector<64x512xbf16>, vector<8x512xf32> -> vector<8x512xf32>
    %c0_7 = arith.constant 0 : index
    %c0_8 = arith.constant 0 : index
    %11 = vector.load %arg5[%c0_7, %c0_8] : memref<1x512xf32, #tpu.memory_space<vmem>>, vector<1x512xf32>
    %12 = vector.broadcast %11 : vector<1x512xf32> to vector<8x512xf32>
    %13 = arith.addf %10, %12 : vector<8x512xf32>
    %14 = arith.truncf %13 : vector<8x512xf32> to vector<8x512xbf16>
    %c0_9 = arith.constant 0 : index
    %c0_10 = arith.constant 0 : index
    %15 = vector.load %arg6[%c0_9, %c0_10] : memref<512x2048xbf16, #tpu.memory_space<vmem>>, vector<512x2048xbf16>
    %cst_11 = arith.constant dense<0.000000e+00> : vector<8x2048xf32>
    %16 = tpu.matmul %14, %15, %cst_11 {dimension_numbers = #tpu.dot_dimension_numbers<[1], [0], [0], [1], [0, 0, 1, 1], [], []>} : vector<8x512xbf16>, vector<512x2048xbf16>, vector<8x2048xf32> -> vector<8x2048xf32>
    %c0_12 = arith.constant 0 : index
    %c0_13 = arith.constant 0 : index
    %17 = vector.load %arg7[%c0_12, %c0_13] : memref<1x2048xf32, #tpu.memory_space<vmem>>, vector<1x2048xf32>
    %18 = vector.broadcast %17 : vector<1x2048xf32> to vector<8x2048xf32>
    %19 = arith.addf %16, %18 : vector<8x2048xf32>
    %20 = arith.truncf %19 : vector<8x2048xf32> to vector<8x2048xbf16>
    %c0_14 = arith.constant 0 : index
    %c0_15 = arith.constant 0 : index
    %21 = vector.load %arg8[%c0_14, %c0_15] : memref<2048x64xbf16, #tpu.memory_space<vmem>>, vector<2048x64xbf16>
    %cst_16 = arith.constant dense<0.000000e+00> : vector<8x64xf32>
    %22 = tpu.matmul %20, %21, %cst_16 {dimension_numbers = #tpu.dot_dimension_numbers<[1], [0], [0], [1], [0, 0, 1, 1], [], []>} : vector<8x2048xbf16>, vector<2048x64xbf16>, vector<8x64xf32> -> vector<8x64xf32>
    %c0_17 = arith.constant 0 : index
    %c0_18 = arith.constant 0 : index
    %23 = vector.load %arg9[%c0_17, %c0_18] : memref<1x64xf32, #tpu.memory_space<vmem>>, vector<1x64xf32>
    %24 = vector.broadcast %23 : vector<1x64xf32> to vector<8x64xf32>
    %25 = arith.addf %22, %24 : vector<8x64xf32>
    %26 = math.tanh %25 : vector<8x64xf32>
    %27 = tpu.concatenate %26, %7 in 1 : vector<8x64xf32>, vector<8x64xf32> -> vector<8x128xf32>
    %c0_19 = arith.constant 0 : index
    %c0_20 = arith.constant 0 : index
    %28 = vector.load %arg10[%c0_19, %c0_20] : memref<8x128xf32, #tpu.memory_space<vmem>>, vector<8x128xf32>
    tpu.vector_store %arg10[%c0_19, %c0_20], %27 {strides = array<i32>} : memref<8x128xf32, #tpu.memory_space<vmem>>, vector<8x128xf32>,
    return
  }
  func.func @transform_0(%arg0: i32) -> (i32, i32) {
    %c0_i32 = arith.constant 0 : i32
    %c0_i32_0 = arith.constant 0 : i32
    return %arg0, %c0_i32 : i32, i32
  }
  func.func @transform_1(%arg0: i32) -> (i32, i32) {
    %c0_i32 = arith.constant 0 : i32
    %c0_i32_0 = arith.constant 0 : i32
    %c0_i32_1 = arith.constant 0 : i32
    return %c0_i32, %c0_i32_0 : i32, i32
  }
  func.func @transform_2(%arg0: i32) -> (i32, i32) {
    %c0_i32 = arith.constant 0 : i32
    %c0_i32_0 = arith.constant 0 : i32
    %c0_i32_1 = arith.constant 0 : i32
    return %c0_i32, %c0_i32_0 : i32, i32
  }
  func.func @transform_3(%arg0: i32) -> (i32, i32) {
    %c0_i32 = arith.constant 0 : i32
    %c0_i32_0 = arith.constant 0 : i32
    %c0_i32_1 = arith.constant 0 : i32
    return %c0_i32, %c0_i32_0 : i32, i32
  }
  func.func @transform_4(%arg0: i32) -> (i32, i32) {
    %c0_i32 = arith.constant 0 : i32
    %c0_i32_0 = arith.constant 0 : i32
    %c0_i32_1 = arith.constant 0 : i32
    return %c0_i32, %c0_i32_0 : i32, i32
  }
  func.func @transform_5(%arg0: i32) -> (i32, i32) {
    %c0_i32 = arith.constant 0 : i32
    %c0_i32_0 = arith.constant 0 : i32
    %c0_i32_1 = arith.constant 0 : i32
    return %c0_i32, %c0_i32_0 : i32, i32
  }
  func.func @transform_6(%arg0: i32) -> (i32, i32) {
    %c0_i32 = arith.constant 0 : i32
    %c0_i32_0 = arith.constant 0 : i32
    %c0_i32_1 = arith.constant 0 : i32
    return %c0_i32, %c0_i32_0 : i32, i32
  }
  func.func @transform_7(%arg0: i32) -> (i32, i32) {
    %c0_i32 = arith.constant 0 : i32
    %c0_i32_0 = arith.constant 0 : i32
    %c0_i32_1 = arith.constant 0 : i32
    return %c0_i32, %c0_i32_0 : i32, i32
  }
  func.func @transform_8(%arg0: i32) -> (i32, i32) {
    %c0_i32 = arith.constant 0 : i32
    %c0_i32_0 = arith.constant 0 : i32
    %c0_i32_1 = arith.constant 0 : i32
    return %c0_i32, %c0_i32_0 : i32, i32
  }
  func.func @transform_9(%arg0: i32) -> (i32, i32) {
    %c0_i32 = arith.constant 0 : i32
    %c0_i32_0 = arith.constant 0 : i32
    return %arg0, %c0_i32 : i32, i32
  }
}

</mosaic_0001>

<llo_original>
// kernel: tpu_custom_call.1
$region0: #{tpu_custom_call.1}
  #allocation0 [shape = 'u32[]', space=smem, size = 0x4, offset = 0x4, fixed_abs, tag = 'smem constant byte address 0x4 - core index']
  #allocation1 [shape = 'u32[144,128]{1,0:T(1,128)}', space=vmem, size = 0x12000, scoped, tag = 'internal scratch']
  %s0 = inlined_call_operand.hbm [shape: f32[8,64], index: 0, kind: input, shape index: {}]
  %s1 = inlined_call_operand.hbm [shape: f32[1,64], index: 1, kind: input, shape index: {}]
  %s2 = inlined_call_operand.hbm [shape: f32[1,64], index: 2, kind: input, shape index: {}]
  %s3 = inlined_call_operand.hbm [shape: bf16[64,512], index: 3, kind: input, shape index: {}]
  %s4 = inlined_call_operand.hbm [shape: f32[1,512], index: 4, kind: input, shape index: {}]
  %s5 = inlined_call_operand.hbm [shape: bf16[512,2048], index: 5, kind: input, shape index: {}]
  %s6 = inlined_call_operand.hbm [shape: f32[1,2048], index: 6, kind: input, shape index: {}]
  %s7 = inlined_call_operand.vmem [shape: bf16[2048,64], index: 7, kind: input, shape index: {}]
  %s8 = inlined_call_operand.hbm [shape: f32[1,64], index: 8, kind: input, shape index: {}]
  %s9 = inlined_call_operand.hbm [shape: f32[8,128], index: 9, kind: output, shape index: {}]
  %s10 = sld [smem:[#allocation0]]
  $region78: #{tpu_custom_call.1} parent=0
    _
  %s12 = ssub.s32 1, %s10
  %s13 = scalar_select 0, %s12, %s10
  $region1: #{tpu_custom_call.1} parent=0
    #allocation2 [shape = 'u8[4096]{0}', space=vmem, size = 0x1000, scoped, tag = 'input window, operand 0, single buffered']
    #allocation3 [shape = 's32[1]{0}', space=sflag, size = 0x4, scoped, tag = 'scoped memory for tpu_custom_call.1']
    #allocation4 [shape = 's32[1]{0}', space=sflag, size = 0x4, scoped, tag = 'scoped memory for tpu_custom_call.1']
    #allocation5 [shape = 'u8[512]{0}', space=vmem, size = 0x400, scoped, tag = 'input window, operand 1, single buffered']
    #allocation6 [shape = 's32[1]{0}', space=sflag, size = 0x4, scoped, tag = 'scoped memory for tpu_custom_call.1']
    #allocation7 [shape = 'u8[512]{0}', space=vmem, size = 0x400, scoped, tag = 'input window, operand 2, single buffered']
    #allocation8 [shape = 'u8[65536]{0}', space=vmem, size = 0x10000, scoped, tag = 'input window, operand 3, single buffered']
    #allocation9 [shape = 's32[1]{0}', space=sflag, size = 0x4, scoped, tag = 'scoped memory for tpu_custom_call.1']
    #allocation10 [shape = 'u8[2048]{0}', space=vmem, size = 0x800, scoped, tag = 'input window, operand 4, single buffered']
    #allocation11 [shape = 'u8[2097152]{0}', space=vmem, size = 0x200000, scoped, tag = 'input window, operand 5, single buffered']
    #allocation12 [shape = 's32[1]{0}', space=sflag, size = 0x4, scoped, tag = 'scoped memory for tpu_custom_call.1']
    #allocation13 [shape = 'u8[8192]{0}', space=vmem, size = 0x2000, scoped, tag = 'input window, operand 6, single buffered']
    #allocation14 [shape = 'u8[512]{0}', space=vmem, size = 0x400, scoped, tag = 'input window, operand 8, single buffered']
    #allocation15 [shape = 's32[1]{0}', space=sflag, size = 0x4, scoped, tag = 'scoped memory for tpu_custom_call.1']
    #allocation16 [shape = 'u8[4096]{0}', space=vmem, size = 0x1000, scoped, tag = 'output window, operand 0, single buffered']
    %14 = vsyncpa [#allocation3], 0
    %15 = vsyncpa [#allocation6], 0
    %16 = vsyncpa [#allocation9], 0
    %17 = vsyncpa [#allocation12], 0
    %18 = vsyncpa [#allocation15], 0
    %19 = vsyncpa [#allocation4], 0
    // Predicated region
    $region2: #{tpu_custom_call.1} parent=1 // pred_check
      _
    $region3: #{tpu_custom_call.1} parent=1 // pred_check_branch
      %21 = sbr.rel (0) target = $region5
    $region4: #{tpu_custom_call.1} parent=1 // pred_region
      %s23 = ssub.s32 128, 128
      %24 = vsyncadd [#allocation3], %s23
      %s26 = sshll.u32 [#allocation2], 4
      %s27 = int_to_ptr.vmem [resolvable:$true] %s26
      %29 = dma.hbm_to_vmem [thread:$0]  %s0, 128, %s27, [#allocation3]
    $region5: #{tpu_custom_call.1} parent=1 // pred_fallthru
      _
    // Predicated region
    $region6: #{tpu_custom_call.1} parent=1 // pred_check
      _
    $region7: #{tpu_custom_call.1} parent=1 // pred_check_branch
      %31 = sbr.rel (0) target = $region9
    $region8: #{tpu_custom_call.1} parent=1 // pred_region
      %s33 = ssub.s32 16, 16
      %34 = vsyncadd [#allocation6], %s33
      %s36 = sshll.u32 [#allocation5], 4
      %s37 = int_to_ptr.vmem [resolvable:$true] %s36
      %39 = dma.hbm_to_vmem [thread:$0]  %s1, 16, %s37, [#allocation6]
    $region9: #{tpu_custom_call.1} parent=1 // pred_fallthru
      _
    // Predicated region
    $region10: #{tpu_custom_call.1} parent=1 // pred_check
      _
    $region11: #{tpu_custom_call.1} parent=1 // pred_check_branch
      %41 = sbr.rel (0) target = $region13
    $region12: #{tpu_custom_call.1} parent=1 // pred_region
      %s43 = ssub.s32 16, 16
      %44 = vsyncadd [#allocation6], %s43
      %s46 = sshll.u32 [#allocation7], 4
      %s47 = int_to_ptr.vmem [resolvable:$true] %s46
      %49 = dma.hbm_to_vmem [thread:$0]  %s2, 16, %s47, [#allocation6]
    $region13: #{tpu_custom_call.1} parent=1 // pred_fallthru
      _
    // Predicated region
    $region14: #{tpu_custom_call.1} parent=1 // pred_check
      _
    $region15: #{tpu_custom_call.1} parent=1 // pred_check_branch
      %51 = sbr.rel (0) target = $region17
    $region16: #{tpu_custom_call.1} parent=1 // pred_region
      %s53 = ssub.s32 2048, 2048
      %54 = vsyncadd [#allocation9], %s53
      %s55 = sshll.u32 [#allocation8], 4
      %s56 = int_to_ptr.vmem [resolvable:$true] %s55
      %61 = dma.hbm_to_vmem [thread:$0]  %s3, 2048, %s56, [#allocation9], 256, 256, 16
    $region17: #{tpu_custom_call.1} parent=1 // pred_fallthru
      _
    // Predicated region
    $region18: #{tpu_custom_call.1} parent=1 // pred_check
      _
    $region19: #{tpu_custom_call.1} parent=1 // pred_check_branch
      %63 = sbr.rel (0) target = $region21
    $region20: #{tpu_custom_call.1} parent=1 // pred_region
      %s65 = ssub.s32 64, 64
      %66 = vsyncadd [#allocation9], %s65
      %s68 = sshll.u32 [#allocation10], 4
      %s69 = int_to_ptr.vmem [resolvable:$true] %s68
      %71 = dma.hbm_to_vmem [thread:$0]  %s4, 64, %s69, [#allocation9]
    $region21: #{tpu_custom_call.1} parent=1 // pred_fallthru
      _
    // Predicated region
    $region22: #{tpu_custom_call.1} parent=1 // pred_check
      _
    $region23: #{tpu_custom_call.1} parent=1 // pred_check_branch
      %73 = sbr.rel (0) target = $region25
    $region24: #{tpu_custom_call.1} parent=1 // pred_region
      %s75 = ssub.s32 65536, 65536
      %76 = vsyncadd [#allocation12], %s75
      %s77 = sshll.u32 [#allocation11], 4
      %s78 = int_to_ptr.vmem [resolvable:$true] %s77
      %83 = dma.hbm_to_vmem [thread:$0]  %s5, 65536, %s78, [#allocation12], 1024, 1024, 64
    $region25: #{tpu_custom_call.1} parent=1 // pred_fallthru
      _
    // Predicated region
    $region26: #{tpu_custom_call.1} parent=1 // pred_check
      _
    $region27: #{tpu_custom_call.1} parent=1 // pred_check_branch
      %85 = sbr.rel (0) target = $region29
    $region28: #{tpu_custom_call.1} parent=1 // pred_region
      %s87 = ssub.s32 256, 256
      %88 = vsyncadd [#allocation12], %s87
      %s90 = sshll.u32 [#allocation13], 4
      %s91 = int_to_ptr.vmem [resolvable:$true] %s90
      %93 = dma.hbm_to_vmem [thread:$0]  %s6, 256, %s91, [#allocation12]
    $region29: #{tpu_custom_call.1} parent=1 // pred_fallthru
      _
    // Predicated region
    $region30: #{tpu_custom_call.1} parent=1 // pred_check
      _
    $region31: #{tpu_custom_call.1} parent=1 // pred_check_branch
      %95 = sbr.rel (0) target = $region33
    $region32: #{tpu_custom_call.1} parent=1 // pred_region
      _
    $region33: #{tpu_custom_call.1} parent=1 // pred_fallthru
      _
    // Predicated region
    $region34: #{tpu_custom_call.1} parent=1 // pred_check
      _
    $region35: #{tpu_custom_call.1} parent=1 // pred_check_branch
      %97 = sbr.rel (0) target = $region37
    $region36: #{tpu_custom_call.1} parent=1 // pred_region
      %s99 = ssub.s32 16, 16
      %100 = vsyncadd [#allocation15], %s99
      %s102 = sshll.u32 [#allocation14], 4
      %s103 = int_to_ptr.vmem [resolvable:$true] %s102
      %105 = dma.hbm_to_vmem [thread:$0]  %s8, 16, %s103, [#allocation15]
    $region37: #{tpu_custom_call.1} parent=1 // pred_fallthru
      _
    // Predicated region
    $region38: #{tpu_custom_call.1} parent=1 // pred_check
      _
    $region39: #{tpu_custom_call.1} parent=1 // pred_check_branch
      %107 = sbr.rel (0) target = $region41
    $region40: #{tpu_custom_call.1} parent=1 // pred_region
      %108 = dma.done [#allocation3], 128
    $region41: #{tpu_custom_call.1} parent=1 // pred_fallthru
      _
    // Predicated region
    $region42: #{tpu_custom_call.1} parent=1 // pred_check
      _
    $region43: #{tpu_custom_call.1} parent=1 // pred_check_branch
      %110 = sbr.rel (0) target = $region45
    $region44: #{tpu_custom_call.1} parent=1 // pred_region
      %111 = dma.done [#allocation6], 16
    $region45: #{tpu_custom_call.1} parent=1 // pred_fallthru
      _
    // Predicated region
    $region46: #{tpu_custom_call.1} parent=1 // pred_check
      _
    $region47: #{tpu_custom_call.1} parent=1 // pred_check_branch
      %113 = sbr.rel (0) target = $region49
    $region48: #{tpu_custom_call.1} parent=1 // pred_region
      %114 = dma.done [#allocation6], 16
    $region49: #{tpu_custom_call.1} parent=1 // pred_fallthru
      _
    // Predicated region
    $region50: #{tpu_custom_call.1} parent=1 // pred_check
      _
    $region51: #{tpu_custom_call.1} parent=1 // pred_check_branch
      %116 = sbr.rel (0) target = $region53
    $region52: #{tpu_custom_call.1} parent=1 // pred_region
      %117 = dma.done [#allocation9], 2048
    $region53: #{tpu_custom_call.1} parent=1 // pred_fallthru
      _
    // Predicated region
    $region54: #{tpu_custom_call.1} parent=1 // pred_check
      _
    $region55: #{tpu_custom_call.1} parent=1 // pred_check_branch
      %119 = sbr.rel (0) target = $region57
    $region56: #{tpu_custom_call.1} parent=1 // pred_region
      %120 = dma.done [#allocation9], 64
    $region57: #{tpu_custom_call.1} parent=1 // pred_fallthru
      _
    // Predicated region
    $region58: #{tpu_custom_call.1} parent=1 // pred_check
      _
    $region59: #{tpu_custom_call.1} parent=1 // pred_check_branch
      %122 = sbr.rel (0) target = $region61
    $region60: #{tpu_custom_call.1} parent=1 // pred_region
      %123 = dma.done [#allocation12], 65536
    $region61: #{tpu_custom_call.1} parent=1 // pred_fallthru
      _
    // Predicated region
    $region62: #{tpu_custom_call.1} parent=1 // pred_check
      _
    $region63: #{tpu_custom_call.1} parent=1 // pred_check_branch
      %125 = sbr.rel (0) target = $region65
    $region64: #{tpu_custom_call.1} parent=1 // pred_region
      %126 = dma.done [#allocation12], 256
    $region65: #{tpu_custom_call.1} parent=1 // pred_fallthru
      _
    // Predicated region
    $region66: #{tpu_custom_call.1} parent=1 // pred_check
      _
    $region67: #{tpu_custom_call.1} parent=1 // pred_check_branch
      %128 = sbr.rel (0) target = $region69
    $region68: #{tpu_custom_call.1} parent=1 // pred_region
      %129 = dma.done [#allocation15], 16
    $region69: #{tpu_custom_call.1} parent=1 // pred_fallthru
      _
    %v131 = vld [vmem:[#allocation2] sm:$0xff]
    %v132 = vld [vmem:[#allocation5] sm:$0x1]
    %v134 = vlaneseq
    %v135 = vshrl.u32 %v134, 7
    %v136 = vsub.s32 0, %v135
    %v137 = vrot.slane %v132, %v136
    %v139 = vmul.f32 %v131, %v137
    %v140 = vld [vmem:[#allocation7] sm:$0x1]
    %v142 = vlaneseq
    %v143 = vshrl.u32 %v142, 7
    %v144 = vsub.s32 0, %v143
    %v145 = vrot.slane %v140, %v144
    %v147 = vadd.f32 %v139, %v145
    %v148 = vtanh.pop %v147
    %v149 = vpack.c.bf16 %v147, %v147
    %v150 = vld [vmem:[#allocation8] sm:$0xff]
    %v151 = vld [vmem:[#allocation8 + $0x8] sm:$0xff]
    %v152 = vld [vmem:[#allocation8 + $0x10] sm:$0xff]
    %v153 = vld [vmem:[#allocation8 + $0x18] sm:$0xff]
    %v154 = vld [vmem:[#allocation8 + $0x20] sm:$0xff]
    %v155 = vld [vmem:[#allocation8 + $0x28] sm:$0xff]
    %v156 = vld [vmem:[#allocation8 + $0x30] sm:$0xff]
    %v157 = vld [vmem:[#allocation8 + $0x38] sm:$0xff]
    %v158 = vld [vmem:[#allocation8 + $0x40] sm:$0xff]
    %v159 = vld [vmem:[#allocation8 + $0x48] sm:$0xff]
    %v160 = vld [vmem:[#allocation8 + $0x50] sm:$0xff]
    %v161 = vld [vmem:[#allocation8 + $0x58] sm:$0xff]
    %v162 = vld [vmem:[#allocation8 + $0x60] sm:$0xff]
    %v163 = vld [vmem:[#allocation8 + $0x68] sm:$0xff]
    %v164 = vld [vmem:[#allocation8 + $0x70] sm:$0xff]
    %v165 = vld [vmem:[#allocation8 + $0x78] sm:$0xff]
    %v166 = vld [vmem:[#allocation10] sm:$0xf]
    %v168 = vlaneseq
    %v169 = vshrl.u32 %v168, 7
    %v170 = vsub.s32 0, %v169
    %v171 = vrot.slane %v166, %v170
    %v172 = vlaneseq
    %v173 = vshrl.u32 %v172, 7
    %v174 = vsub.s32 1, %v173
    %v175 = vrot.slane %v166, %v174
    %v176 = vlaneseq
    %v177 = vshrl.u32 %v176, 7
    %v178 = vsub.s32 2, %v177
    %v179 = vrot.slane %v166, %v178
    %v180 = vlaneseq
    %v181 = vshrl.u32 %v180, 7
    %v182 = vsub.s32 3, %v181
    %v183 = vrot.slane %v166, %v182
    %v204 = vunpack.c.l.b16 %v150
    %v205 = vunpack.c.h.b16 %v150
    %v206 = vunpack.c.l.b16 %v151
    %v207 = vunpack.c.h.b16 %v151
    %v208 = vunpack.c.l.b16 %v152
    %v209 = vunpack.c.h.b16 %v152
    %v210 = vunpack.c.l.b16 %v153
    %v211 = vunpack.c.h.b16 %v153
    %v212 = vunpack.c.l.b16 %v154
    %v213 = vunpack.c.h.b16 %v154
    %v214 = vunpack.c.l.b16 %v155
    %v215 = vunpack.c.h.b16 %v155
    %v216 = vunpack.c.l.b16 %v156
    %v217 = vunpack.c.h.b16 %v156
    %v218 = vunpack.c.l.b16 %v157
    %v219 = vunpack.c.h.b16 %v157
    %v220 = vunpack.c.l.b16 %v158
    %v221 = vunpack.c.h.b16 %v158
    %v222 = vunpack.c.l.b16 %v159
    %v223 = vunpack.c.h.b16 %v159
    %v224 = vunpack.c.l.b16 %v160
    %v225 = vunpack.c.h.b16 %v160
    %v226 = vunpack.c.l.b16 %v161
    %v227 = vunpack.c.h.b16 %v161
    %v228 = vunpack.c.l.b16 %v162
    %v229 = vunpack.c.h.b16 %v162
    %v230 = vunpack.c.l.b16 %v163
    %v231 = vunpack.c.h.b16 %v163
    %v232 = vunpack.c.l.b16 %v164
    %v233 = vunpack.c.h.b16 %v164
    %v234 = vunpack.c.l.b16 %v165
    %v235 = vunpack.c.h.b16 %v165
    %v236 = vpack.c.b16 %v208, %v204
    %v237 = vpack.c.b16 %v209, %v205
    %v238 = vpack.c.b16 %v210, %v206
    %v239 = vpack.c.b16 %v211, %v207
    %v240 = vpack.c.b16 %v216, %v212
    %v241 = vpack.c.b16 %v217, %v213
    %v242 = vpack.c.b16 %v218, %v214
    %v243 = vpack.c.b16 %v219, %v215
    %v244 = vpack.c.b16 %v224, %v220
    %v245 = vpack.c.b16 %v225, %v221
    %v246 = vpack.c.b16 %v226, %v222
    %v247 = vpack.c.b16 %v227, %v223
    %v248 = vpack.c.b16 %v232, %v228
    %v249 = vpack.c.b16 %v233, %v229
    %v250 = vpack.c.b16 %v234, %v230
    %v251 = vpack.c.b16 %v235, %v231
    %vm268 = vcmask 523264
    %v270 = vsel %vm268, %v149, 0
    %272 = vmatprep.subr.bf16.mxu0 %v237
    %273 = vmatpush1.bf16.msra.mxu0 %v236
    %274 = vmatprep.subr.bf16.mxu0 %v241
    %275 = vmatpush1.bf16.msra.mxu0 %v240
    %276 = vmatprep.subr.bf16.mxu0 %v245
    %277 = vmatpush1.bf16.msra.mxu0 %v244
    %278 = vmatprep.subr.bf16.mxu0 %v249
    %279 = vmatpush1.bf16.msra.mxu0 %v248
    %280 = vmatprep.subr.bf16.mxu0 0
    %281 = vmatpush1.bf16.msra.mxu0 0
    %282 = vmatprep.subr.bf16.mxu0 0
    %283 = vmatpush1.bf16.msra.mxu0 0
    %284 = vmatprep.subr.bf16.mxu0 0
    %285 = vmatpush1.bf16.msra.mxu0 0
    %286 = vmatprep.subr.bf16.mxu0 0
    %287 = vmatpush1.bf16.msra.mxu0 0
    %288 = vmatprep.subr.bf16.mxu0 0
    %289 = vmatpush1.bf16.msra.mxu0 0
    %290 = vmatprep.subr.bf16.mxu0 0
    %291 = vmatpush1.bf16.msra.mxu0 0
    %292 = vmatprep.subr.bf16.mxu0 0
    %293 = vmatpush1.bf16.msra.mxu0 0
    %294 = vmatprep.subr.bf16.mxu0 0
    %295 = vmatpush1.bf16.msra.mxu0 0
    %296 = vmatprep.subr.bf16.mxu0 0
    %297 = vmatpush1.bf16.msra.mxu0 0
    %298 = vmatprep.subr.bf16.mxu0 0
    %299 = vmatpush1.bf16.msra.mxu0 0
    %300 = vmatprep.subr.bf16.mxu0 0
    %301 = vmatpush1.bf16.msra.mxu0 0
    %302 = vmatprep.subr.bf16.mxu0 0
    %303 = vmatpush1.bf16.msra.mxu0 0
    %304 = vmatprep.mubr.bf16.mxu0 0
    %305 = vmatmul.mubr.bf16.gmra.mrb[0].mxu0 %v270
    %v306 = vpop.f32.mrb[0].mxu0
    %v307 = vadd.f32 %v171, %v306
    %v308 = vpop.f32.mrb[0].mxu0
    %v309 = vadd.f32 %v175, %v308
    %v310 = vpop.f32.mrb[0].mxu0
    %v311 = vpop.f32.mrb[0].mxu0
    %312 = vdwg.mxu0
    %313 = vmatprep.subr.bf16.mxu0 %v239
    %314 = vmatpush1.bf16.msra.mxu0 %v238
    %315 = vmatprep.subr.bf16.mxu0 %v243
    %316 = vmatpush1.bf16.msra.mxu0 %v242
    %317 = vmatprep.subr.bf16.mxu0 %v247
    %318 = vmatpush1.bf16.msra.mxu0 %v246
    %319 = vmatprep.subr.bf16.mxu0 %v251
    %320 = vmatpush1.bf16.msra.mxu0 %v250
    %321 = vmatprep.subr.bf16.mxu0 0
    %322 = vmatpush1.bf16.msra.mxu0 0
    %323 = vmatprep.subr.bf16.mxu0 0
    %324 = vmatpush1.bf16.msra.mxu0 0
    %325 = vmatprep.subr.bf16.mxu0 0
    %326 = vmatpush1.bf16.msra.mxu0 0
    %327 = vmatprep.subr.bf16.mxu0 0
    %328 = vmatpush1.bf16.msra.mxu0 0
    %329 = vmatprep.subr.bf16.mxu0 0
    %330 = vmatpush1.bf16.msra.mxu0 0
    %331 = vmatprep.subr.bf16.mxu0 0
    %332 = vmatpush1.bf16.msra.mxu0 0
    %333 = vmatprep.subr.bf16.mxu0 0
    %334 = vmatpush1.bf16.msra.mxu0 0
    %335 = vmatprep.subr.bf16.mxu0 0
    %336 = vmatpush1.bf16.msra.mxu0 0
    %337 = vmatprep.subr.bf16.mxu0 0
    %338 = vmatpush1.bf16.msra.mxu0 0
    %339 = vmatprep.subr.bf16.mxu0 0
    %340 = vmatpush1.bf16.msra.mxu0 0
    %341 = vmatprep.subr.bf16.mxu0 0
    %342 = vmatpush1.bf16.msra.mxu0 0
    %343 = vmatprep.subr.bf16.mxu0 0
    %344 = vmatpush1.bf16.msra.mxu0 0
    %345 = vmatprep.mubr.bf16.mxu0 0
    %346 = vmatmul.mubr.bf16.gmra.mrb[0].mxu0 %v270
    %v347 = vpop.f32.mrb[0].mxu0
    %v348 = vadd.f32 %v179, %v347
    %v349 = vpop.f32.mrb[0].mxu0
    %v350 = vadd.f32 %v183, %v349
    %v351 = vpop.f32.mrb[0].mxu0
    %v352 = vpop.f32.mrb[0].mxu0
    %353 = vdwg.mxu0
    %v354 = vpack.c.bf16 %v307, %v307
    %v355 = vpack.c.bf16 %v309, %v309
    %v356 = vpack.c.bf16 %v348, %v348
    %v357 = vpack.c.bf16 %v350, %v350
    %v358 = vld [vmem:[#allocation11] sm:$0xff]
    %v359 = vld [vmem:[#allocation11 + $0x8] sm:$0xff]
    %v360 = vld [vmem:[#allocation11 + $0x10] sm:$0xff]
    %v361 = vld [vmem:[#allocation11 + $0x18] sm:$0xff]
    %v362 = vld [vmem:[#allocation11 + $0x20] sm:$0xff]
    %v363 = vld [vmem:[#allocation11 + $0x28] sm:$0xff]
    %v364 = vld [vmem:[#allocation11 + $0x30] sm:$0xff]
    %v365 = vld [vmem:[#allocation11 + $0x38] sm:$0xff]
    %v366 = vld [vmem:[#allocation11 + $0x40] sm:$0xff]
    %v367 = vld [vmem:[#allocation11 + $0x48] sm:$0xff]
    %v368 = vld [vmem:[#allocation11 + $0x50] sm:$0xff]
    %v369 = vld [vmem:[#allocation11 + $0x58] sm:$0xff]
    %v370 = vld [vmem:[#allocation11 + $0x60] sm:$0xff]
    %v371 = vld [vmem:[#allocation11 + $0x68] sm:$0xff]
    %v372 = vld [vmem:[#allocation11 + $0x70] sm:$0xff]
    %v373 = vld [vmem:[#allocation11 + $0x78] sm:$0xff]
    %v374 = vld [vmem:[#allocation11 + $0x80] sm:$0xff]
    %v375 = vld [vmem:[#allocation11 + $0x88] sm:$0xff]
    %v376 = vld [vmem:[#allocation11 + $0x90] sm:$0xff]
    %v377 = vld [vmem:[#allocation11 + $0x98] sm:$0xff]
    %v378 = vld [vmem:[#allocation11 + $0xa0] sm:$0xff]
    %v379 = vld [vmem:[#allocation11 + $0xa8] sm:$0xff]
    %v380 = vld [vmem:[#allocation11 + $0xb0] sm:$0xff]
    %v381 = vld [vmem:[#allocation11 + $0xb8] sm:$0xff]
    %v382 = vld [vmem:[#allocation11 + $0xc0] sm:$0xff]
    %v383 = vld [vmem:[#allocation11 + $0xc8] sm:$0xff]
    %v384 = vld [vmem:[#allocation11 + $0xd0] sm:$0xff]
    %v385 = vld [vmem:[#allocation11 + $0xd8] sm:$0xff]
    %v386 = vld [vmem:[#allocation11 + $0xe0] sm:$0xff]
    %v387 = vld [vmem:[#allocation11 + $0xe8] sm:$0xff]
    %v388 = vld [vmem:[#allocation11 + $0xf0] sm:$0xff]
    %v389 = vld [vmem:[#allocation11 + $0xf8] sm:$0xff]
    %v390 = vld [vmem:[#allocation11 + $0x100] sm:$0xff]
    %v391 = vld [vmem:[#allocation11 + $0x108] sm:$0xff]
    %v392 = vld [vmem:[#allocation11 + $0x110] sm:$0xff]
    %v393 = vld [vmem:[#allocation11 + $0x118] sm:$0xff]
    %v394 = vld [vmem:[#allocation11 + $0x120] sm:$0xff]
    %v395 = vld [vmem:[#allocation11 + $0x128] sm:$0xff]
    %v396 = vld [vmem:[#allocation11 + $0x130] sm:$0xff]
    %v397 = vld [vmem:[#allocation11 + $0x138] sm:$0xff]
    %v398 = vld [vmem:[#allocation11 + $0x140] sm:$0xff]
    %v399 = vld [vmem:[#allocation11 + $0x148] sm:$0xff]
    %v400 = vld [vmem:[#allocation11 + $0x150] sm:$0xff]
    %v401 = vld [vmem:[#allocation11 + $0x158] sm:$0xff]
    %v402 = vld [vmem:[#allocation11 + $0x160] sm:$0xff]
    %v403 = vld [vmem:[#allocation11 + $0x168] sm:$0xff]
    %v404 = vld [vmem:[#allocation11 + $0x170] sm:$0xff]
    %v405 = vld [vmem:[#allocation11 + $0x178] sm:$0xff]
    %v406 = vld [vmem:[#allocation11 + $0x180] sm:$0xff]
    %v407 = vld [vmem:[#allocation11 + $0x188] sm:$0xff]
    %v408 = vld [vmem:[#allocation11 + $0x190] sm:$0xff]
    %v409 = vld [vmem:[#allocation11 + $0x198] sm:$0xff]
    %v410 = vld [vmem:[#allocation11 + $0x1a0] sm:$0xff]
    %v411 = vld [vmem:[#allocation11 + $0x1a8] sm:$0xff]
    %v412 = vld [vmem:[#allocation11 + $0x1b0] sm:$0xff]
    %v413 = vld [vmem:[#allocation11 + $0x1b8] sm:$0xff]
    %v414 = vld [vmem:[#allocation11 + $0x1c0] sm:$0xff]
    %v415 = vld [vmem:[#allocation11 + $0x1c8] sm:$0xff]
    %v416 = vld [vmem:[#allocation11 + $0x1d0] sm:$0xff]
    %v417 = vld [vmem:[#allocation11 + $0x1d8] sm:$0xff]
    %v418 = vld [vmem:[#allocation11 + $0x1e0] sm:$0xff]
    %v419 = vld [vmem:[#allocation11 + $0x1e8] sm:$0xff]
    %v420 = vld [vmem:[#allocation11 + $0x1f0] sm:$0xff]
    %v421 = vld [vmem:[#allocation11 + $0x1f8] sm:$0xff]
    %v422 = vld [vmem:[#allocation11 + $0x200] sm:$0xff]
    %v423 = vld [vmem:[#allocation11 + $0x208] sm:$0xff]
    %v424 = vld [vmem:[#allocation11 + $0x210] sm:$0xff]
    %v425 = vld [vmem:[#allocation11 + $0x218] sm:$0xff]
    %v426 = vld [vmem:[#allocation11 + $0x220] sm:$0xff]
    %v427 = vld [vmem:[#allocation11 + $0x228] sm:$0xff]
    %v428 = vld [vmem:[#allocation11 + $0x230] sm:$0xff]
    %v429 = vld [vmem:[#allocation11 + $0x238] sm:$0xff]
    %v430 = vld [vmem:[#allocation11 + $0x240] sm:$0xff]
    %v431 = vld [vmem:[#allocation11 + $0x248] sm:$0xff]
    %v432 = vld [vmem:[#allocation11 + $0x250] sm:$0xff]
    %v433 = vld [vmem:[#allocation11 + $0x258] sm:$0xff]
    %v434 = vld [vmem:[#allocation11 + $0x260] sm:$0xff]
    %v435 = vld [vmem:[#allocation11 + $0x268] sm:$0xff]
    %v436 = vld [vmem:[#allocation11 + $0x270] sm:$0xff]
    %v437 = vld [vmem:[#allocation11 + $0x278] sm:$0xff]
    %v438 = vld [vmem:[#allocation11 + $0x280] sm:$0xff]
    %v439 = vld [vmem:[#allocation11 + $0x288] sm:$0xff]
    %v440 = vld [vmem:[#allocation11 + $0x290] sm:$0xff]
    %v441 = vld [vmem:[#allocation11 + $0x298] sm:$0xff]
    %v442 = vld [vmem:[#allocation11 + $0x2a0] sm:$0xff]
    %v443 = vld [vmem:[#allocation11 + $0x2a8] sm:$0xff]
    %v444 = vld [vmem:[#allocation11 + $0x2b0] sm:$0xff]
    %v445 = vld [vmem:[#allocation11 + $0x2b8] sm:$0xff]
    %v446 = vld [vmem:[#allocation11 + $0x2c0] sm:$0xff]
    %v447 = vld [vmem:[#allocation11 + $0x2c8] sm:$0xff]
    %v448 = vld [vmem:[#allocation11 + $0x2d0] sm:$0xff]
    %v449 = vld [vmem:[#allocation11 + $0x2d8] sm:$0xff]
    %v450 = vld [vmem:[#allocation11 + $0x2e0] sm:$0xff]
    %v451 = vld [vmem:[#allocation11 + $0x2e8] sm:$0xff]
    %v452 = vld [vmem:[#allocation11 + $0x2f0] sm:$0xff]
    %v453 = vld [vmem:[#allocation11 + $0x2f8] sm:$0xff]
    %v454 = vld [vmem:[#allocation11 + $0x300] sm:$0xff]
    %v455 = vld [vmem:[#allocation11 + $0x308] sm:$0xff]
    %v456 = vld [vmem:[#allocation11 + $0x310] sm:$0xff]
    %v457 = vld [vmem:[#allocation11 + $0x318] sm:$0xff]
    %v458 = vld [vmem:[#allocation11 + $0x320] sm:$0xff]
    %v459 = vld [vmem:[#allocation11 + $0x328] sm:$0xff]
    %v460 = vld [vmem:[#allocation11 + $0x330] sm:$0xff]
    %v461 = vld [vmem:[#allocation11 + $0x338] sm:$0xff]
    %v462 = vld [vmem:[#allocation11 + $0x340] sm:$0xff]
    %v463 = vld [vmem:[#allocation11 + $0x348] sm:$0xff]
    %v464 = vld [vmem:[#allocation11 + $0x350] sm:$0xff]
    %v465 = vld [vmem:[#allocation11 + $0x358] sm:$0xff]
    %v466 = vld [vmem:[#allocation11 + $0x360] sm:$0xff]
    %v467 = vld [vmem:[#allocation11 + $0x368] sm:$0xff]
    %v468 = vld [vmem:[#allocation11 + $0x370] sm:$0xff]
    %v469 = vld [vmem:[#allocation11 + $0x378] sm:$0xff]
    %v470 = vld [vmem:[#allocation11 + $0x380] sm:$0xff]
    %v471 = vld [vmem:[#allocation11 + $0x388] sm:$0xff]
    %v472 = vld [vmem:[#allocation11 + $0x390] sm:$0xff]
    %v473 = vld [vmem:[#allocation11 + $0x398] sm:$0xff]
    %v474 = vld [vmem:[#allocation11 + $0x3a0] sm:$0xff]
    %v475 = vld [vmem:[#allocation11 + $0x3a8] sm:$0xff]
    %v476 = vld [vmem:[#allocation11 + $0x3b0] sm:$0xff]
    %v477 = vld [vmem:[#allocation11 + $0x3b8] sm:$0xff]
    %v478 = vld [vmem:[#allocation11 + $0x3c0] sm:$0xff]
    %v479 = vld [vmem:[#allocation11 + $0x3c8] sm:$0xff]
    %v480 = vld [vmem:[#allocation11 + $0x3d0] sm:$0xff]
    %v481 = vld [vmem:[#allocation11 + $0x3d8] sm:$0xff]
    %v482 = vld [vmem:[#allocation11 + $0x3e0] sm:$0xff]
    %v483 = vld [vmem:[#allocation11 + $0x3e8] sm:$0xff]
    %v484 = vld [vmem:[#allocation11 + $0x3f0] sm:$0xff]
    %v485 = vld [vmem:[#allocation11 + $0x3f8] sm:$0xff]
    %v486 = vld [vmem:[#allocation11 + $0x400] sm:$0xff]
    %v487 = vld [vmem:[#allocation11 + $0x408] sm:$0xff]
    %v488 = vld [vmem:[#allocation11 + $0x410] sm:$0xff]
    %v489 = vld [vmem:[#allocation11 + $0x418] sm:$0xff]
    %v490 = vld [vmem:[#allocation11 + $0x420] sm:$0xff]
    %v491 = vld [vmem:[#allocation11 + $0x428] sm:$0xff]
    %v492 = vld [vmem:[#allocation11 + $0x430] sm:$0xff]
    %v493 = vld [vmem:[#allocation11 + $0x438] sm:$0xff]
    %v494 = vld [vmem:[#allocation11 + $0x440] sm:$0xff]
    %v495 = vld [vmem:[#allocation11 + $0x448] sm:$0xff]
    %v496 = vld [vmem:[#allocation11 + $0x450] sm:$0xff]
    %v497 = vld [vmem:[#allocation11 + $0x458] sm:$0xff]
    %v498 = vld [vmem:[#allocation11 + $0x460] sm:$0xff]
    %v499 = vld [vmem:[#allocation11 + $0x468] sm:$0xff]
    %v500 = vld [vmem:[#allocation11 + $0x470] sm:$0xff]
    %v501 = vld [vmem:[#allocation11 + $0x478] sm:$0xff]
    %v502 = vld [vmem:[#allocation11 + $0x480] sm:$0xff]
    %v503 = vld [vmem:[#allocation11 + $0x488] sm:$0xff]
    %v504 = vld [vmem:[#allocation11 + $0x490] sm:$0xff]
    %v505 = vld [vmem:[#allocation11 + $0x498] sm:$0xff]
    %v506 = vld [vmem:[#allocation11 + $0x4a0] sm:$0xff]
    %v507 = vld [vmem:[#allocation11 + $0x4a8] sm:$0xff]
    %v508 = vld [vmem:[#allocation11 + $0x4b0] sm:$0xff]
    %v509 = vld [vmem:[#allocation11 + $0x4b8] sm:$0xff]
    %v510 = vld [vmem:[#allocation11 + $0x4c0] sm:$0xff]
    %v511 = vld [vmem:[#allocation11 + $0x4c8] sm:$0xff]
    %v512 = vld [vmem:[#allocation11 + $0x4d0] sm:$0xff]
    %v513 = vld [vmem:[#allocation11 + $0x4d8] sm:$0xff]
    %v514 = vld [vmem:[#allocation11 + $0x4e0] sm:$0xff]
    %v515 = vld [vmem:[#allocation11 + $0x4e8] sm:$0xff]
    %v516 = vld [vmem:[#allocation11 + $0x4f0] sm:$0xff]
    %v517 = vld [vmem:[#allocation11 + $0x4f8] sm:$0xff]
    %v518 = vld [vmem:[#allocation11 + $0x500] sm:$0xff]
    %v519 = vld [vmem:[#allocation11 + $0x508] sm:$0xff]
    %v520 = vld [vmem:[#allocation11 + $0x510] sm:$0xff]
    %v521 = vld [vmem:[#allocation11 + $0x518] sm:$0xff]
    %v522 = vld [vmem:[#allocation11 + $0x520] sm:$0xff]
    %v523 = vld [vmem:[#allocation11 + $0x528] sm:$0xff]
    %v524 = vld [vmem:[#allocation11 + $0x530] sm:$0xff]
    %v525 = vld [vmem:[#allocation11 + $0x538] sm:$0xff]
    %v526 = vld [vmem:[#allocation11 + $0x540] sm:$0xff]
    %v527 = vld [vmem:[#allocation11 + $0x548] sm:$0xff]
    %v528 = vld [vmem:[#allocation11 + $0x550] sm:$0xff]
    %v529 = vld [vmem:[#allocation11 + $0x558] sm:$0xff]
    %v530 = vld [vmem:[#allocation11 + $0x560] sm:$0xff]
    %v531 = vld [vmem:[#allocation11 + $0x568] sm:$0xff]
    %v532 = vld [vmem:[#allocation11 + $0x570] sm:$0xff]
    %v533 = vld [vmem:[#allocation11 + $0x578] sm:$0xff]
    %v534 = vld [vmem:[#allocation11 + $0x580] sm:$0xff]
    %v535 = vld [vmem:[#allocation11 + $0x588] sm:$0xff]
    %v536 = vld [vmem:[#allocation11 + $0x590] sm:$0xff]
    %v537 = vld [vmem:[#allocation11 + $0x598] sm:$0xff]
    %v538 = vld [vmem:[#allocation11 + $0x5a0] sm:$0xff]
    %v539 = vld [vmem:[#allocation11 + $0x5a8] sm:$0xff]
    %v540 = vld [vmem:[#allocation11 + $0x5b0] sm:$0xff]
    %v541 = vld [vmem:[#allocation11 + $0x5b8] sm:$0xff]
    %v542 = vld [vmem:[#allocation11 + $0x5c0] sm:$0xff]
    %v543 = vld [vmem:[#allocation11 + $0x5c8] sm:$0xff]
    %v544 = vld [vmem:[#allocation11 + $0x5d0] sm:$0xff]
    %v545 = vld [vmem:[#allocation11 + $0x5d8] sm:$0xff]
    %v546 = vld [vmem:[#allocation11 + $0x5e0] sm:$0xff]
    %v547 = vld [vmem:[#allocation11 + $0x5e8] sm:$0xff]
    %v548 = vld [vmem:[#allocation11 + $0x5f0] sm:$0xff]
    %v549 = vld [vmem:[#allocation11 + $0x5f8] sm:$0xff]
    %v550 = vld [vmem:[#allocation11 + $0x600] sm:$0xff]
    %v551 = vld [vmem:[#allocation11 + $0x608] sm:$0xff]
    %v552 = vld [vmem:[#allocation11 + $0x610] sm:$0xff]
    %v553 = vld [vmem:[#allocation11 + $0x618] sm:$0xff]
    %v554 = vld [vmem:[#allocation11 + $0x620] sm:$0xff]
    %v555 = vld [vmem:[#allocation11 + $0x628] sm:$0xff]
    %v556 = vld [vmem:[#allocation11 + $0x630] sm:$0xff]
    %v557 = vld [vmem:[#allocation11 + $0x638] sm:$0xff]
    %v558 = vld [vmem:[#allocation11 + $0x640] sm:$0xff]
    %v559 = vld [vmem:[#allocation11 + $0x648] sm:$0xff]
    %v560 = vld [vmem:[#allocation11 + $0x650] sm:$0xff]
    %v561 = vld [vmem:[#allocation11 + $0x658] sm:$0xff]
    %v562 = vld [vmem:[#allocation11 + $0x660] sm:$0xff]
    %v563 = vld [vmem:[#allocation11 + $0x668] sm:$0xff]
    %v564 = vld [vmem:[#allocation11 + $0x670] sm:$0xff]
    %v565 = vld [vmem:[#allocation11 + $0x678] sm:$0xff]
    %v566 = vld [vmem:[#allocation11 + $0x680] sm:$0xff]
    %v567 = vld [vmem:[#allocation11 + $0x688] sm:$0xff]
    %v568 = vld [vmem:[#allocation11 + $0x690] sm:$0xff]
    %v569 = vld [vmem:[#allocation11 + $0x698] sm:$0xff]
    %v570 = vld [vmem:[#allocation11 + $0x6a0] sm:$0xff]
    %v571 = vld [vmem:[#allocation11 + $0x6a8] sm:$0xff]
    %v572 = vld [vmem:[#allocation11 + $0x6b0] sm:$0xff]
    %v573 = vld [vmem:[#allocation11 + $0x6b8] sm:$0xff]
    %v574 = vld [vmem:[#allocation11 + $0x6c0] sm:$0xff]
    %v575 = vld [vmem:[#allocation11 + $0x6c8] sm:$0xff]
    %v576 = vld [vmem:[#allocation11 + $0x6d0] sm:$0xff]
    %v577 = vld [vmem:[#allocation11 + $0x6d8] sm:$0xff]
    %v578 = vld [vmem:[#allocation11 + $0x6e0] sm:$0xff]
    %v579 = vld [vmem:[#allocation11 + $0x6e8] sm:$0xff]
    %v580 = vld [vmem:[#allocation11 + $0x6f0] sm:$0xff]
    %v581 = vld [vmem:[#allocation11 + $0x6f8] sm:$0xff]
    %v582 = vld [vmem:[#allocation11 + $0x700] sm:$0xff]
    %v583 = vld [vmem:[#allocation11 + $0x708] sm:$0xff]
    %v584 = vld [vmem:[#allocation11 + $0x710] sm:$0xff]
    %v585 = vld [vmem:[#allocation11 + $0x718] sm:$0xff]
    %v586 = vld [vmem:[#allocation11 + $0x720] sm:$0xff]
    %v587 = vld [vmem:[#allocation11 + $0x728] sm:$0xff]
    %v588 = vld [vmem:[#allocation11 + $0x730] sm:$0xff]
    %v589 = vld [vmem:[#allocation11 + $0x738] sm:$0xff]
    %v590 = vld [vmem:[#allocation11 + $0x740] sm:$0xff]
    %v591 = vld [vmem:[#allocation11 + $0x748] sm:$0xff]
    %v592 = vld [vmem:[#allocation11 + $0x750] sm:$0xff]
    %v593 = vld [vmem:[#allocation11 + $0x758] sm:$0xff]
    %v594 = vld [vmem:[#allocation11 + $0x760] sm:$0xff]
    %v595 = vld [vmem:[#allocation11 + $0x768] sm:$0xff]
    %v596 = vld [vmem:[#allocation11 + $0x770] sm:$0xff]
    %v597 = vld [vmem:[#allocation11 + $0x778] sm:$0xff]
    %v598 = vld [vmem:[#allocation11 + $0x780] sm:$0xff]
    %v599 = vld [vmem:[#allocation11 + $0x788] sm:$0xff]
    %v600 = vld [vmem:[#allocation11 + $0x790] sm:$0xff]
    %v601 = vld [vmem:[#allocation11 + $0x798] sm:$0xff]
    %v602 = vld [vmem:[#allocation11 + $0x7a0] sm:$0xff]
    %v603 = vld [vmem:[#allocation11 + $0x7a8] sm:$0xff]
    %v604 = vld [vmem:[#allocation11 + $0x7b0] sm:$0xff]
    %v605 = vld [vmem:[#allocation11 + $0x7b8] sm:$0xff]
    %v606 = vld [vmem:[#allocation11 + $0x7c0] sm:$0xff]
    %v607 = vld [vmem:[#allocation11 + $0x7c8] sm:$0xff]
    %v608 = vld [vmem:[#allocation11 + $0x7d0] sm:$0xff]
    %v609 = vld [vmem:[#allocation11 + $0x7d8] sm:$0xff]
    %v610 = vld [vmem:[#allocation11 + $0x7e0] sm:$0xff]
    %v611 = vld [vmem:[#allocation11 + $0x7e8] sm:$0xff]
    %v612 = vld [vmem:[#allocation11 + $0x7f0] sm:$0xff]
    %v613 = vld [vmem:[#allocation11 + $0x7f8] sm:$0xff]
    %v614 = vld [vmem:[#allocation11 + $0x800] sm:$0xff]
    %v615 = vld [vmem:[#allocation11 + $0x808] sm:$0xff]
    %v616 = vld [vmem:[#allocation11 + $0x810] sm:$0xff]
    %v617 = vld [vmem:[#allocation11 + $0x818] sm:$0xff]
    %v618 = vld [vmem:[#allocation11 + $0x820] sm:$0xff]
    %v619 = vld [vmem:[#allocation11 + $0x828] sm:$0xff]
    %v620 = vld [vmem:[#allocation11 + $0x830] sm:$0xff]
    %v621 = vld [vmem:[#allocation11 + $0x838] sm:$0xff]
    %v622 = vld [vmem:[#allocation11 + $0x840] sm:$0xff]
    %v623 = vld [vmem:[#allocation11 + $0x848] sm:$0xff]
    %v624 = vld [vmem:[#allocation11 + $0x850] sm:$0xff]
    %v625 = vld [vmem:[#allocation11 + $0x858] sm:$0xff]
    %v626 = vld [vmem:[#allocation11 + $0x860] sm:$0xff]
    %v627 = vld [vmem:[#allocation11 + $0x868] sm:$0xff]
    %v628 = vld [vmem:[#allocation11 + $0x870] sm:$0xff]
    %v629 = vld [vmem:[#allocation11 + $0x878] sm:$0xff]
    %v630 = vld [vmem:[#allocation11 + $0x880] sm:$0xff]
    %v631 = vld [vmem:[#allocation11 + $0x888] sm:$0xff]
    %v632 = vld [vmem:[#allocation11 + $0x890] sm:$0xff]
    %v633 = vld [vmem:[#allocation11 + $0x898] sm:$0xff]
    %v634 = vld [vmem:[#allocation11 + $0x8a0] sm:$0xff]
    %v635 = vld [vmem:[#allocation11 + $0x8a8] sm:$0xff]
    %v636 = vld [vmem:[#allocation11 + $0x8b0] sm:$0xff]
    %v637 = vld [vmem:[#allocation11 + $0x8b8] sm:$0xff]
    %v638 = vld [vmem:[#allocation11 + $0x8c0] sm:$0xff]
    %v639 = vld [vmem:[#allocation11 + $0x8c8] sm:$0xff]
    %v640 = vld [vmem:[#allocation11 + $0x8d0] sm:$0xff]
    %v641 = vld [vmem:[#allocation11 + $0x8d8] sm:$0xff]
    %v642 = vld [vmem:[#allocation11 + $0x8e0] sm:$0xff]
    %v643 = vld [vmem:[#allocation11 + $0x8e8] sm:$0xff]
    %v644 = vld [vmem:[#allocation11 + $0x8f0] sm:$0xff]
    %v645 = vld [vmem:[#allocation11 + $0x8f8] sm:$0xff]
    %v646 = vld [vmem:[#allocation11 + $0x900] sm:$0xff]
    %v647 = vld [vmem:[#allocation11 + $0x908] sm:$0xff]
    %v648 = vld [vmem:[#allocation11 + $0x910] sm:$0xff]
    %v649 = vld [vmem:[#allocation11 + $0x918] sm:$0xff]
    %v650 = vld [vmem:[#allocation11 + $0x920] sm:$0xff]
    %v651 = vld [vmem:[#allocation11 + $0x928] sm:$0xff]
    %v652 = vld [vmem:[#allocation11 + $0x930] sm:$0xff]
    %v653 = vld [vmem:[#allocation11 + $0x938] sm:$0xff]
    %v654 = vld [vmem:[#allocation11 + $0x940] sm:$0xff]
    %v655 = vld [vmem:[#allocation11 + $0x948] sm:$0xff]
    %v656 = vld [vmem:[#allocation11 + $0x950] sm:$0xff]
    %v657 = vld [vmem:[#allocation11 + $0x958] sm:$0xff]
    %v658 = vld [vmem:[#allocation11 + $0x960] sm:$0xff]
    %v659 = vld [vmem:[#allocation11 + $0x968] sm:$0xff]
    %v660 = vld [vmem:[#allocation11 + $0x970] sm:$0xff]
    %v661 = vld [vmem:[#allocation11 + $0x978] sm:$0xff]
    %v662 = vld [vmem:[#allocation11 + $0x980] sm:$0xff]
    %v663 = vld [vmem:[#allocation11 + $0x988] sm:$0xff]
    %v664 = vld [vmem:[#allocation11 + $0x990] sm:$0xff]
    %v665 = vld [vmem:[#allocation11 + $0x998] sm:$0xff]
    %v666 = vld [vmem:[#allocation11 + $0x9a0] sm:$0xff]
    %v667 = vld [vmem:[#allocation11 + $0x9a8] sm:$0xff]
    %v668 = vld [vmem:[#allocation11 + $0x9b0] sm:$0xff]
    %v669 = vld [vmem:[#allocation11 + $0x9b8] sm:$0xff]
    %v670 = vld [vmem:[#allocation11 + $0x9c0] sm:$0xff]
    %v671 = vld [vmem:[#allocation11 + $0x9c8] sm:$0xff]
    %v672 = vld [vmem:[#allocation11 + $0x9d0] sm:$0xff]
    %v673 = vld [vmem:[#allocation11 + $0x9d8] sm:$0xff]
    %v674 = vld [vmem:[#allocation11 + $0x9e0] sm:$0xff]
    %v675 = vld [vmem:[#allocation11 + $0x9e8] sm:$0xff]
    %v676 = vld [vmem:[#allocation11 + $0x9f0] sm:$0xff]
    %v677 = vld [vmem:[#allocation11 + $0x9f8] sm:$0xff]
    %v678 = vld [vmem:[#allocation11 + $0xa00] sm:$0xff]
    %v679 = vld [vmem:[#allocation11 + $0xa08] sm:$0xff]
    %v680 = vld [vmem:[#allocation11 + $0xa10] sm:$0xff]
    %v681 = vld [vmem:[#allocation11 + $0xa18] sm:$0xff]
    %v682 = vld [vmem:[#allocation11 + $0xa20] sm:$0xff]
    %v683 = vld [vmem:[#allocation11 + $0xa28] sm:$0xff]
    %v684 = vld [vmem:[#allocation11 + $0xa30] sm:$0xff]
    %v685 = vld [vmem:[#allocation11 + $0xa38] sm:$0xff]
    %v686 = vld [vmem:[#allocation11 + $0xa40] sm:$0xff]
    %v687 = vld [vmem:[#allocation11 + $0xa48] sm:$0xff]
    %v688 = vld [vmem:[#allocation11 + $0xa50] sm:$0xff]
    %v689 = vld [vmem:[#allocation11 + $0xa58] sm:$0xff]
    %v690 = vld [vmem:[#allocation11 + $0xa60] sm:$0xff]
    %v691 = vld [vmem:[#allocation11 + $0xa68] sm:$0xff]
    %v692 = vld [vmem:[#allocation11 + $0xa70] sm:$0xff]
    %v693 = vld [vmem:[#allocation11 + $0xa78] sm:$0xff]
    %v694 = vld [vmem:[#allocation11 + $0xa80] sm:$0xff]
    %v695 = vld [vmem:[#allocation11 + $0xa88] sm:$0xff]
    %v696 = vld [vmem:[#allocation11 + $0xa90] sm:$0xff]
    %v697 = vld [vmem:[#allocation11 + $0xa98] sm:$0xff]
    %v698 = vld [vmem:[#allocation11 + $0xaa0] sm:$0xff]
    %v699 = vld [vmem:[#allocation11 + $0xaa8] sm:$0xff]
    %v700 = vld [vmem:[#allocation11 + $0xab0] sm:$0xff]
    %v701 = vld [vmem:[#allocation11 + $0xab8] sm:$0xff]
    %v702 = vld [vmem:[#allocation11 + $0xac0] sm:$0xff]
    %v703 = vld [vmem:[#allocation11 + $0xac8] sm:$0xff]
    %v704 = vld [vmem:[#allocation11 + $0xad0] sm:$0xff]
    %v705 = vld [vmem:[#allocation11 + $0xad8] sm:$0xff]
    %v706 = vld [vmem:[#allocation11 + $0xae0] sm:$0xff]
    %v707 = vld [vmem:[#allocation11 + $0xae8] sm:$0xff]
    %v708 = vld [vmem:[#allocation11 + $0xaf0] sm:$0xff]
    %v709 = vld [vmem:[#allocation11 + $0xaf8] sm:$0xff]
    %v710 = vld [vmem:[#allocation11 + $0xb00] sm:$0xff]
    %v711 = vld [vmem:[#allocation11 + $0xb08] sm:$0xff]
    %v712 = vld [vmem:[#allocation11 + $0xb10] sm:$0xff]
    %v713 = vld [vmem:[#allocation11 + $0xb18] sm:$0xff]
    %v714 = vld [vmem:[#allocation11 + $0xb20] sm:$0xff]
    %v715 = vld [vmem:[#allocation11 + $0xb28] sm:$0xff]
    %v716 = vld [vmem:[#allocation11 + $0xb30] sm:$0xff]
    %v717 = vld [vmem:[#allocation11 + $0xb38] sm:$0xff]
    %v718 = vld [vmem:[#allocation11 + $0xb40] sm:$0xff]
    %v719 = vld [vmem:[#allocation11 + $0xb48] sm:$0xff]
    %v720 = vld [vmem:[#allocation11 + $0xb50] sm:$0xff]
    %v721 = vld [vmem:[#allocation11 + $0xb58] sm:$0xff]
    %v722 = vld [vmem:[#allocation11 + $0xb60] sm:$0xff]
    %v723 = vld [vmem:[#allocation11 + $0xb68] sm:$0xff]
    %v724 = vld [vmem:[#allocation11 + $0xb70] sm:$0xff]
    %v725 = vld [vmem:[#allocation11 + $0xb78] sm:$0xff]
    %v726 = vld [vmem:[#allocation11 + $0xb80] sm:$0xff]
    %v727 = vld [vmem:[#allocation11 + $0xb88] sm:$0xff]
    %v728 = vld [vmem:[#allocation11 + $0xb90] sm:$0xff]
    %v729 = vld [vmem:[#allocation11 + $0xb98] sm:$0xff]
    %v730 = vld [vmem:[#allocation11 + $0xba0] sm:$0xff]
    %v731 = vld [vmem:[#allocation11 + $0xba8] sm:$0xff]
    %v732 = vld [vmem:[#allocation11 + $0xbb0] sm:$0xff]
    %v733 = vld [vmem:[#allocation11 + $0xbb8] sm:$0xff]
    %v734 = vld [vmem:[#allocation11 + $0xbc0] sm:$0xff]
    %v735 = vld [vmem:[#allocation11 + $0xbc8] sm:$0xff]
    %v736 = vld [vmem:[#allocation11 + $0xbd0] sm:$0xff]
    %v737 = vld [vmem:[#allocation11 + $0xbd8] sm:$0xff]
    %v738 = vld [vmem:[#allocation11 + $0xbe0] sm:$0xff]
    %v739 = vld [vmem:[#allocation11 + $0xbe8] sm:$0xff]
    %v740 = vld [vmem:[#allocation11 + $0xbf0] sm:$0xff]
    %v741 = vld [vmem:[#allocation11 + $0xbf8] sm:$0xff]
    %v742 = vld [vmem:[#allocation11 + $0xc00] sm:$0xff]
    %v743 = vld [vmem:[#allocation11 + $0xc08] sm:$0xff]
    %v744 = vld [vmem:[#allocation11 + $0xc10] sm:$0xff]
    %v745 = vld [vmem:[#allocation11 + $0xc18] sm:$0xff]
    %v746 = vld [vmem:[#allocation11 + $0xc20] sm:$0xff]
    %v747 = vld [vmem:[#allocation11 + $0xc28] sm:$0xff]
    %v748 = vld [vmem:[#allocation11 + $0xc30] sm:$0xff]
    %v749 = vld [vmem:[#allocation11 + $0xc38] sm:$0xff]
    %v750 = vld [vmem:[#allocation11 + $0xc40] sm:$0xff]
    %v751 = vld [vmem:[#allocation11 + $0xc48] sm:$0xff]
    %v752 = vld [vmem:[#allocation11 + $0xc50] sm:$0xff]
    %v753 = vld [vmem:[#allocation11 + $0xc58] sm:$0xff]
    %v754 = vld [vmem:[#allocation11 + $0xc60] sm:$0xff]
    %v755 = vld [vmem:[#allocation11 + $0xc68] sm:$0xff]
    %v756 = vld [vmem:[#allocation11 + $0xc70] sm:$0xff]
    %v757 = vld [vmem:[#allocation11 + $0xc78] sm:$0xff]
    %v758 = vld [vmem:[#allocation11 + $0xc80] sm:$0xff]
    %v759 = vld [vmem:[#allocation11 + $0xc88] sm:$0xff]
    %v760 = vld [vmem:[#allocation11 + $0xc90] sm:$0xff]
    %v761 = vld [vmem:[#allocation11 + $0xc98] sm:$0xff]
    %v762 = vld [vmem:[#allocation11 + $0xca0] sm:$0xff]
    %v763 = vld [vmem:[#allocation11 + $0xca8] sm:$0xff]
    %v764 = vld [vmem:[#allocation11 + $0xcb0] sm:$0xff]
    %v765 = vld [vmem:[#allocation11 + $0xcb8] sm:$0xff]
    %v766 = vld [vmem:[#allocation11 + $0xcc0] sm:$0xff]
    %v767 = vld [vmem:[#allocation11 + $0xcc8] sm:$0xff]
    %v768 = vld [vmem:[#allocation11 + $0xcd0] sm:$0xff]
    %v769 = vld [vmem:[#allocation11 + $0xcd8] sm:$0xff]
    %v770 = vld [vmem:[#allocation11 + $0xce0] sm:$0xff]
    %v771 = vld [vmem:[#allocation11 + $0xce8] sm:$0xff]
    %v772 = vld [vmem:[#allocation11 + $0xcf0] sm:$0xff]
    %v773 = vld [vmem:[#allocation11 + $0xcf8] sm:$0xff]
    %v774 = vld [vmem:[#allocation11 + $0xd00] sm:$0xff]
    %v775 = vld [vmem:[#allocation11 + $0xd08] sm:$0xff]
    %v776 = vld [vmem:[#allocation11 + $0xd10] sm:$0xff]
    %v777 = vld [vmem:[#allocation11 + $0xd18] sm:$0xff]
    %v778 = vld [vmem:[#allocation11 + $0xd20] sm:$0xff]
    %v779 = vld [vmem:[#allocation11 + $0xd28] sm:$0xff]
    %v780 = vld [vmem:[#allocation11 + $0xd30] sm:$0xff]
    %v781 = vld [vmem:[#allocation11 + $0xd38] sm:$0xff]
    %v782 = vld [vmem:[#allocation11 + $0xd40] sm:$0xff]
    %v783 = vld [vmem:[#allocation11 + $0xd48] sm:$0xff]
    %v784 = vld [vmem:[#allocation11 + $0xd50] sm:$0xff]
    %v785 = vld [vmem:[#allocation11 + $0xd58] sm:$0xff]
    %v786 = vld [vmem:[#allocation11 + $0xd60] sm:$0xff]
    %v787 = vld [vmem:[#allocation11 + $0xd68] sm:$0xff]
    %v788 = vld [vmem:[#allocation11 + $0xd70] sm:$0xff]
    %v789 = vld [vmem:[#allocation11 + $0xd78] sm:$0xff]
    %v790 = vld [vmem:[#allocation11 + $0xd80] sm:$0xff]
    %v791 = vld [vmem:[#allocation11 + $0xd88] sm:$0xff]
    %v792 = vld [vmem:[#allocation11 + $0xd90] sm:$0xff]
    %v793 = vld [vmem:[#allocation11 + $0xd98] sm:$0xff]
    %v794 = vld [vmem:[#allocation11 + $0xda0] sm:$0xff]
    %v795 = vld [vmem:[#allocation11 + $0xda8] sm:$0xff]
    %v796 = vld [vmem:[#allocation11 + $0xdb0] sm:$0xff]
    %v797 = vld [vmem:[#allocation11 + $0xdb8] sm:$0xff]
    %v798 = vld [vmem:[#allocation11 + $0xdc0] sm:$0xff]
    %v799 = vld [vmem:[#allocation11 + $0xdc8] sm:$0xff]
    %v800 = vld [vmem:[#allocation11 + $0xdd0] sm:$0xff]
    %v801 = vld [vmem:[#allocation11 + $0xdd8] sm:$0xff]
    %v802 = vld [vmem:[#allocation11 + $0xde0] sm:$0xff]
    %v803 = vld [vmem:[#allocation11 + $0xde8] sm:$0xff]
    %v804 = vld [vmem:[#allocation11 + $0xdf0] sm:$0xff]
    %v805 = vld [vmem:[#allocation11 + $0xdf8] sm:$0xff]
    %v806 = vld [vmem:[#allocation11 + $0xe00] sm:$0xff]
    %v807 = vld [vmem:[#allocation11 + $0xe08] sm:$0xff]
    %v808 = vld [vmem:[#allocation11 + $0xe10] sm:$0xff]
    %v809 = vld [vmem:[#allocation11 + $0xe18] sm:$0xff]
    %v810 = vld [vmem:[#allocation11 + $0xe20] sm:$0xff]
    %v811 = vld [vmem:[#allocation11 + $0xe28] sm:$0xff]
    %v812 = vld [vmem:[#allocation11 + $0xe30] sm:$0xff]
    %v813 = vld [vmem:[#allocation11 + $0xe38] sm:$0xff]
    %v814 = vld [vmem:[#allocation11 + $0xe40] sm:$0xff]
    %v815 = vld [vmem:[#allocation11 + $0xe48] sm:$0xff]
    %v816 = vld [vmem:[#allocation11 + $0xe50] sm:$0xff]
    %v817 = vld [vmem:[#allocation11 + $0xe58] sm:$0xff]
    %v818 = vld [vmem:[#allocation11 + $0xe60] sm:$0xff]
    %v819 = vld [vmem:[#allocation11 + $0xe68] sm:$0xff]
    %v820 = vld [vmem:[#allocation11 + $0xe70] sm:$0xff]
    %v821 = vld [vmem:[#allocation11 + $0xe78] sm:$0xff]
    %v822 = vld [vmem:[#allocation11 + $0xe80] sm:$0xff]
    %v823 = vld [vmem:[#allocation11 + $0xe88] sm:$0xff]
    %v824 = vld [vmem:[#allocation11 + $0xe90] sm:$0xff]
    %v825 = vld [vmem:[#allocation11 + $0xe98] sm:$0xff]
    %v826 = vld [vmem:[#allocation11 + $0xea0] sm:$0xff]
    %v827 = vld [vmem:[#allocation11 + $0xea8] sm:$0xff]
    %v828 = vld [vmem:[#allocation11 + $0xeb0] sm:$0xff]
    %v829 = vld [vmem:[#allocation11 + $0xeb8] sm:$0xff]
    %v830 = vld [vmem:[#allocation11 + $0xec0] sm:$0xff]
    %v831 = vld [vmem:[#allocation11 + $0xec8] sm:$0xff]
    %v832 = vld [vmem:[#allocation11 + $0xed0] sm:$0xff]
    %v833 = vld [vmem:[#allocation11 + $0xed8] sm:$0xff]
    %v834 = vld [vmem:[#allocation11 + $0xee0] sm:$0xff]
    %v835 = vld [vmem:[#allocation11 + $0xee8] sm:$0xff]
    %v836 = vld [vmem:[#allocation11 + $0xef0] sm:$0xff]
    %v837 = vld [vmem:[#allocation11 + $0xef8] sm:$0xff]
    %v838 = vld [vmem:[#allocation11 + $0xf00] sm:$0xff]
    %v839 = vld [vmem:[#allocation11 + $0xf08] sm:$0xff]
    %v840 = vld [vmem:[#allocation11 + $0xf10] sm:$0xff]
    %v841 = vld [vmem:[#allocation11 + $0xf18] sm:$0xff]
    %v842 = vld [vmem:[#allocation11 + $0xf20] sm:$0xff]
    %v843 = vld [vmem:[#allocation11 + $0xf28] sm:$0xff]
    %v844 = vld [vmem:[#allocation11 + $0xf30] sm:$0xff]
    %v845 = vld [vmem:[#allocation11 + $0xf38] sm:$0xff]
    %v846 = vld [vmem:[#allocation11 + $0xf40] sm:$0xff]
    %v847 = vld [vmem:[#allocation11 + $0xf48] sm:$0xff]
    %v848 = vld [vmem:[#allocation11 + $0xf50] sm:$0xff]
    %v849 = vld [vmem:[#allocation11 + $0xf58] sm:$0xff]
    %v850 = vld [vmem:[#allocation11 + $0xf60] sm:$0xff]
    %v851 = vld [vmem:[#allocation11 + $0xf68] sm:$0xff]
    %v852 = vld [vmem:[#allocation11 + $0xf70] sm:$0xff]
    %v853 = vld [vmem:[#allocation11 + $0xf78] sm:$0xff]
    %v854 = vld [vmem:[#allocation11 + $0xf80] sm:$0xff]
    %v855 = vld [vmem:[#allocation11 + $0xf88] sm:$0xff]
    %v856 = vld [vmem:[#allocation11 + $0xf90] sm:$0xff]
    %v857 = vld [vmem:[#allocation11 + $0xf98] sm:$0xff]
    %v858 = vld [vmem:[#allocation11 + $0xfa0] sm:$0xff]
    %v859 = vld [vmem:[#allocation11 + $0xfa8] sm:$0xff]
    %v860 = vld [vmem:[#allocation11 + $0xfb0] sm:$0xff]
    %v861 = vld [vmem:[#allocation11 + $0xfb8] sm:$0xff]
    %v862 = vld [vmem:[#allocation11 + $0xfc0] sm:$0xff]
    %v863 = vld [vmem:[#allocation11 + $0xfc8] sm:$0xff]
    %v864 = vld [vmem:[#allocation11 + $0xfd0] sm:$0xff]
    %v865 = vld [vmem:[#allocation11 + $0xfd8] sm:$0xff]
    %v866 = vld [vmem:[#allocation11 + $0xfe0] sm:$0xff]
    %v867 = vld [vmem:[#allocation11 + $0xfe8] sm:$0xff]
    %v868 = vld [vmem:[#allocation11 + $0xff0] sm:$0xff]
    %v869 = vld [vmem:[#allocation11 + $0xff8] sm:$0xff]
    %v870 = vld [vmem:[#allocation13] sm:$0xff]
    %v871 = vld [vmem:[#allocation13 + $0x8] sm:$0xff]
    %v874 = vlaneseq
    %v875 = vshrl.u32 %v874, 7
    %v876 = vsub.s32 0, %v875
    %v877 = vrot.slane %v870, %v876
    %v878 = vlaneseq
    %v879 = vshrl.u32 %v878, 7
    %v880 = vsub.s32 1, %v879
    %v881 = vrot.slane %v870, %v880
    %v882 = vlaneseq
    %v883 = vshrl.u32 %v882, 7
    %v884 = vsub.s32 2, %v883
    %v885 = vrot.slane %v870, %v884
    %v886 = vlaneseq
    %v887 = vshrl.u32 %v886, 7
    %v888 = vsub.s32 3, %v887
    %v889 = vrot.slane %v870, %v888
    %v890 = vlaneseq
    %v891 = vshrl.u32 %v890, 7
    %v892 = vsub.s32 4, %v891
    %v893 = vrot.slane %v870, %v892
    %v894 = vlaneseq
    %v895 = vshrl.u32 %v894, 7
    %v896 = vsub.s32 5, %v895
    %v897 = vrot.slane %v870, %v896
    %v898 = vlaneseq
    %v899 = vshrl.u32 %v898, 7
    %v900 = vsub.s32 6, %v899
    %v901 = vrot.slane %v870, %v900
    %v902 = vlaneseq
    %v903 = vshrl.u32 %v902, 7
    %v904 = vsub.s32 7, %v903
    %v905 = vrot.slane %v870, %v904
    %v906 = vlaneseq
    %v907 = vshrl.u32 %v906, 7
    %v908 = vsub.s32 0, %v907
    %v909 = vrot.slane %v871, %v908
    %v910 = vlaneseq
    %v911 = vshrl.u32 %v910, 7
    %v912 = vsub.s32 1, %v911
    %v913 = vrot.slane %v871, %v912
    %v914 = vlaneseq
    %v915 = vshrl.u32 %v914, 7
    %v916 = vsub.s32 2, %v915
    %v917 = vrot.slane %v871, %v916
    %v918 = vlaneseq
    %v919 = vshrl.u32 %v918, 7
    %v920 = vsub.s32 3, %v919
    %v921 = vrot.slane %v871, %v920
    %v922 = vlaneseq
    %v923 = vshrl.u32 %v922, 7
    %v924 = vsub.s32 4, %v923
    %v925 = vrot.slane %v871, %v924
    %v926 = vlaneseq
    %v927 = vshrl.u32 %v926, 7
    %v928 = vsub.s32 5, %v927
    %v929 = vrot.slane %v871, %v928
    %v930 = vlaneseq
    %v931 = vshrl.u32 %v930, 7
    %v932 = vsub.s32 6, %v931
    %v933 = vrot.slane %v871, %v932
    %v934 = vlaneseq
    %v935 = vshrl.u32 %v934, 7
    %v936 = vsub.s32 7, %v935
    %v937 = vrot.slane %v871, %v936
    %v1466 = vunpack.c.l.b16 %v358
    %v1467 = vunpack.c.h.b16 %v358
    %v1468 = vunpack.c.l.b16 %v359
    %v1469 = vunpack.c.h.b16 %v359
    %v1470 = vunpack.c.l.b16 %v360
    %v1471 = vunpack.c.h.b16 %v360
    %v1472 = vunpack.c.l.b16 %v361
    %v1473 = vunpack.c.h.b16 %v361
    %v1474 = vunpack.c.l.b16 %v362
    %v1475 = vunpack.c.h.b16 %v362
    %v1476 = vunpack.c.l.b16 %v363
    %v1477 = vunpack.c.h.b16 %v363
    %v1478 = vunpack.c.l.b16 %v364
    %v1479 = vunpack.c.h.b16 %v364
    %v1480 = vunpack.c.l.b16 %v365
    %v1481 = vunpack.c.h.b16 %v365
    %v1482 = vunpack.c.l.b16 %v366
    %v1483 = vunpack.c.h.b16 %v366
    %v1484 = vunpack.c.l.b16 %v367
    %v1485 = vunpack.c.h.b16 %v367
    %v1486 = vunpack.c.l.b16 %v368
    %v1487 = vunpack.c.h.b16 %v368
    %v1488 = vunpack.c.l.b16 %v369
    %v1489 = vunpack.c.h.b16 %v369
    %v1490 = vunpack.c.l.b16 %v370
    %v1491 = vunpack.c.h.b16 %v370
    %v1492 = vunpack.c.l.b16 %v371
    %v1493 = vunpack.c.h.b16 %v371
    %v1494 = vunpack.c.l.b16 %v372
    %v1495 = vunpack.c.h.b16 %v372
    %v1496 = vunpack.c.l.b16 %v373
    %v1497 = vunpack.c.h.b16 %v373
    %v1498 = vunpack.c.l.b16 %v374
    %v1499 = vunpack.c.h.b16 %v374
    %v1500 = vunpack.c.l.b16 %v375
    %v1501 = vunpack.c.h.b16 %v375
    %v1502 = vunpack.c.l.b16 %v376
    %v1503 = vunpack.c.h.b16 %v376
    %v1504 = vunpack.c.l.b16 %v377
    %v1505 = vunpack.c.h.b16 %v377
    %v1506 = vunpack.c.l.b16 %v378
    %v1507 = vunpack.c.h.b16 %v378
    %v1508 = vunpack.c.l.b16 %v379
    %v1509 = vunpack.c.h.b16 %v379
    %v1510 = vunpack.c.l.b16 %v380
    %v1511 = vunpack.c.h.b16 %v380
    %v1512 = vunpack.c.l.b16 %v381
    %v1513 = vunpack.c.h.b16 %v381
    %v1514 = vunpack.c.l.b16 %v382
    %v1515 = vunpack.c.h.b16 %v382
    %v1516 = vunpack.c.l.b16 %v383
    %v1517 = vunpack.c.h.b16 %v383
    %v1518 = vunpack.c.l.b16 %v384
    %v1519 = vunpack.c.h.b16 %v384
    %v1520 = vunpack.c.l.b16 %v385
    %v1521 = vunpack.c.h.b16 %v385
    %v1522 = vunpack.c.l.b16 %v386
    %v1523 = vunpack.c.h.b16 %v386
    %v1524 = vunpack.c.l.b16 %v387
    %v1525 = vunpack.c.h.b16 %v387
    %v1526 = vunpack.c.l.b16 %v388
    %v1527 = vunpack.c.h.b16 %v388
    %v1528 = vunpack.c.l.b16 %v389
    %v1529 = vunpack.c.h.b16 %v389
    %v1530 = vunpack.c.l.b16 %v390
    %v1531 = vunpack.c.h.b16 %v390
    %v1532 = vunpack.c.l.b16 %v391
    %v1533 = vunpack.c.h.b16 %v391
    %v1534 = vunpack.c.l.b16 %v392
    %v1535 = vunpack.c.h.b16 %v392
    %v1536 = vunpack.c.l.b16 %v393
    %v1537 = vunpack.c.h.b16 %v393
    %v1538 = vunpack.c.l.b16 %v394
    %v1539 = vunpack.c.h.b16 %v394
    %v1540 = vunpack.c.l.b16 %v395
    %v1541 = vunpack.c.h.b16 %v395
    %v1542 = vunpack.c.l.b16 %v396
    %v1543 = vunpack.c.h.b16 %v396
    %v1544 = vunpack.c.l.b16 %v397
    %v1545 = vunpack.c.h.b16 %v397
    %v1546 = vunpack.c.l.b16 %v398
    %v1547 = vunpack.c.h.b16 %v398
    %v1548 = vunpack.c.l.b16 %v399
    %v1549 = vunpack.c.h.b16 %v399
    %v1550 = vunpack.c.l.b16 %v400
    %v1551 = vunpack.c.h.b16 %v400
    %v1552 = vunpack.c.l.b16 %v401
    %v1553 = vunpack.c.h.b16 %v401
    %v1554 = vunpack.c.l.b16 %v402
    %v1555 = vunpack.c.h.b16 %v402
    %v1556 = vunpack.c.l.b16 %v403
    %v1557 = vunpack.c.h.b16 %v403
    %v1558 = vunpack.c.l.b16 %v404
    %v1559 = vunpack.c.h.b16 %v404
    %v1560 = vunpack.c.l.b16 %v405
    %v1561 = vunpack.c.h.b16 %v405
    %v1562 = vunpack.c.l.b16 %v406
    %v1563 = vunpack.c.h.b16 %v406
    %v1564 = vunpack.c.l.b16 %v407
    %v1565 = vunpack.c.h.b16 %v407
    %v1566 = vunpack.c.l.b16 %v408
    %v1567 = vunpack.c.h.b16 %v408
    %v1568 = vunpack.c.l.b16 %v409
    %v1569 = vunpack.c.h.b16 %v409
    %v1570 = vunpack.c.l.b16 %v410
    %v1571 = vunpack.c.h.b16 %v410
    %v1572 = vunpack.c.l.b16 %v411
    %v1573 = vunpack.c.h.b16 %v411
    %v1574 = vunpack.c.l.b16 %v412
    %v1575 = vunpack.c.h.b16 %v412
    %v1576 = vunpack.c.l.b16 %v413
    %v1577 = vunpack.c.h.b16 %v413
    %v1578 = vunpack.c.l.b16 %v414
    %v1579 = vunpack.c.h.b16 %v414
    %v1580 = vunpack.c.l.b16 %v415
    %v1581 = vunpack.c.h.b16 %v415
    %v1582 = vunpack.c.l.b16 %v416
    %v1583 = vunpack.c.h.b16 %v416
    %v1584 = vunpack.c.l.b16 %v417
    %v1585 = vunpack.c.h.b16 %v417
    %v1586 = vunpack.c.l.b16 %v418
    %v1587 = vunpack.c.h.b16 %v418
    %v1588 = vunpack.c.l.b16 %v419
    %v1589 = vunpack.c.h.b16 %v419
    %v1590 = vunpack.c.l.b16 %v420
    %v1591 = vunpack.c.h.b16 %v420
    %v1592 = vunpack.c.l.b16 %v421
    %v1593 = vunpack.c.h.b16 %v421
    %v1594 = vunpack.c.l.b16 %v422
    %v1595 = vunpack.c.h.b16 %v422
    %v1596 = vunpack.c.l.b16 %v423
    %v1597 = vunpack.c.h.b16 %v423
    %v1598 = vunpack.c.l.b16 %v424
    %v1599 = vunpack.c.h.b16 %v424
    %v1600 = vunpack.c.l.b16 %v425
    %v1601 = vunpack.c.h.b16 %v425
    %v1602 = vunpack.c.l.b16 %v426
    %v1603 = vunpack.c.h.b16 %v426
    %v1604 = vunpack.c.l.b16 %v427
    %v1605 = vunpack.c.h.b16 %v427
    %v1606 = vunpack.c.l.b16 %v428
    %v1607 = vunpack.c.h.b16 %v428
    %v1608 = vunpack.c.l.b16 %v429
    %v1609 = vunpack.c.h.b16 %v429
    %v1610 = vunpack.c.l.b16 %v430
    %v1611 = vunpack.c.h.b16 %v430
    %v1612 = vunpack.c.l.b16 %v431
    %v1613 = vunpack.c.h.b16 %v431
    %v1614 = vunpack.c.l.b16 %v432
    %v1615 = vunpack.c.h.b16 %v432
    %v1616 = vunpack.c.l.b16 %v433
    %v1617 = vunpack.c.h.b16 %v433
    %v1618 = vunpack.c.l.b16 %v434
    %v1619 = vunpack.c.h.b16 %v434
    %v1620 = vunpack.c.l.b16 %v435
    %v1621 = vunpack.c.h.b16 %v435
    %v1622 = vunpack.c.l.b16 %v436
    %v1623 = vunpack.c.h.b16 %v436
    %v1624 = vunpack.c.l.b16 %v437
    %v1625 = vunpack.c.h.b16 %v437
    %v1626 = vunpack.c.l.b16 %v438
    %v1627 = vunpack.c.h.b16 %v438
    %v1628 = vunpack.c.l.b16 %v439
    %v1629 = vunpack.c.h.b16 %v439
    %v1630 = vunpack.c.l.b16 %v440
    %v1631 = vunpack.c.h.b16 %v440
    %v1632 = vunpack.c.l.b16 %v441
    %v1633 = vunpack.c.h.b16 %v441
    %v1634 = vunpack.c.l.b16 %v442
    %v1635 = vunpack.c.h.b16 %v442
    %v1636 = vunpack.c.l.b16 %v443
    %v1637 = vunpack.c.h.b16 %v443
    %v1638 = vunpack.c.l.b16 %v444
    %v1639 = vunpack.c.h.b16 %v444
    %v1640 = vunpack.c.l.b16 %v445
    %v1641 = vunpack.c.h.b16 %v445
    %v1642 = vunpack.c.l.b16 %v446
    %v1643 = vunpack.c.h.b16 %v446
    %v1644 = vunpack.c.l.b16 %v447
    %v1645 = vunpack.c.h.b16 %v447
    %v1646 = vunpack.c.l.b16 %v448
    %v1647 = vunpack.c.h.b16 %v448
    %v1648 = vunpack.c.l.b16 %v449
    %v1649 = vunpack.c.h.b16 %v449
    %v1650 = vunpack.c.l.b16 %v450
    %v1651 = vunpack.c.h.b16 %v450
    %v1652 = vunpack.c.l.b16 %v451
    %v1653 = vunpack.c.h.b16 %v451
    %v1654 = vunpack.c.l.b16 %v452
    %v1655 = vunpack.c.h.b16 %v452
    %v1656 = vunpack.c.l.b16 %v453
    %v1657 = vunpack.c.h.b16 %v453
    %v1658 = vunpack.c.l.b16 %v454
    %v1659 = vunpack.c.h.b16 %v454
    %v1660 = vunpack.c.l.b16 %v455
    %v1661 = vunpack.c.h.b16 %v455
    %v1662 = vunpack.c.l.b16 %v456
    %v1663 = vunpack.c.h.b16 %v456
    %v1664 = vunpack.c.l.b16 %v457
    %v1665 = vunpack.c.h.b16 %v457
    %v1666 = vunpack.c.l.b16 %v458
    %v1667 = vunpack.c.h.b16 %v458
    %v1668 = vunpack.c.l.b16 %v459
    %v1669 = vunpack.c.h.b16 %v459
    %v1670 = vunpack.c.l.b16 %v460
    %v1671 = vunpack.c.h.b16 %v460
    %v1672 = vunpack.c.l.b16 %v461
    %v1673 = vunpack.c.h.b16 %v461
    %v1674 = vunpack.c.l.b16 %v462
    %v1675 = vunpack.c.h.b16 %v462
    %v1676 = vunpack.c.l.b16 %v463
    %v1677 = vunpack.c.h.b16 %v463
    %v1678 = vunpack.c.l.b16 %v464
    %v1679 = vunpack.c.h.b16 %v464
    %v1680 = vunpack.c.l.b16 %v465
    %v1681 = vunpack.c.h.b16 %v465
    %v1682 = vunpack.c.l.b16 %v466
    %v1683 = vunpack.c.h.b16 %v466
    %v1684 = vunpack.c.l.b16 %v467
    %v1685 = vunpack.c.h.b16 %v467
    %v1686 = vunpack.c.l.b16 %v468
    %v1687 = vunpack.c.h.b16 %v468
    %v1688 = vunpack.c.l.b16 %v469
    %v1689 = vunpack.c.h.b16 %v469
    %v1690 = vunpack.c.l.b16 %v470
    %v1691 = vunpack.c.h.b16 %v470
    %v1692 = vunpack.c.l.b16 %v471
    %v1693 = vunpack.c.h.b16 %v471
    %v1694 = vunpack.c.l.b16 %v472
    %v1695 = vunpack.c.h.b16 %v472
    %v1696 = vunpack.c.l.b16 %v473
    %v1697 = vunpack.c.h.b16 %v473
    %v1698 = vunpack.c.l.b16 %v474
    %v1699 = vunpack.c.h.b16 %v474
    %v1700 = vunpack.c.l.b16 %v475
    %v1701 = vunpack.c.h.b16 %v475
    %v1702 = vunpack.c.l.b16 %v476
    %v1703 = vunpack.c.h.b16 %v476
    %v1704 = vunpack.c.l.b16 %v477
    %v1705 = vunpack.c.h.b16 %v477
    %v1706 = vunpack.c.l.b16 %v478
    %v1707 = vunpack.c.h.b16 %v478
    %v1708 = vunpack.c.l.b16 %v479
    %v1709 = vunpack.c.h.b16 %v479
    %v1710 = vunpack.c.l.b16 %v480
    %v1711 = vunpack.c.h.b16 %v480
    %v1712 = vunpack.c.l.b16 %v481
    %v1713 = vunpack.c.h.b16 %v481
    %v1714 = vunpack.c.l.b16 %v482
    %v1715 = vunpack.c.h.b16 %v482
    %v1716 = vunpack.c.l.b16 %v483
    %v1717 = vunpack.c.h.b16 %v483
    %v1718 = vunpack.c.l.b16 %v484
    %v1719 = vunpack.c.h.b16 %v484
    %v1720 = vunpack.c.l.b16 %v485
    %v1721 = vunpack.c.h.b16 %v485
    %v1722 = vunpack.c.l.b16 %v486
    %v1723 = vunpack.c.h.b16 %v486
    %v1724 = vunpack.c.l.b16 %v487
    %v1725 = vunpack.c.h.b16 %v487
    %v1726 = vunpack.c.l.b16 %v488
    %v1727 = vunpack.c.h.b16 %v488
    %v1728 = vunpack.c.l.b16 %v489
    %v1729 = vunpack.c.h.b16 %v489
    %v1730 = vunpack.c.l.b16 %v490
    %v1731 = vunpack.c.h.b16 %v490
    %v1732 = vunpack.c.l.b16 %v491
    %v1733 = vunpack.c.h.b16 %v491
    %v1734 = vunpack.c.l.b16 %v492
    %v1735 = vunpack.c.h.b16 %v492
    %v1736 = vunpack.c.l.b16 %v493
    %v1737 = vunpack.c.h.b16 %v493
    %v1738 = vunpack.c.l.b16 %v494
    %v1739 = vunpack.c.h.b16 %v494
    %v1740 = vunpack.c.l.b16 %v495
    %v1741 = vunpack.c.h.b16 %v495
    %v1742 = vunpack.c.l.b16 %v496
    %v1743 = vunpack.c.h.b16 %v496
    %v1744 = vunpack.c.l.b16 %v497
    %v1745 = vunpack.c.h.b16 %v497
    %v1746 = vunpack.c.l.b16 %v498
    %v1747 = vunpack.c.h.b16 %v498
    %v1748 = vunpack.c.l.b16 %v499
    %v1749 = vunpack.c.h.b16 %v499
    %v1750 = vunpack.c.l.b16 %v500
    %v1751 = vunpack.c.h.b16 %v500
    %v1752 = vunpack.c.l.b16 %v501
    %v1753 = vunpack.c.h.b16 %v501
    %v1754 = vunpack.c.l.b16 %v502
    %v1755 = vunpack.c.h.b16 %v502
    %v1756 = vunpack.c.l.b16 %v503
    %v1757 = vunpack.c.h.b16 %v503
    %v1758 = vunpack.c.l.b16 %v504
    %v1759 = vunpack.c.h.b16 %v504
    %v1760 = vunpack.c.l.b16 %v505
    %v1761 = vunpack.c.h.b16 %v505
    %v1762 = vunpack.c.l.b16 %v506
    %v1763 = vunpack.c.h.b16 %v506
    %v1764 = vunpack.c.l.b16 %v507
    %v1765 = vunpack.c.h.b16 %v507
    %v1766 = vunpack.c.l.b16 %v508
    %v1767 = vunpack.c.h.b16 %v508
    %v1768 = vunpack.c.l.b16 %v509
    %v1769 = vunpack.c.h.b16 %v509
    %v1770 = vunpack.c.l.b16 %v510
    %v1771 = vunpack.c.h.b16 %v510
    %v1772 = vunpack.c.l.b16 %v511
    %v1773 = vunpack.c.h.b16 %v511
    %v1774 = vunpack.c.l.b16 %v512
    %v1775 = vunpack.c.h.b16 %v512
    %v1776 = vunpack.c.l.b16 %v513
    %v1777 = vunpack.c.h.b16 %v513
    %v1778 = vunpack.c.l.b16 %v514
    %v1779 = vunpack.c.h.b16 %v514
    %v1780 = vunpack.c.l.b16 %v515
    %v1781 = vunpack.c.h.b16 %v515
    %v1782 = vunpack.c.l.b16 %v516
    %v1783 = vunpack.c.h.b16 %v516
    %v1784 = vunpack.c.l.b16 %v517
    %v1785 = vunpack.c.h.b16 %v517
    %v1786 = vunpack.c.l.b16 %v518
    %v1787 = vunpack.c.h.b16 %v518
    %v1788 = vunpack.c.l.b16 %v519
    %v1789 = vunpack.c.h.b16 %v519
    %v1790 = vunpack.c.l.b16 %v520
    %v1791 = vunpack.c.h.b16 %v520
    %v1792 = vunpack.c.l.b16 %v521
    %v1793 = vunpack.c.h.b16 %v521
    %v1794 = vunpack.c.l.b16 %v522
    %v1795 = vunpack.c.h.b16 %v522
    %v1796 = vunpack.c.l.b16 %v523
    %v1797 = vunpack.c.h.b16 %v523
    %v1798 = vunpack.c.l.b16 %v524
    %v1799 = vunpack.c.h.b16 %v524
    %v1800 = vunpack.c.l.b16 %v525
    %v1801 = vunpack.c.h.b16 %v525
    %v1802 = vunpack.c.l.b16 %v526
    %v1803 = vunpack.c.h.b16 %v526
    %v1804 = vunpack.c.l.b16 %v527
    %v1805 = vunpack.c.h.b16 %v527
    %v1806 = vunpack.c.l.b16 %v528
    %v1807 = vunpack.c.h.b16 %v528
    %v1808 = vunpack.c.l.b16 %v529
    %v1809 = vunpack.c.h.b16 %v529
    %v1810 = vunpack.c.l.b16 %v530
    %v1811 = vunpack.c.h.b16 %v530
    %v1812 = vunpack.c.l.b16 %v531
    %v1813 = vunpack.c.h.b16 %v531
    %v1814 = vunpack.c.l.b16 %v532
    %v1815 = vunpack.c.h.b16 %v532
    %v1816 = vunpack.c.l.b16 %v533
    %v1817 = vunpack.c.h.b16 %v533
    %v1818 = vunpack.c.l.b16 %v534
    %v1819 = vunpack.c.h.b16 %v534
    %v1820 = vunpack.c.l.b16 %v535
    %v1821 = vunpack.c.h.b16 %v535
    %v1822 = vunpack.c.l.b16 %v536
    %v1823 = vunpack.c.h.b16 %v536
    %v1824 = vunpack.c.l.b16 %v537
    %v1825 = vunpack.c.h.b16 %v537
    %v1826 = vunpack.c.l.b16 %v538
    %v1827 = vunpack.c.h.b16 %v538
    %v1828 = vunpack.c.l.b16 %v539
    %v1829 = vunpack.c.h.b16 %v539
    %v1830 = vunpack.c.l.b16 %v540
    %v1831 = vunpack.c.h.b16 %v540
    %v1832 = vunpack.c.l.b16 %v541
    %v1833 = vunpack.c.h.b16 %v541
    %v1834 = vunpack.c.l.b16 %v542
    %v1835 = vunpack.c.h.b16 %v542
    %v1836 = vunpack.c.l.b16 %v543
    %v1837 = vunpack.c.h.b16 %v543
    %v1838 = vunpack.c.l.b16 %v544
    %v1839 = vunpack.c.h.b16 %v544
    %v1840 = vunpack.c.l.b16 %v545
    %v1841 = vunpack.c.h.b16 %v545
    %v1842 = vunpack.c.l.b16 %v546
    %v1843 = vunpack.c.h.b16 %v546
    %v1844 = vunpack.c.l.b16 %v547
    %v1845 = vunpack.c.h.b16 %v547
    %v1846 = vunpack.c.l.b16 %v548
    %v1847 = vunpack.c.h.b16 %v548
    %v1848 = vunpack.c.l.b16 %v549
    %v1849 = vunpack.c.h.b16 %v549
    %v1850 = vunpack.c.l.b16 %v550
    %v1851 = vunpack.c.h.b16 %v550
    %v1852 = vunpack.c.l.b16 %v551
    %v1853 = vunpack.c.h.b16 %v551
    %v1854 = vunpack.c.l.b16 %v552
    %v1855 = vunpack.c.h.b16 %v552
    %v1856 = vunpack.c.l.b16 %v553
    %v1857 = vunpack.c.h.b16 %v553
    %v1858 = vunpack.c.l.b16 %v554
    %v1859 = vunpack.c.h.b16 %v554
    %v1860 = vunpack.c.l.b16 %v555
    %v1861 = vunpack.c.h.b16 %v555
    %v1862 = vunpack.c.l.b16 %v556
    %v1863 = vunpack.c.h.b16 %v556
    %v1864 = vunpack.c.l.b16 %v557
    %v1865 = vunpack.c.h.b16 %v557
    %v1866 = vunpack.c.l.b16 %v558
    %v1867 = vunpack.c.h.b16 %v558
    %v1868 = vunpack.c.l.b16 %v559
    %v1869 = vunpack.c.h.b16 %v559
    %v1870 = vunpack.c.l.b16 %v560
    %v1871 = vunpack.c.h.b16 %v560
    %v1872 = vunpack.c.l.b16 %v561
    %v1873 = vunpack.c.h.b16 %v561
    %v1874 = vunpack.c.l.b16 %v562
    %v1875 = vunpack.c.h.b16 %v562
    %v1876 = vunpack.c.l.b16 %v563
    %v1877 = vunpack.c.h.b16 %v563
    %v1878 = vunpack.c.l.b16 %v564
    %v1879 = vunpack.c.h.b16 %v564
    %v1880 = vunpack.c.l.b16 %v565
    %v1881 = vunpack.c.h.b16 %v565
    %v1882 = vunpack.c.l.b16 %v566
    %v1883 = vunpack.c.h.b16 %v566
    %v1884 = vunpack.c.l.b16 %v567
    %v1885 = vunpack.c.h.b16 %v567
    %v1886 = vunpack.c.l.b16 %v568
    %v1887 = vunpack.c.h.b16 %v568
    %v1888 = vunpack.c.l.b16 %v569
    %v1889 = vunpack.c.h.b16 %v569
    %v1890 = vunpack.c.l.b16 %v570
    %v1891 = vunpack.c.h.b16 %v570
    %v1892 = vunpack.c.l.b16 %v571
    %v1893 = vunpack.c.h.b16 %v571
    %v1894 = vunpack.c.l.b16 %v572
    %v1895 = vunpack.c.h.b16 %v572
    %v1896 = vunpack.c.l.b16 %v573
    %v1897 = vunpack.c.h.b16 %v573
    %v1898 = vunpack.c.l.b16 %v574
    %v1899 = vunpack.c.h.b16 %v574
    %v1900 = vunpack.c.l.b16 %v575
    %v1901 = vunpack.c.h.b16 %v575
    %v1902 = vunpack.c.l.b16 %v576
    %v1903 = vunpack.c.h.b16 %v576
    %v1904 = vunpack.c.l.b16 %v577
    %v1905 = vunpack.c.h.b16 %v577
    %v1906 = vunpack.c.l.b16 %v578
    %v1907 = vunpack.c.h.b16 %v578
    %v1908 = vunpack.c.l.b16 %v579
    %v1909 = vunpack.c.h.b16 %v579
    %v1910 = vunpack.c.l.b16 %v580
    %v1911 = vunpack.c.h.b16 %v580
    %v1912 = vunpack.c.l.b16 %v581
    %v1913 = vunpack.c.h.b16 %v581
    %v1914 = vunpack.c.l.b16 %v582
    %v1915 = vunpack.c.h.b16 %v582
    %v1916 = vunpack.c.l.b16 %v583
    %v1917 = vunpack.c.h.b16 %v583
    %v1918 = vunpack.c.l.b16 %v584
    %v1919 = vunpack.c.h.b16 %v584
    %v1920 = vunpack.c.l.b16 %v585
    %v1921 = vunpack.c.h.b16 %v585
    %v1922 = vunpack.c.l.b16 %v586
    %v1923 = vunpack.c.h.b16 %v586
    %v1924 = vunpack.c.l.b16 %v587
    %v1925 = vunpack.c.h.b16 %v587
    %v1926 = vunpack.c.l.b16 %v588
    %v1927 = vunpack.c.h.b16 %v588
    %v1928 = vunpack.c.l.b16 %v589
    %v1929 = vunpack.c.h.b16 %v589
    %v1930 = vunpack.c.l.b16 %v590
    %v1931 = vunpack.c.h.b16 %v590
    %v1932 = vunpack.c.l.b16 %v591
    %v1933 = vunpack.c.h.b16 %v591
    %v1934 = vunpack.c.l.b16 %v592
    %v1935 = vunpack.c.h.b16 %v592
    %v1936 = vunpack.c.l.b16 %v593
    %v1937 = vunpack.c.h.b16 %v593
    %v1938 = vunpack.c.l.b16 %v594
    %v1939 = vunpack.c.h.b16 %v594
    %v1940 = vunpack.c.l.b16 %v595
    %v1941 = vunpack.c.h.b16 %v595
    %v1942 = vunpack.c.l.b16 %v596
    %v1943 = vunpack.c.h.b16 %v596
    %v1944 = vunpack.c.l.b16 %v597
    %v1945 = vunpack.c.h.b16 %v597
    %v1946 = vunpack.c.l.b16 %v598
    %v1947 = vunpack.c.h.b16 %v598
    %v1948 = vunpack.c.l.b16 %v599
    %v1949 = vunpack.c.h.b16 %v599
    %v1950 = vunpack.c.l.b16 %v600
    %v1951 = vunpack.c.h.b16 %v600
    %v1952 = vunpack.c.l.b16 %v601
    %v1953 = vunpack.c.h.b16 %v601
    %v1954 = vunpack.c.l.b16 %v602
    %v1955 = vunpack.c.h.b16 %v602
    %v1956 = vunpack.c.l.b16 %v603
    %v1957 = vunpack.c.h.b16 %v603
    %v1958 = vunpack.c.l.b16 %v604
    %v1959 = vunpack.c.h.b16 %v604
    %v1960 = vunpack.c.l.b16 %v605
    %v1961 = vunpack.c.h.b16 %v605
    %v1962 = vunpack.c.l.b16 %v606
    %v1963 = vunpack.c.h.b16 %v606
    %v1964 = vunpack.c.l.b16 %v607
    %v1965 = vunpack.c.h.b16 %v607
    %v1966 = vunpack.c.l.b16 %v608
    %v1967 = vunpack.c.h.b16 %v608
    %v1968 = vunpack.c.l.b16 %v609
    %v1969 = vunpack.c.h.b16 %v609
    %v1970 = vunpack.c.l.b16 %v610
    %v1971 = vunpack.c.h.b16 %v610
    %v1972 = vunpack.c.l.b16 %v611
    %v1973 = vunpack.c.h.b16 %v611
    %v1974 = vunpack.c.l.b16 %v612
    %v1975 = vunpack.c.h.b16 %v612
    %v1976 = vunpack.c.l.b16 %v613
    %v1977 = vunpack.c.h.b16 %v613
    %v1978 = vunpack.c.l.b16 %v614
    %v1979 = vunpack.c.h.b16 %v614
    %v1980 = vunpack.c.l.b16 %v615
    %v1981 = vunpack.c.h.b16 %v615
    %v1982 = vunpack.c.l.b16 %v616
    %v1983 = vunpack.c.h.b16 %v616
    %v1984 = vunpack.c.l.b16 %v617
    %v1985 = vunpack.c.h.b16 %v617
    %v1986 = vunpack.c.l.b16 %v618
    %v1987 = vunpack.c.h.b16 %v618
    %v1988 = vunpack.c.l.b16 %v619
    %v1989 = vunpack.c.h.b16 %v619
    %v1990 = vunpack.c.l.b16 %v620
    %v1991 = vunpack.c.h.b16 %v620
    %v1992 = vunpack.c.l.b16 %v621
    %v1993 = vunpack.c.h.b16 %v621
    %v1994 = vunpack.c.l.b16 %v622
    %v1995 = vunpack.c.h.b16 %v622
    %v1996 = vunpack.c.l.b16 %v623
    %v1997 = vunpack.c.h.b16 %v623
    %v1998 = vunpack.c.l.b16 %v624
    %v1999 = vunpack.c.h.b16 %v624
    %v2000 = vunpack.c.l.b16 %v625
    %v2001 = vunpack.c.h.b16 %v625
    %v2002 = vunpack.c.l.b16 %v626
    %v2003 = vunpack.c.h.b16 %v626
    %v2004 = vunpack.c.l.b16 %v627
    %v2005 = vunpack.c.h.b16 %v627
    %v2006 = vunpack.c.l.b16 %v628
    %v2007 = vunpack.c.h.b16 %v628
    %v2008 = vunpack.c.l.b16 %v629
    %v2009 = vunpack.c.h.b16 %v629
    %v2010 = vunpack.c.l.b16 %v630
    %v2011 = vunpack.c.h.b16 %v630
    %v2012 = vunpack.c.l.b16 %v631
    %v2013 = vunpack.c.h.b16 %v631
    %v2014 = vunpack.c.l.b16 %v632
    %v2015 = vunpack.c.h.b16 %v632
    %v2016 = vunpack.c.l.b16 %v633
    %v2017 = vunpack.c.h.b16 %v633
    %v2018 = vunpack.c.l.b16 %v634
    %v2019 = vunpack.c.h.b16 %v634
    %v2020 = vunpack.c.l.b16 %v635
    %v2021 = vunpack.c.h.b16 %v635
    %v2022 = vunpack.c.l.b16 %v636
    %v2023 = vunpack.c.h.b16 %v636
    %v2024 = vunpack.c.l.b16 %v637
    %v2025 = vunpack.c.h.b16 %v637
    %v2026 = vunpack.c.l.b16 %v638
    %v2027 = vunpack.c.h.b16 %v638
    %v2028 = vunpack.c.l.b16 %v639
    %v2029 = vunpack.c.h.b16 %v639
    %v2030 = vunpack.c.l.b16 %v640
    %v2031 = vunpack.c.h.b16 %v640
    %v2032 = vunpack.c.l.b16 %v641
    %v2033 = vunpack.c.h.b16 %v641
    %v2034 = vunpack.c.l.b16 %v642
    %v2035 = vunpack.c.h.b16 %v642
    %v2036 = vunpack.c.l.b16 %v643
    %v2037 = vunpack.c.h.b16 %v643
    %v2038 = vunpack.c.l.b16 %v644
    %v2039 = vunpack.c.h.b16 %v644
    %v2040 = vunpack.c.l.b16 %v645
    %v2041 = vunpack.c.h.b16 %v645
    %v2042 = vunpack.c.l.b16 %v646
    %v2043 = vunpack.c.h.b16 %v646
    %v2044 = vunpack.c.l.b16 %v647
    %v2045 = vunpack.c.h.b16 %v647
    %v2046 = vunpack.c.l.b16 %v648
    %v2047 = vunpack.c.h.b16 %v648
    %v2048 = vunpack.c.l.b16 %v649
    %v2049 = vunpack.c.h.b16 %v649
    %v2050 = vunpack.c.l.b16 %v650
    %v2051 = vunpack.c.h.b16 %v650
    %v2052 = vunpack.c.l.b16 %v651
    %v2053 = vunpack.c.h.b16 %v651
    %v2054 = vunpack.c.l.b16 %v652
    %v2055 = vunpack.c.h.b16 %v652
    %v2056 = vunpack.c.l.b16 %v653
    %v2057 = vunpack.c.h.b16 %v653
    %v2058 = vunpack.c.l.b16 %v654
    %v2059 = vunpack.c.h.b16 %v654
    %v2060 = vunpack.c.l.b16 %v655
    %v2061 = vunpack.c.h.b16 %v655
    %v2062 = vunpack.c.l.b16 %v656
    %v2063 = vunpack.c.h.b16 %v656
    %v2064 = vunpack.c.l.b16 %v657
    %v2065 = vunpack.c.h.b16 %v657
    %v2066 = vunpack.c.l.b16 %v658
    %v2067 = vunpack.c.h.b16 %v658
    %v2068 = vunpack.c.l.b16 %v659
    %v2069 = vunpack.c.h.b16 %v659
    %v2070 = vunpack.c.l.b16 %v660
    %v2071 = vunpack.c.h.b16 %v660
    %v2072 = vunpack.c.l.b16 %v661
    %v2073 = vunpack.c.h.b16 %v661
    %v2074 = vunpack.c.l.b16 %v662
    %v2075 = vunpack.c.h.b16 %v662
    %v2076 = vunpack.c.l.b16 %v663
    %v2077 = vunpack.c.h.b16 %v663
    %v2078 = vunpack.c.l.b16 %v664
    %v2079 = vunpack.c.h.b16 %v664
    %v2080 = vunpack.c.l.b16 %v665
    %v2081 = vunpack.c.h.b16 %v665
    %v2082 = vunpack.c.l.b16 %v666
    %v2083 = vunpack.c.h.b16 %v666
    %v2084 = vunpack.c.l.b16 %v667
    %v2085 = vunpack.c.h.b16 %v667
    %v2086 = vunpack.c.l.b16 %v668
    %v2087 = vunpack.c.h.b16 %v668
    %v2088 = vunpack.c.l.b16 %v669
    %v2089 = vunpack.c.h.b16 %v669
    %v2090 = vunpack.c.l.b16 %v670
    %v2091 = vunpack.c.h.b16 %v670
    %v2092 = vunpack.c.l.b16 %v671
    %v2093 = vunpack.c.h.b16 %v671
    %v2094 = vunpack.c.l.b16 %v672
    %v2095 = vunpack.c.h.b16 %v672
    %v2096 = vunpack.c.l.b16 %v673
    %v2097 = vunpack.c.h.b16 %v673
    %v2098 = vunpack.c.l.b16 %v674
    %v2099 = vunpack.c.h.b16 %v674
    %v2100 = vunpack.c.l.b16 %v675
    %v2101 = vunpack.c.h.b16 %v675
    %v2102 = vunpack.c.l.b16 %v676
    %v2103 = vunpack.c.h.b16 %v676
    %v2104 = vunpack.c.l.b16 %v677
    %v2105 = vunpack.c.h.b16 %v677
    %v2106 = vunpack.c.l.b16 %v678
    %v2107 = vunpack.c.h.b16 %v678
    %v2108 = vunpack.c.l.b16 %v679
    %v2109 = vunpack.c.h.b16 %v679
    %v2110 = vunpack.c.l.b16 %v680
    %v2111 = vunpack.c.h.b16 %v680
    %v2112 = vunpack.c.l.b16 %v681
    %v2113 = vunpack.c.h.b16 %v681
    %v2114 = vunpack.c.l.b16 %v682
    %v2115 = vunpack.c.h.b16 %v682
    %v2116 = vunpack.c.l.b16 %v683
    %v2117 = vunpack.c.h.b16 %v683
    %v2118 = vunpack.c.l.b16 %v684
    %v2119 = vunpack.c.h.b16 %v684
    %v2120 = vunpack.c.l.b16 %v685
    %v2121 = vunpack.c.h.b16 %v685
    %v2122 = vunpack.c.l.b16 %v686
    %v2123 = vunpack.c.h.b16 %v686
    %v2124 = vunpack.c.l.b16 %v687
    %v2125 = vunpack.c.h.b16 %v687
    %v2126 = vunpack.c.l.b16 %v688
    %v2127 = vunpack.c.h.b16 %v688
    %v2128 = vunpack.c.l.b16 %v689
    %v2129 = vunpack.c.h.b16 %v689
    %v2130 = vunpack.c.l.b16 %v690
    %v2131 = vunpack.c.h.b16 %v690
    %v2132 = vunpack.c.l.b16 %v691
    %v2133 = vunpack.c.h.b16 %v691
    %v2134 = vunpack.c.l.b16 %v692
    %v2135 = vunpack.c.h.b16 %v692
    %v2136 = vunpack.c.l.b16 %v693
    %v2137 = vunpack.c.h.b16 %v693
    %v2138 = vunpack.c.l.b16 %v694
    %v2139 = vunpack.c.h.b16 %v694
    %v2140 = vunpack.c.l.b16 %v695
    %v2141 = vunpack.c.h.b16 %v695
    %v2142 = vunpack.c.l.b16 %v696
    %v2143 = vunpack.c.h.b16 %v696
    %v2144 = vunpack.c.l.b16 %v697
    %v2145 = vunpack.c.h.b16 %v697
    %v2146 = vunpack.c.l.b16 %v698
    %v2147 = vunpack.c.h.b16 %v698
    %v2148 = vunpack.c.l.b16 %v699
    %v2149 = vunpack.c.h.b16 %v699
    %v2150 = vunpack.c.l.b16 %v700
    %v2151 = vunpack.c.h.b16 %v700
    %v2152 = vunpack.c.l.b16 %v701
    %v2153 = vunpack.c.h.b16 %v701
    %v2154 = vunpack.c.l.b16 %v702
    %v2155 = vunpack.c.h.b16 %v702
    %v2156 = vunpack.c.l.b16 %v703
    %v2157 = vunpack.c.h.b16 %v703
    %v2158 = vunpack.c.l.b16 %v704
    %v2159 = vunpack.c.h.b16 %v704
    %v2160 = vunpack.c.l.b16 %v705
    %v2161 = vunpack.c.h.b16 %v705
    %v2162 = vunpack.c.l.b16 %v706
    %v2163 = vunpack.c.h.b16 %v706
    %v2164 = vunpack.c.l.b16 %v707
    %v2165 = vunpack.c.h.b16 %v707
    %v2166 = vunpack.c.l.b16 %v708
    %v2167 = vunpack.c.h.b16 %v708
    %v2168 = vunpack.c.l.b16 %v709
    %v2169 = vunpack.c.h.b16 %v709
    %v2170 = vunpack.c.l.b16 %v710
    %v2171 = vunpack.c.h.b16 %v710
    %v2172 = vunpack.c.l.b16 %v711
    %v2173 = vunpack.c.h.b16 %v711
    %v2174 = vunpack.c.l.b16 %v712
    %v2175 = vunpack.c.h.b16 %v712
    %v2176 = vunpack.c.l.b16 %v713
    %v2177 = vunpack.c.h.b16 %v713
    %v2178 = vunpack.c.l.b16 %v714
    %v2179 = vunpack.c.h.b16 %v714
    %v2180 = vunpack.c.l.b16 %v715
    %v2181 = vunpack.c.h.b16 %v715
    %v2182 = vunpack.c.l.b16 %v716
    %v2183 = vunpack.c.h.b16 %v716
    %v2184 = vunpack.c.l.b16 %v717
    %v2185 = vunpack.c.h.b16 %v717
    %v2186 = vunpack.c.l.b16 %v718
    %v2187 = vunpack.c.h.b16 %v718
    %v2188 = vunpack.c.l.b16 %v719
    %v2189 = vunpack.c.h.b16 %v719
    %v2190 = vunpack.c.l.b16 %v720
    %v2191 = vunpack.c.h.b16 %v720
    %v2192 = vunpack.c.l.b16 %v721
    %v2193 = vunpack.c.h.b16 %v721
    %v2194 = vunpack.c.l.b16 %v722
    %v2195 = vunpack.c.h.b16 %v722
    %v2196 = vunpack.c.l.b16 %v723
    %v2197 = vunpack.c.h.b16 %v723
    %v2198 = vunpack.c.l.b16 %v724
    %v2199 = vunpack.c.h.b16 %v724
    %v2200 = vunpack.c.l.b16 %v725
    %v2201 = vunpack.c.h.b16 %v725
    %v2202 = vunpack.c.l.b16 %v726
    %v2203 = vunpack.c.h.b16 %v726
    %v2204 = vunpack.c.l.b16 %v727
    %v2205 = vunpack.c.h.b16 %v727
    %v2206 = vunpack.c.l.b16 %v728
    %v2207 = vunpack.c.h.b16 %v728
    %v2208 = vunpack.c.l.b16 %v729
    %v2209 = vunpack.c.h.b16 %v729
    %v2210 = vunpack.c.l.b16 %v730
    %v2211 = vunpack.c.h.b16 %v730
    %v2212 = vunpack.c.l.b16 %v731
    %v2213 = vunpack.c.h.b16 %v731
    %v2214 = vunpack.c.l.b16 %v732
    %v2215 = vunpack.c.h.b16 %v732
    %v2216 = vunpack.c.l.b16 %v733
    %v2217 = vunpack.c.h.b16 %v733
    %v2218 = vunpack.c.l.b16 %v734
    %v2219 = vunpack.c.h.b16 %v734
    %v2220 = vunpack.c.l.b16 %v735
    %v2221 = vunpack.c.h.b16 %v735
    %v2222 = vunpack.c.l.b16 %v736
    %v2223 = vunpack.c.h.b16 %v736
    %v2224 = vunpack.c.l.b16 %v737
    %v2225 = vunpack.c.h.b16 %v737
    %v2226 = vunpack.c.l.b16 %v738
    %v2227 = vunpack.c.h.b16 %v738
    %v2228 = vunpack.c.l.b16 %v739
    %v2229 = vunpack.c.h.b16 %v739
    %v2230 = vunpack.c.l.b16 %v740
    %v2231 = vunpack.c.h.b16 %v740
    %v2232 = vunpack.c.l.b16 %v741
    %v2233 = vunpack.c.h.b16 %v741
    %v2234 = vunpack.c.l.b16 %v742
    %v2235 = vunpack.c.h.b16 %v742
    %v2236 = vunpack.c.l.b16 %v743
    %v2237 = vunpack.c.h.b16 %v743
    %v2238 = vunpack.c.l.b16 %v744
    %v2239 = vunpack.c.h.b16 %v744
    %v2240 = vunpack.c.l.b16 %v745
    %v2241 = vunpack.c.h.b16 %v745
    %v2242 = vunpack.c.l.b16 %v746
    %v2243 = vunpack.c.h.b16 %v746
    %v2244 = vunpack.c.l.b16 %v747
    %v2245 = vunpack.c.h.b16 %v747
    %v2246 = vunpack.c.l.b16 %v748
    %v2247 = vunpack.c.h.b16 %v748
    %v2248 = vunpack.c.l.b16 %v749
    %v2249 = vunpack.c.h.b16 %v749
    %v2250 = vunpack.c.l.b16 %v750
    %v2251 = vunpack.c.h.b16 %v750
    %v2252 = vunpack.c.l.b16 %v751
    %v2253 = vunpack.c.h.b16 %v751
    %v2254 = vunpack.c.l.b16 %v752
    %v2255 = vunpack.c.h.b16 %v752
    %v2256 = vunpack.c.l.b16 %v753
    %v2257 = vunpack.c.h.b16 %v753
    %v2258 = vunpack.c.l.b16 %v754
    %v2259 = vunpack.c.h.b16 %v754
    %v2260 = vunpack.c.l.b16 %v755
    %v2261 = vunpack.c.h.b16 %v755
    %v2262 = vunpack.c.l.b16 %v756
    %v2263 = vunpack.c.h.b16 %v756
    %v2264 = vunpack.c.l.b16 %v757
    %v2265 = vunpack.c.h.b16 %v757
    %v2266 = vunpack.c.l.b16 %v758
    %v2267 = vunpack.c.h.b16 %v758
    %v2268 = vunpack.c.l.b16 %v759
    %v2269 = vunpack.c.h.b16 %v759
    %v2270 = vunpack.c.l.b16 %v760
    %v2271 = vunpack.c.h.b16 %v760
    %v2272 = vunpack.c.l.b16 %v761
    %v2273 = vunpack.c.h.b16 %v761
    %v2274 = vunpack.c.l.b16 %v762
    %v2275 = vunpack.c.h.b16 %v762
    %v2276 = vunpack.c.l.b16 %v763
    %v2277 = vunpack.c.h.b16 %v763
    %v2278 = vunpack.c.l.b16 %v764
    %v2279 = vunpack.c.h.b16 %v764
    %v2280 = vunpack.c.l.b16 %v765
    %v2281 = vunpack.c.h.b16 %v765
    %v2282 = vunpack.c.l.b16 %v766
    %v2283 = vunpack.c.h.b16 %v766
    %v2284 = vunpack.c.l.b16 %v767
    %v2285 = vunpack.c.h.b16 %v767
    %v2286 = vunpack.c.l.b16 %v768
    %v2287 = vunpack.c.h.b16 %v768
    %v2288 = vunpack.c.l.b16 %v769
    %v2289 = vunpack.c.h.b16 %v769
    %v2290 = vunpack.c.l.b16 %v770
    %v2291 = vunpack.c.h.b16 %v770
    %v2292 = vunpack.c.l.b16 %v771
    %v2293 = vunpack.c.h.b16 %v771
    %v2294 = vunpack.c.l.b16 %v772
    %v2295 = vunpack.c.h.b16 %v772
    %v2296 = vunpack.c.l.b16 %v773
    %v2297 = vunpack.c.h.b16 %v773
    %v2298 = vunpack.c.l.b16 %v774
    %v2299 = vunpack.c.h.b16 %v774
    %v2300 = vunpack.c.l.b16 %v775
    %v2301 = vunpack.c.h.b16 %v775
    %v2302 = vunpack.c.l.b16 %v776
    %v2303 = vunpack.c.h.b16 %v776
    %v2304 = vunpack.c.l.b16 %v777
    %v2305 = vunpack.c.h.b16 %v777
    %v2306 = vunpack.c.l.b16 %v778
    %v2307 = vunpack.c.h.b16 %v778
    %v2308 = vunpack.c.l.b16 %v779
    %v2309 = vunpack.c.h.b16 %v779
    %v2310 = vunpack.c.l.b16 %v780
    %v2311 = vunpack.c.h.b16 %v780
    %v2312 = vunpack.c.l.b16 %v781
    %v2313 = vunpack.c.h.b16 %v781
    %v2314 = vunpack.c.l.b16 %v782
    %v2315 = vunpack.c.h.b16 %v782
    %v2316 = vunpack.c.l.b16 %v783
    %v2317 = vunpack.c.h.b16 %v783
    %v2318 = vunpack.c.l.b16 %v784
    %v2319 = vunpack.c.h.b16 %v784
    %v2320 = vunpack.c.l.b16 %v785
    %v2321 = vunpack.c.h.b16 %v785
    %v2322 = vunpack.c.l.b16 %v786
    %v2323 = vunpack.c.h.b16 %v786
    %v2324 = vunpack.c.l.b16 %v787
    %v2325 = vunpack.c.h.b16 %v787
    %v2326 = vunpack.c.l.b16 %v788
    %v2327 = vunpack.c.h.b16 %v788
    %v2328 = vunpack.c.l.b16 %v789
    %v2329 = vunpack.c.h.b16 %v789
    %v2330 = vunpack.c.l.b16 %v790
    %v2331 = vunpack.c.h.b16 %v790
    %v2332 = vunpack.c.l.b16 %v791
    %v2333 = vunpack.c.h.b16 %v791
    %v2334 = vunpack.c.l.b16 %v792
    %v2335 = vunpack.c.h.b16 %v792
    %v2336 = vunpack.c.l.b16 %v793
    %v2337 = vunpack.c.h.b16 %v793
    %v2338 = vunpack.c.l.b16 %v794
    %v2339 = vunpack.c.h.b16 %v794
    %v2340 = vunpack.c.l.b16 %v795
    %v2341 = vunpack.c.h.b16 %v795
    %v2342 = vunpack.c.l.b16 %v796
    %v2343 = vunpack.c.h.b16 %v796
    %v2344 = vunpack.c.l.b16 %v797
    %v2345 = vunpack.c.h.b16 %v797
    %v2346 = vunpack.c.l.b16 %v798
    %v2347 = vunpack.c.h.b16 %v798
    %v2348 = vunpack.c.l.b16 %v799
    %v2349 = vunpack.c.h.b16 %v799
    %v2350 = vunpack.c.l.b16 %v800
    %v2351 = vunpack.c.h.b16 %v800
    %v2352 = vunpack.c.l.b16 %v801
    %v2353 = vunpack.c.h.b16 %v801
    %v2354 = vunpack.c.l.b16 %v802
    %v2355 = vunpack.c.h.b16 %v802
    %v2356 = vunpack.c.l.b16 %v803
    %v2357 = vunpack.c.h.b16 %v803
    %v2358 = vunpack.c.l.b16 %v804
    %v2359 = vunpack.c.h.b16 %v804
    %v2360 = vunpack.c.l.b16 %v805
    %v2361 = vunpack.c.h.b16 %v805
    %v2362 = vunpack.c.l.b16 %v806
    %v2363 = vunpack.c.h.b16 %v806
    %v2364 = vunpack.c.l.b16 %v807
    %v2365 = vunpack.c.h.b16 %v807
    %v2366 = vunpack.c.l.b16 %v808
    %v2367 = vunpack.c.h.b16 %v808
    %v2368 = vunpack.c.l.b16 %v809
    %v2369 = vunpack.c.h.b16 %v809
    %v2370 = vunpack.c.l.b16 %v810
    %v2371 = vunpack.c.h.b16 %v810
    %v2372 = vunpack.c.l.b16 %v811
    %v2373 = vunpack.c.h.b16 %v811
    %v2374 = vunpack.c.l.b16 %v812
    %v2375 = vunpack.c.h.b16 %v812
    %v2376 = vunpack.c.l.b16 %v813
    %v2377 = vunpack.c.h.b16 %v813
    %v2378 = vunpack.c.l.b16 %v814
    %v2379 = vunpack.c.h.b16 %v814
    %v2380 = vunpack.c.l.b16 %v815
    %v2381 = vunpack.c.h.b16 %v815
    %v2382 = vunpack.c.l.b16 %v816
    %v2383 = vunpack.c.h.b16 %v816
    %v2384 = vunpack.c.l.b16 %v817
    %v2385 = vunpack.c.h.b16 %v817
    %v2386 = vunpack.c.l.b16 %v818
    %v2387 = vunpack.c.h.b16 %v818
    %v2388 = vunpack.c.l.b16 %v819
    %v2389 = vunpack.c.h.b16 %v819
    %v2390 = vunpack.c.l.b16 %v820
    %v2391 = vunpack.c.h.b16 %v820
    %v2392 = vunpack.c.l.b16 %v821
    %v2393 = vunpack.c.h.b16 %v821
    %v2394 = vunpack.c.l.b16 %v822
    %v2395 = vunpack.c.h.b16 %v822
    %v2396 = vunpack.c.l.b16 %v823
    %v2397 = vunpack.c.h.b16 %v823
    %v2398 = vunpack.c.l.b16 %v824
    %v2399 = vunpack.c.h.b16 %v824
    %v2400 = vunpack.c.l.b16 %v825
    %v2401 = vunpack.c.h.b16 %v825
    %v2402 = vunpack.c.l.b16 %v826
    %v2403 = vunpack.c.h.b16 %v826
    %v2404 = vunpack.c.l.b16 %v827
    %v2405 = vunpack.c.h.b16 %v827
    %v2406 = vunpack.c.l.b16 %v828
    %v2407 = vunpack.c.h.b16 %v828
    %v2408 = vunpack.c.l.b16 %v829
    %v2409 = vunpack.c.h.b16 %v829
    %v2410 = vunpack.c.l.b16 %v830
    %v2411 = vunpack.c.h.b16 %v830
    %v2412 = vunpack.c.l.b16 %v831
    %v2413 = vunpack.c.h.b16 %v831
    %v2414 = vunpack.c.l.b16 %v832
    %v2415 = vunpack.c.h.b16 %v832
    %v2416 = vunpack.c.l.b16 %v833
    %v2417 = vunpack.c.h.b16 %v833
    %v2418 = vunpack.c.l.b16 %v834
    %v2419 = vunpack.c.h.b16 %v834
    %v2420 = vunpack.c.l.b16 %v835
    %v2421 = vunpack.c.h.b16 %v835
    %v2422 = vunpack.c.l.b16 %v836
    %v2423 = vunpack.c.h.b16 %v836
    %v2424 = vunpack.c.l.b16 %v837
    %v2425 = vunpack.c.h.b16 %v837
    %v2426 = vunpack.c.l.b16 %v838
    %v2427 = vunpack.c.h.b16 %v838
    %v2428 = vunpack.c.l.b16 %v839
    %v2429 = vunpack.c.h.b16 %v839
    %v2430 = vunpack.c.l.b16 %v840
    %v2431 = vunpack.c.h.b16 %v840
    %v2432 = vunpack.c.l.b16 %v841
    %v2433 = vunpack.c.h.b16 %v841
    %v2434 = vunpack.c.l.b16 %v842
    %v2435 = vunpack.c.h.b16 %v842
    %v2436 = vunpack.c.l.b16 %v843
    %v2437 = vunpack.c.h.b16 %v843
    %v2438 = vunpack.c.l.b16 %v844
    %v2439 = vunpack.c.h.b16 %v844
    %v2440 = vunpack.c.l.b16 %v845
    %v2441 = vunpack.c.h.b16 %v845
    %v2442 = vunpack.c.l.b16 %v846
    %v2443 = vunpack.c.h.b16 %v846
    %v2444 = vunpack.c.l.b16 %v847
    %v2445 = vunpack.c.h.b16 %v847
    %v2446 = vunpack.c.l.b16 %v848
    %v2447 = vunpack.c.h.b16 %v848
    %v2448 = vunpack.c.l.b16 %v849
    %v2449 = vunpack.c.h.b16 %v849
    %v2450 = vunpack.c.l.b16 %v850
    %v2451 = vunpack.c.h.b16 %v850
    %v2452 = vunpack.c.l.b16 %v851
    %v2453 = vunpack.c.h.b16 %v851
    %v2454 = vunpack.c.l.b16 %v852
    %v2455 = vunpack.c.h.b16 %v852
    %v2456 = vunpack.c.l.b16 %v853
    %v2457 = vunpack.c.h.b16 %v853
    %v2458 = vunpack.c.l.b16 %v854
    %v2459 = vunpack.c.h.b16 %v854
    %v2460 = vunpack.c.l.b16 %v855
    %v2461 = vunpack.c.h.b16 %v855
    %v2462 = vunpack.c.l.b16 %v856
    %v2463 = vunpack.c.h.b16 %v856
    %v2464 = vunpack.c.l.b16 %v857
    %v2465 = vunpack.c.h.b16 %v857
    %v2466 = vunpack.c.l.b16 %v858
    %v2467 = vunpack.c.h.b16 %v858
    %v2468 = vunpack.c.l.b16 %v859
    %v2469 = vunpack.c.h.b16 %v859
    %v2470 = vunpack.c.l.b16 %v860
    %v2471 = vunpack.c.h.b16 %v860
    %v2472 = vunpack.c.l.b16 %v861
    %v2473 = vunpack.c.h.b16 %v861
    %v2474 = vunpack.c.l.b16 %v862
    %v2475 = vunpack.c.h.b16 %v862
    %v2476 = vunpack.c.l.b16 %v863
    %v2477 = vunpack.c.h.b16 %v863
    %v2478 = vunpack.c.l.b16 %v864
    %v2479 = vunpack.c.h.b16 %v864
    %v2480 = vunpack.c.l.b16 %v865
    %v2481 = vunpack.c.h.b16 %v865
    %v2482 = vunpack.c.l.b16 %v866
    %v2483 = vunpack.c.h.b16 %v866
    %v2484 = vunpack.c.l.b16 %v867
    %v2485 = vunpack.c.h.b16 %v867
    %v2486 = vunpack.c.l.b16 %v868
    %v2487 = vunpack.c.h.b16 %v868
    %v2488 = vunpack.c.l.b16 %v869
    %v2489 = vunpack.c.h.b16 %v869
    %v2490 = vpack.c.b16 %v1482, %v1466
    %v2491 = vpack.c.b16 %v1483, %v1467
    %v2492 = vpack.c.b16 %v1484, %v1468
    %v2493 = vpack.c.b16 %v1485, %v1469
    %v2494 = vpack.c.b16 %v1486, %v1470
    %v2495 = vpack.c.b16 %v1487, %v1471
    %v2496 = vpack.c.b16 %v1488, %v1472
    %v2497 = vpack.c.b16 %v1489, %v1473
    %v2498 = vpack.c.b16 %v1490, %v1474
    %v2499 = vpack.c.b16 %v1491, %v1475
    %v2500 = vpack.c.b16 %v1492, %v1476
    %v2501 = vpack.c.b16 %v1493, %v1477
    %v2502 = vpack.c.b16 %v1494, %v1478
    %v2503 = vpack.c.b16 %v1495, %v1479
    %v2504 = vpack.c.b16 %v1496, %v1480
    %v2505 = vpack.c.b16 %v1497, %v1481
    %v2506 = vpack.c.b16 %v1514, %v1498
    %v2507 = vpack.c.b16 %v1515, %v1499
    %v2508 = vpack.c.b16 %v1516, %v1500
    %v2509 = vpack.c.b16 %v1517, %v1501
    %v2510 = vpack.c.b16 %v1518, %v1502
    %v2511 = vpack.c.b16 %v1519, %v1503
    %v2512 = vpack.c.b16 %v1520, %v1504
    %v2513 = vpack.c.b16 %v1521, %v1505
    %v2514 = vpack.c.b16 %v1522, %v1506
    %v2515 = vpack.c.b16 %v1523, %v1507
    %v2516 = vpack.c.b16 %v1524, %v1508
    %v2517 = vpack.c.b16 %v1525, %v1509
    %v2518 = vpack.c.b16 %v1526, %v1510
    %v2519 = vpack.c.b16 %v1527, %v1511
    %v2520 = vpack.c.b16 %v1528, %v1512
    %v2521 = vpack.c.b16 %v1529, %v1513
    %v2522 = vpack.c.b16 %v1546, %v1530
    %v2523 = vpack.c.b16 %v1547, %v1531
    %v2524 = vpack.c.b16 %v1548, %v1532
    %v2525 = vpack.c.b16 %v1549, %v1533
    %v2526 = vpack.c.b16 %v1550, %v1534
    %v2527 = vpack.c.b16 %v1551, %v1535
    %v2528 = vpack.c.b16 %v1552, %v1536
    %v2529 = vpack.c.b16 %v1553, %v1537
    %v2530 = vpack.c.b16 %v1554, %v1538
    %v2531 = vpack.c.b16 %v1555, %v1539
    %v2532 = vpack.c.b16 %v1556, %v1540
    %v2533 = vpack.c.b16 %v1557, %v1541
    %v2534 = vpack.c.b16 %v1558, %v1542
    %v2535 = vpack.c.b16 %v1559, %v1543
    %v2536 = vpack.c.b16 %v1560, %v1544
    %v2537 = vpack.c.b16 %v1561, %v1545
    %v2538 = vpack.c.b16 %v1578, %v1562
    %v2539 = vpack.c.b16 %v1579, %v1563
    %v2540 = vpack.c.b16 %v1580, %v1564
    %v2541 = vpack.c.b16 %v1581, %v1565
    %v2542 = vpack.c.b16 %v1582, %v1566
    %v2543 = vpack.c.b16 %v1583, %v1567
    %v2544 = vpack.c.b16 %v1584, %v1568
    %v2545 = vpack.c.b16 %v1585, %v1569
    %v2546 = vpack.c.b16 %v1586, %v1570
    %v2547 = vpack.c.b16 %v1587, %v1571
    %v2548 = vpack.c.b16 %v1588, %v1572
    %v2549 = vpack.c.b16 %v1589, %v1573
    %v2550 = vpack.c.b16 %v1590, %v1574
    %v2551 = vpack.c.b16 %v1591, %v1575
    %v2552 = vpack.c.b16 %v1592, %v1576
    %v2553 = vpack.c.b16 %v1593, %v1577
    %v2554 = vpack.c.b16 %v1610, %v1594
    %v2555 = vpack.c.b16 %v1611, %v1595
    %v2556 = vpack.c.b16 %v1612, %v1596
    %v2557 = vpack.c.b16 %v1613, %v1597
    %v2558 = vpack.c.b16 %v1614, %v1598
    %v2559 = vpack.c.b16 %v1615, %v1599
    %v2560 = vpack.c.b16 %v1616, %v1600
    %v2561 = vpack.c.b16 %v1617, %v1601
    %v2562 = vpack.c.b16 %v1618, %v1602
    %v2563 = vpack.c.b16 %v1619, %v1603
    %v2564 = vpack.c.b16 %v1620, %v1604
    %v2565 = vpack.c.b16 %v1621, %v1605
    %v2566 = vpack.c.b16 %v1622, %v1606
    %v2567 = vpack.c.b16 %v1623, %v1607
    %v2568 = vpack.c.b16 %v1624, %v1608
    %v2569 = vpack.c.b16 %v1625, %v1609
    %v2570 = vpack.c.b16 %v1642, %v1626
    %v2571 = vpack.c.b16 %v1643, %v1627
    %v2572 = vpack.c.b16 %v1644, %v1628
    %v2573 = vpack.c.b16 %v1645, %v1629
    %v2574 = vpack.c.b16 %v1646, %v1630
    %v2575 = vpack.c.b16 %v1647, %v1631
    %v2576 = vpack.c.b16 %v1648, %v1632
    %v2577 = vpack.c.b16 %v1649, %v1633
    %v2578 = vpack.c.b16 %v1650, %v1634
    %v2579 = vpack.c.b16 %v1651, %v1635
    %v2580 = vpack.c.b16 %v1652, %v1636
    %v2581 = vpack.c.b16 %v1653, %v1637
    %v2582 = vpack.c.b16 %v1654, %v1638
    %v2583 = vpack.c.b16 %v1655, %v1639
    %v2584 = vpack.c.b16 %v1656, %v1640
    %v2585 = vpack.c.b16 %v1657, %v1641
    %v2586 = vpack.c.b16 %v1674, %v1658
    %v2587 = vpack.c.b16 %v1675, %v1659
    %v2588 = vpack.c.b16 %v1676, %v1660
    %v2589 = vpack.c.b16 %v1677, %v1661
    %v2590 = vpack.c.b16 %v1678, %v1662
    %v2591 = vpack.c.b16 %v1679, %v1663
    %v2592 = vpack.c.b16 %v1680, %v1664
    %v2593 = vpack.c.b16 %v1681, %v1665
    %v2594 = vpack.c.b16 %v1682, %v1666
    %v2595 = vpack.c.b16 %v1683, %v1667
    %v2596 = vpack.c.b16 %v1684, %v1668
    %v2597 = vpack.c.b16 %v1685, %v1669
    %v2598 = vpack.c.b16 %v1686, %v1670
    %v2599 = vpack.c.b16 %v1687, %v1671
    %v2600 = vpack.c.b16 %v1688, %v1672
    %v2601 = vpack.c.b16 %v1689, %v1673
    %v2602 = vpack.c.b16 %v1706, %v1690
    %v2603 = vpack.c.b16 %v1707, %v1691
    %v2604 = vpack.c.b16 %v1708, %v1692
    %v2605 = vpack.c.b16 %v1709, %v1693
    %v2606 = vpack.c.b16 %v1710, %v1694
    %v2607 = vpack.c.b16 %v1711, %v1695
    %v2608 = vpack.c.b16 %v1712, %v1696
    %v2609 = vpack.c.b16 %v1713, %v1697
    %v2610 = vpack.c.b16 %v1714, %v1698
    %v2611 = vpack.c.b16 %v1715, %v1699
    %v2612 = vpack.c.b16 %v1716, %v1700
    %v2613 = vpack.c.b16 %v1717, %v1701
    %v2614 = vpack.c.b16 %v1718, %v1702
    %v2615 = vpack.c.b16 %v1719, %v1703
    %v2616 = vpack.c.b16 %v1720, %v1704
    %v2617 = vpack.c.b16 %v1721, %v1705
    %v2618 = vpack.c.b16 %v1738, %v1722
    %v2619 = vpack.c.b16 %v1739, %v1723
    %v2620 = vpack.c.b16 %v1740, %v1724
    %v2621 = vpack.c.b16 %v1741, %v1725
    %v2622 = vpack.c.b16 %v1742, %v1726
    %v2623 = vpack.c.b16 %v1743, %v1727
    %v2624 = vpack.c.b16 %v1744, %v1728
    %v2625 = vpack.c.b16 %v1745, %v1729
    %v2626 = vpack.c.b16 %v1746, %v1730
    %v2627 = vpack.c.b16 %v1747, %v1731
    %v2628 = vpack.c.b16 %v1748, %v1732
    %v2629 = vpack.c.b16 %v1749, %v1733
    %v2630 = vpack.c.b16 %v1750, %v1734
    %v2631 = vpack.c.b16 %v1751, %v1735
    %v2632 = vpack.c.b16 %v1752, %v1736
    %v2633 = vpack.c.b16 %v1753, %v1737
    %v2634 = vpack.c.b16 %v1770, %v1754
    %v2635 = vpack.c.b16 %v1771, %v1755
    %v2636 = vpack.c.b16 %v1772, %v1756
    %v2637 = vpack.c.b16 %v1773, %v1757
    %v2638 = vpack.c.b16 %v1774, %v1758
    %v2639 = vpack.c.b16 %v1775, %v1759
    %v2640 = vpack.c.b16 %v1776, %v1760
    %v2641 = vpack.c.b16 %v1777, %v1761
    %v2642 = vpack.c.b16 %v1778, %v1762
    %v2643 = vpack.c.b16 %v1779, %v1763
    %v2644 = vpack.c.b16 %v1780, %v1764
    %v2645 = vpack.c.b16 %v1781, %v1765
    %v2646 = vpack.c.b16 %v1782, %v1766
    %v2647 = vpack.c.b16 %v1783, %v1767
    %v2648 = vpack.c.b16 %v1784, %v1768
    %v2649 = vpack.c.b16 %v1785, %v1769
    %v2650 = vpack.c.b16 %v1802, %v1786
    %v2651 = vpack.c.b16 %v1803, %v1787
    %v2652 = vpack.c.b16 %v1804, %v1788
    %v2653 = vpack.c.b16 %v1805, %v1789
    %v2654 = vpack.c.b16 %v1806, %v1790
    %v2655 = vpack.c.b16 %v1807, %v1791
    %v2656 = vpack.c.b16 %v1808, %v1792
    %v2657 = vpack.c.b16 %v1809, %v1793
    %v2658 = vpack.c.b16 %v1810, %v1794
    %v2659 = vpack.c.b16 %v1811, %v1795
    %v2660 = vpack.c.b16 %v1812, %v1796
    %v2661 = vpack.c.b16 %v1813, %v1797
    %v2662 = vpack.c.b16 %v1814, %v1798
    %v2663 = vpack.c.b16 %v1815, %v1799
    %v2664 = vpack.c.b16 %v1816, %v1800
    %v2665 = vpack.c.b16 %v1817, %v1801
    %v2666 = vpack.c.b16 %v1834, %v1818
    %v2667 = vpack.c.b16 %v1835, %v1819
    %v2668 = vpack.c.b16 %v1836, %v1820
    %v2669 = vpack.c.b16 %v1837, %v1821
    %v2670 = vpack.c.b16 %v1838, %v1822
    %v2671 = vpack.c.b16 %v1839, %v1823
    %v2672 = vpack.c.b16 %v1840, %v1824
    %v2673 = vpack.c.b16 %v1841, %v1825
    %v2674 = vpack.c.b16 %v1842, %v1826
    %v2675 = vpack.c.b16 %v1843, %v1827
    %v2676 = vpack.c.b16 %v1844, %v1828
    %v2677 = vpack.c.b16 %v1845, %v1829
    %v2678 = vpack.c.b16 %v1846, %v1830
    %v2679 = vpack.c.b16 %v1847, %v1831
    %v2680 = vpack.c.b16 %v1848, %v1832
    %v2681 = vpack.c.b16 %v1849, %v1833
    %v2682 = vpack.c.b16 %v1866, %v1850
    %v2683 = vpack.c.b16 %v1867, %v1851
    %v2684 = vpack.c.b16 %v1868, %v1852
    %v2685 = vpack.c.b16 %v1869, %v1853
    %v2686 = vpack.c.b16 %v1870, %v1854
    %v2687 = vpack.c.b16 %v1871, %v1855
    %v2688 = vpack.c.b16 %v1872, %v1856
    %v2689 = vpack.c.b16 %v1873, %v1857
    %v2690 = vpack.c.b16 %v1874, %v1858
    %v2691 = vpack.c.b16 %v1875, %v1859
    %v2692 = vpack.c.b16 %v1876, %v1860
    %v2693 = vpack.c.b16 %v1877, %v1861
    %v2694 = vpack.c.b16 %v1878, %v1862
    %v2695 = vpack.c.b16 %v1879, %v1863
    %v2696 = vpack.c.b16 %v1880, %v1864
    %v2697 = vpack.c.b16 %v1881, %v1865
    %v2698 = vpack.c.b16 %v1898, %v1882
    %v2699 = vpack.c.b16 %v1899, %v1883
    %v2700 = vpack.c.b16 %v1900, %v1884
    %v2701 = vpack.c.b16 %v1901, %v1885
    %v2702 = vpack.c.b16 %v1902, %v1886
    %v2703 = vpack.c.b16 %v1903, %v1887
    %v2704 = vpack.c.b16 %v1904, %v1888
    %v2705 = vpack.c.b16 %v1905, %v1889
    %v2706 = vpack.c.b16 %v1906, %v1890
    %v2707 = vpack.c.b16 %v1907, %v1891
    %v2708 = vpack.c.b16 %v1908, %v1892
    %v2709 = vpack.c.b16 %v1909, %v1893
    %v2710 = vpack.c.b16 %v1910, %v1894
    %v2711 = vpack.c.b16 %v1911, %v1895
    %v2712 = vpack.c.b16 %v1912, %v1896
    %v2713 = vpack.c.b16 %v1913, %v1897
    %v2714 = vpack.c.b16 %v1930, %v1914
    %v2715 = vpack.c.b16 %v1931, %v1915
    %v2716 = vpack.c.b16 %v1932, %v1916
    %v2717 = vpack.c.b16 %v1933, %v1917
    %v2718 = vpack.c.b16 %v1934, %v1918
    %v2719 = vpack.c.b16 %v1935, %v1919
    %v2720 = vpack.c.b16 %v1936, %v1920
    %v2721 = vpack.c.b16 %v1937, %v1921
    %v2722 = vpack.c.b16 %v1938, %v1922
    %v2723 = vpack.c.b16 %v1939, %v1923
    %v2724 = vpack.c.b16 %v1940, %v1924
    %v2725 = vpack.c.b16 %v1941, %v1925
    %v2726 = vpack.c.b16 %v1942, %v1926
    %v2727 = vpack.c.b16 %v1943, %v1927
    %v2728 = vpack.c.b16 %v1944, %v1928
    %v2729 = vpack.c.b16 %v1945, %v1929
    %v2730 = vpack.c.b16 %v1962, %v1946
    %v2731 = vpack.c.b16 %v1963, %v1947
    %v2732 = vpack.c.b16 %v1964, %v1948
    %v2733 = vpack.c.b16 %v1965, %v1949
    %v2734 = vpack.c.b16 %v1966, %v1950
    %v2735 = vpack.c.b16 %v1967, %v1951
    %v2736 = vpack.c.b16 %v1968, %v1952
    %v2737 = vpack.c.b16 %v1969, %v1953
    %v2738 = vpack.c.b16 %v1970, %v1954
    %v2739 = vpack.c.b16 %v1971, %v1955
    %v2740 = vpack.c.b16 %v1972, %v1956
    %v2741 = vpack.c.b16 %v1973, %v1957
    %v2742 = vpack.c.b16 %v1974, %v1958
    %v2743 = vpack.c.b16 %v1975, %v1959
    %v2744 = vpack.c.b16 %v1976, %v1960
    %v2745 = vpack.c.b16 %v1977, %v1961
    %v2746 = vpack.c.b16 %v1994, %v1978
    %v2747 = vpack.c.b16 %v1995, %v1979
    %v2748 = vpack.c.b16 %v1996, %v1980
    %v2749 = vpack.c.b16 %v1997, %v1981
    %v2750 = vpack.c.b16 %v1998, %v1982
    %v2751 = vpack.c.b16 %v1999, %v1983
    %v2752 = vpack.c.b16 %v2000, %v1984
    %v2753 = vpack.c.b16 %v2001, %v1985
    %v2754 = vpack.c.b16 %v2002, %v1986
    %v2755 = vpack.c.b16 %v2003, %v1987
    %v2756 = vpack.c.b16 %v2004, %v1988
    %v2757 = vpack.c.b16 %v2005, %v1989
    %v2758 = vpack.c.b16 %v2006, %v1990
    %v2759 = vpack.c.b16 %v2007, %v1991
    %v2760 = vpack.c.b16 %v2008, %v1992
    %v2761 = vpack.c.b16 %v2009, %v1993
    %v2762 = vpack.c.b16 %v2026, %v2010
    %v2763 = vpack.c.b16 %v2027, %v2011
    %v2764 = vpack.c.b16 %v2028, %v2012
    %v2765 = vpack.c.b16 %v2029, %v2013
    %v2766 = vpack.c.b16 %v2030, %v2014
    %v2767 = vpack.c.b16 %v2031, %v2015
    %v2768 = vpack.c.b16 %v2032, %v2016
    %v2769 = vpack.c.b16 %v2033, %v2017
    %v2770 = vpack.c.b16 %v2034, %v2018
    %v2771 = vpack.c.b16 %v2035, %v2019
    %v2772 = vpack.c.b16 %v2036, %v2020
    %v2773 = vpack.c.b16 %v2037, %v2021
    %v2774 = vpack.c.b16 %v2038, %v2022
    %v2775 = vpack.c.b16 %v2039, %v2023
    %v2776 = vpack.c.b16 %v2040, %v2024
    %v2777 = vpack.c.b16 %v2041, %v2025
    %v2778 = vpack.c.b16 %v2058, %v2042
    %v2779 = vpack.c.b16 %v2059, %v2043
    %v2780 = vpack.c.b16 %v2060, %v2044
    %v2781 = vpack.c.b16 %v2061, %v2045
    %v2782 = vpack.c.b16 %v2062, %v2046
    %v2783 = vpack.c.b16 %v2063, %v2047
    %v2784 = vpack.c.b16 %v2064, %v2048
    %v2785 = vpack.c.b16 %v2065, %v2049
    %v2786 = vpack.c.b16 %v2066, %v2050
    %v2787 = vpack.c.b16 %v2067, %v2051
    %v2788 = vpack.c.b16 %v2068, %v2052
    %v2789 = vpack.c.b16 %v2069, %v2053
    %v2790 = vpack.c.b16 %v2070, %v2054
    %v2791 = vpack.c.b16 %v2071, %v2055
    %v2792 = vpack.c.b16 %v2072, %v2056
    %v2793 = vpack.c.b16 %v2073, %v2057
    %v2794 = vpack.c.b16 %v2090, %v2074
    %v2795 = vpack.c.b16 %v2091, %v2075
    %v2796 = vpack.c.b16 %v2092, %v2076
    %v2797 = vpack.c.b16 %v2093, %v2077
    %v2798 = vpack.c.b16 %v2094, %v2078
    %v2799 = vpack.c.b16 %v2095, %v2079
    %v2800 = vpack.c.b16 %v2096, %v2080
    %v2801 = vpack.c.b16 %v2097, %v2081
    %v2802 = vpack.c.b16 %v2098, %v2082
    %v2803 = vpack.c.b16 %v2099, %v2083
    %v2804 = vpack.c.b16 %v2100, %v2084
    %v2805 = vpack.c.b16 %v2101, %v2085
    %v2806 = vpack.c.b16 %v2102, %v2086
    %v2807 = vpack.c.b16 %v2103, %v2087
    %v2808 = vpack.c.b16 %v2104, %v2088
    %v2809 = vpack.c.b16 %v2105, %v2089
    %v2810 = vpack.c.b16 %v2122, %v2106
    %v2811 = vpack.c.b16 %v2123, %v2107
    %v2812 = vpack.c.b16 %v2124, %v2108
    %v2813 = vpack.c.b16 %v2125, %v2109
    %v2814 = vpack.c.b16 %v2126, %v2110
    %v2815 = vpack.c.b16 %v2127, %v2111
    %v2816 = vpack.c.b16 %v2128, %v2112
    %v2817 = vpack.c.b16 %v2129, %v2113
    %v2818 = vpack.c.b16 %v2130, %v2114
    %v2819 = vpack.c.b16 %v2131, %v2115
    %v2820 = vpack.c.b16 %v2132, %v2116
    %v2821 = vpack.c.b16 %v2133, %v2117
    %v2822 = vpack.c.b16 %v2134, %v2118
    %v2823 = vpack.c.b16 %v2135, %v2119
    %v2824 = vpack.c.b16 %v2136, %v2120
    %v2825 = vpack.c.b16 %v2137, %v2121
    %v2826 = vpack.c.b16 %v2154, %v2138
    %v2827 = vpack.c.b16 %v2155, %v2139
    %v2828 = vpack.c.b16 %v2156, %v2140
    %v2829 = vpack.c.b16 %v2157, %v2141
    %v2830 = vpack.c.b16 %v2158, %v2142
    %v2831 = vpack.c.b16 %v2159, %v2143
    %v2832 = vpack.c.b16 %v2160, %v2144
    %v2833 = vpack.c.b16 %v2161, %v2145
    %v2834 = vpack.c.b16 %v2162, %v2146
    %v2835 = vpack.c.b16 %v2163, %v2147
    %v2836 = vpack.c.b16 %v2164, %v2148
    %v2837 = vpack.c.b16 %v2165, %v2149
    %v2838 = vpack.c.b16 %v2166, %v2150
    %v2839 = vpack.c.b16 %v2167, %v2151
    %v2840 = vpack.c.b16 %v2168, %v2152
    %v2841 = vpack.c.b16 %v2169, %v2153
    %v2842 = vpack.c.b16 %v2186, %v2170
    %v2843 = vpack.c.b16 %v2187, %v2171
    %v2844 = vpack.c.b16 %v2188, %v2172
    %v2845 = vpack.c.b16 %v2189, %v2173
    %v2846 = vpack.c.b16 %v2190, %v2174
    %v2847 = vpack.c.b16 %v2191, %v2175
    %v2848 = vpack.c.b16 %v2192, %v2176
    %v2849 = vpack.c.b16 %v2193, %v2177
    %v2850 = vpack.c.b16 %v2194, %v2178
    %v2851 = vpack.c.b16 %v2195, %v2179
    %v2852 = vpack.c.b16 %v2196, %v2180
    %v2853 = vpack.c.b16 %v2197, %v2181
    %v2854 = vpack.c.b16 %v2198, %v2182
    %v2855 = vpack.c.b16 %v2199, %v2183
    %v2856 = vpack.c.b16 %v2200, %v2184
    %v2857 = vpack.c.b16 %v2201, %v2185
    %v2858 = vpack.c.b16 %v2218, %v2202
    %v2859 = vpack.c.b16 %v2219, %v2203
    %v2860 = vpack.c.b16 %v2220, %v2204
    %v2861 = vpack.c.b16 %v2221, %v2205
    %v2862 = vpack.c.b16 %v2222, %v2206
    %v2863 = vpack.c.b16 %v2223, %v2207
    %v2864 = vpack.c.b16 %v2224, %v2208
    %v2865 = vpack.c.b16 %v2225, %v2209
    %v2866 = vpack.c.b16 %v2226, %v2210
    %v2867 = vpack.c.b16 %v2227, %v2211
    %v2868 = vpack.c.b16 %v2228, %v2212
    %v2869 = vpack.c.b16 %v2229, %v2213
    %v2870 = vpack.c.b16 %v2230, %v2214
    %v2871 = vpack.c.b16 %v2231, %v2215
    %v2872 = vpack.c.b16 %v2232, %v2216
    %v2873 = vpack.c.b16 %v2233, %v2217
    %v2874 = vpack.c.b16 %v2250, %v2234
    %v2875 = vpack.c.b16 %v2251, %v2235
    %v2876 = vpack.c.b16 %v2252, %v2236
    %v2877 = vpack.c.b16 %v2253, %v2237
    %v2878 = vpack.c.b16 %v2254, %v2238
    %v2879 = vpack.c.b16 %v2255, %v2239
    %v2880 = vpack.c.b16 %v2256, %v2240
    %v2881 = vpack.c.b16 %v2257, %v2241
    %v2882 = vpack.c.b16 %v2258, %v2242
    %v2883 = vpack.c.b16 %v2259, %v2243
    %v2884 = vpack.c.b16 %v2260, %v2244
    %v2885 = vpack.c.b16 %v2261, %v2245
    %v2886 = vpack.c.b16 %v2262, %v2246
    %v2887 = vpack.c.b16 %v2263, %v2247
    %v2888 = vpack.c.b16 %v2264, %v2248
    %v2889 = vpack.c.b16 %v2265, %v2249
    %v2890 = vpack.c.b16 %v2282, %v2266
    %v2891 = vpack.c.b16 %v2283, %v2267
    %v2892 = vpack.c.b16 %v2284, %v2268
    %v2893 = vpack.c.b16 %v2285, %v2269
    %v2894 = vpack.c.b16 %v2286, %v2270
    %v2895 = vpack.c.b16 %v2287, %v2271
    %v2896 = vpack.c.b16 %v2288, %v2272
    %v2897 = vpack.c.b16 %v2289, %v2273
    %v2898 = vpack.c.b16 %v2290, %v2274
    %v2899 = vpack.c.b16 %v2291, %v2275
    %v2900 = vpack.c.b16 %v2292, %v2276
    %v2901 = vpack.c.b16 %v2293, %v2277
    %v2902 = vpack.c.b16 %v2294, %v2278
    %v2903 = vpack.c.b16 %v2295, %v2279
    %v2904 = vpack.c.b16 %v2296, %v2280
    %v2905 = vpack.c.b16 %v2297, %v2281
    %v2906 = vpack.c.b16 %v2314, %v2298
    %v2907 = vpack.c.b16 %v2315, %v2299
    %v2908 = vpack.c.b16 %v2316, %v2300
    %v2909 = vpack.c.b16 %v2317, %v2301
    %v2910 = vpack.c.b16 %v2318, %v2302
    %v2911 = vpack.c.b16 %v2319, %v2303
    %v2912 = vpack.c.b16 %v2320, %v2304
    %v2913 = vpack.c.b16 %v2321, %v2305
    %v2914 = vpack.c.b16 %v2322, %v2306
    %v2915 = vpack.c.b16 %v2323, %v2307
    %v2916 = vpack.c.b16 %v2324, %v2308
    %v2917 = vpack.c.b16 %v2325, %v2309
    %v2918 = vpack.c.b16 %v2326, %v2310
    %v2919 = vpack.c.b16 %v2327, %v2311
    %v2920 = vpack.c.b16 %v2328, %v2312
    %v2921 = vpack.c.b16 %v2329, %v2313
    %v2922 = vpack.c.b16 %v2346, %v2330
    %v2923 = vpack.c.b16 %v2347, %v2331
    %v2924 = vpack.c.b16 %v2348, %v2332
    %v2925 = vpack.c.b16 %v2349, %v2333
    %v2926 = vpack.c.b16 %v2350, %v2334
    %v2927 = vpack.c.b16 %v2351, %v2335
    %v2928 = vpack.c.b16 %v2352, %v2336
    %v2929 = vpack.c.b16 %v2353, %v2337
    %v2930 = vpack.c.b16 %v2354, %v2338
    %v2931 = vpack.c.b16 %v2355, %v2339
    %v2932 = vpack.c.b16 %v2356, %v2340
    %v2933 = vpack.c.b16 %v2357, %v2341
    %v2934 = vpack.c.b16 %v2358, %v2342
    %v2935 = vpack.c.b16 %v2359, %v2343
    %v2936 = vpack.c.b16 %v2360, %v2344
    %v2937 = vpack.c.b16 %v2361, %v2345
    %v2938 = vpack.c.b16 %v2378, %v2362
    %v2939 = vpack.c.b16 %v2379, %v2363
    %v2940 = vpack.c.b16 %v2380, %v2364
    %v2941 = vpack.c.b16 %v2381, %v2365
    %v2942 = vpack.c.b16 %v2382, %v2366
    %v2943 = vpack.c.b16 %v2383, %v2367
    %v2944 = vpack.c.b16 %v2384, %v2368
    %v2945 = vpack.c.b16 %v2385, %v2369
    %v2946 = vpack.c.b16 %v2386, %v2370
    %v2947 = vpack.c.b16 %v2387, %v2371
    %v2948 = vpack.c.b16 %v2388, %v2372
    %v2949 = vpack.c.b16 %v2389, %v2373
    %v2950 = vpack.c.b16 %v2390, %v2374
    %v2951 = vpack.c.b16 %v2391, %v2375
    %v2952 = vpack.c.b16 %v2392, %v2376
    %v2953 = vpack.c.b16 %v2393, %v2377
    %v2954 = vpack.c.b16 %v2410, %v2394
    %v2955 = vpack.c.b16 %v2411, %v2395
    %v2956 = vpack.c.b16 %v2412, %v2396
    %v2957 = vpack.c.b16 %v2413, %v2397
    %v2958 = vpack.c.b16 %v2414, %v2398
    %v2959 = vpack.c.b16 %v2415, %v2399
    %v2960 = vpack.c.b16 %v2416, %v2400
    %v2961 = vpack.c.b16 %v2417, %v2401
    %v2962 = vpack.c.b16 %v2418, %v2402
    %v2963 = vpack.c.b16 %v2419, %v2403
    %v2964 = vpack.c.b16 %v2420, %v2404
    %v2965 = vpack.c.b16 %v2421, %v2405
    %v2966 = vpack.c.b16 %v2422, %v2406
    %v2967 = vpack.c.b16 %v2423, %v2407
    %v2968 = vpack.c.b16 %v2424, %v2408
    %v2969 = vpack.c.b16 %v2425, %v2409
    %v2970 = vpack.c.b16 %v2442, %v2426
    %v2971 = vpack.c.b16 %v2443, %v2427
    %v2972 = vpack.c.b16 %v2444, %v2428
    %v2973 = vpack.c.b16 %v2445, %v2429
    %v2974 = vpack.c.b16 %v2446, %v2430
    %v2975 = vpack.c.b16 %v2447, %v2431
    %v2976 = vpack.c.b16 %v2448, %v2432
    %v2977 = vpack.c.b16 %v2449, %v2433
    %v2978 = vpack.c.b16 %v2450, %v2434
    %v2979 = vpack.c.b16 %v2451, %v2435
    %v2980 = vpack.c.b16 %v2452, %v2436
    %v2981 = vpack.c.b16 %v2453, %v2437
    %v2982 = vpack.c.b16 %v2454, %v2438
    %v2983 = vpack.c.b16 %v2455, %v2439
    %v2984 = vpack.c.b16 %v2456, %v2440
    %v2985 = vpack.c.b16 %v2457, %v2441
    %v2986 = vpack.c.b16 %v2474, %v2458
    %v2987 = vpack.c.b16 %v2475, %v2459
    %v2988 = vpack.c.b16 %v2476, %v2460
    %v2989 = vpack.c.b16 %v2477, %v2461
    %v2990 = vpack.c.b16 %v2478, %v2462
    %v2991 = vpack.c.b16 %v2479, %v2463
    %v2992 = vpack.c.b16 %v2480, %v2464
    %v2993 = vpack.c.b16 %v2481, %v2465
    %v2994 = vpack.c.b16 %v2482, %v2466
    %v2995 = vpack.c.b16 %v2483, %v2467
    %v2996 = vpack.c.b16 %v2484, %v2468
    %v2997 = vpack.c.b16 %v2485, %v2469
    %v2998 = vpack.c.b16 %v2486, %v2470
    %v2999 = vpack.c.b16 %v2487, %v2471
    %v3000 = vpack.c.b16 %v2488, %v2472
    %v3001 = vpack.c.b16 %v2489, %v2473
    %3514 = vmatprep.subr.bf16.mxu0 %v2491
    %3515 = vmatpush1.bf16.msra.mxu0 %v2490
    %3516 = vmatprep.subr.bf16.mxu0 %v2507
    %3517 = vmatpush1.bf16.msra.mxu0 %v2506
    %3518 = vmatprep.subr.bf16.mxu0 %v2523
    %3519 = vmatpush1.bf16.msra.mxu0 %v2522
    %3520 = vmatprep.subr.bf16.mxu0 %v2539
    %3521 = vmatpush1.bf16.msra.mxu0 %v2538
    %3522 = vmatprep.subr.bf16.mxu0 %v2555
    %3523 = vmatpush1.bf16.msra.mxu0 %v2554
    %3524 = vmatprep.subr.bf16.mxu0 %v2571
    %3525 = vmatpush1.bf16.msra.mxu0 %v2570
    %3526 = vmatprep.subr.bf16.mxu0 %v2587
    %3527 = vmatpush1.bf16.msra.mxu0 %v2586
    %3528 = vmatprep.subr.bf16.mxu0 %v2603
    %3529 = vmatpush1.bf16.msra.mxu0 %v2602
    %3530 = vmatprep.subr.bf16.mxu0 %v2619
    %3531 = vmatpush1.bf16.msra.mxu0 %v2618
    %3532 = vmatprep.subr.bf16.mxu0 %v2635
    %3533 = vmatpush1.bf16.msra.mxu0 %v2634
    %3534 = vmatprep.subr.bf16.mxu0 %v2651
    %3535 = vmatpush1.bf16.msra.mxu0 %v2650
    %3536 = vmatprep.subr.bf16.mxu0 %v2667
    %3537 = vmatpush1.bf16.msra.mxu0 %v2666
    %3538 = vmatprep.subr.bf16.mxu0 %v2683
    %3539 = vmatpush1.bf16.msra.mxu0 %v2682
    %3540 = vmatprep.subr.bf16.mxu0 %v2699
    %3541 = vmatpush1.bf16.msra.mxu0 %v2698
    %3542 = vmatprep.subr.bf16.mxu0 %v2715
    %3543 = vmatpush1.bf16.msra.mxu0 %v2714
    %3544 = vmatprep.subr.bf16.mxu0 %v2731
    %3545 = vmatpush1.bf16.msra.mxu0 %v2730
    %3546 = vmatprep.mubr.bf16.mxu0 %v355
    %3547 = vmatmul.mubr.bf16.gmra.mrb[0].mxu0 %v354
    %v3548 = vpop.f32.mrb[0].mxu0
    %v3549 = vadd.f32 %v877, %v3548
    %v3550 = vpop.f32.mrb[0].mxu0
    %v3551 = vadd.f32 %v881, %v3550
    %v3552 = vpop.f32.mrb[0].mxu0
    %v3553 = vpop.f32.mrb[0].mxu0
    %3554 = vdwg.mxu0
    %3555 = vmatprep.subr.bf16.mxu0 %v2747
    %3556 = vmatpush1.bf16.msra.mxu0 %v2746
    %3557 = vmatprep.subr.bf16.mxu0 %v2763
    %3558 = vmatpush1.bf16.msra.mxu0 %v2762
    %3559 = vmatprep.subr.bf16.mxu0 %v2779
    %3560 = vmatpush1.bf16.msra.mxu0 %v2778
    %3561 = vmatprep.subr.bf16.mxu0 %v2795
    %3562 = vmatpush1.bf16.msra.mxu0 %v2794
    %3563 = vmatprep.subr.bf16.mxu0 %v2811
    %3564 = vmatpush1.bf16.msra.mxu0 %v2810
    %3565 = vmatprep.subr.bf16.mxu0 %v2827
    %3566 = vmatpush1.bf16.msra.mxu0 %v2826
    %3567 = vmatprep.subr.bf16.mxu0 %v2843
    %3568 = vmatpush1.bf16.msra.mxu0 %v2842
    %3569 = vmatprep.subr.bf16.mxu0 %v2859
    %3570 = vmatpush1.bf16.msra.mxu0 %v2858
    %3571 = vmatprep.subr.bf16.mxu0 %v2875
    %3572 = vmatpush1.bf16.msra.mxu0 %v2874
    %3573 = vmatprep.subr.bf16.mxu0 %v2891
    %3574 = vmatpush1.bf16.msra.mxu0 %v2890
    %3575 = vmatprep.subr.bf16.mxu0 %v2907
    %3576 = vmatpush1.bf16.msra.mxu0 %v2906
    %3577 = vmatprep.subr.bf16.mxu0 %v2923
    %3578 = vmatpush1.bf16.msra.mxu0 %v2922
    %3579 = vmatprep.subr.bf16.mxu0 %v2939
    %3580 = vmatpush1.bf16.msra.mxu0 %v2938
    %3581 = vmatprep.subr.bf16.mxu0 %v2955
    %3582 = vmatpush1.bf16.msra.mxu0 %v2954
    %3583 = vmatprep.subr.bf16.mxu0 %v2971
    %3584 = vmatpush1.bf16.msra.mxu0 %v2970
    %3585 = vmatprep.subr.bf16.mxu0 %v2987
    %3586 = vmatpush1.bf16.msra.mxu0 %v2986
    %3587 = vmatprep.mubr.bf16.mxu0 %v357
    %3588 = vmatmul.mubr.bf16.gmra.mrb[0].mxu0 %v356
    %v3589 = vpop.f32.mrb[0].mxu0
    %v3590 = vadd.f32 %v3549, %v3589
    %v3591 = vpop.f32.mrb[0].mxu0
    %v3592 = vadd.f32 %v3551, %v3591
    %v3593 = vpop.f32.mrb[0].mxu0
    %v3594 = vpop.f32.mrb[0].mxu0
    %3595 = vdwg.mxu0
    %3596 = vmatprep.subr.bf16.mxu0 %v2493
    %3597 = vmatpush1.bf16.msra.mxu0 %v2492
    %3598 = vmatprep.subr.bf16.mxu0 %v2509
    %3599 = vmatpush1.bf16.msra.mxu0 %v2508
    %3600 = vmatprep.subr.bf16.mxu0 %v2525
    %3601 = vmatpush1.bf16.msra.mxu0 %v2524
    %3602 = vmatprep.subr.bf16.mxu0 %v2541
    %3603 = vmatpush1.bf16.msra.mxu0 %v2540
    %3604 = vmatprep.subr.bf16.mxu0 %v2557
    %3605 = vmatpush1.bf16.msra.mxu0 %v2556
    %3606 = vmatprep.subr.bf16.mxu0 %v2573
    %3607 = vmatpush1.bf16.msra.mxu0 %v2572
    %3608 = vmatprep.subr.bf16.mxu0 %v2589
    %3609 = vmatpush1.bf16.msra.mxu0 %v2588
    %3610 = vmatprep.subr.bf16.mxu0 %v2605
    %3611 = vmatpush1.bf16.msra.mxu0 %v2604
    %3612 = vmatprep.subr.bf16.mxu0 %v2621
    %3613 = vmatpush1.bf16.msra.mxu0 %v2620
    %3614 = vmatprep.subr.bf16.mxu0 %v2637
    %3615 = vmatpush1.bf16.msra.mxu0 %v2636
    %3616 = vmatprep.subr.bf16.mxu0 %v2653
    %3617 = vmatpush1.bf16.msra.mxu0 %v2652
    %3618 = vmatprep.subr.bf16.mxu0 %v2669
    %3619 = vmatpush1.bf16.msra.mxu0 %v2668
    %3620 = vmatprep.subr.bf16.mxu0 %v2685
    %3621 = vmatpush1.bf16.msra.mxu0 %v2684
    %3622 = vmatprep.subr.bf16.mxu0 %v2701
    %3623 = vmatpush1.bf16.msra.mxu0 %v2700
    %3624 = vmatprep.subr.bf16.mxu0 %v2717
    %3625 = vmatpush1.bf16.msra.mxu0 %v2716
    %3626 = vmatprep.subr.bf16.mxu0 %v2733
    %3627 = vmatpush1.bf16.msra.mxu0 %v2732
    %3628 = vmatprep.mubr.bf16.mxu0 %v355
    %3629 = vmatmul.mubr.bf16.gmra.mrb[0].mxu0 %v354
    %v3630 = vpop.f32.mrb[0].mxu0
    %v3631 = vadd.f32 %v885, %v3630
    %v3632 = vpop.f32.mrb[0].mxu0
    %v3633 = vadd.f32 %v889, %v3632
    %v3634 = vpop.f32.mrb[0].mxu0
    %v3635 = vpop.f32.mrb[0].mxu0
    %3636 = vdwg.mxu0
    %3637 = vmatprep.subr.bf16.mxu0 %v2749
    %3638 = vmatpush1.bf16.msra.mxu0 %v2748
    %3639 = vmatprep.subr.bf16.mxu0 %v2765
    %3640 = vmatpush1.bf16.msra.mxu0 %v2764
    %3641 = vmatprep.subr.bf16.mxu0 %v2781
    %3642 = vmatpush1.bf16.msra.mxu0 %v2780
    %3643 = vmatprep.subr.bf16.mxu0 %v2797
    %3644 = vmatpush1.bf16.msra.mxu0 %v2796
    %3645 = vmatprep.subr.bf16.mxu0 %v2813
    %3646 = vmatpush1.bf16.msra.mxu0 %v2812
    %3647 = vmatprep.subr.bf16.mxu0 %v2829
    %3648 = vmatpush1.bf16.msra.mxu0 %v2828
    %3649 = vmatprep.subr.bf16.mxu0 %v2845
    %3650 = vmatpush1.bf16.msra.mxu0 %v2844
    %3651 = vmatprep.subr.bf16.mxu0 %v2861
    %3652 = vmatpush1.bf16.msra.mxu0 %v2860
    %3653 = vmatprep.subr.bf16.mxu0 %v2877
    %3654 = vmatpush1.bf16.msra.mxu0 %v2876
    %3655 = vmatprep.subr.bf16.mxu0 %v2893
    %3656 = vmatpush1.bf16.msra.mxu0 %v2892
    %3657 = vmatprep.subr.bf16.mxu0 %v2909
    %3658 = vmatpush1.bf16.msra.mxu0 %v2908
    %3659 = vmatprep.subr.bf16.mxu0 %v2925
    %3660 = vmatpush1.bf16.msra.mxu0 %v2924
    %3661 = vmatprep.subr.bf16.mxu0 %v2941
    %3662 = vmatpush1.bf16.msra.mxu0 %v2940
    %3663 = vmatprep.subr.bf16.mxu0 %v2957
    %3664 = vmatpush1.bf16.msra.mxu0 %v2956
    %3665 = vmatprep.subr.bf16.mxu0 %v2973
    %3666 = vmatpush1.bf16.msra.mxu0 %v2972
    %3667 = vmatprep.subr.bf16.mxu0 %v2989
    %3668 = vmatpush1.bf16.msra.mxu0 %v2988
    %3669 = vmatprep.mubr.bf16.mxu0 %v357
    %3670 = vmatmul.mubr.bf16.gmra.mrb[0].mxu0 %v356
    %v3671 = vpop.f32.mrb[0].mxu0
    %v3672 = vadd.f32 %v3631, %v3671
    %v3673 = vpop.f32.mrb[0].mxu0
    %v3674 = vadd.f32 %v3633, %v3673
    %v3675 = vpop.f32.mrb[0].mxu0
    %v3676 = vpop.f32.mrb[0].mxu0
    %3677 = vdwg.mxu0
    %3678 = vmatprep.subr.bf16.mxu0 %v2495
    %3679 = vmatpush1.bf16.msra.mxu0 %v2494
    %3680 = vmatprep.subr.bf16.mxu0 %v2511
    %3681 = vmatpush1.bf16.msra.mxu0 %v2510
    %3682 = vmatprep.subr.bf16.mxu0 %v2527
    %3683 = vmatpush1.bf16.msra.mxu0 %v2526
    %3684 = vmatprep.subr.bf16.mxu0 %v2543
    %3685 = vmatpush1.bf16.msra.mxu0 %v2542
    %3686 = vmatprep.subr.bf16.mxu0 %v2559
    %3687 = vmatpush1.bf16.msra.mxu0 %v2558
    %3688 = vmatprep.subr.bf16.mxu0 %v2575
    %3689 = vmatpush1.bf16.msra.mxu0 %v2574
    %3690 = vmatprep.subr.bf16.mxu0 %v2591
    %3691 = vmatpush1.bf16.msra.mxu0 %v2590
    %3692 = vmatprep.subr.bf16.mxu0 %v2607
    %3693 = vmatpush1.bf16.msra.mxu0 %v2606
    %3694 = vmatprep.subr.bf16.mxu0 %v2623
    %3695 = vmatpush1.bf16.msra.mxu0 %v2622
    %3696 = vmatprep.subr.bf16.mxu0 %v2639
    %3697 = vmatpush1.bf16.msra.mxu0 %v2638
    %3698 = vmatprep.subr.bf16.mxu0 %v2655
    %3699 = vmatpush1.bf16.msra.mxu0 %v2654
    %3700 = vmatprep.subr.bf16.mxu0 %v2671
    %3701 = vmatpush1.bf16.msra.mxu0 %v2670
    %3702 = vmatprep.subr.bf16.mxu0 %v2687
    %3703 = vmatpush1.bf16.msra.mxu0 %v2686
    %3704 = vmatprep.subr.bf16.mxu0 %v2703
    %3705 = vmatpush1.bf16.msra.mxu0 %v2702
    %3706 = vmatprep.subr.bf16.mxu0 %v2719
    %3707 = vmatpush1.bf16.msra.mxu0 %v2718
    %3708 = vmatprep.subr.bf16.mxu0 %v2735
    %3709 = vmatpush1.bf16.msra.mxu0 %v2734
    %3710 = vmatprep.mubr.bf16.mxu0 %v355
    %3711 = vmatmul.mubr.bf16.gmra.mrb[0].mxu0 %v354
    %v3712 = vpop.f32.mrb[0].mxu0
    %v3713 = vadd.f32 %v893, %v3712
    %v3714 = vpop.f32.mrb[0].mxu0
    %v3715 = vadd.f32 %v897, %v3714
    %v3716 = vpop.f32.mrb[0].mxu0
    %v3717 = vpop.f32.mrb[0].mxu0
    %3718 = vdwg.mxu0
    %3719 = vmatprep.subr.bf16.mxu0 %v2751
    %3720 = vmatpush1.bf16.msra.mxu0 %v2750
    %3721 = vmatprep.subr.bf16.mxu0 %v2767
    %3722 = vmatpush1.bf16.msra.mxu0 %v2766
    %3723 = vmatprep.subr.bf16.mxu0 %v2783
    %3724 = vmatpush1.bf16.msra.mxu0 %v2782
    %3725 = vmatprep.subr.bf16.mxu0 %v2799
    %3726 = vmatpush1.bf16.msra.mxu0 %v2798
    %3727 = vmatprep.subr.bf16.mxu0 %v2815
    %3728 = vmatpush1.bf16.msra.mxu0 %v2814
    %3729 = vmatprep.subr.bf16.mxu0 %v2831
    %3730 = vmatpush1.bf16.msra.mxu0 %v2830
    %3731 = vmatprep.subr.bf16.mxu0 %v2847
    %3732 = vmatpush1.bf16.msra.mxu0 %v2846
    %3733 = vmatprep.subr.bf16.mxu0 %v2863
    %3734 = vmatpush1.bf16.msra.mxu0 %v2862
    %3735 = vmatprep.subr.bf16.mxu0 %v2879
    %3736 = vmatpush1.bf16.msra.mxu0 %v2878
    %3737 = vmatprep.subr.bf16.mxu0 %v2895
    %3738 = vmatpush1.bf16.msra.mxu0 %v2894
    %3739 = vmatprep.subr.bf16.mxu0 %v2911
    %3740 = vmatpush1.bf16.msra.mxu0 %v2910
    %3741 = vmatprep.subr.bf16.mxu0 %v2927
    %3742 = vmatpush1.bf16.msra.mxu0 %v2926
    %3743 = vmatprep.subr.bf16.mxu0 %v2943
    %3744 = vmatpush1.bf16.msra.mxu0 %v2942
    %3745 = vmatprep.subr.bf16.mxu0 %v2959
    %3746 = vmatpush1.bf16.msra.mxu0 %v2958
    %3747 = vmatprep.subr.bf16.mxu0 %v2975
    %3748 = vmatpush1.bf16.msra.mxu0 %v2974
    %3749 = vmatprep.subr.bf16.mxu0 %v2991
    %3750 = vmatpush1.bf16.msra.mxu0 %v2990
    %3751 = vmatprep.mubr.bf16.mxu0 %v357
    %3752 = vmatmul.mubr.bf16.gmra.mrb[0].mxu0 %v356
    %v3753 = vpop.f32.mrb[0].mxu0
    %v3754 = vadd.f32 %v3713, %v3753
    %v3755 = vpop.f32.mrb[0].mxu0
    %v3756 = vadd.f32 %v3715, %v3755
    %v3757 = vpop.f32.mrb[0].mxu0
    %v3758 = vpop.f32.mrb[0].mxu0
    %3759 = vdwg.mxu0
    %3760 = vmatprep.subr.bf16.mxu0 %v2497
    %3761 = vmatpush1.bf16.msra.mxu0 %v2496
    %3762 = vmatprep.subr.bf16.mxu0 %v2513
    %3763 = vmatpush1.bf16.msra.mxu0 %v2512
    %3764 = vmatprep.subr.bf16.mxu0 %v2529
    %3765 = vmatpush1.bf16.msra.mxu0 %v2528
    %3766 = vmatprep.subr.bf16.mxu0 %v2545
    %3767 = vmatpush1.bf16.msra.mxu0 %v2544
    %3768 = vmatprep.subr.bf16.mxu0 %v2561
    %3769 = vmatpush1.bf16.msra.mxu0 %v2560
    %3770 = vmatprep.subr.bf16.mxu0 %v2577
    %3771 = vmatpush1.bf16.msra.mxu0 %v2576
    %3772 = vmatprep.subr.bf16.mxu0 %v2593
    %3773 = vmatpush1.bf16.msra.mxu0 %v2592
    %3774 = vmatprep.subr.bf16.mxu0 %v2609
    %3775 = vmatpush1.bf16.msra.mxu0 %v2608
    %3776 = vmatprep.subr.bf16.mxu0 %v2625
    %3777 = vmatpush1.bf16.msra.mxu0 %v2624
    %3778 = vmatprep.subr.bf16.mxu0 %v2641
    %3779 = vmatpush1.bf16.msra.mxu0 %v2640
    %3780 = vmatprep.subr.bf16.mxu0 %v2657
    %3781 = vmatpush1.bf16.msra.mxu0 %v2656
    %3782 = vmatprep.subr.bf16.mxu0 %v2673
    %3783 = vmatpush1.bf16.msra.mxu0 %v2672
    %3784 = vmatprep.subr.bf16.mxu0 %v2689
    %3785 = vmatpush1.bf16.msra.mxu0 %v2688
    %3786 = vmatprep.subr.bf16.mxu0 %v2705
    %3787 = vmatpush1.bf16.msra.mxu0 %v2704
    %3788 = vmatprep.subr.bf16.mxu0 %v2721
    %3789 = vmatpush1.bf16.msra.mxu0 %v2720
    %3790 = vmatprep.subr.bf16.mxu0 %v2737
    %3791 = vmatpush1.bf16.msra.mxu0 %v2736
    %3792 = vmatprep.mubr.bf16.mxu0 %v355
    %3793 = vmatmul.mubr.bf16.gmra.mrb[0].mxu0 %v354
    %v3794 = vpop.f32.mrb[0].mxu0
    %v3795 = vadd.f32 %v901, %v3794
    %v3796 = vpop.f32.mrb[0].mxu0
    %v3797 = vadd.f32 %v905, %v3796
    %v3798 = vpop.f32.mrb[0].mxu0
    %v3799 = vpop.f32.mrb[0].mxu0
    %3800 = vdwg.mxu0
    %3801 = vmatprep.subr.bf16.mxu0 %v2753
    %3802 = vmatpush1.bf16.msra.mxu0 %v2752
    %3803 = vmatprep.subr.bf16.mxu0 %v2769
    %3804 = vmatpush1.bf16.msra.mxu0 %v2768
    %3805 = vmatprep.subr.bf16.mxu0 %v2785
    %3806 = vmatpush1.bf16.msra.mxu0 %v2784
    %3807 = vmatprep.subr.bf16.mxu0 %v2801
    %3808 = vmatpush1.bf16.msra.mxu0 %v2800
    %3809 = vmatprep.subr.bf16.mxu0 %v2817
    %3810 = vmatpush1.bf16.msra.mxu0 %v2816
    %3811 = vmatprep.subr.bf16.mxu0 %v2833
    %3812 = vmatpush1.bf16.msra.mxu0 %v2832
    %3813 = vmatprep.subr.bf16.mxu0 %v2849
    %3814 = vmatpush1.bf16.msra.mxu0 %v2848
    %3815 = vmatprep.subr.bf16.mxu0 %v2865
    %3816 = vmatpush1.bf16.msra.mxu0 %v2864
    %3817 = vmatprep.subr.bf16.mxu0 %v2881
    %3818 = vmatpush1.bf16.msra.mxu0 %v2880
    %3819 = vmatprep.subr.bf16.mxu0 %v2897
    %3820 = vmatpush1.bf16.msra.mxu0 %v2896
    %3821 = vmatprep.subr.bf16.mxu0 %v2913
    %3822 = vmatpush1.bf16.msra.mxu0 %v2912
    %3823 = vmatprep.subr.bf16.mxu0 %v2929
    %3824 = vmatpush1.bf16.msra.mxu0 %v2928
    %3825 = vmatprep.subr.bf16.mxu0 %v2945
    %3826 = vmatpush1.bf16.msra.mxu0 %v2944
    %3827 = vmatprep.subr.bf16.mxu0 %v2961
    %3828 = vmatpush1.bf16.msra.mxu0 %v2960
    %3829 = vmatprep.subr.bf16.mxu0 %v2977
    %3830 = vmatpush1.bf16.msra.mxu0 %v2976
    %3831 = vmatprep.subr.bf16.mxu0 %v2993
    %3832 = vmatpush1.bf16.msra.mxu0 %v2992
    %3833 = vmatprep.mubr.bf16.mxu0 %v357
    %3834 = vmatmul.mubr.bf16.gmra.mrb[0].mxu0 %v356
    %v3835 = vpop.f32.mrb[0].mxu0
    %v3836 = vadd.f32 %v3795, %v3835
    %v3837 = vpop.f32.mrb[0].mxu0
    %v3838 = vadd.f32 %v3797, %v3837
    %v3839 = vpop.f32.mrb[0].mxu0
    %v3840 = vpop.f32.mrb[0].mxu0
    %3841 = vdwg.mxu0
    %3842 = vmatprep.subr.bf16.mxu0 %v2499
    %3843 = vmatpush1.bf16.msra.mxu0 %v2498
    %3844 = vmatprep.subr.bf16.mxu0 %v2515
    %3845 = vmatpush1.bf16.msra.mxu0 %v2514
    %3846 = vmatprep.subr.bf16.mxu0 %v2531
    %3847 = vmatpush1.bf16.msra.mxu0 %v2530
    %3848 = vmatprep.subr.bf16.mxu0 %v2547
    %3849 = vmatpush1.bf16.msra.mxu0 %v2546
    %3850 = vmatprep.subr.bf16.mxu0 %v2563
    %3851 = vmatpush1.bf16.msra.mxu0 %v2562
    %3852 = vmatprep.subr.bf16.mxu0 %v2579
    %3853 = vmatpush1.bf16.msra.mxu0 %v2578
    %3854 = vmatprep.subr.bf16.mxu0 %v2595
    %3855 = vmatpush1.bf16.msra.mxu0 %v2594
    %3856 = vmatprep.subr.bf16.mxu0 %v2611
    %3857 = vmatpush1.bf16.msra.mxu0 %v2610
    %3858 = vmatprep.subr.bf16.mxu0 %v2627
    %3859 = vmatpush1.bf16.msra.mxu0 %v2626
    %3860 = vmatprep.subr.bf16.mxu0 %v2643
    %3861 = vmatpush1.bf16.msra.mxu0 %v2642
    %3862 = vmatprep.subr.bf16.mxu0 %v2659
    %3863 = vmatpush1.bf16.msra.mxu0 %v2658
    %3864 = vmatprep.subr.bf16.mxu0 %v2675
    %3865 = vmatpush1.bf16.msra.mxu0 %v2674
    %3866 = vmatprep.subr.bf16.mxu0 %v2691
    %3867 = vmatpush1.bf16.msra.mxu0 %v2690
    %3868 = vmatprep.subr.bf16.mxu0 %v2707
    %3869 = vmatpush1.bf16.msra.mxu0 %v2706
    %3870 = vmatprep.subr.bf16.mxu0 %v2723
    %3871 = vmatpush1.bf16.msra.mxu0 %v2722
    %3872 = vmatprep.subr.bf16.mxu0 %v2739
    %3873 = vmatpush1.bf16.msra.mxu0 %v2738
    %3874 = vmatprep.mubr.bf16.mxu0 %v355
    %3875 = vmatmul.mubr.bf16.gmra.mrb[0].mxu0 %v354
    %v3876 = vpop.f32.mrb[0].mxu0
    %v3877 = vadd.f32 %v909, %v3876
    %v3878 = vpop.f32.mrb[0].mxu0
    %v3879 = vadd.f32 %v913, %v3878
    %v3880 = vpop.f32.mrb[0].mxu0
    %v3881 = vpop.f32.mrb[0].mxu0
    %3882 = vdwg.mxu0
    %3883 = vmatprep.subr.bf16.mxu0 %v2755
    %3884 = vmatpush1.bf16.msra.mxu0 %v2754
    %3885 = vmatprep.subr.bf16.mxu0 %v2771
    %3886 = vmatpush1.bf16.msra.mxu0 %v2770
    %3887 = vmatprep.subr.bf16.mxu0 %v2787
    %3888 = vmatpush1.bf16.msra.mxu0 %v2786
    %3889 = vmatprep.subr.bf16.mxu0 %v2803
    %3890 = vmatpush1.bf16.msra.mxu0 %v2802
    %3891 = vmatprep.subr.bf16.mxu0 %v2819
    %3892 = vmatpush1.bf16.msra.mxu0 %v2818
    %3893 = vmatprep.subr.bf16.mxu0 %v2835
    %3894 = vmatpush1.bf16.msra.mxu0 %v2834
    %3895 = vmatprep.subr.bf16.mxu0 %v2851
    %3896 = vmatpush1.bf16.msra.mxu0 %v2850
    %3897 = vmatprep.subr.bf16.mxu0 %v2867
    %3898 = vmatpush1.bf16.msra.mxu0 %v2866
    %3899 = vmatprep.subr.bf16.mxu0 %v2883
    %3900 = vmatpush1.bf16.msra.mxu0 %v2882
    %3901 = vmatprep.subr.bf16.mxu0 %v2899
    %3902 = vmatpush1.bf16.msra.mxu0 %v2898
    %3903 = vmatprep.subr.bf16.mxu0 %v2915
    %3904 = vmatpush1.bf16.msra.mxu0 %v2914
    %3905 = vmatprep.subr.bf16.mxu0 %v2931
    %3906 = vmatpush1.bf16.msra.mxu0 %v2930
    %3907 = vmatprep.subr.bf16.mxu0 %v2947
    %3908 = vmatpush1.bf16.msra.mxu0 %v2946
    %3909 = vmatprep.subr.bf16.mxu0 %v2963
    %3910 = vmatpush1.bf16.msra.mxu0 %v2962
    %3911 = vmatprep.subr.bf16.mxu0 %v2979
    %3912 = vmatpush1.bf16.msra.mxu0 %v2978
    %3913 = vmatprep.subr.bf16.mxu0 %v2995
    %3914 = vmatpush1.bf16.msra.mxu0 %v2994
    %3915 = vmatprep.mubr.bf16.mxu0 %v357
    %3916 = vmatmul.mubr.bf16.gmra.mrb[0].mxu0 %v356
    %v3917 = vpop.f32.mrb[0].mxu0
    %v3918 = vadd.f32 %v3877, %v3917
    %v3919 = vpop.f32.mrb[0].mxu0
    %v3920 = vadd.f32 %v3879, %v3919
    %v3921 = vpop.f32.mrb[0].mxu0
    %v3922 = vpop.f32.mrb[0].mxu0
    %3923 = vdwg.mxu0
    %3924 = vmatprep.subr.bf16.mxu0 %v2501
    %3925 = vmatpush1.bf16.msra.mxu0 %v2500
    %3926 = vmatprep.subr.bf16.mxu0 %v2517
    %3927 = vmatpush1.bf16.msra.mxu0 %v2516
    %3928 = vmatprep.subr.bf16.mxu0 %v2533
    %3929 = vmatpush1.bf16.msra.mxu0 %v2532
    %3930 = vmatprep.subr.bf16.mxu0 %v2549
    %3931 = vmatpush1.bf16.msra.mxu0 %v2548
    %3932 = vmatprep.subr.bf16.mxu0 %v2565
    %3933 = vmatpush1.bf16.msra.mxu0 %v2564
    %3934 = vmatprep.subr.bf16.mxu0 %v2581
    %3935 = vmatpush1.bf16.msra.mxu0 %v2580
    %3936 = vmatprep.subr.bf16.mxu0 %v2597
    %3937 = vmatpush1.bf16.msra.mxu0 %v2596
    %3938 = vmatprep.subr.bf16.mxu0 %v2613
    %3939 = vmatpush1.bf16.msra.mxu0 %v2612
    %3940 = vmatprep.subr.bf16.mxu0 %v2629
    %3941 = vmatpush1.bf16.msra.mxu0 %v2628
    %3942 = vmatprep.subr.bf16.mxu0 %v2645
    %3943 = vmatpush1.bf16.msra.mxu0 %v2644
    %3944 = vmatprep.subr.bf16.mxu0 %v2661
    %3945 = vmatpush1.bf16.msra.mxu0 %v2660
    %3946 = vmatprep.subr.bf16.mxu0 %v2677
    %3947 = vmatpush1.bf16.msra.mxu0 %v2676
    %3948 = vmatprep.subr.bf16.mxu0 %v2693
    %3949 = vmatpush1.bf16.msra.mxu0 %v2692
    %3950 = vmatprep.subr.bf16.mxu0 %v2709
    %3951 = vmatpush1.bf16.msra.mxu0 %v2708
    %3952 = vmatprep.subr.bf16.mxu0 %v2725
    %3953 = vmatpush1.bf16.msra.mxu0 %v2724
    %3954 = vmatprep.subr.bf16.mxu0 %v2741
    %3955 = vmatpush1.bf16.msra.mxu0 %v2740
    %3956 = vmatprep.mubr.bf16.mxu0 %v355
    %3957 = vmatmul.mubr.bf16.gmra.mrb[0].mxu0 %v354
    %v3958 = vpop.f32.mrb[0].mxu0
    %v3959 = vadd.f32 %v917, %v3958
    %v3960 = vpop.f32.mrb[0].mxu0
    %v3961 = vadd.f32 %v921, %v3960
    %v3962 = vpop.f32.mrb[0].mxu0
    %v3963 = vpop.f32.mrb[0].mxu0
    %3964 = vdwg.mxu0
    %3965 = vmatprep.subr.bf16.mxu0 %v2757
    %3966 = vmatpush1.bf16.msra.mxu0 %v2756
    %3967 = vmatprep.subr.bf16.mxu0 %v2773
    %3968 = vmatpush1.bf16.msra.mxu0 %v2772
    %3969 = vmatprep.subr.bf16.mxu0 %v2789
    %3970 = vmatpush1.bf16.msra.mxu0 %v2788
    %3971 = vmatprep.subr.bf16.mxu0 %v2805
    %3972 = vmatpush1.bf16.msra.mxu0 %v2804
    %3973 = vmatprep.subr.bf16.mxu0 %v2821
    %3974 = vmatpush1.bf16.msra.mxu0 %v2820
    %3975 = vmatprep.subr.bf16.mxu0 %v2837
    %3976 = vmatpush1.bf16.msra.mxu0 %v2836
    %3977 = vmatprep.subr.bf16.mxu0 %v2853
    %3978 = vmatpush1.bf16.msra.mxu0 %v2852
    %3979 = vmatprep.subr.bf16.mxu0 %v2869
    %3980 = vmatpush1.bf16.msra.mxu0 %v2868
    %3981 = vmatprep.subr.bf16.mxu0 %v2885
    %3982 = vmatpush1.bf16.msra.mxu0 %v2884
    %3983 = vmatprep.subr.bf16.mxu0 %v2901
    %3984 = vmatpush1.bf16.msra.mxu0 %v2900
    %3985 = vmatprep.subr.bf16.mxu0 %v2917
    %3986 = vmatpush1.bf16.msra.mxu0 %v2916
    %3987 = vmatprep.subr.bf16.mxu0 %v2933
    %3988 = vmatpush1.bf16.msra.mxu0 %v2932
    %3989 = vmatprep.subr.bf16.mxu0 %v2949
    %3990 = vmatpush1.bf16.msra.mxu0 %v2948
    %3991 = vmatprep.subr.bf16.mxu0 %v2965
    %3992 = vmatpush1.bf16.msra.mxu0 %v2964
    %3993 = vmatprep.subr.bf16.mxu0 %v2981
    %3994 = vmatpush1.bf16.msra.mxu0 %v2980
    %3995 = vmatprep.subr.bf16.mxu0 %v2997
    %3996 = vmatpush1.bf16.msra.mxu0 %v2996
    %3997 = vmatprep.mubr.bf16.mxu0 %v357
    %3998 = vmatmul.mubr.bf16.gmra.mrb[0].mxu0 %v356
    %v3999 = vpop.f32.mrb[0].mxu0
    %v4000 = vadd.f32 %v3959, %v3999
    %v4001 = vpop.f32.mrb[0].mxu0
    %v4002 = vadd.f32 %v3961, %v4001
    %v4003 = vpop.f32.mrb[0].mxu0
    %v4004 = vpop.f32.mrb[0].mxu0
    %4005 = vdwg.mxu0
    %4006 = vmatprep.subr.bf16.mxu0 %v2503
    %4007 = vmatpush1.bf16.msra.mxu0 %v2502
    %4008 = vmatprep.subr.bf16.mxu0 %v2519
    %4009 = vmatpush1.bf16.msra.mxu0 %v2518
    %4010 = vmatprep.subr.bf16.mxu0 %v2535
    %4011 = vmatpush1.bf16.msra.mxu0 %v2534
    %4012 = vmatprep.subr.bf16.mxu0 %v2551
    %4013 = vmatpush1.bf16.msra.mxu0 %v2550
    %4014 = vmatprep.subr.bf16.mxu0 %v2567
    %4015 = vmatpush1.bf16.msra.mxu0 %v2566
    %4016 = vmatprep.subr.bf16.mxu0 %v2583
    %4017 = vmatpush1.bf16.msra.mxu0 %v2582
    %4018 = vmatprep.subr.bf16.mxu0 %v2599
    %4019 = vmatpush1.bf16.msra.mxu0 %v2598
    %4020 = vmatprep.subr.bf16.mxu0 %v2615
    %4021 = vmatpush1.bf16.msra.mxu0 %v2614
    %4022 = vmatprep.subr.bf16.mxu0 %v2631
    %4023 = vmatpush1.bf16.msra.mxu0 %v2630
    %4024 = vmatprep.subr.bf16.mxu0 %v2647
    %4025 = vmatpush1.bf16.msra.mxu0 %v2646
    %4026 = vmatprep.subr.bf16.mxu0 %v2663
    %4027 = vmatpush1.bf16.msra.mxu0 %v2662
    %4028 = vmatprep.subr.bf16.mxu0 %v2679
    %4029 = vmatpush1.bf16.msra.mxu0 %v2678
    %4030 = vmatprep.subr.bf16.mxu0 %v2695
    %4031 = vmatpush1.bf16.msra.mxu0 %v2694
    %4032 = vmatprep.subr.bf16.mxu0 %v2711
    %4033 = vmatpush1.bf16.msra.mxu0 %v2710
    %4034 = vmatprep.subr.bf16.mxu0 %v2727
    %4035 = vmatpush1.bf16.msra.mxu0 %v2726
    %4036 = vmatprep.subr.bf16.mxu0 %v2743
    %4037 = vmatpush1.bf16.msra.mxu0 %v2742
    %4038 = vmatprep.mubr.bf16.mxu0 %v355
    %4039 = vmatmul.mubr.bf16.gmra.mrb[0].mxu0 %v354
    %v4040 = vpop.f32.mrb[0].mxu0
    %v4041 = vadd.f32 %v925, %v4040
    %v4042 = vpop.f32.mrb[0].mxu0
    %v4043 = vadd.f32 %v929, %v4042
    %v4044 = vpop.f32.mrb[0].mxu0
    %v4045 = vpop.f32.mrb[0].mxu0
    %4046 = vdwg.mxu0
    %4047 = vmatprep.subr.bf16.mxu0 %v2759
    %4048 = vmatpush1.bf16.msra.mxu0 %v2758
    %4049 = vmatprep.subr.bf16.mxu0 %v2775
    %4050 = vmatpush1.bf16.msra.mxu0 %v2774
    %4051 = vmatprep.subr.bf16.mxu0 %v2791
    %4052 = vmatpush1.bf16.msra.mxu0 %v2790
    %4053 = vmatprep.subr.bf16.mxu0 %v2807
    %4054 = vmatpush1.bf16.msra.mxu0 %v2806
    %4055 = vmatprep.subr.bf16.mxu0 %v2823
    %4056 = vmatpush1.bf16.msra.mxu0 %v2822
    %4057 = vmatprep.subr.bf16.mxu0 %v2839
    %4058 = vmatpush1.bf16.msra.mxu0 %v2838
    %4059 = vmatprep.subr.bf16.mxu0 %v2855
    %4060 = vmatpush1.bf16.msra.mxu0 %v2854
    %4061 = vmatprep.subr.bf16.mxu0 %v2871
    %4062 = vmatpush1.bf16.msra.mxu0 %v2870
    %4063 = vmatprep.subr.bf16.mxu0 %v2887
    %4064 = vmatpush1.bf16.msra.mxu0 %v2886
    %4065 = vmatprep.subr.bf16.mxu0 %v2903
    %4066 = vmatpush1.bf16.msra.mxu0 %v2902
    %4067 = vmatprep.subr.bf16.mxu0 %v2919
    %4068 = vmatpush1.bf16.msra.mxu0 %v2918
    %4069 = vmatprep.subr.bf16.mxu0 %v2935
    %4070 = vmatpush1.bf16.msra.mxu0 %v2934
    %4071 = vmatprep.subr.bf16.mxu0 %v2951
    %4072 = vmatpush1.bf16.msra.mxu0 %v2950
    %4073 = vmatprep.subr.bf16.mxu0 %v2967
    %4074 = vmatpush1.bf16.msra.mxu0 %v2966
    %4075 = vmatprep.subr.bf16.mxu0 %v2983
    %4076 = vmatpush1.bf16.msra.mxu0 %v2982
    %4077 = vmatprep.subr.bf16.mxu0 %v2999
    %4078 = vmatpush1.bf16.msra.mxu0 %v2998
    %4079 = vmatprep.mubr.bf16.mxu0 %v357
    %4080 = vmatmul.mubr.bf16.gmra.mrb[0].mxu0 %v356
    %v4081 = vpop.f32.mrb[0].mxu0
    %v4082 = vadd.f32 %v4041, %v4081
    %v4083 = vpop.f32.mrb[0].mxu0
    %v4084 = vadd.f32 %v4043, %v4083
    %v4085 = vpop.f32.mrb[0].mxu0
    %v4086 = vpop.f32.mrb[0].mxu0
    %4087 = vdwg.mxu0
    %4088 = vmatprep.subr.bf16.mxu0 %v2505
    %4089 = vmatpush1.bf16.msra.mxu0 %v2504
    %4090 = vmatprep.subr.bf16.mxu0 %v2521
    %4091 = vmatpush1.bf16.msra.mxu0 %v2520
    %4092 = vmatprep.subr.bf16.mxu0 %v2537
    %4093 = vmatpush1.bf16.msra.mxu0 %v2536
    %4094 = vmatprep.subr.bf16.mxu0 %v2553
    %4095 = vmatpush1.bf16.msra.mxu0 %v2552
    %4096 = vmatprep.subr.bf16.mxu0 %v2569
    %4097 = vmatpush1.bf16.msra.mxu0 %v2568
    %4098 = vmatprep.subr.bf16.mxu0 %v2585
    %4099 = vmatpush1.bf16.msra.mxu0 %v2584
    %4100 = vmatprep.subr.bf16.mxu0 %v2601
    %4101 = vmatpush1.bf16.msra.mxu0 %v2600
    %4102 = vmatprep.subr.bf16.mxu0 %v2617
    %4103 = vmatpush1.bf16.msra.mxu0 %v2616
    %4104 = vmatprep.subr.bf16.mxu0 %v2633
    %4105 = vmatpush1.bf16.msra.mxu0 %v2632
    %4106 = vmatprep.subr.bf16.mxu0 %v2649
    %4107 = vmatpush1.bf16.msra.mxu0 %v2648
    %4108 = vmatprep.subr.bf16.mxu0 %v2665
    %4109 = vmatpush1.bf16.msra.mxu0 %v2664
    %4110 = vmatprep.subr.bf16.mxu0 %v2681
    %4111 = vmatpush1.bf16.msra.mxu0 %v2680
    %4112 = vmatprep.subr.bf16.mxu0 %v2697
    %4113 = vmatpush1.bf16.msra.mxu0 %v2696
    %4114 = vmatprep.subr.bf16.mxu0 %v2713
    %4115 = vmatpush1.bf16.msra.mxu0 %v2712
    %4116 = vmatprep.subr.bf16.mxu0 %v2729
    %4117 = vmatpush1.bf16.msra.mxu0 %v2728
    %4118 = vmatprep.subr.bf16.mxu0 %v2745
    %4119 = vmatpush1.bf16.msra.mxu0 %v2744
    %4120 = vmatprep.mubr.bf16.mxu0 %v355
    %4121 = vmatmul.mubr.bf16.gmra.mrb[0].mxu0 %v354
    %v4122 = vpop.f32.mrb[0].mxu0
    %v4123 = vadd.f32 %v933, %v4122
    %v4124 = vpop.f32.mrb[0].mxu0
    %v4125 = vadd.f32 %v937, %v4124
    %v4126 = vpop.f32.mrb[0].mxu0
    %v4127 = vpop.f32.mrb[0].mxu0
    %4128 = vdwg.mxu0
    %4129 = vmatprep.subr.bf16.mxu0 %v2761
    %4130 = vmatpush1.bf16.msra.mxu0 %v2760
    %4131 = vmatprep.subr.bf16.mxu0 %v2777
    %4132 = vmatpush1.bf16.msra.mxu0 %v2776
    %4133 = vmatprep.subr.bf16.mxu0 %v2793
    %4134 = vmatpush1.bf16.msra.mxu0 %v2792
    %4135 = vmatprep.subr.bf16.mxu0 %v2809
    %4136 = vmatpush1.bf16.msra.mxu0 %v2808
    %4137 = vmatprep.subr.bf16.mxu0 %v2825
    %4138 = vmatpush1.bf16.msra.mxu0 %v2824
    %4139 = vmatprep.subr.bf16.mxu0 %v2841
    %4140 = vmatpush1.bf16.msra.mxu0 %v2840
    %4141 = vmatprep.subr.bf16.mxu0 %v2857
    %4142 = vmatpush1.bf16.msra.mxu0 %v2856
    %4143 = vmatprep.subr.bf16.mxu0 %v2873
    %4144 = vmatpush1.bf16.msra.mxu0 %v2872
    %4145 = vmatprep.subr.bf16.mxu0 %v2889
    %4146 = vmatpush1.bf16.msra.mxu0 %v2888
    %4147 = vmatprep.subr.bf16.mxu0 %v2905
    %4148 = vmatpush1.bf16.msra.mxu0 %v2904
    %4149 = vmatprep.subr.bf16.mxu0 %v2921
    %4150 = vmatpush1.bf16.msra.mxu0 %v2920
    %4151 = vmatprep.subr.bf16.mxu0 %v2937
    %4152 = vmatpush1.bf16.msra.mxu0 %v2936
    %4153 = vmatprep.subr.bf16.mxu0 %v2953
    %4154 = vmatpush1.bf16.msra.mxu0 %v2952
    %4155 = vmatprep.subr.bf16.mxu0 %v2969
    %4156 = vmatpush1.bf16.msra.mxu0 %v2968
    %4157 = vmatprep.subr.bf16.mxu0 %v2985
    %4158 = vmatpush1.bf16.msra.mxu0 %v2984
    %4159 = vmatprep.subr.bf16.mxu0 %v3001
    %4160 = vmatpush1.bf16.msra.mxu0 %v3000
    %4161 = vmatprep.mubr.bf16.mxu0 %v357
    %4162 = vmatmul.mubr.bf16.gmra.mrb[0].mxu0 %v356
    %v4163 = vpop.f32.mrb[0].mxu0
    %v4164 = vadd.f32 %v4123, %v4163
    %v4165 = vpop.f32.mrb[0].mxu0
    %v4166 = vadd.f32 %v4125, %v4165
    %v4167 = vpop.f32.mrb[0].mxu0
    %v4168 = vpop.f32.mrb[0].mxu0
    %4169 = vdwg.mxu0
    %v4170 = vpack.c.bf16 %v3590, %v3590
    %v4171 = vpack.c.bf16 %v3592, %v3592
    %v4172 = vpack.c.bf16 %v3672, %v3672
    %v4173 = vpack.c.bf16 %v3674, %v3674
    %v4174 = vpack.c.bf16 %v3754, %v3754
    %v4175 = vpack.c.bf16 %v3756, %v3756
    %v4176 = vpack.c.bf16 %v3836, %v3836
    %v4177 = vpack.c.bf16 %v3838, %v3838
    %v4178 = vpack.c.bf16 %v3918, %v3918
    %v4179 = vpack.c.bf16 %v3920, %v3920
    %v4180 = vpack.c.bf16 %v4000, %v4000
    %v4181 = vpack.c.bf16 %v4002, %v4002
    %v4182 = vpack.c.bf16 %v4082, %v4082
    %v4183 = vpack.c.bf16 %v4084, %v4084
    %v4184 = vpack.c.bf16 %v4164, %v4164
    %v4185 = vpack.c.bf16 %v4166, %v4166
    %v4186 = vld [vmem:[%s7] sm:$0xf]
    %v4187 = vld [vmem:[%s7 + $0x4] sm:$0xf]
    %v4188 = vld [vmem:[%s7 + $0x8] sm:$0xf]
    %v4189 = vld [vmem:[%s7 + $0xc] sm:$0xf]
    %v4190 = vld [vmem:[%s7 + $0x10] sm:$0xf]
    %v4191 = vld [vmem:[%s7 + $0x14] sm:$0xf]
    %v4192 = vld [vmem:[%s7 + $0x18] sm:$0xf]
    %v4193 = vld [vmem:[%s7 + $0x1c] sm:$0xf]
    %v4194 = vld [vmem:[%s7 + $0x20] sm:$0xf]
    %v4195 = vld [vmem:[%s7 + $0x24] sm:$0xf]
    %v4196 = vld [vmem:[%s7 + $0x28] sm:$0xf]
    %v4197 = vld [vmem:[%s7 + $0x2c] sm:$0xf]
    %v4198 = vld [vmem:[%s7 + $0x30] sm:$0xf]
    %v4199 = vld [vmem:[%s7 + $0x34] sm:$0xf]
    %v4200 = vld [vmem:[%s7 + $0x38] sm:$0xf]
    %v4201 = vld [vmem:[%s7 + $0x3c] sm:$0xf]
    %v4202 = vld [vmem:[%s7 + $0x40] sm:$0xf]
    %v4203 = vld [vmem:[%s7 + $0x44] sm:$0xf]
    %v4204 = vld [vmem:[%s7 + $0x48] sm:$0xf]
    %v4205 = vld [vmem:[%s7 + $0x4c] sm:$0xf]
    %v4206 = vld [vmem:[%s7 + $0x50] sm:$0xf]
    %v4207 = vld [vmem:[%s7 + $0x54] sm:$0xf]
    %v4208 = vld [vmem:[%s7 + $0x58] sm:$0xf]
    %v4209 = vld [vmem:[%s7 + $0x5c] sm:$0xf]
    %v4210 = vld [vmem:[%s7 + $0x60] sm:$0xf]
    %v4211 = vld [vmem:[%s7 + $0x64] sm:$0xf]
    %v4212 = vld [vmem:[%s7 + $0x68] sm:$0xf]
    %v4213 = vld [vmem:[%s7 + $0x6c] sm:$0xf]
    %v4214 = vld [vmem:[%s7 + $0x70] sm:$0xf]
    %v4215 = vld [vmem:[%s7 + $0x74] sm:$0xf]
    %v4216 = vld [vmem:[%s7 + $0x78] sm:$0xf]
    %v4217 = vld [vmem:[%s7 + $0x7c] sm:$0xf]
    %v4218 = vld [vmem:[%s7 + $0x80] sm:$0xf]
    %v4219 = vld [vmem:[%s7 + $0x84] sm:$0xf]
    %v4220 = vld [vmem:[%s7 + $0x88] sm:$0xf]
    %v4221 = vld [vmem:[%s7 + $0x8c] sm:$0xf]
    %v4222 = vld [vmem:[%s7 + $0x90] sm:$0xf]
    %v4223 = vld [vmem:[%s7 + $0x94] sm:$0xf]
    %v4224 = vld [vmem:[%s7 + $0x98] sm:$0xf]
    %v4225 = vld [vmem:[%s7 + $0x9c] sm:$0xf]
    %v4226 = vld [vmem:[%s7 + $0xa0] sm:$0xf]
    %v4227 = vld [vmem:[%s7 + $0xa4] sm:$0xf]
    %v4228 = vld [vmem:[%s7 + $0xa8] sm:$0xf]
    %v4229 = vld [vmem:[%s7 + $0xac] sm:$0xf]
    %v4230 = vld [vmem:[%s7 + $0xb0] sm:$0xf]
    %v4231 = vld [vmem:[%s7 + $0xb4] sm:$0xf]
    %v4232 = vld [vmem:[%s7 + $0xb8] sm:$0xf]
    %v4233 = vld [vmem:[%s7 + $0xbc] sm:$0xf]
    %v4234 = vld [vmem:[%s7 + $0xc0] sm:$0xf]
    %v4235 = vld [vmem:[%s7 + $0xc4] sm:$0xf]
    %v4236 = vld [vmem:[%s7 + $0xc8] sm:$0xf]
    %v4237 = vld [vmem:[%s7 + $0xcc] sm:$0xf]
    %v4238 = vld [vmem:[%s7 + $0xd0] sm:$0xf]
    %v4239 = vld [vmem:[%s7 + $0xd4] sm:$0xf]
    %v4240 = vld [vmem:[%s7 + $0xd8] sm:$0xf]
    %v4241 = vld [vmem:[%s7 + $0xdc] sm:$0xf]
    %v4242 = vld [vmem:[%s7 + $0xe0] sm:$0xf]
    %v4243 = vld [vmem:[%s7 + $0xe4] sm:$0xf]
    %v4244 = vld [vmem:[%s7 + $0xe8] sm:$0xf]
    %v4245 = vld [vmem:[%s7 + $0xec] sm:$0xf]
    %v4246 = vld [vmem:[%s7 + $0xf0] sm:$0xf]
    %v4247 = vld [vmem:[%s7 + $0xf4] sm:$0xf]
    %v4248 = vld [vmem:[%s7 + $0xf8] sm:$0xf]
    %v4249 = vld [vmem:[%s7 + $0xfc] sm:$0xf]
    %v4250 = vld [vmem:[%s7 + $0x100] sm:$0xf]
    %v4251 = vld [vmem:[%s7 + $0x104] sm:$0xf]
    %v4252 = vld [vmem:[%s7 + $0x108] sm:$0xf]
    %v4253 = vld [vmem:[%s7 + $0x10c] sm:$0xf]
    %v4254 = vld [vmem:[%s7 + $0x110] sm:$0xf]
    %v4255 = vld [vmem:[%s7 + $0x114] sm:$0xf]
    %v4256 = vld [vmem:[%s7 + $0x118] sm:$0xf]
    %v4257 = vld [vmem:[%s7 + $0x11c] sm:$0xf]
    %v4258 = vld [vmem:[%s7 + $0x120] sm:$0xf]
    %v4259 = vld [vmem:[%s7 + $0x124] sm:$0xf]
    %v4260 = vld [vmem:[%s7 + $0x128] sm:$0xf]
    %v4261 = vld [vmem:[%s7 + $0x12c] sm:$0xf]
    %v4262 = vld [vmem:[%s7 + $0x130] sm:$0xf]
    %v4263 = vld [vmem:[%s7 + $0x134] sm:$0xf]
    %v4264 = vld [vmem:[%s7 + $0x138] sm:$0xf]
    %v4265 = vld [vmem:[%s7 + $0x13c] sm:$0xf]
    %v4266 = vld [vmem:[%s7 + $0x140] sm:$0xf]
    %v4267 = vld [vmem:[%s7 + $0x144] sm:$0xf]
    %v4268 = vld [vmem:[%s7 + $0x148] sm:$0xf]
    %v4269 = vld [vmem:[%s7 + $0x14c] sm:$0xf]
    %v4270 = vld [vmem:[%s7 + $0x150] sm:$0xf]
    %v4271 = vld [vmem:[%s7 + $0x154] sm:$0xf]
    %v4272 = vld [vmem:[%s7 + $0x158] sm:$0xf]
    %v4273 = vld [vmem:[%s7 + $0x15c] sm:$0xf]
    %v4274 = vld [vmem:[%s7 + $0x160] sm:$0xf]
    %v4275 = vld [vmem:[%s7 + $0x164] sm:$0xf]
    %v4276 = vld [vmem:[%s7 + $0x168] sm:$0xf]
    %v4277 = vld [vmem:[%s7 + $0x16c] sm:$0xf]
    %v4278 = vld [vmem:[%s7 + $0x170] sm:$0xf]
    %v4279 = vld [vmem:[%s7 + $0x174] sm:$0xf]
    %v4280 = vld [vmem:[%s7 + $0x178] sm:$0xf]
    %v4281 = vld [vmem:[%s7 + $0x17c] sm:$0xf]
    %v4282 = vld [vmem:[%s7 + $0x180] sm:$0xf]
    %v4283 = vld [vmem:[%s7 + $0x184] sm:$0xf]
    %v4284 = vld [vmem:[%s7 + $0x188] sm:$0xf]
    %v4285 = vld [vmem:[%s7 + $0x18c] sm:$0xf]
    %v4286 = vld [vmem:[%s7 + $0x190] sm:$0xf]
    %v4287 = vld [vmem:[%s7 + $0x194] sm:$0xf]
    %v4288 = vld [vmem:[%s7 + $0x198] sm:$0xf]
    %v4289 = vld [vmem:[%s7 + $0x19c] sm:$0xf]
    %v4290 = vld [vmem:[%s7 + $0x1a0] sm:$0xf]
    %v4291 = vld [vmem:[%s7 + $0x1a4] sm:$0xf]
    %v4292 = vld [vmem:[%s7 + $0x1a8] sm:$0xf]
    %v4293 = vld [vmem:[%s7 + $0x1ac] sm:$0xf]
    %v4294 = vld [vmem:[%s7 + $0x1b0] sm:$0xf]
    %v4295 = vld [vmem:[%s7 + $0x1b4] sm:$0xf]
    %v4296 = vld [vmem:[%s7 + $0x1b8] sm:$0xf]
    %v4297 = vld [vmem:[%s7 + $0x1bc] sm:$0xf]
    %v4298 = vld [vmem:[%s7 + $0x1c0] sm:$0xf]
    %v4299 = vld [vmem:[%s7 + $0x1c4] sm:$0xf]
    %v4300 = vld [vmem:[%s7 + $0x1c8] sm:$0xf]
    %v4301 = vld [vmem:[%s7 + $0x1cc] sm:$0xf]
    %v4302 = vld [vmem:[%s7 + $0x1d0] sm:$0xf]
    %v4303 = vld [vmem:[%s7 + $0x1d4] sm:$0xf]
    %v4304 = vld [vmem:[%s7 + $0x1d8] sm:$0xf]
    %v4305 = vld [vmem:[%s7 + $0x1dc] sm:$0xf]
    %v4306 = vld [vmem:[%s7 + $0x1e0] sm:$0xf]
    %v4307 = vld [vmem:[%s7 + $0x1e4] sm:$0xf]
    %v4308 = vld [vmem:[%s7 + $0x1e8] sm:$0xf]
    %v4309 = vld [vmem:[%s7 + $0x1ec] sm:$0xf]
    %v4310 = vld [vmem:[%s7 + $0x1f0] sm:$0xf]
    %v4311 = vld [vmem:[%s7 + $0x1f4] sm:$0xf]
    %v4312 = vld [vmem:[%s7 + $0x1f8] sm:$0xf]
    %v4313 = vld [vmem:[%s7 + $0x1fc] sm:$0xf]
    %v4314 = vld [vmem:[%s7 + $0x200] sm:$0xf]
    %v4315 = vld [vmem:[%s7 + $0x204] sm:$0xf]
    %v4316 = vld [vmem:[%s7 + $0x208] sm:$0xf]
    %v4317 = vld [vmem:[%s7 + $0x20c] sm:$0xf]
    %v4318 = vld [vmem:[%s7 + $0x210] sm:$0xf]
    %v4319 = vld [vmem:[%s7 + $0x214] sm:$0xf]
    %v4320 = vld [vmem:[%s7 + $0x218] sm:$0xf]
    %v4321 = vld [vmem:[%s7 + $0x21c] sm:$0xf]
    %v4322 = vld [vmem:[%s7 + $0x220] sm:$0xf]
    %v4323 = vld [vmem:[%s7 + $0x224] sm:$0xf]
    %v4324 = vld [vmem:[%s7 + $0x228] sm:$0xf]
    %v4325 = vld [vmem:[%s7 + $0x22c] sm:$0xf]
    %v4326 = vld [vmem:[%s7 + $0x230] sm:$0xf]
    %v4327 = vld [vmem:[%s7 + $0x234] sm:$0xf]
    %v4328 = vld [vmem:[%s7 + $0x238] sm:$0xf]
    %v4329 = vld [vmem:[%s7 + $0x23c] sm:$0xf]
    %v4330 = vld [vmem:[%s7 + $0x240] sm:$0xf]
    %v4331 = vld [vmem:[%s7 + $0x244] sm:$0xf]
    %v4332 = vld [vmem:[%s7 + $0x248] sm:$0xf]
    %v4333 = vld [vmem:[%s7 + $0x24c] sm:$0xf]
    %v4334 = vld [vmem:[%s7 + $0x250] sm:$0xf]
    %v4335 = vld [vmem:[%s7 + $0x254] sm:$0xf]
    %v4336 = vld [vmem:[%s7 + $0x258] sm:$0xf]
    %v4337 = vld [vmem:[%s7 + $0x25c] sm:$0xf]
    %v4338 = vld [vmem:[%s7 + $0x260] sm:$0xf]
    %v4339 = vld [vmem:[%s7 + $0x264] sm:$0xf]
    %v4340 = vld [vmem:[%s7 + $0x268] sm:$0xf]
    %v4341 = vld [vmem:[%s7 + $0x26c] sm:$0xf]
    %v4342 = vld [vmem:[%s7 + $0x270] sm:$0xf]
    %v4343 = vld [vmem:[%s7 + $0x274] sm:$0xf]
    %v4344 = vld [vmem:[%s7 + $0x278] sm:$0xf]
    %v4345 = vld [vmem:[%s7 + $0x27c] sm:$0xf]
    %v4346 = vld [vmem:[%s7 + $0x280] sm:$0xf]
    %v4347 = vld [vmem:[%s7 + $0x284] sm:$0xf]
    %v4348 = vld [vmem:[%s7 + $0x288] sm:$0xf]
    %v4349 = vld [vmem:[%s7 + $0x28c] sm:$0xf]
    %v4350 = vld [vmem:[%s7 + $0x290] sm:$0xf]
    %v4351 = vld [vmem:[%s7 + $0x294] sm:$0xf]
    %v4352 = vld [vmem:[%s7 + $0x298] sm:$0xf]
    %v4353 = vld [vmem:[%s7 + $0x29c] sm:$0xf]
    %v4354 = vld [vmem:[%s7 + $0x2a0] sm:$0xf]
    %v4355 = vld [vmem:[%s7 + $0x2a4] sm:$0xf]
    %v4356 = vld [vmem:[%s7 + $0x2a8] sm:$0xf]
    %v4357 = vld [vmem:[%s7 + $0x2ac] sm:$0xf]
    %v4358 = vld [vmem:[%s7 + $0x2b0] sm:$0xf]
    %v4359 = vld [vmem:[%s7 + $0x2b4] sm:$0xf]
    %v4360 = vld [vmem:[%s7 + $0x2b8] sm:$0xf]
    %v4361 = vld [vmem:[%s7 + $0x2bc] sm:$0xf]
    %v4362 = vld [vmem:[%s7 + $0x2c0] sm:$0xf]
    %v4363 = vld [vmem:[%s7 + $0x2c4] sm:$0xf]
    %v4364 = vld [vmem:[%s7 + $0x2c8] sm:$0xf]
    %v4365 = vld [vmem:[%s7 + $0x2cc] sm:$0xf]
    %v4366 = vld [vmem:[%s7 + $0x2d0] sm:$0xf]
    %v4367 = vld [vmem:[%s7 + $0x2d4] sm:$0xf]
    %v4368 = vld [vmem:[%s7 + $0x2d8] sm:$0xf]
    %v4369 = vld [vmem:[%s7 + $0x2dc] sm:$0xf]
    %v4370 = vld [vmem:[%s7 + $0x2e0] sm:$0xf]
    %v4371 = vld [vmem:[%s7 + $0x2e4] sm:$0xf]
    %v4372 = vld [vmem:[%s7 + $0x2e8] sm:$0xf]
    %v4373 = vld [vmem:[%s7 + $0x2ec] sm:$0xf]
    %v4374 = vld [vmem:[%s7 + $0x2f0] sm:$0xf]
    %v4375 = vld [vmem:[%s7 + $0x2f4] sm:$0xf]
    %v4376 = vld [vmem:[%s7 + $0x2f8] sm:$0xf]
    %v4377 = vld [vmem:[%s7 + $0x2fc] sm:$0xf]
    %v4378 = vld [vmem:[%s7 + $0x300] sm:$0xf]
    %v4379 = vld [vmem:[%s7 + $0x304] sm:$0xf]
    %v4380 = vld [vmem:[%s7 + $0x308] sm:$0xf]
    %v4381 = vld [vmem:[%s7 + $0x30c] sm:$0xf]
    %v4382 = vld [vmem:[%s7 + $0x310] sm:$0xf]
    %v4383 = vld [vmem:[%s7 + $0x314] sm:$0xf]
    %v4384 = vld [vmem:[%s7 + $0x318] sm:$0xf]
    %v4385 = vld [vmem:[%s7 + $0x31c] sm:$0xf]
    %v4386 = vld [vmem:[%s7 + $0x320] sm:$0xf]
    %v4387 = vld [vmem:[%s7 + $0x324] sm:$0xf]
    %v4388 = vld [vmem:[%s7 + $0x328] sm:$0xf]
    %v4389 = vld [vmem:[%s7 + $0x32c] sm:$0xf]
    %v4390 = vld [vmem:[%s7 + $0x330] sm:$0xf]
    %v4391 = vld [vmem:[%s7 + $0x334] sm:$0xf]
    %v4392 = vld [vmem:[%s7 + $0x338] sm:$0xf]
    %v4393 = vld [vmem:[%s7 + $0x33c] sm:$0xf]
    %v4394 = vld [vmem:[%s7 + $0x340] sm:$0xf]
    %v4395 = vld [vmem:[%s7 + $0x344] sm:$0xf]
    %v4396 = vld [vmem:[%s7 + $0x348] sm:$0xf]
    %v4397 = vld [vmem:[%s7 + $0x34c] sm:$0xf]
    %v4398 = vld [vmem:[%s7 + $0x350] sm:$0xf]
    %v4399 = vld [vmem:[%s7 + $0x354] sm:$0xf]
    %v4400 = vld [vmem:[%s7 + $0x358] sm:$0xf]
    %v4401 = vld [vmem:[%s7 + $0x35c] sm:$0xf]
    %v4402 = vld [vmem:[%s7 + $0x360] sm:$0xf]
    %v4403 = vld [vmem:[%s7 + $0x364] sm:$0xf]
    %v4404 = vld [vmem:[%s7 + $0x368] sm:$0xf]
    %v4405 = vld [vmem:[%s7 + $0x36c] sm:$0xf]
    %v4406 = vld [vmem:[%s7 + $0x370] sm:$0xf]
    %v4407 = vld [vmem:[%s7 + $0x374] sm:$0xf]
    %v4408 = vld [vmem:[%s7 + $0x378] sm:$0xf]
    %v4409 = vld [vmem:[%s7 + $0x37c] sm:$0xf]
    %v4410 = vld [vmem:[%s7 + $0x380] sm:$0xf]
    %v4411 = vld [vmem:[%s7 + $0x384] sm:$0xf]
    %v4412 = vld [vmem:[%s7 + $0x388] sm:$0xf]
    %v4413 = vld [vmem:[%s7 + $0x38c] sm:$0xf]
    %v4414 = vld [vmem:[%s7 + $0x390] sm:$0xf]
    %v4415 = vld [vmem:[%s7 + $0x394] sm:$0xf]
    %v4416 = vld [vmem:[%s7 + $0x398] sm:$0xf]
    %v4417 = vld [vmem:[%s7 + $0x39c] sm:$0xf]
    %v4418 = vld [vmem:[%s7 + $0x3a0] sm:$0xf]
    %v4419 = vld [vmem:[%s7 + $0x3a4] sm:$0xf]
    %v4420 = vld [vmem:[%s7 + $0x3a8] sm:$0xf]
    %v4421 = vld [vmem:[%s7 + $0x3ac] sm:$0xf]
    %v4422 = vld [vmem:[%s7 + $0x3b0] sm:$0xf]
    %v4423 = vld [vmem:[%s7 + $0x3b4] sm:$0xf]
    %v4424 = vld [vmem:[%s7 + $0x3b8] sm:$0xf]
    %v4425 = vld [vmem:[%s7 + $0x3bc] sm:$0xf]
    %v4426 = vld [vmem:[%s7 + $0x3c0] sm:$0xf]
    %v4427 = vld [vmem:[%s7 + $0x3c4] sm:$0xf]
    %v4428 = vld [vmem:[%s7 + $0x3c8] sm:$0xf]
    %v4429 = vld [vmem:[%s7 + $0x3cc] sm:$0xf]
    %v4430 = vld [vmem:[%s7 + $0x3d0] sm:$0xf]
    %v4431 = vld [vmem:[%s7 + $0x3d4] sm:$0xf]
    %v4432 = vld [vmem:[%s7 + $0x3d8] sm:$0xf]
    %v4433 = vld [vmem:[%s7 + $0x3dc] sm:$0xf]
    %v4434 = vld [vmem:[%s7 + $0x3e0] sm:$0xf]
    %v4435 = vld [vmem:[%s7 + $0x3e4] sm:$0xf]
    %v4436 = vld [vmem:[%s7 + $0x3e8] sm:$0xf]
    %v4437 = vld [vmem:[%s7 + $0x3ec] sm:$0xf]
    %v4438 = vld [vmem:[%s7 + $0x3f0] sm:$0xf]
    %v4439 = vld [vmem:[%s7 + $0x3f4] sm:$0xf]
    %v4440 = vld [vmem:[%s7 + $0x3f8] sm:$0xf]
    %v4441 = vld [vmem:[%s7 + $0x3fc] sm:$0xf]
    %v4442 = vld [vmem:[#allocation14] sm:$0x1]
    %v4444 = vlaneseq
    %v4445 = vshrl.u32 %v4444, 7
    %v4446 = vsub.s32 0, %v4445
    %v4447 = vrot.slane %v4442, %v4446
    %v4705 = vunpack.c.l.b16 %v4186
    %v4706 = vunpack.c.l.b16 %v4187
    %v4707 = vunpack.c.l.b16 %v4188
    %v4708 = vunpack.c.l.b16 %v4189
    %v4709 = vunpack.c.l.b16 %v4190
    %v4710 = vunpack.c.l.b16 %v4191
    %v4711 = vunpack.c.l.b16 %v4192
    %v4712 = vunpack.c.l.b16 %v4193
    %v4713 = vunpack.c.l.b16 %v4194
    %v4714 = vunpack.c.l.b16 %v4195
    %v4715 = vunpack.c.l.b16 %v4196
    %v4716 = vunpack.c.l.b16 %v4197
    %v4717 = vunpack.c.l.b16 %v4198
    %v4718 = vunpack.c.l.b16 %v4199
    %v4719 = vunpack.c.l.b16 %v4200
    %v4720 = vunpack.c.l.b16 %v4201
    %v4721 = vunpack.c.l.b16 %v4202
    %v4722 = vunpack.c.l.b16 %v4203
    %v4723 = vunpack.c.l.b16 %v4204
    %v4724 = vunpack.c.l.b16 %v4205
    %v4725 = vunpack.c.l.b16 %v4206
    %v4726 = vunpack.c.l.b16 %v4207
    %v4727 = vunpack.c.l.b16 %v4208
    %v4728 = vunpack.c.l.b16 %v4209
    %v4729 = vunpack.c.l.b16 %v4210
    %v4730 = vunpack.c.l.b16 %v4211
    %v4731 = vunpack.c.l.b16 %v4212
    %v4732 = vunpack.c.l.b16 %v4213
    %v4733 = vunpack.c.l.b16 %v4214
    %v4734 = vunpack.c.l.b16 %v4215
    %v4735 = vunpack.c.l.b16 %v4216
    %v4736 = vunpack.c.l.b16 %v4217
    %v4737 = vunpack.c.l.b16 %v4218
    %v4738 = vunpack.c.l.b16 %v4219
    %v4739 = vunpack.c.l.b16 %v4220
    %v4740 = vunpack.c.l.b16 %v4221
    %v4741 = vunpack.c.l.b16 %v4222
    %v4742 = vunpack.c.l.b16 %v4223
    %v4743 = vunpack.c.l.b16 %v4224
    %v4744 = vunpack.c.l.b16 %v4225
    %v4745 = vunpack.c.l.b16 %v4226
    %v4746 = vunpack.c.l.b16 %v4227
    %v4747 = vunpack.c.l.b16 %v4228
    %v4748 = vunpack.c.l.b16 %v4229
    %v4749 = vunpack.c.l.b16 %v4230
    %v4750 = vunpack.c.l.b16 %v4231
    %v4751 = vunpack.c.l.b16 %v4232
    %v4752 = vunpack.c.l.b16 %v4233
    %v4753 = vunpack.c.l.b16 %v4234
    %v4754 = vunpack.c.l.b16 %v4235
    %v4755 = vunpack.c.l.b16 %v4236
    %v4756 = vunpack.c.l.b16 %v4237
    %v4757 = vunpack.c.l.b16 %v4238
    %v4758 = vunpack.c.l.b16 %v4239
    %v4759 = vunpack.c.l.b16 %v4240
    %v4760 = vunpack.c.l.b16 %v4241
    %v4761 = vunpack.c.l.b16 %v4242
    %v4762 = vunpack.c.l.b16 %v4243
    %v4763 = vunpack.c.l.b16 %v4244
    %v4764 = vunpack.c.l.b16 %v4245
    %v4765 = vunpack.c.l.b16 %v4246
    %v4766 = vunpack.c.l.b16 %v4247
    %v4767 = vunpack.c.l.b16 %v4248
    %v4768 = vunpack.c.l.b16 %v4249
    %v4769 = vunpack.c.l.b16 %v4250
    %v4770 = vunpack.c.l.b16 %v4251
    %v4771 = vunpack.c.l.b16 %v4252
    %v4772 = vunpack.c.l.b16 %v4253
    %v4773 = vunpack.c.l.b16 %v4254
    %v4774 = vunpack.c.l.b16 %v4255
    %v4775 = vunpack.c.l.b16 %v4256
    %v4776 = vunpack.c.l.b16 %v4257
    %v4777 = vunpack.c.l.b16 %v4258
    %v4778 = vunpack.c.l.b16 %v4259
    %v4779 = vunpack.c.l.b16 %v4260
    %v4780 = vunpack.c.l.b16 %v4261
    %v4781 = vunpack.c.l.b16 %v4262
    %v4782 = vunpack.c.l.b16 %v4263
    %v4783 = vunpack.c.l.b16 %v4264
    %v4784 = vunpack.c.l.b16 %v4265
    %v4785 = vunpack.c.l.b16 %v4266
    %v4786 = vunpack.c.l.b16 %v4267
    %v4787 = vunpack.c.l.b16 %v4268
    %v4788 = vunpack.c.l.b16 %v4269
    %v4789 = vunpack.c.l.b16 %v4270
    %v4790 = vunpack.c.l.b16 %v4271
    %v4791 = vunpack.c.l.b16 %v4272
    %v4792 = vunpack.c.l.b16 %v4273
    %v4793 = vunpack.c.l.b16 %v4274
    %v4794 = vunpack.c.l.b16 %v4275
    %v4795 = vunpack.c.l.b16 %v4276
    %v4796 = vunpack.c.l.b16 %v4277
    %v4797 = vunpack.c.l.b16 %v4278
    %v4798 = vunpack.c.l.b16 %v4279
    %v4799 = vunpack.c.l.b16 %v4280
    %v4800 = vunpack.c.l.b16 %v4281
    %v4801 = vunpack.c.l.b16 %v4282
    %v4802 = vunpack.c.l.b16 %v4283
    %v4803 = vunpack.c.l.b16 %v4284
    %v4804 = vunpack.c.l.b16 %v4285
    %v4805 = vunpack.c.l.b16 %v4286
    %v4806 = vunpack.c.l.b16 %v4287
    %v4807 = vunpack.c.l.b16 %v4288
    %v4808 = vunpack.c.l.b16 %v4289
    %v4809 = vunpack.c.l.b16 %v4290
    %v4810 = vunpack.c.l.b16 %v4291
    %v4811 = vunpack.c.l.b16 %v4292
    %v4812 = vunpack.c.l.b16 %v4293
    %v4813 = vunpack.c.l.b16 %v4294
    %v4814 = vunpack.c.l.b16 %v4295
    %v4815 = vunpack.c.l.b16 %v4296
    %v4816 = vunpack.c.l.b16 %v4297
    %v4817 = vunpack.c.l.b16 %v4298
    %v4818 = vunpack.c.l.b16 %v4299
    %v4819 = vunpack.c.l.b16 %v4300
    %v4820 = vunpack.c.l.b16 %v4301
    %v4821 = vunpack.c.l.b16 %v4302
    %v4822 = vunpack.c.l.b16 %v4303
    %v4823 = vunpack.c.l.b16 %v4304
    %v4824 = vunpack.c.l.b16 %v4305
    %v4825 = vunpack.c.l.b16 %v4306
    %v4826 = vunpack.c.l.b16 %v4307
    %v4827 = vunpack.c.l.b16 %v4308
    %v4828 = vunpack.c.l.b16 %v4309
    %v4829 = vunpack.c.l.b16 %v4310
    %v4830 = vunpack.c.l.b16 %v4311
    %v4831 = vunpack.c.l.b16 %v4312
    %v4832 = vunpack.c.l.b16 %v4313
    %v4833 = vunpack.c.l.b16 %v4314
    %v4834 = vunpack.c.l.b16 %v4315
    %v4835 = vunpack.c.l.b16 %v4316
    %v4836 = vunpack.c.l.b16 %v4317
    %v4837 = vunpack.c.l.b16 %v4318
    %v4838 = vunpack.c.l.b16 %v4319
    %v4839 = vunpack.c.l.b16 %v4320
    %v4840 = vunpack.c.l.b16 %v4321
    %v4841 = vunpack.c.l.b16 %v4322
    %v4842 = vunpack.c.l.b16 %v4323
    %v4843 = vunpack.c.l.b16 %v4324
    %v4844 = vunpack.c.l.b16 %v4325
    %v4845 = vunpack.c.l.b16 %v4326
    %v4846 = vunpack.c.l.b16 %v4327
    %v4847 = vunpack.c.l.b16 %v4328
    %v4848 = vunpack.c.l.b16 %v4329
    %v4849 = vunpack.c.l.b16 %v4330
    %v4850 = vunpack.c.l.b16 %v4331
    %v4851 = vunpack.c.l.b16 %v4332
    %v4852 = vunpack.c.l.b16 %v4333
    %v4853 = vunpack.c.l.b16 %v4334
    %v4854 = vunpack.c.l.b16 %v4335
    %v4855 = vunpack.c.l.b16 %v4336
    %v4856 = vunpack.c.l.b16 %v4337
    %v4857 = vunpack.c.l.b16 %v4338
    %v4858 = vunpack.c.l.b16 %v4339
    %v4859 = vunpack.c.l.b16 %v4340
    %v4860 = vunpack.c.l.b16 %v4341
    %v4861 = vunpack.c.l.b16 %v4342
    %v4862 = vunpack.c.l.b16 %v4343
    %v4863 = vunpack.c.l.b16 %v4344
    %v4864 = vunpack.c.l.b16 %v4345
    %v4865 = vunpack.c.l.b16 %v4346
    %v4866 = vunpack.c.l.b16 %v4347
    %v4867 = vunpack.c.l.b16 %v4348
    %v4868 = vunpack.c.l.b16 %v4349
    %v4869 = vunpack.c.l.b16 %v4350
    %v4870 = vunpack.c.l.b16 %v4351
    %v4871 = vunpack.c.l.b16 %v4352
    %v4872 = vunpack.c.l.b16 %v4353
    %v4873 = vunpack.c.l.b16 %v4354
    %v4874 = vunpack.c.l.b16 %v4355
    %v4875 = vunpack.c.l.b16 %v4356
    %v4876 = vunpack.c.l.b16 %v4357
    %v4877 = vunpack.c.l.b16 %v4358
    %v4878 = vunpack.c.l.b16 %v4359
    %v4879 = vunpack.c.l.b16 %v4360
    %v4880 = vunpack.c.l.b16 %v4361
    %v4881 = vunpack.c.l.b16 %v4362
    %v4882 = vunpack.c.l.b16 %v4363
    %v4883 = vunpack.c.l.b16 %v4364
    %v4884 = vunpack.c.l.b16 %v4365
    %v4885 = vunpack.c.l.b16 %v4366
    %v4886 = vunpack.c.l.b16 %v4367
    %v4887 = vunpack.c.l.b16 %v4368
    %v4888 = vunpack.c.l.b16 %v4369
    %v4889 = vunpack.c.l.b16 %v4370
    %v4890 = vunpack.c.l.b16 %v4371
    %v4891 = vunpack.c.l.b16 %v4372
    %v4892 = vunpack.c.l.b16 %v4373
    %v4893 = vunpack.c.l.b16 %v4374
    %v4894 = vunpack.c.l.b16 %v4375
    %v4895 = vunpack.c.l.b16 %v4376
    %v4896 = vunpack.c.l.b16 %v4377
    %v4897 = vunpack.c.l.b16 %v4378
    %v4898 = vunpack.c.l.b16 %v4379
    %v4899 = vunpack.c.l.b16 %v4380
    %v4900 = vunpack.c.l.b16 %v4381
    %v4901 = vunpack.c.l.b16 %v4382
    %v4902 = vunpack.c.l.b16 %v4383
    %v4903 = vunpack.c.l.b16 %v4384
    %v4904 = vunpack.c.l.b16 %v4385
    %v4905 = vunpack.c.l.b16 %v4386
    %v4906 = vunpack.c.l.b16 %v4387
    %v4907 = vunpack.c.l.b16 %v4388
    %v4908 = vunpack.c.l.b16 %v4389
    %v4909 = vunpack.c.l.b16 %v4390
    %v4910 = vunpack.c.l.b16 %v4391
    %v4911 = vunpack.c.l.b16 %v4392
    %v4912 = vunpack.c.l.b16 %v4393
    %v4913 = vunpack.c.l.b16 %v4394
    %v4914 = vunpack.c.l.b16 %v4395
    %v4915 = vunpack.c.l.b16 %v4396
    %v4916 = vunpack.c.l.b16 %v4397
    %v4917 = vunpack.c.l.b16 %v4398
    %v4918 = vunpack.c.l.b16 %v4399
    %v4919 = vunpack.c.l.b16 %v4400
    %v4920 = vunpack.c.l.b16 %v4401
    %v4921 = vunpack.c.l.b16 %v4402
    %v4922 = vunpack.c.l.b16 %v4403
    %v4923 = vunpack.c.l.b16 %v4404
    %v4924 = vunpack.c.l.b16 %v4405
    %v4925 = vunpack.c.l.b16 %v4406
    %v4926 = vunpack.c.l.b16 %v4407
    %v4927 = vunpack.c.l.b16 %v4408
    %v4928 = vunpack.c.l.b16 %v4409
    %v4929 = vunpack.c.l.b16 %v4410
    %v4930 = vunpack.c.l.b16 %v4411
    %v4931 = vunpack.c.l.b16 %v4412
    %v4932 = vunpack.c.l.b16 %v4413
    %v4933 = vunpack.c.l.b16 %v4414
    %v4934 = vunpack.c.l.b16 %v4415
    %v4935 = vunpack.c.l.b16 %v4416
    %v4936 = vunpack.c.l.b16 %v4417
    %v4937 = vunpack.c.l.b16 %v4418
    %v4938 = vunpack.c.l.b16 %v4419
    %v4939 = vunpack.c.l.b16 %v4420
    %v4940 = vunpack.c.l.b16 %v4421
    %v4941 = vunpack.c.l.b16 %v4422
    %v4942 = vunpack.c.l.b16 %v4423
    %v4943 = vunpack.c.l.b16 %v4424
    %v4944 = vunpack.c.l.b16 %v4425
    %v4945 = vunpack.c.l.b16 %v4426
    %v4946 = vunpack.c.l.b16 %v4427
    %v4947 = vunpack.c.l.b16 %v4428
    %v4948 = vunpack.c.l.b16 %v4429
    %v4949 = vunpack.c.l.b16 %v4430
    %v4950 = vunpack.c.l.b16 %v4431
    %v4951 = vunpack.c.l.b16 %v4432
    %v4952 = vunpack.c.l.b16 %v4433
    %v4953 = vunpack.c.l.b16 %v4434
    %v4954 = vunpack.c.l.b16 %v4435
    %v4955 = vunpack.c.l.b16 %v4436
    %v4956 = vunpack.c.l.b16 %v4437
    %v4957 = vunpack.c.l.b16 %v4438
    %v4958 = vunpack.c.l.b16 %v4439
    %v4959 = vunpack.c.l.b16 %v4440
    %v4960 = vunpack.c.l.b16 %v4441
    %v4961 = vpack.c.b16 %v4706, %v4705
    %v4962 = vpack.c.b16 %v4708, %v4707
    %v4963 = vpack.c.b16 %v4710, %v4709
    %v4964 = vpack.c.b16 %v4712, %v4711
    %v4965 = vpack.c.b16 %v4714, %v4713
    %v4966 = vpack.c.b16 %v4716, %v4715
    %v4967 = vpack.c.b16 %v4718, %v4717
    %v4968 = vpack.c.b16 %v4720, %v4719
    %v4969 = vpack.c.b16 %v4722, %v4721
    %v4970 = vpack.c.b16 %v4724, %v4723
    %v4971 = vpack.c.b16 %v4726, %v4725
    %v4972 = vpack.c.b16 %v4728, %v4727
    %v4973 = vpack.c.b16 %v4730, %v4729
    %v4974 = vpack.c.b16 %v4732, %v4731
    %v4975 = vpack.c.b16 %v4734, %v4733
    %v4976 = vpack.c.b16 %v4736, %v4735
    %v4977 = vpack.c.b16 %v4738, %v4737
    %v4978 = vpack.c.b16 %v4740, %v4739
    %v4979 = vpack.c.b16 %v4742, %v4741
    %v4980 = vpack.c.b16 %v4744, %v4743
    %v4981 = vpack.c.b16 %v4746, %v4745
    %v4982 = vpack.c.b16 %v4748, %v4747
    %v4983 = vpack.c.b16 %v4750, %v4749
    %v4984 = vpack.c.b16 %v4752, %v4751
    %v4985 = vpack.c.b16 %v4754, %v4753
    %v4986 = vpack.c.b16 %v4756, %v4755
    %v4987 = vpack.c.b16 %v4758, %v4757
    %v4988 = vpack.c.b16 %v4760, %v4759
    %v4989 = vpack.c.b16 %v4762, %v4761
    %v4990 = vpack.c.b16 %v4764, %v4763
    %v4991 = vpack.c.b16 %v4766, %v4765
    %v4992 = vpack.c.b16 %v4768, %v4767
    %v4993 = vpack.c.b16 %v4770, %v4769
    %v4994 = vpack.c.b16 %v4772, %v4771
    %v4995 = vpack.c.b16 %v4774, %v4773
    %v4996 = vpack.c.b16 %v4776, %v4775
    %v4997 = vpack.c.b16 %v4778, %v4777
    %v4998 = vpack.c.b16 %v4780, %v4779
    %v4999 = vpack.c.b16 %v4782, %v4781
    %v5000 = vpack.c.b16 %v4784, %v4783
    %v5001 = vpack.c.b16 %v4786, %v4785
    %v5002 = vpack.c.b16 %v4788, %v4787
    %v5003 = vpack.c.b16 %v4790, %v4789
    %v5004 = vpack.c.b16 %v4792, %v4791
    %v5005 = vpack.c.b16 %v4794, %v4793
    %v5006 = vpack.c.b16 %v4796, %v4795
    %v5007 = vpack.c.b16 %v4798, %v4797
    %v5008 = vpack.c.b16 %v4800, %v4799
    %v5009 = vpack.c.b16 %v4802, %v4801
    %v5010 = vpack.c.b16 %v4804, %v4803
    %v5011 = vpack.c.b16 %v4806, %v4805
    %v5012 = vpack.c.b16 %v4808, %v4807
    %v5013 = vpack.c.b16 %v4810, %v4809
    %v5014 = vpack.c.b16 %v4812, %v4811
    %v5015 = vpack.c.b16 %v4814, %v4813
    %v5016 = vpack.c.b16 %v4816, %v4815
    %v5017 = vpack.c.b16 %v4818, %v4817
    %v5018 = vpack.c.b16 %v4820, %v4819
    %v5019 = vpack.c.b16 %v4822, %v4821
    %v5020 = vpack.c.b16 %v4824, %v4823
    %v5021 = vpack.c.b16 %v4826, %v4825
    %v5022 = vpack.c.b16 %v4828, %v4827
    %v5023 = vpack.c.b16 %v4830, %v4829
    %v5024 = vpack.c.b16 %v4832, %v4831
    %v5025 = vpack.c.b16 %v4834, %v4833
    %v5026 = vpack.c.b16 %v4836, %v4835
    %v5027 = vpack.c.b16 %v4838, %v4837
    %v5028 = vpack.c.b16 %v4840, %v4839
    %v5029 = vpack.c.b16 %v4842, %v4841
    %v5030 = vpack.c.b16 %v4844, %v4843
    %v5031 = vpack.c.b16 %v4846, %v4845
    %v5032 = vpack.c.b16 %v4848, %v4847
    %v5033 = vpack.c.b16 %v4850, %v4849
    %v5034 = vpack.c.b16 %v4852, %v4851
    %v5035 = vpack.c.b16 %v4854, %v4853
    %v5036 = vpack.c.b16 %v4856, %v4855
    %v5037 = vpack.c.b16 %v4858, %v4857
    %v5038 = vpack.c.b16 %v4860, %v4859
    %v5039 = vpack.c.b16 %v4862, %v4861
    %v5040 = vpack.c.b16 %v4864, %v4863
    %v5041 = vpack.c.b16 %v4866, %v4865
    %v5042 = vpack.c.b16 %v4868, %v4867
    %v5043 = vpack.c.b16 %v4870, %v4869
    %v5044 = vpack.c.b16 %v4872, %v4871
    %v5045 = vpack.c.b16 %v4874, %v4873
    %v5046 = vpack.c.b16 %v4876, %v4875
    %v5047 = vpack.c.b16 %v4878, %v4877
    %v5048 = vpack.c.b16 %v4880, %v4879
    %v5049 = vpack.c.b16 %v4882, %v4881
    %v5050 = vpack.c.b16 %v4884, %v4883
    %v5051 = vpack.c.b16 %v4886, %v4885
    %v5052 = vpack.c.b16 %v4888, %v4887
    %v5053 = vpack.c.b16 %v4890, %v4889
    %v5054 = vpack.c.b16 %v4892, %v4891
    %v5055 = vpack.c.b16 %v4894, %v4893
    %v5056 = vpack.c.b16 %v4896, %v4895
    %v5057 = vpack.c.b16 %v4898, %v4897
    %v5058 = vpack.c.b16 %v4900, %v4899
    %v5059 = vpack.c.b16 %v4902, %v4901
    %v5060 = vpack.c.b16 %v4904, %v4903
    %v5061 = vpack.c.b16 %v4906, %v4905
    %v5062 = vpack.c.b16 %v4908, %v4907
    %v5063 = vpack.c.b16 %v4910, %v4909
    %v5064 = vpack.c.b16 %v4912, %v4911
    %v5065 = vpack.c.b16 %v4914, %v4913
    %v5066 = vpack.c.b16 %v4916, %v4915
    %v5067 = vpack.c.b16 %v4918, %v4917
    %v5068 = vpack.c.b16 %v4920, %v4919
    %v5069 = vpack.c.b16 %v4922, %v4921
    %v5070 = vpack.c.b16 %v4924, %v4923
    %v5071 = vpack.c.b16 %v4926, %v4925
    %v5072 = vpack.c.b16 %v4928, %v4927
    %v5073 = vpack.c.b16 %v4930, %v4929
    %v5074 = vpack.c.b16 %v4932, %v4931
    %v5075 = vpack.c.b16 %v4934, %v4933
    %v5076 = vpack.c.b16 %v4936, %v4935
    %v5077 = vpack.c.b16 %v4938, %v4937
    %v5078 = vpack.c.b16 %v4940, %v4939
    %v5079 = vpack.c.b16 %v4942, %v4941
    %v5080 = vpack.c.b16 %v4944, %v4943
    %v5081 = vpack.c.b16 %v4946, %v4945
    %v5082 = vpack.c.b16 %v4948, %v4947
    %v5083 = vpack.c.b16 %v4950, %v4949
    %v5084 = vpack.c.b16 %v4952, %v4951
    %v5085 = vpack.c.b16 %v4954, %v4953
    %v5086 = vpack.c.b16 %v4956, %v4955
    %v5087 = vpack.c.b16 %v4958, %v4957
    %v5088 = vpack.c.b16 %v4960, %v4959
    %5217 = vmatprep.subr.bf16.mxu0 0
    %5218 = vmatpush1.bf16.msra.mxu0 %v4961
    %5219 = vmatprep.subr.bf16.mxu0 0
    %5220 = vmatpush1.bf16.msra.mxu0 %v4962
    %5221 = vmatprep.subr.bf16.mxu0 0
    %5222 = vmatpush1.bf16.msra.mxu0 %v4963
    %5223 = vmatprep.subr.bf16.mxu0 0
    %5224 = vmatpush1.bf16.msra.mxu0 %v4964
    %5225 = vmatprep.subr.bf16.mxu0 0
    %5226 = vmatpush1.bf16.msra.mxu0 %v4965
    %5227 = vmatprep.subr.bf16.mxu0 0
    %5228 = vmatpush1.bf16.msra.mxu0 %v4966
    %5229 = vmatprep.subr.bf16.mxu0 0
    %5230 = vmatpush1.bf16.msra.mxu0 %v4967
    %5231 = vmatprep.subr.bf16.mxu0 0
    %5232 = vmatpush1.bf16.msra.mxu0 %v4968
    %5233 = vmatprep.subr.bf16.mxu0 0
    %5234 = vmatpush1.bf16.msra.mxu0 %v4969
    %5235 = vmatprep.subr.bf16.mxu0 0
    %5236 = vmatpush1.bf16.msra.mxu0 %v4970
    %5237 = vmatprep.subr.bf16.mxu0 0
    %5238 = vmatpush1.bf16.msra.mxu0 %v4971
    %5239 = vmatprep.subr.bf16.mxu0 0
    %5240 = vmatpush1.bf16.msra.mxu0 %v4972
    %5241 = vmatprep.subr.bf16.mxu0 0
    %5242 = vmatpush1.bf16.msra.mxu0 %v4973
    %5243 = vmatprep.subr.bf16.mxu0 0
    %5244 = vmatpush1.bf16.msra.mxu0 %v4974
    %5245 = vmatprep.subr.bf16.mxu0 0
    %5246 = vmatpush1.bf16.msra.mxu0 %v4975
    %5247 = vmatprep.subr.bf16.mxu0 0
    %5248 = vmatpush1.bf16.msra.mxu0 %v4976
    %5249 = vmatprep.mubr.bf16.mxu0 %v4171
    %5250 = vmatmul.mubr.bf16.gmra.mrb[0].mxu0 %v4170
    %v5251 = vpop.f32.mrb[0].mxu0
    %v5252 = vadd.f32 %v4447, %v5251
    %v5253 = vpop.f32.mrb[0].mxu0
    %v5254 = vpop.f32.mrb[0].mxu0
    %v5255 = vpop.f32.mrb[0].mxu0
    %5256 = vdwg.mxu0
    %5257 = vmatprep.subr.bf16.mxu0 0
    %5258 = vmatpush1.bf16.msra.mxu0 %v4977
    %5259 = vmatprep.subr.bf16.mxu0 0
    %5260 = vmatpush1.bf16.msra.mxu0 %v4978
    %5261 = vmatprep.subr.bf16.mxu0 0
    %5262 = vmatpush1.bf16.msra.mxu0 %v4979
    %5263 = vmatprep.subr.bf16.mxu0 0
    %5264 = vmatpush1.bf16.msra.mxu0 %v4980
    %5265 = vmatprep.subr.bf16.mxu0 0
    %5266 = vmatpush1.bf16.msra.mxu0 %v4981
    %5267 = vmatprep.subr.bf16.mxu0 0
    %5268 = vmatpush1.bf16.msra.mxu0 %v4982
    %5269 = vmatprep.subr.bf16.mxu0 0
    %5270 = vmatpush1.bf16.msra.mxu0 %v4983
    %5271 = vmatprep.subr.bf16.mxu0 0
    %5272 = vmatpush1.bf16.msra.mxu0 %v4984
    %5273 = vmatprep.subr.bf16.mxu0 0
    %5274 = vmatpush1.bf16.msra.mxu0 %v4985
    %5275 = vmatprep.subr.bf16.mxu0 0
    %5276 = vmatpush1.bf16.msra.mxu0 %v4986
    %5277 = vmatprep.subr.bf16.mxu0 0
    %5278 = vmatpush1.bf16.msra.mxu0 %v4987
    %5279 = vmatprep.subr.bf16.mxu0 0
    %5280 = vmatpush1.bf16.msra.mxu0 %v4988
    %5281 = vmatprep.subr.bf16.mxu0 0
    %5282 = vmatpush1.bf16.msra.mxu0 %v4989
    %5283 = vmatprep.subr.bf16.mxu0 0
    %5284 = vmatpush1.bf16.msra.mxu0 %v4990
    %5285 = vmatprep.subr.bf16.mxu0 0
    %5286 = vmatpush1.bf16.msra.mxu0 %v4991
    %5287 = vmatprep.subr.bf16.mxu0 0
    %5288 = vmatpush1.bf16.msra.mxu0 %v4992
    %5289 = vmatprep.mubr.bf16.mxu0 %v4173
    %5290 = vmatmul.mubr.bf16.gmra.mrb[0].mxu0 %v4172
    %v5291 = vpop.f32.mrb[0].mxu0
    %v5292 = vadd.f32 %v5252, %v5291
    %v5293 = vpop.f32.mrb[0].mxu0
    %v5294 = vpop.f32.mrb[0].mxu0
    %v5295 = vpop.f32.mrb[0].mxu0
    %5296 = vdwg.mxu0
    %5297 = vmatprep.subr.bf16.mxu0 0
    %5298 = vmatpush1.bf16.msra.mxu0 %v4993
    %5299 = vmatprep.subr.bf16.mxu0 0
    %5300 = vmatpush1.bf16.msra.mxu0 %v4994
    %5301 = vmatprep.subr.bf16.mxu0 0
    %5302 = vmatpush1.bf16.msra.mxu0 %v4995
    %5303 = vmatprep.subr.bf16.mxu0 0
    %5304 = vmatpush1.bf16.msra.mxu0 %v4996
    %5305 = vmatprep.subr.bf16.mxu0 0
    %5306 = vmatpush1.bf16.msra.mxu0 %v4997
    %5307 = vmatprep.subr.bf16.mxu0 0
    %5308 = vmatpush1.bf16.msra.mxu0 %v4998
    %5309 = vmatprep.subr.bf16.mxu0 0
    %5310 = vmatpush1.bf16.msra.mxu0 %v4999
    %5311 = vmatprep.subr.bf16.mxu0 0
    %5312 = vmatpush1.bf16.msra.mxu0 %v5000
    %5313 = vmatprep.subr.bf16.mxu0 0
    %5314 = vmatpush1.bf16.msra.mxu0 %v5001
    %5315 = vmatprep.subr.bf16.mxu0 0
    %5316 = vmatpush1.bf16.msra.mxu0 %v5002
    %5317 = vmatprep.subr.bf16.mxu0 0
    %5318 = vmatpush1.bf16.msra.mxu0 %v5003
    %5319 = vmatprep.subr.bf16.mxu0 0
    %5320 = vmatpush1.bf16.msra.mxu0 %v5004
    %5321 = vmatprep.subr.bf16.mxu0 0
    %5322 = vmatpush1.bf16.msra.mxu0 %v5005
    %5323 = vmatprep.subr.bf16.mxu0 0
    %5324 = vmatpush1.bf16.msra.mxu0 %v5006
    %5325 = vmatprep.subr.bf16.mxu0 0
    %5326 = vmatpush1.bf16.msra.mxu0 %v5007
    %5327 = vmatprep.subr.bf16.mxu0 0
    %5328 = vmatpush1.bf16.msra.mxu0 %v5008
    %5329 = vmatprep.mubr.bf16.mxu0 %v4175
    %5330 = vmatmul.mubr.bf16.gmra.mrb[0].mxu0 %v4174
    %v5331 = vpop.f32.mrb[0].mxu0
    %v5332 = vadd.f32 %v5292, %v5331
    %v5333 = vpop.f32.mrb[0].mxu0
    %v5334 = vpop.f32.mrb[0].mxu0
    %v5335 = vpop.f32.mrb[0].mxu0
    %5336 = vdwg.mxu0
    %5337 = vmatprep.subr.bf16.mxu0 0
    %5338 = vmatpush1.bf16.msra.mxu0 %v5009
    %5339 = vmatprep.subr.bf16.mxu0 0
    %5340 = vmatpush1.bf16.msra.mxu0 %v5010
    %5341 = vmatprep.subr.bf16.mxu0 0
    %5342 = vmatpush1.bf16.msra.mxu0 %v5011
    %5343 = vmatprep.subr.bf16.mxu0 0
    %5344 = vmatpush1.bf16.msra.mxu0 %v5012
    %5345 = vmatprep.subr.bf16.mxu0 0
    %5346 = vmatpush1.bf16.msra.mxu0 %v5013
    %5347 = vmatprep.subr.bf16.mxu0 0
    %5348 = vmatpush1.bf16.msra.mxu0 %v5014
    %5349 = vmatprep.subr.bf16.mxu0 0
    %5350 = vmatpush1.bf16.msra.mxu0 %v5015
    %5351 = vmatprep.subr.bf16.mxu0 0
    %5352 = vmatpush1.bf16.msra.mxu0 %v5016
    %5353 = vmatprep.subr.bf16.mxu0 0
    %5354 = vmatpush1.bf16.msra.mxu0 %v5017
    %5355 = vmatprep.subr.bf16.mxu0 0
    %5356 = vmatpush1.bf16.msra.mxu0 %v5018
    %5357 = vmatprep.subr.bf16.mxu0 0
    %5358 = vmatpush1.bf16.msra.mxu0 %v5019
    %5359 = vmatprep.subr.bf16.mxu0 0
    %5360 = vmatpush1.bf16.msra.mxu0 %v5020
    %5361 = vmatprep.subr.bf16.mxu0 0
    %5362 = vmatpush1.bf16.msra.mxu0 %v5021
    %5363 = vmatprep.subr.bf16.mxu0 0
    %5364 = vmatpush1.bf16.msra.mxu0 %v5022
    %5365 = vmatprep.subr.bf16.mxu0 0
    %5366 = vmatpush1.bf16.msra.mxu0 %v5023
    %5367 = vmatprep.subr.bf16.mxu0 0
    %5368 = vmatpush1.bf16.msra.mxu0 %v5024
    %5369 = vmatprep.mubr.bf16.mxu0 %v4177
    %5370 = vmatmul.mubr.bf16.gmra.mrb[0].mxu0 %v4176
    %v5371 = vpop.f32.mrb[0].mxu0
    %v5372 = vadd.f32 %v5332, %v5371
    %v5373 = vpop.f32.mrb[0].mxu0
    %v5374 = vpop.f32.mrb[0].mxu0
    %v5375 = vpop.f32.mrb[0].mxu0
    %5376 = vdwg.mxu0
    %5377 = vmatprep.subr.bf16.mxu0 0
    %5378 = vmatpush1.bf16.msra.mxu0 %v5025
    %5379 = vmatprep.subr.bf16.mxu0 0
    %5380 = vmatpush1.bf16.msra.mxu0 %v5026
    %5381 = vmatprep.subr.bf16.mxu0 0
    %5382 = vmatpush1.bf16.msra.mxu0 %v5027
    %5383 = vmatprep.subr.bf16.mxu0 0
    %5384 = vmatpush1.bf16.msra.mxu0 %v5028
    %5385 = vmatprep.subr.bf16.mxu0 0
    %5386 = vmatpush1.bf16.msra.mxu0 %v5029
    %5387 = vmatprep.subr.bf16.mxu0 0
    %5388 = vmatpush1.bf16.msra.mxu0 %v5030
    %5389 = vmatprep.subr.bf16.mxu0 0
    %5390 = vmatpush1.bf16.msra.mxu0 %v5031
    %5391 = vmatprep.subr.bf16.mxu0 0
    %5392 = vmatpush1.bf16.msra.mxu0 %v5032
    %5393 = vmatprep.subr.bf16.mxu0 0
    %5394 = vmatpush1.bf16.msra.mxu0 %v5033
    %5395 = vmatprep.subr.bf16.mxu0 0
    %5396 = vmatpush1.bf16.msra.mxu0 %v5034
    %5397 = vmatprep.subr.bf16.mxu0 0
    %5398 = vmatpush1.bf16.msra.mxu0 %v5035
    %5399 = vmatprep.subr.bf16.mxu0 0
    %5400 = vmatpush1.bf16.msra.mxu0 %v5036
    %5401 = vmatprep.subr.bf16.mxu0 0
    %5402 = vmatpush1.bf16.msra.mxu0 %v5037
    %5403 = vmatprep.subr.bf16.mxu0 0
    %5404 = vmatpush1.bf16.msra.mxu0 %v5038
    %5405 = vmatprep.subr.bf16.mxu0 0
    %5406 = vmatpush1.bf16.msra.mxu0 %v5039
    %5407 = vmatprep.subr.bf16.mxu0 0
    %5408 = vmatpush1.bf16.msra.mxu0 %v5040
    %5409 = vmatprep.mubr.bf16.mxu0 %v4179
    %5410 = vmatmul.mubr.bf16.gmra.mrb[0].mxu0 %v4178
    %v5411 = vpop.f32.mrb[0].mxu0
    %v5412 = vadd.f32 %v5372, %v5411
    %v5413 = vpop.f32.mrb[0].mxu0
    %v5414 = vpop.f32.mrb[0].mxu0
    %v5415 = vpop.f32.mrb[0].mxu0
    %5416 = vdwg.mxu0
    %5417 = vmatprep.subr.bf16.mxu0 0
    %5418 = vmatpush1.bf16.msra.mxu0 %v5041
    %5419 = vmatprep.subr.bf16.mxu0 0
    %5420 = vmatpush1.bf16.msra.mxu0 %v5042
    %5421 = vmatprep.subr.bf16.mxu0 0
    %5422 = vmatpush1.bf16.msra.mxu0 %v5043
    %5423 = vmatprep.subr.bf16.mxu0 0
    %5424 = vmatpush1.bf16.msra.mxu0 %v5044
    %5425 = vmatprep.subr.bf16.mxu0 0
    %5426 = vmatpush1.bf16.msra.mxu0 %v5045
    %5427 = vmatprep.subr.bf16.mxu0 0
    %5428 = vmatpush1.bf16.msra.mxu0 %v5046
    %5429 = vmatprep.subr.bf16.mxu0 0
    %5430 = vmatpush1.bf16.msra.mxu0 %v5047
    %5431 = vmatprep.subr.bf16.mxu0 0
    %5432 = vmatpush1.bf16.msra.mxu0 %v5048
    %5433 = vmatprep.subr.bf16.mxu0 0
    %5434 = vmatpush1.bf16.msra.mxu0 %v5049
    %5435 = vmatprep.subr.bf16.mxu0 0
    %5436 = vmatpush1.bf16.msra.mxu0 %v5050
    %5437 = vmatprep.subr.bf16.mxu0 0
    %5438 = vmatpush1.bf16.msra.mxu0 %v5051
    %5439 = vmatprep.subr.bf16.mxu0 0
    %5440 = vmatpush1.bf16.msra.mxu0 %v5052
    %5441 = vmatprep.subr.bf16.mxu0 0
    %5442 = vmatpush1.bf16.msra.mxu0 %v5053
    %5443 = vmatprep.subr.bf16.mxu0 0
    %5444 = vmatpush1.bf16.msra.mxu0 %v5054
    %5445 = vmatprep.subr.bf16.mxu0 0
    %5446 = vmatpush1.bf16.msra.mxu0 %v5055
    %5447 = vmatprep.subr.bf16.mxu0 0
    %5448 = vmatpush1.bf16.msra.mxu0 %v5056
    %5449 = vmatprep.mubr.bf16.mxu0 %v4181
    %5450 = vmatmul.mubr.bf16.gmra.mrb[0].mxu0 %v4180
    %v5451 = vpop.f32.mrb[0].mxu0
    %v5452 = vadd.f32 %v5412, %v5451
    %v5453 = vpop.f32.mrb[0].mxu0
    %v5454 = vpop.f32.mrb[0].mxu0
    %v5455 = vpop.f32.mrb[0].mxu0
    %5456 = vdwg.mxu0
    %5457 = vmatprep.subr.bf16.mxu0 0
    %5458 = vmatpush1.bf16.msra.mxu0 %v5057
    %5459 = vmatprep.subr.bf16.mxu0 0
    %5460 = vmatpush1.bf16.msra.mxu0 %v5058
    %5461 = vmatprep.subr.bf16.mxu0 0
    %5462 = vmatpush1.bf16.msra.mxu0 %v5059
    %5463 = vmatprep.subr.bf16.mxu0 0
    %5464 = vmatpush1.bf16.msra.mxu0 %v5060
    %5465 = vmatprep.subr.bf16.mxu0 0
    %5466 = vmatpush1.bf16.msra.mxu0 %v5061
    %5467 = vmatprep.subr.bf16.mxu0 0
    %5468 = vmatpush1.bf16.msra.mxu0 %v5062
    %5469 = vmatprep.subr.bf16.mxu0 0
    %5470 = vmatpush1.bf16.msra.mxu0 %v5063
    %5471 = vmatprep.subr.bf16.mxu0 0
    %5472 = vmatpush1.bf16.msra.mxu0 %v5064
    %5473 = vmatprep.subr.bf16.mxu0 0
    %5474 = vmatpush1.bf16.msra.mxu0 %v5065
    %5475 = vmatprep.subr.bf16.mxu0 0
    %5476 = vmatpush1.bf16.msra.mxu0 %v5066
    %5477 = vmatprep.subr.bf16.mxu0 0
    %5478 = vmatpush1.bf16.msra.mxu0 %v5067
    %5479 = vmatprep.subr.bf16.mxu0 0
    %5480 = vmatpush1.bf16.msra.mxu0 %v5068
    %5481 = vmatprep.subr.bf16.mxu0 0
    %5482 = vmatpush1.bf16.msra.mxu0 %v5069
    %5483 = vmatprep.subr.bf16.mxu0 0
    %5484 = vmatpush1.bf16.msra.mxu0 %v5070
    %5485 = vmatprep.subr.bf16.mxu0 0
    %5486 = vmatpush1.bf16.msra.mxu0 %v5071
    %5487 = vmatprep.subr.bf16.mxu0 0
    %5488 = vmatpush1.bf16.msra.mxu0 %v5072
    %5489 = vmatprep.mubr.bf16.mxu0 %v4183
    %5490 = vmatmul.mubr.bf16.gmra.mrb[0].mxu0 %v4182
    %v5491 = vpop.f32.mrb[0].mxu0
    %v5492 = vadd.f32 %v5452, %v5491
    %v5493 = vpop.f32.mrb[0].mxu0
    %v5494 = vpop.f32.mrb[0].mxu0
    %v5495 = vpop.f32.mrb[0].mxu0
    %5496 = vdwg.mxu0
    %5497 = vmatprep.subr.bf16.mxu0 0
    %5498 = vmatpush1.bf16.msra.mxu0 %v5073
    %5499 = vmatprep.subr.bf16.mxu0 0
    %5500 = vmatpush1.bf16.msra.mxu0 %v5074
    %5501 = vmatprep.subr.bf16.mxu0 0
    %5502 = vmatpush1.bf16.msra.mxu0 %v5075
    %5503 = vmatprep.subr.bf16.mxu0 0
    %5504 = vmatpush1.bf16.msra.mxu0 %v5076
    %5505 = vmatprep.subr.bf16.mxu0 0
    %5506 = vmatpush1.bf16.msra.mxu0 %v5077
    %5507 = vmatprep.subr.bf16.mxu0 0
    %5508 = vmatpush1.bf16.msra.mxu0 %v5078
    %5509 = vmatprep.subr.bf16.mxu0 0
    %5510 = vmatpush1.bf16.msra.mxu0 %v5079
    %5511 = vmatprep.subr.bf16.mxu0 0
    %5512 = vmatpush1.bf16.msra.mxu0 %v5080
    %5513 = vmatprep.subr.bf16.mxu0 0
    %5514 = vmatpush1.bf16.msra.mxu0 %v5081
    %5515 = vmatprep.subr.bf16.mxu0 0
    %5516 = vmatpush1.bf16.msra.mxu0 %v5082
    %5517 = vmatprep.subr.bf16.mxu0 0
    %5518 = vmatpush1.bf16.msra.mxu0 %v5083
    %5519 = vmatprep.subr.bf16.mxu0 0
    %5520 = vmatpush1.bf16.msra.mxu0 %v5084
    %5521 = vmatprep.subr.bf16.mxu0 0
    %5522 = vmatpush1.bf16.msra.mxu0 %v5085
    %5523 = vmatprep.subr.bf16.mxu0 0
    %5524 = vmatpush1.bf16.msra.mxu0 %v5086
    %5525 = vmatprep.subr.bf16.mxu0 0
    %5526 = vmatpush1.bf16.msra.mxu0 %v5087
    %5527 = vmatprep.subr.bf16.mxu0 0
    %5528 = vmatpush1.bf16.msra.mxu0 %v5088
    %5529 = vmatprep.mubr.bf16.mxu0 %v4185
    %5530 = vmatmul.mubr.bf16.gmra.mrb[0].mxu0 %v4184
    %v5531 = vpop.f32.mrb[0].mxu0
    %v5532 = vadd.f32 %v5492, %v5531
    %v5533 = vpop.f32.mrb[0].mxu0
    %v5534 = vpop.f32.mrb[0].mxu0
    %v5535 = vpop.f32.mrb[0].mxu0
    %5536 = vdwg.mxu0
    %v5537 = vtanh.pop %v5532
    %5539 = vrot.lane.b32.xlu0 %v148, 64
    %v5540 = vpop.permute.xlu0 %5539
    %v5542 = vsel %vm268, %v5537, %v5540
    %5543 = vst [vmem:[#allocation16] sm:$0xff] %v5542
    // Predicated region
    $region70: #{tpu_custom_call.1} parent=1 // pred_check
      _
    $region71: #{tpu_custom_call.1} parent=1 // pred_check_branch
      %5545 = sbr.rel (0) target = $region73
    $region72: #{tpu_custom_call.1} parent=1 // pred_region
      %s5547 = ssub.s32 128, 128
      %5548 = vsyncadd [#allocation4], %s5547
      %s5550 = sshll.u32 [#allocation16], 4
      %s5551 = int_to_ptr.vmem [resolvable:$true] %s5550
      %5553 = dma.vmem_to_hbm [thread:$0]  %s5551, 128, %s9, [#allocation4]
    $region73: #{tpu_custom_call.1} parent=1 // pred_fallthru
      _
    // Predicated region
    $region74: #{tpu_custom_call.1} parent=1 // pred_check
      _
    $region75: #{tpu_custom_call.1} parent=1 // pred_check_branch
      %5555 = sbr.rel (0) target = $region77
    $region76: #{tpu_custom_call.1} parent=1 // pred_region
      %5556 = dma.done [#allocation4], 128
    $region77: #{tpu_custom_call.1} parent=1 // pred_fallthru
      _
    %5557 = vsyncpa [#allocation3], 1
    %5558 = vsyncpa [#allocation6], 1
    %5559 = vsyncpa [#allocation9], 1
    %5560 = vsyncpa [#allocation12], 1
    %5561 = vsyncpa [#allocation15], 1
    %5562 = vsyncpa [#allocation4], 1

// kernel: tpu_custom_call.1
$region0: #{tpu_custom_call.1}
  #allocation0 [shape = 'u32[]', space=smem, size = 0x4, offset = 0x4, fixed_abs, tag = 'smem constant byte address 0x4 - core index']
  #allocation1 [shape = 'u32[144,128]{1,0:T(1,128)}', space=vmem, size = 0x12000, scoped, tag = 'internal scratch']
  %s0 = inlined_call_operand.hbm [shape: f32[8,64], index: 0, kind: input, shape index: {}]
  %s1 = inlined_call_operand.hbm [shape: f32[1,64], index: 1, kind: input, shape index: {}]
  %s2 = inlined_call_operand.hbm [shape: f32[1,64], index: 2, kind: input, shape index: {}]
  %s3 = inlined_call_operand.hbm [shape: bf16[64,512], index: 3, kind: input, shape index: {}]
  %s4 = inlined_call_operand.hbm [shape: f32[1,512], index: 4, kind: input, shape index: {}]
  %s5 = inlined_call_operand.hbm [shape: bf16[512,2048], index: 5, kind: input, shape index: {}]
  %s6 = inlined_call_operand.hbm [shape: f32[1,2048], index: 6, kind: input, shape index: {}]
  %s7 = inlined_call_operand.vmem [shape: bf16[2048,64], index: 7, kind: input, shape index: {}]
  %s8 = inlined_call_operand.hbm [shape: f32[1,64], index: 8, kind: input, shape index: {}]
  %s9 = inlined_call_operand.hbm [shape: f32[8,128], index: 9, kind: output, shape index: {}]
  %s10 = sld [smem:[#allocation0]]
  $region78: #{tpu_custom_call.1} parent=0
    _
  %s12 = ssub.s32 1, %s10
  %s13 = scalar_select 0, %s12, %s10
  $region1: #{tpu_custom_call.1} parent=0
    #allocation2 [shape = 'u8[4096]{0}', space=vmem, size = 0x1000, scoped, tag = 'input window, operand 0, single buffered']
    #allocation3 [shape = 's32[1]{0}', space=sflag, size = 0x4, scoped, tag = 'scoped memory for tpu_custom_call.1']
    #allocation4 [shape = 's32[1]{0}', space=sflag, size = 0x4, scoped, tag = 'scoped memory for tpu_custom_call.1']
    #allocation5 [shape = 'u8[512]{0}', space=vmem, size = 0x400, scoped, tag = 'input window, operand 1, single buffered']
    #allocation6 [shape = 's32[1]{0}', space=sflag, size = 0x4, scoped, tag = 'scoped memory for tpu_custom_call.1']
    #allocation7 [shape = 'u8[512]{0}', space=vmem, size = 0x400, scoped, tag = 'input window, operand 2, single buffered']
    #allocation8 [shape = 'u8[65536]{0}', space=vmem, size = 0x10000, scoped, tag = 'input window, operand 3, single buffered']
    #allocation9 [shape = 's32[1]{0}', space=sflag, size = 0x4, scoped, tag = 'scoped memory for tpu_custom_call.1']
    #allocation10 [shape = 'u8[2048]{0}', space=vmem, size = 0x800, scoped, tag = 'input window, operand 4, single buffered']
    #allocation11 [shape = 'u8[2097152]{0}', space=vmem, size = 0x200000, scoped, tag = 'input window, operand 5, single buffered']
    #allocation12 [shape = 's32[1]{0}', space=sflag, size = 0x4, scoped, tag = 'scoped memory for tpu_custom_call.1']
    #allocation13 [shape = 'u8[8192]{0}', space=vmem, size = 0x2000, scoped, tag = 'input window, operand 6, single buffered']
    #allocation14 [shape = 'u8[512]{0}', space=vmem, size = 0x400, scoped, tag = 'input window, operand 8, single buffered']
    #allocation15 [shape = 's32[1]{0}', space=sflag, size = 0x4, scoped, tag = 'scoped memory for tpu_custom_call.1']
    #allocation16 [shape = 'u8[4096]{0}', space=vmem, size = 0x1000, scoped, tag = 'output window, operand 0, single buffered']
    %14 = vsyncpa [#allocation3], 0
    %15 = vsyncpa [#allocation6], 0
    %16 = vsyncpa [#allocation9], 0
    %17 = vsyncpa [#allocation12], 0
    %18 = vsyncpa [#allocation15], 0
    %19 = vsyncpa [#allocation4], 0
    // Predicated region
    $region2: #{tpu_custom_call.1} parent=1 // pred_check
      _
    $region3: #{tpu_custom_call.1} parent=1 // pred_check_branch
      %21 = sbr.rel (0) target = $region5
    $region4: #{tpu_custom_call.1} parent=1 // pred_region
      %s23 = ssub.s32 128, 128
      %24 = vsyncadd [#allocation3], %s23
      %s26 = sshll.u32 [#allocation2], 4
      %s27 = int_to_ptr.vmem [resolvable:$true] %s26
      %29 = dma.hbm_to_vmem [thread:$0]  %s0, 128, %s27, [#allocation3]
    $region5: #{tpu_custom_call.1} parent=1 // pred_fallthru
      _
    // Predicated region
    $region6: #{tpu_custom_call.1} parent=1 // pred_check
      _
    $region7: #{tpu_custom_call.1} parent=1 // pred_check_branch
      %31 = sbr.rel (0) target = $region9
    $region8: #{tpu_custom_call.1} parent=1 // pred_region
      %s33 = ssub.s32 16, 16
      %34 = vsyncadd [#allocation6], %s33
      %s36 = sshll.u32 [#allocation5], 4
      %s37 = int_to_ptr.vmem [resolvable:$true] %s36
      %39 = dma.hbm_to_vmem [thread:$0]  %s1, 16, %s37, [#allocation6]
    $region9: #{tpu_custom_call.1} parent=1 // pred_fallthru
      _
    // Predicated region
    $region10: #{tpu_custom_call.1} parent=1 // pred_check
      _
    $region11: #{tpu_custom_call.1} parent=1 // pred_check_branch
      %41 = sbr.rel (0) target = $region13
    $region12: #{tpu_custom_call.1} parent=1 // pred_region
      %s43 = ssub.s32 16, 16
      %44 = vsyncadd [#allocation6], %s43
      %s46 = sshll.u32 [#allocation7], 4
      %s47 = int_to_ptr.vmem [resolvable:$true] %s46
      %49 = dma.hbm_to_vmem [thread:$0]  %s2, 16, %s47, [#allocation6]
    $region13: #{tpu_custom_call.1} parent=1 // pred_fallthru
      _
    // Predicated region
    $region14: #{tpu_custom_call.1} parent=1 // pred_check
      _
    $region15: #{tpu_custom_call.1} parent=1 // pred_check_branch
      %51 = sbr.rel (0) target = $region17
    $region16: #{tpu_custom_call.1} parent=1 // pred_region
      %s53 = ssub.s32 2048, 2048
      %54 = vsyncadd [#allocation9], %s53
      %s55 = sshll.u32 [#allocation8], 4
      %s56 = int_to_ptr.vmem [resolvable:$true] %s55
      %61 = dma.hbm_to_vmem [thread:$0]  %s3, 2048, %s56, [#allocation9], 256, 256, 16
    $region17: #{tpu_custom_call.1} parent=1 // pred_fallthru
      _
    // Predicated region
    $region18: #{tpu_custom_call.1} parent=1 // pred_check
      _
    $region19: #{tpu_custom_call.1} parent=1 // pred_check_branch
      %63 = sbr.rel (0) target = $region21
    $region20: #{tpu_custom_call.1} parent=1 // pred_region
      %s65 = ssub.s32 64, 64
      %66 = vsyncadd [#allocation9], %s65
      %s68 = sshll.u32 [#allocation10], 4
      %s69 = int_to_ptr.vmem [resolvable:$true] %s68
      %71 = dma.hbm_to_vmem [thread:$0]  %s4, 64, %s69, [#allocation9]
    $region21: #{tpu_custom_call.1} parent=1 // pred_fallthru
      _
    // Predicated region
    $region22: #{tpu_custom_call.1} parent=1 // pred_check
      _
    $region23: #{tpu_custom_call.1} parent=1 // pred_check_branch
      %73 = sbr.rel (0) target = $region25
    $region24: #{tpu_custom_call.1} parent=1 // pred_region
      %s75 = ssub.s32 65536, 65536
      %76 = vsyncadd [#allocation12], %s75
      %s77 = sshll.u32 [#allocation11], 4
      %s78 = int_to_ptr.vmem [resolvable:$true] %s77
      %83 = dma.hbm_to_vmem [thread:$0]  %s5, 65536, %s78, [#allocation12], 1024, 1024, 64
    $region25: #{tpu_custom_call.1} parent=1 // pred_fallthru
      _
    // Predicated region
    $region26: #{tpu_custom_call.1} parent=1 // pred_check
      _
    $region27: #{tpu_custom_call.1} parent=1 // pred_check_branch
      %85 = sbr.rel (0) target = $region29
    $region28: #{tpu_custom_call.1} parent=1 // pred_region
      %s87 = ssub.s32 256, 256
      %88 = vsyncadd [#allocation12], %s87
      %s90 = sshll.u32 [#allocation13], 4
      %s91 = int_to_ptr.vmem [resolvable:$true] %s90
      %93 = dma.hbm_to_vmem [thread:$0]  %s6, 256, %s91, [#allocation12]
    $region29: #{tpu_custom_call.1} parent=1 // pred_fallthru
      _
    // Predicated region
    $region30: #{tpu_custom_call.1} parent=1 // pred_check
      _
    $region31: #{tpu_custom_call.1} parent=1 // pred_check_branch
      %95 = sbr.rel (0) target = $region33
    $region32: #{tpu_custom_call.1} parent=1 // pred_region
      _
    $region33: #{tpu_custom_call.1} parent=1 // pred_fallthru
      _
    // Predicated region
    $region34: #{tpu_custom_call.1} parent=1 // pred_check
      _
    $region35: #{tpu_custom_call.1} parent=1 // pred_check_branch
      %97 = sbr.rel (0) target = $region37
    $region36: #{tpu_custom_call.1} parent=1 // pred_region
      %s99 = ssub.s32 16, 16
      %100 = vsyncadd [#allocation15], %s99
      %s102 = sshll.u32 [#allocation14], 4
      %s103 = int_to_ptr.vmem [resolvable:$true] %s102
      %105 = dma.hbm_to_vmem [thread:$0]  %s8, 16, %s103, [#allocation15]
    $region37: #{tpu_custom_call.1} parent=1 // pred_fallthru
      _
    // Predicated region
    $region38: #{tpu_custom_call.1} parent=1 // pred_check
      _
    $region39: #{tpu_custom_call.1} parent=1 // pred_check_branch
      %107 = sbr.rel (0) target = $region41
    $region40: #{tpu_custom_call.1} parent=1 // pred_region
      %108 = dma.done [#allocation3], 128
    $region41: #{tpu_custom_call.1} parent=1 // pred_fallthru
      _
    // Predicated region
    $region42: #{tpu_custom_call.1} parent=1 // pred_check
      _
    $region43: #{tpu_custom_call.1} parent=1 // pred_check_branch
      %110 = sbr.rel (0) target = $region45
    $region44: #{tpu_custom_call.1} parent=1 // pred_region
      %111 = dma.done [#allocation6], 16
    $region45: #{tpu_custom_call.1} parent=1 // pred_fallthru
      _
    // Predicated region
    $region46: #{tpu_custom_call.1} parent=1 // pred_check
      _
    $region47: #{tpu_custom_call.1} parent=1 // pred_check_branch
      %113 = sbr.rel (0) target = $region49
    $region48: #{tpu_custom_call.1} parent=1 // pred_region
      %114 = dma.done [#allocation6], 16
    $region49: #{tpu_custom_call.1} parent=1 // pred_fallthru
      _
    // Predicated region
    $region50: #{tpu_custom_call.1} parent=1 // pred_check
      _
    $region51: #{tpu_custom_call.1} parent=1 // pred_check_branch
      %116 = sbr.rel (0) target = $region53
    $region52: #{tpu_custom_call.1} parent=1 // pred_region
      %117 = dma.done [#allocation9], 2048
    $region53: #{tpu_custom_call.1} parent=1 // pred_fallthru
      _
    // Predicated region
    $region54: #{tpu_custom_call.1} parent=1 // pred_check
      _
    $region55: #{tpu_custom_call.1} parent=1 // pred_check_branch
      %119 = sbr.rel (0) target = $region57
    $region56: #{tpu_custom_call.1} parent=1 // pred_region
      %120 = dma.done [#allocation9], 64
    $region57: #{tpu_custom_call.1} parent=1 // pred_fallthru
      _
    // Predicated region
    $region58: #{tpu_custom_call.1} parent=1 // pred_check
      _
    $region59: #{tpu_custom_call.1} parent=1 // pred_check_branch
      %122 = sbr.rel (0) target = $region61
    $region60: #{tpu_custom_call.1} parent=1 // pred_region
      %123 = dma.done [#allocation12], 65536
    $region61: #{tpu_custom_call.1} parent=1 // pred_fallthru
      _
    // Predicated region
    $region62: #{tpu_custom_call.1} parent=1 // pred_check
      _
    $region63: #{tpu_custom_call.1} parent=1 // pred_check_branch
      %125 = sbr.rel (0) target = $region65
    $region64: #{tpu_custom_call.1} parent=1 // pred_region
      %126 = dma.done [#allocation12], 256
    $region65: #{tpu_custom_call.1} parent=1 // pred_fallthru
      _
    // Predicated region
    $region66: #{tpu_custom_call.1} parent=1 // pred_check
      _
    $region67: #{tpu_custom_call.1} parent=1 // pred_check_branch
      %128 = sbr.rel (0) target = $region69
    $region68: #{tpu_custom_call.1} parent=1 // pred_region
      %129 = dma.done [#allocation15], 16
    $region69: #{tpu_custom_call.1} parent=1 // pred_fallthru
      _
    %v131 = vld [vmem:[#allocation2] sm:$0xff]
    %v132 = vld [vmem:[#allocation5] sm:$0x1]
    %v134 = vlaneseq
    %v135 = vshrl.u32 %v134, 7
    %v136 = vsub.s32 0, %v135
    %v137 = vrot.slane %v132, %v136
    %v139 = vmul.f32 %v131, %v137
    %v140 = vld [vmem:[#allocation7] sm:$0x1]
    %v142 = vlaneseq
    %v143 = vshrl.u32 %v142, 7
    %v144 = vsub.s32 0, %v143
    %v145 = vrot.slane %v140, %v144
    %v147 = vadd.f32 %v139, %v145
    %v148 = vtanh.pop %v147
    %v149 = vpack.c.bf16 %v147, %v147
    %v150 = vld [vmem:[#allocation8] sm:$0xff]
    %v151 = vld [vmem:[#allocation8 + $0x8] sm:$0xff]
    %v152 = vld [vmem:[#allocation8 + $0x10] sm:$0xff]
    %v153 = vld [vmem:[#allocation8 + $0x18] sm:$0xff]
    %v154 = vld [vmem:[#allocation8 + $0x20] sm:$0xff]
    %v155 = vld [vmem:[#allocation8 + $0x28] sm:$0xff]
    %v156 = vld [vmem:[#allocation8 + $0x30] sm:$0xff]
    %v157 = vld [vmem:[#allocation8 + $0x38] sm:$0xff]
    %v158 = vld [vmem:[#allocation8 + $0x40] sm:$0xff]
    %v159 = vld [vmem:[#allocation8 + $0x48] sm:$0xff]
    %v160 = vld [vmem:[#allocation8 + $0x50] sm:$0xff]
    %v161 = vld [vmem:[#allocation8 + $0x58] sm:$0xff]
    %v162 = vld [vmem:[#allocation8 + $0x60] sm:$0xff]
    %v163 = vld [vmem:[#allocation8 + $0x68] sm:$0xff]
    %v164 = vld [vmem:[#allocation8 + $0x70] sm:$0xff]
    %v165 = vld [vmem:[#allocation8 + $0x78] sm:$0xff]
    %v166 = vld [vmem:[#allocation10] sm:$0xf]
    %v168 = vlaneseq
    %v169 = vshrl.u32 %v168, 7
    %v170 = vsub.s32 0, %v169
    %v171 = vrot.slane %v166, %v170
    %v172 = vlaneseq
    %v173 = vshrl.u32 %v172, 7
    %v174 = vsub.s32 1, %v173
    %v175 = vrot.slane %v166, %v174
    %v176 = vlaneseq
    %v177 = vshrl.u32 %v176, 7
    %v178 = vsub.s32 2, %v177
    %v179 = vrot.slane %v166, %v178
    %v180 = vlaneseq
    %v181 = vshrl.u32 %v180, 7
    %v182 = vsub.s32 3, %v181
    %v183 = vrot.slane %v166, %v182
    %v204 = vunpack.c.l.b16 %v150
    %v205 = vunpack.c.h.b16 %v150
    %v206 = vunpack.c.l.b16 %v151
    %v207 = vunpack.c.h.b16 %v151
    %v208 = vunpack.c.l.b16 %v152
    %v209 = vunpack.c.h.b16 %v152
    %v210 = vunpack.c.l.b16 %v153
    %v211 = vunpack.c.h.b16 %v153
    %v212 = vunpack.c.l.b16 %v154
    %v213 = vunpack.c.h.b16 %v154
    %v214 = vunpack.c.l.b16 %v155
    %v215 = vunpack.c.h.b16 %v155
    %v216 = vunpack.c.l.b16 %v156
    %v217 = vunpack.c.h.b16 %v156
    %v218 = vunpack.c.l.b16 %v157
    %v219 = vunpack.c.h.b16 %v157
    %v220 = vunpack.c.l.b16 %v158
    %v221 = vunpack.c.h.b16 %v158
    %v222 = vunpack.c.l.b16 %v159
    %v223 = vunpack.c.h.b16 %v159
    %v224 = vunpack.c.l.b16 %v160
    %v225 = vunpack.c.h.b16 %v160
    %v226 = vunpack.c.l.b16 %v161
    %v227 = vunpack.c.h.b16 %v161
    %v228 = vunpack.c.l.b16 %v162
    %v229 = vunpack.c.h.b16 %v162
    %v230 = vunpack.c.l.b16 %v163
    %v231 = vunpack.c.h.b16 %v163
    %v232 = vunpack.c.l.b16 %v164
    %v233 = vunpack.c.h.b16 %v164
    %v234 = vunpack.c.l.b16 %v165
    %v235 = vunpack.c.h.b16 %v165
    %v236 = vpack.c.b16 %v208, %v204
    %v237 = vpack.c.b16 %v209, %v205
    %v238 = vpack.c.b16 %v210, %v206
    %v239 = vpack.c.b16 %v211, %v207
    %v240 = vpack.c.b16 %v216, %v212
    %v241 = vpack.c.b16 %v217, %v213
    %v242 = vpack.c.b16 %v218, %v214
    %v243 = vpack.c.b16 %v219, %v215
    %v244 = vpack.c.b16 %v224, %v220
    %v245 = vpack.c.b16 %v225, %v221
    %v246 = vpack.c.b16 %v226, %v222
    %v247 = vpack.c.b16 %v227, %v223
    %v248 = vpack.c.b16 %v232, %v228
    %v249 = vpack.c.b16 %v233, %v229
    %v250 = vpack.c.b16 %v234, %v230
    %v251 = vpack.c.b16 %v235, %v231
    %vm268 = vcmask 523264
    %v270 = vsel %vm268, %v149, 0
    %272 = vmatprep.subr.bf16.mxu0 %v237
    %273 = vmatpush1.bf16.msra.mxu0 %v236
    %274 = vmatprep.subr.bf16.mxu0 %v241
    %275 = vmatpush1.bf16.msra.mxu0 %v240
    %276 = vmatprep.subr.bf16.mxu0 %v245
    %277 = vmatpush1.bf16.msra.mxu0 %v244
    %278 = vmatprep.subr.bf16.mxu0 %v249
    %279 = vmatpush1.bf16.msra.mxu0 %v248
    %280 = vmatprep.subr.bf16.mxu0 0
    %281 = vmatpush1.bf16.msra.mxu0 0
    %282 = vmatprep.subr.bf16.mxu0 0
    %283 = vmatpush1.bf16.msra.mxu0 0
    %284 = vmatprep.subr.bf16.mxu0 0
    %285 = vmatpush1.bf16.msra.mxu0 0
    %286 = vmatprep.subr.bf16.mxu0 0
    %287 = vmatpush1.bf16.msra.mxu0 0
    %288 = vmatprep.subr.bf16.mxu0 0
    %289 = vmatpush1.bf16.msra.mxu0 0
    %290 = vmatprep.subr.bf16.mxu0 0
    %291 = vmatpush1.bf16.msra.mxu0 0
    %292 = vmatprep.subr.bf16.mxu0 0
    %293 = vmatpush1.bf16.msra.mxu0 0
    %294 = vmatprep.subr.bf16.mxu0 0
    %295 = vmatpush1.bf16.msra.mxu0 0
    %296 = vmatprep.subr.bf16.mxu0 0
    %297 = vmatpush1.bf16.msra.mxu0 0
    %298 = vmatprep.subr.bf16.mxu0 0
    %299 = vmatpush1.bf16.msra.mxu0 0
    %300 = vmatprep.subr.bf16.mxu0 0
    %301 = vmatpush1.bf16.msra.mxu0 0
    %302 = vmatprep.subr.bf16.mxu0 0
    %303 = vmatpush1.bf16.msra.mxu0 0
    %304 = vmatprep.mubr.bf16.mxu0 0
    %305 = vmatmul.mubr.bf16.gmra.mrb[0].mxu0 %v270
    %v306 = vpop.f32.mrb[0].mxu0
    %v307 = vadd.f32 %v171, %v306
    %v308 = vpop.f32.mrb[0].mxu0
    %v309 = vadd.f32 %v175, %v308
    %v310 = vpop.f32.mrb[0].mxu0
    %v311 = vpop.f32.mrb[0].mxu0
    %312 = vdwg.mxu0
    %313 = vmatprep.subr.bf16.mxu0 %v239
    %314 = vmatpush1.bf16.msra.mxu0 %v238
    %315 = vmatprep.subr.bf16.mxu0 %v243
    %316 = vmatpush1.bf16.msra.mxu0 %v242
    %317 = vmatprep.subr.bf16.mxu0 %v247
    %318 = vmatpush1.bf16.msra.mxu0 %v246
    %319 = vmatprep.subr.bf16.mxu0 %v251
    %320 = vmatpush1.bf16.msra.mxu0 %v250
    %321 = vmatprep.subr.bf16.mxu0 0
    %322 = vmatpush1.bf16.msra.mxu0 0
    %323 = vmatprep.subr.bf16.mxu0 0
    %324 = vmatpush1.bf16.msra.mxu0 0
    %325 = vmatprep.subr.bf16.mxu0 0
    %326 = vmatpush1.bf16.msra.mxu0 0
    %327 = vmatprep.subr.bf16.mxu0 0
    %328 = vmatpush1.bf16.msra.mxu0 0
    %329 = vmatprep.subr.bf16.mxu0 0
    %330 = vmatpush1.bf16.msra.mxu0 0
    %331 = vmatprep.subr.bf16.mxu0 0
    %332 = vmatpush1.bf16.msra.mxu0 0
    %333 = vmatprep.subr.bf16.mxu0 0
    %334 = vmatpush1.bf16.msra.mxu0 0
    %335 = vmatprep.subr.bf16.mxu0 0
    %336 = vmatpush1.bf16.msra.mxu0 0
    %337 = vmatprep.subr.bf16.mxu0 0
    %338 = vmatpush1.bf16.msra.mxu0 0
    %339 = vmatprep.subr.bf16.mxu0 0
    %340 = vmatpush1.bf16.msra.mxu0 0
    %341 = vmatprep.subr.bf16.mxu0 0
    %342 = vmatpush1.bf16.msra.mxu0 0
    %343 = vmatprep.subr.bf16.mxu0 0
    %344 = vmatpush1.bf16.msra.mxu0 0
    %345 = vmatprep.mubr.bf16.mxu0 0
    %346 = vmatmul.mubr.bf16.gmra.mrb[0].mxu0 %v270
    %v347 = vpop.f32.mrb[0].mxu0
    %v348 = vadd.f32 %v179, %v347
    %v349 = vpop.f32.mrb[0].mxu0
    %v350 = vadd.f32 %v183, %v349
    %v351 = vpop.f32.mrb[0].mxu0
    %v352 = vpop.f32.mrb[0].mxu0
    %353 = vdwg.mxu0
    %v354 = vpack.c.bf16 %v307, %v307
    %v355 = vpack.c.bf16 %v309, %v309
    %v356 = vpack.c.bf16 %v348, %v348
    %v357 = vpack.c.bf16 %v350, %v350
    %v358 = vld [vmem:[#allocation11] sm:$0xff]
    %v359 = vld [vmem:[#allocation11 + $0x8] sm:$0xff]
    %v360 = vld [vmem:[#allocation11 + $0x10] sm:$0xff]
    %v361 = vld [vmem:[#allocation11 + $0x18] sm:$0xff]
    %v362 = vld [vmem:[#allocation11 + $0x20] sm:$0xff]
    %v363 = vld [vmem:[#allocation11 + $0x28] sm:$0xff]
    %v364 = vld [vmem:[#allocation11 + $0x30] sm:$0xff]
    %v365 = vld [vmem:[#allocation11 + $0x38] sm:$0xff]
    %v366 = vld [vmem:[#allocation11 + $0x40] sm:$0xff]
    %v367 = vld [vmem:[#allocation11 + $0x48] sm:$0xff]
    %v368 = vld [vmem:[#allocation11 + $0x50] sm:$0xff]
    %v369 = vld [vmem:[#allocation11 + $0x58] sm:$0xff]
    %v370 = vld [vmem:[#allocation11 + $0x60] sm:$0xff]
    %v371 = vld [vmem:[#allocation11 + $0x68] sm:$0xff]
    %v372 = vld [vmem:[#allocation11 + $0x70] sm:$0xff]
    %v373 = vld [vmem:[#allocation11 + $0x78] sm:$0xff]
    %v374 = vld [vmem:[#allocation11 + $0x80] sm:$0xff]
    %v375 = vld [vmem:[#allocation11 + $0x88] sm:$0xff]
    %v376 = vld [vmem:[#allocation11 + $0x90] sm:$0xff]
    %v377 = vld [vmem:[#allocation11 + $0x98] sm:$0xff]
    %v378 = vld [vmem:[#allocation11 + $0xa0] sm:$0xff]
    %v379 = vld [vmem:[#allocation11 + $0xa8] sm:$0xff]
    %v380 = vld [vmem:[#allocation11 + $0xb0] sm:$0xff]
    %v381 = vld [vmem:[#allocation11 + $0xb8] sm:$0xff]
    %v382 = vld [vmem:[#allocation11 + $0xc0] sm:$0xff]
    %v383 = vld [vmem:[#allocation11 + $0xc8] sm:$0xff]
    %v384 = vld [vmem:[#allocation11 + $0xd0] sm:$0xff]
    %v385 = vld [vmem:[#allocation11 + $0xd8] sm:$0xff]
    %v386 = vld [vmem:[#allocation11 + $0xe0] sm:$0xff]
    %v387 = vld [vmem:[#allocation11 + $0xe8] sm:$0xff]
    %v388 = vld [vmem:[#allocation11 + $0xf0] sm:$0xff]
    %v389 = vld [vmem:[#allocation11 + $0xf8] sm:$0xff]
    %v390 = vld [vmem:[#allocation11 + $0x100] sm:$0xff]
    %v391 = vld [vmem:[#allocation11 + $0x108] sm:$0xff]
    %v392 = vld [vmem:[#allocation11 + $0x110] sm:$0xff]
    %v393 = vld [vmem:[#allocation11 + $0x118] sm:$0xff]
    %v394 = vld [vmem:[#allocation11 + $0x120] sm:$0xff]
    %v395 = vld [vmem:[#allocation11 + $0x128] sm:$0xff]
    %v396 = vld [vmem:[#allocation11 + $0x130] sm:$0xff]
    %v397 = vld [vmem:[#allocation11 + $0x138] sm:$0xff]
    %v398 = vld [vmem:[#allocation11 + $0x140] sm:$0xff]
    %v399 = vld [vmem:[#allocation11 + $0x148] sm:$0xff]
    %v400 = vld [vmem:[#allocation11 + $0x150] sm:$0xff]
    %v401 = vld [vmem:[#allocation11 + $0x158] sm:$0xff]
    %v402 = vld [vmem:[#allocation11 + $0x160] sm:$0xff]
    %v403 = vld [vmem:[#allocation11 + $0x168] sm:$0xff]
    %v404 = vld [vmem:[#allocation11 + $0x170] sm:$0xff]
    %v405 = vld [vmem:[#allocation11 + $0x178] sm:$0xff]
    %v406 = vld [vmem:[#allocation11 + $0x180] sm:$0xff]
    %v407 = vld [vmem:[#allocation11 + $0x188] sm:$0xff]
    %v408 = vld [vmem:[#allocation11 + $0x190] sm:$0xff]
    %v409 = vld [vmem:[#allocation11 + $0x198] sm:$0xff]
    %v410 = vld [vmem:[#allocation11 + $0x1a0] sm:$0xff]
    %v411 = vld [vmem:[#allocation11 + $0x1a8] sm:$0xff]
    %v412 = vld [vmem:[#allocation11 + $0x1b0] sm:$0xff]
    %v413 = vld [vmem:[#allocation11 + $0x1b8] sm:$0xff]
    %v414 = vld [vmem:[#allocation11 + $0x1c0] sm:$0xff]
    %v415 = vld [vmem:[#allocation11 + $0x1c8] sm:$0xff]
    %v416 = vld [vmem:[#allocation11 + $0x1d0] sm:$0xff]
    %v417 = vld [vmem:[#allocation11 + $0x1d8] sm:$0xff]
    %v418 = vld [vmem:[#allocation11 + $0x1e0] sm:$0xff]
    %v419 = vld [vmem:[#allocation11 + $0x1e8] sm:$0xff]
    %v420 = vld [vmem:[#allocation11 + $0x1f0] sm:$0xff]
    %v421 = vld [vmem:[#allocation11 + $0x1f8] sm:$0xff]
    %v422 = vld [vmem:[#allocation11 + $0x200] sm:$0xff]
    %v423 = vld [vmem:[#allocation11 + $0x208] sm:$0xff]
    %v424 = vld [vmem:[#allocation11 + $0x210] sm:$0xff]
    %v425 = vld [vmem:[#allocation11 + $0x218] sm:$0xff]
    %v426 = vld [vmem:[#allocation11 + $0x220] sm:$0xff]
    %v427 = vld [vmem:[#allocation11 + $0x228] sm:$0xff]
    %v428 = vld [vmem:[#allocation11 + $0x230] sm:$0xff]
    %v429 = vld [vmem:[#allocation11 + $0x238] sm:$0xff]
    %v430 = vld [vmem:[#allocation11 + $0x240] sm:$0xff]
    %v431 = vld [vmem:[#allocation11 + $0x248] sm:$0xff]
    %v432 = vld [vmem:[#allocation11 + $0x250] sm:$0xff]
    %v433 = vld [vmem:[#allocation11 + $0x258] sm:$0xff]
    %v434 = vld [vmem:[#allocation11 + $0x260] sm:$0xff]
    %v435 = vld [vmem:[#allocation11 + $0x268] sm:$0xff]
    %v436 = vld [vmem:[#allocation11 + $0x270] sm:$0xff]
    %v437 = vld [vmem:[#allocation11 + $0x278] sm:$0xff]
    %v438 = vld [vmem:[#allocation11 + $0x280] sm:$0xff]
    %v439 = vld [vmem:[#allocation11 + $0x288] sm:$0xff]
    %v440 = vld [vmem:[#allocation11 + $0x290] sm:$0xff]
    %v441 = vld [vmem:[#allocation11 + $0x298] sm:$0xff]
    %v442 = vld [vmem:[#allocation11 + $0x2a0] sm:$0xff]
    %v443 = vld [vmem:[#allocation11 + $0x2a8] sm:$0xff]
    %v444 = vld [vmem:[#allocation11 + $0x2b0] sm:$0xff]
    %v445 = vld [vmem:[#allocation11 + $0x2b8] sm:$0xff]
    %v446 = vld [vmem:[#allocation11 + $0x2c0] sm:$0xff]
    %v447 = vld [vmem:[#allocation11 + $0x2c8] sm:$0xff]
    %v448 = vld [vmem:[#allocation11 + $0x2d0] sm:$0xff]
    %v449 = vld [vmem:[#allocation11 + $0x2d8] sm:$0xff]
    %v450 = vld [vmem:[#allocation11 + $0x2e0] sm:$0xff]
    %v451 = vld [vmem:[#allocation11 + $0x2e8] sm:$0xff]
    %v452 = vld [vmem:[#allocation11 + $0x2f0] sm:$0xff]
    %v453 = vld [vmem:[#allocation11 + $0x2f8] sm:$0xff]
    %v454 = vld [vmem:[#allocation11 + $0x300] sm:$0xff]
    %v455 = vld [vmem:[#allocation11 + $0x308] sm:$0xff]
    %v456 = vld [vmem:[#allocation11 + $0x310] sm:$0xff]
    %v457 = vld [vmem:[#allocation11 + $0x318] sm:$0xff]
    %v458 = vld [vmem:[#allocation11 + $0x320] sm:$0xff]
    %v459 = vld [vmem:[#allocation11 + $0x328] sm:$0xff]
    %v460 = vld [vmem:[#allocation11 + $0x330] sm:$0xff]
    %v461 = vld [vmem:[#allocation11 + $0x338] sm:$0xff]
    %v462 = vld [vmem:[#allocation11 + $0x340] sm:$0xff]
    %v463 = vld [vmem:[#allocation11 + $0x348] sm:$0xff]
    %v464 = vld [vmem:[#allocation11 + $0x350] sm:$0xff]
    %v465 = vld [vmem:[#allocation11 + $0x358] sm:$0xff]
    %v466 = vld [vmem:[#allocation11 + $0x360] sm:$0xff]
    %v467 = vld [vmem:[#allocation11 + $0x368] sm:$0xff]
    %v468 = vld [vmem:[#allocation11 + $0x370] sm:$0xff]
    %v469 = vld [vmem:[#allocation11 + $0x378] sm:$0xff]
    %v470 = vld [vmem:[#allocation11 + $0x380] sm:$0xff]
    %v471 = vld [vmem:[#allocation11 + $0x388] sm:$0xff]
    %v472 = vld [vmem:[#allocation11 + $0x390] sm:$0xff]
    %v473 = vld [vmem:[#allocation11 + $0x398] sm:$0xff]
    %v474 = vld [vmem:[#allocation11 + $0x3a0] sm:$0xff]
    %v475 = vld [vmem:[#allocation11 + $0x3a8] sm:$0xff]
    %v476 = vld [vmem:[#allocation11 + $0x3b0] sm:$0xff]
    %v477 = vld [vmem:[#allocation11 + $0x3b8] sm:$0xff]
    %v478 = vld [vmem:[#allocation11 + $0x3c0] sm:$0xff]
    %v479 = vld [vmem:[#allocation11 + $0x3c8] sm:$0xff]
    %v480 = vld [vmem:[#allocation11 + $0x3d0] sm:$0xff]
    %v481 = vld [vmem:[#allocation11 + $0x3d8] sm:$0xff]
    %v482 = vld [vmem:[#allocation11 + $0x3e0] sm:$0xff]
    %v483 = vld [vmem:[#allocation11 + $0x3e8] sm:$0xff]
    %v484 = vld [vmem:[#allocation11 + $0x3f0] sm:$0xff]
    %v485 = vld [vmem:[#allocation11 + $0x3f8] sm:$0xff]
    %v486 = vld [vmem:[#allocation11 + $0x400] sm:$0xff]
    %v487 = vld [vmem:[#allocation11 + $0x408] sm:$0xff]
    %v488 = vld [vmem:[#allocation11 + $0x410] sm:$0xff]
    %v489 = vld [vmem:[#allocation11 + $0x418] sm:$0xff]
    %v490 = vld [vmem:[#allocation11 + $0x420] sm:$0xff]
    %v491 = vld [vmem:[#allocation11 + $0x428] sm:$0xff]
    %v492 = vld [vmem:[#allocation11 + $0x430] sm:$0xff]
    %v493 = vld [vmem:[#allocation11 + $0x438] sm:$0xff]
    %v494 = vld [vmem:[#allocation11 + $0x440] sm:$0xff]
    %v495 = vld [vmem:[#allocation11 + $0x448] sm:$0xff]
    %v496 = vld [vmem:[#allocation11 + $0x450] sm:$0xff]
    %v497 = vld [vmem:[#allocation11 + $0x458] sm:$0xff]
    %v498 = vld [vmem:[#allocation11 + $0x460] sm:$0xff]
    %v499 = vld [vmem:[#allocation11 + $0x468] sm:$0xff]
    %v500 = vld [vmem:[#allocation11 + $0x470] sm:$0xff]
    %v501 = vld [vmem:[#allocation11 + $0x478] sm:$0xff]
    %v502 = vld [vmem:[#allocation11 + $0x480] sm:$0xff]
    %v503 = vld [vmem:[#allocation11 + $0x488] sm:$0xff]
    %v504 = vld [vmem:[#allocation11 + $0x490] sm:$0xff]
    %v505 = vld [vmem:[#allocation11 + $0x498] sm:$0xff]
    %v506 = vld [vmem:[#allocation11 + $0x4a0] sm:$0xff]
    %v507 = vld [vmem:[#allocation11 + $0x4a8] sm:$0xff]
    %v508 = vld [vmem:[#allocation11 + $0x4b0] sm:$0xff]
    %v509 = vld [vmem:[#allocation11 + $0x4b8] sm:$0xff]
    %v510 = vld [vmem:[#allocation11 + $0x4c0] sm:$0xff]
    %v511 = vld [vmem:[#allocation11 + $0x4c8] sm:$0xff]
    %v512 = vld [vmem:[#allocation11 + $0x4d0] sm:$0xff]
    %v513 = vld [vmem:[#allocation11 + $0x4d8] sm:$0xff]
    %v514 = vld [vmem:[#allocation11 + $0x4e0] sm:$0xff]
    %v515 = vld [vmem:[#allocation11 + $0x4e8] sm:$0xff]
    %v516 = vld [vmem:[#allocation11 + $0x4f0] sm:$0xff]
    %v517 = vld [vmem:[#allocation11 + $0x4f8] sm:$0xff]
    %v518 = vld [vmem:[#allocation11 + $0x500] sm:$0xff]
    %v519 = vld [vmem:[#allocation11 + $0x508] sm:$0xff]
    %v520 = vld [vmem:[#allocation11 + $0x510] sm:$0xff]
    %v521 = vld [vmem:[#allocation11 + $0x518] sm:$0xff]
    %v522 = vld [vmem:[#allocation11 + $0x520] sm:$0xff]
    %v523 = vld [vmem:[#allocation11 + $0x528] sm:$0xff]
    %v524 = vld [vmem:[#allocation11 + $0x530] sm:$0xff]
    %v525 = vld [vmem:[#allocation11 + $0x538] sm:$0xff]
    %v526 = vld [vmem:[#allocation11 + $0x540] sm:$0xff]
    %v527 = vld [vmem:[#allocation11 + $0x548] sm:$0xff]
    %v528 = vld [vmem:[#allocation11 + $0x550] sm:$0xff]
    %v529 = vld [vmem:[#allocation11 + $0x558] sm:$0xff]
    %v530 = vld [vmem:[#allocation11 + $0x560] sm:$0xff]
    %v531 = vld [vmem:[#allocation11 + $0x568] sm:$0xff]
    %v532 = vld [vmem:[#allocation11 + $0x570] sm:$0xff]
    %v533 = vld [vmem:[#allocation11 + $0x578] sm:$0xff]
    %v534 = vld [vmem:[#allocation11 + $0x580] sm:$0xff]
    %v535 = vld [vmem:[#allocation11 + $0x588] sm:$0xff]
    %v536 = vld [vmem:[#allocation11 + $0x590] sm:$0xff]
    %v537 = vld [vmem:[#allocation11 + $0x598] sm:$0xff]
    %v538 = vld [vmem:[#allocation11 + $0x5a0] sm:$0xff]
    %v539 = vld [vmem:[#allocation11 + $0x5a8] sm:$0xff]
    %v540 = vld [vmem:[#allocation11 + $0x5b0] sm:$0xff]
    %v541 = vld [vmem:[#allocation11 + $0x5b8] sm:$0xff]
    %v542 = vld [vmem:[#allocation11 + $0x5c0] sm:$0xff]
    %v543 = vld [vmem:[#allocation11 + $0x5c8] sm:$0xff]
    %v544 = vld [vmem:[#allocation11 + $0x5d0] sm:$0xff]
    %v545 = vld [vmem:[#allocation11 + $0x5d8] sm:$0xff]
    %v546 = vld [vmem:[#allocation11 + $0x5e0] sm:$0xff]
    %v547 = vld [vmem:[#allocation11 + $0x5e8] sm:$0xff]
    %v548 = vld [vmem:[#allocation11 + $0x5f0] sm:$0xff]
    %v549 = vld [vmem:[#allocation11 + $0x5f8] sm:$0xff]
    %v550 = vld [vmem:[#allocation11 + $0x600] sm:$0xff]
    %v551 = vld [vmem:[#allocation11 + $0x608] sm:$0xff]
    %v552 = vld [vmem:[#allocation11 + $0x610] sm:$0xff]
    %v553 = vld [vmem:[#allocation11 + $0x618] sm:$0xff]
    %v554 = vld [vmem:[#allocation11 + $0x620] sm:$0xff]
    %v555 = vld [vmem:[#allocation11 + $0x628] sm:$0xff]
    %v556 = vld [vmem:[#allocation11 + $0x630] sm:$0xff]
    %v557 = vld [vmem:[#allocation11 + $0x638] sm:$0xff]
    %v558 = vld [vmem:[#allocation11 + $0x640] sm:$0xff]
    %v559 = vld [vmem:[#allocation11 + $0x648] sm:$0xff]
    %v560 = vld [vmem:[#allocation11 + $0x650] sm:$0xff]
    %v561 = vld [vmem:[#allocation11 + $0x658] sm:$0xff]
    %v562 = vld [vmem:[#allocation11 + $0x660] sm:$0xff]
    %v563 = vld [vmem:[#allocation11 + $0x668] sm:$0xff]
    %v564 = vld [vmem:[#allocation11 + $0x670] sm:$0xff]
    %v565 = vld [vmem:[#allocation11 + $0x678] sm:$0xff]
    %v566 = vld [vmem:[#allocation11 + $0x680] sm:$0xff]
    %v567 = vld [vmem:[#allocation11 + $0x688] sm:$0xff]
    %v568 = vld [vmem:[#allocation11 + $0x690] sm:$0xff]
    %v569 = vld [vmem:[#allocation11 + $0x698] sm:$0xff]
    %v570 = vld [vmem:[#allocation11 + $0x6a0] sm:$0xff]
    %v571 = vld [vmem:[#allocation11 + $0x6a8] sm:$0xff]
    %v572 = vld [vmem:[#allocation11 + $0x6b0] sm:$0xff]
    %v573 = vld [vmem:[#allocation11 + $0x6b8] sm:$0xff]
    %v574 = vld [vmem:[#allocation11 + $0x6c0] sm:$0xff]
    %v575 = vld [vmem:[#allocation11 + $0x6c8] sm:$0xff]
    %v576 = vld [vmem:[#allocation11 + $0x6d0] sm:$0xff]
    %v577 = vld [vmem:[#allocation11 + $0x6d8] sm:$0xff]
    %v578 = vld [vmem:[#allocation11 + $0x6e0] sm:$0xff]
    %v579 = vld [vmem:[#allocation11 + $0x6e8] sm:$0xff]
    %v580 = vld [vmem:[#allocation11 + $0x6f0] sm:$0xff]
    %v581 = vld [vmem:[#allocation11 + $0x6f8] sm:$0xff]
    %v582 = vld [vmem:[#allocation11 + $0x700] sm:$0xff]
    %v583 = vld [vmem:[#allocation11 + $0x708] sm:$0xff]
    %v584 = vld [vmem:[#allocation11 + $0x710] sm:$0xff]
    %v585 = vld [vmem:[#allocation11 + $0x718] sm:$0xff]
    %v586 = vld [vmem:[#allocation11 + $0x720] sm:$0xff]
    %v587 = vld [vmem:[#allocation11 + $0x728] sm:$0xff]
    %v588 = vld [vmem:[#allocation11 + $0x730] sm:$0xff]
    %v589 = vld [vmem:[#allocation11 + $0x738] sm:$0xff]
    %v590 = vld [vmem:[#allocation11 + $0x740] sm:$0xff]
    %v591 = vld [vmem:[#allocation11 + $0x748] sm:$0xff]
    %v592 = vld [vmem:[#allocation11 + $0x750] sm:$0xff]
    %v593 = vld [vmem:[#allocation11 + $0x758] sm:$0xff]
    %v594 = vld [vmem:[#allocation11 + $0x760] sm:$0xff]
    %v595 = vld [vmem:[#allocation11 + $0x768] sm:$0xff]
    %v596 = vld [vmem:[#allocation11 + $0x770] sm:$0xff]
    %v597 = vld [vmem:[#allocation11 + $0x778] sm:$0xff]
    %v598 = vld [vmem:[#allocation11 + $0x780] sm:$0xff]
    %v599 = vld [vmem:[#allocation11 + $0x788] sm:$0xff]
    %v600 = vld [vmem:[#allocation11 + $0x790] sm:$0xff]
    %v601 = vld [vmem:[#allocation11 + $0x798] sm:$0xff]
    %v602 = vld [vmem:[#allocation11 + $0x7a0] sm:$0xff]
    %v603 = vld [vmem:[#allocation11 + $0x7a8] sm:$0xff]
    %v604 = vld [vmem:[#allocation11 + $0x7b0] sm:$0xff]
    %v605 = vld [vmem:[#allocation11 + $0x7b8] sm:$0xff]
    %v606 = vld [vmem:[#allocation11 + $0x7c0] sm:$0xff]
    %v607 = vld [vmem:[#allocation11 + $0x7c8] sm:$0xff]
    %v608 = vld [vmem:[#allocation11 + $0x7d0] sm:$0xff]
    %v609 = vld [vmem:[#allocation11 + $0x7d8] sm:$0xff]
    %v610 = vld [vmem:[#allocation11 + $0x7e0] sm:$0xff]
    %v611 = vld [vmem:[#allocation11 + $0x7e8] sm:$0xff]
    %v612 = vld [vmem:[#allocation11 + $0x7f0] sm:$0xff]
    %v613 = vld [vmem:[#allocation11 + $0x7f8] sm:$0xff]
    %v614 = vld [vmem:[#allocation11 + $0x800] sm:$0xff]
    %v615 = vld [vmem:[#allocation11 + $0x808] sm:$0xff]
    %v616 = vld [vmem:[#allocation11 + $0x810] sm:$0xff]
    %v617 = vld [vmem:[#allocation11 + $0x818] sm:$0xff]
    %v618 = vld [vmem:[#allocation11 + $0x820] sm:$0xff]
    %v619 = vld [vmem:[#allocation11 + $0x828] sm:$0xff]
    %v620 = vld [vmem:[#allocation11 + $0x830] sm:$0xff]
    %v621 = vld [vmem:[#allocation11 + $0x838] sm:$0xff]
    %v622 = vld [vmem:[#allocation11 + $0x840] sm:$0xff]
    %v623 = vld [vmem:[#allocation11 + $0x848] sm:$0xff]
    %v624 = vld [vmem:[#allocation11 + $0x850] sm:$0xff]
    %v625 = vld [vmem:[#allocation11 + $0x858] sm:$0xff]
    %v626 = vld [vmem:[#allocation11 + $0x860] sm:$0xff]
    %v627 = vld [vmem:[#allocation11 + $0x868] sm:$0xff]
    %v628 = vld [vmem:[#allocation11 + $0x870] sm:$0xff]
    %v629 = vld [vmem:[#allocation11 + $0x878] sm:$0xff]
    %v630 = vld [vmem:[#allocation11 + $0x880] sm:$0xff]
    %v631 = vld [vmem:[#allocation11 + $0x888] sm:$0xff]
    %v632 = vld [vmem:[#allocation11 + $0x890] sm:$0xff]
    %v633 = vld [vmem:[#allocation11 + $0x898] sm:$0xff]
    %v634 = vld [vmem:[#allocation11 + $0x8a0] sm:$0xff]
    %v635 = vld [vmem:[#allocation11 + $0x8a8] sm:$0xff]
    %v636 = vld [vmem:[#allocation11 + $0x8b0] sm:$0xff]
    %v637 = vld [vmem:[#allocation11 + $0x8b8] sm:$0xff]
    %v638 = vld [vmem:[#allocation11 + $0x8c0] sm:$0xff]
    %v639 = vld [vmem:[#allocation11 + $0x8c8] sm:$0xff]
    %v640 = vld [vmem:[#allocation11 + $0x8d0] sm:$0xff]
    %v641 = vld [vmem:[#allocation11 + $0x8d8] sm:$0xff]
    %v642 = vld [vmem:[#allocation11 + $0x8e0] sm:$0xff]
    %v643 = vld [vmem:[#allocation11 + $0x8e8] sm:$0xff]
    %v644 = vld [vmem:[#allocation11 + $0x8f0] sm:$0xff]
    %v645 = vld [vmem:[#allocation11 + $0x8f8] sm:$0xff]
    %v646 = vld [vmem:[#allocation11 + $0x900] sm:$0xff]
    %v647 = vld [vmem:[#allocation11 + $0x908] sm:$0xff]
    %v648 = vld [vmem:[#allocation11 + $0x910] sm:$0xff]
    %v649 = vld [vmem:[#allocation11 + $0x918] sm:$0xff]
    %v650 = vld [vmem:[#allocation11 + $0x920] sm:$0xff]
    %v651 = vld [vmem:[#allocation11 + $0x928] sm:$0xff]
    %v652 = vld [vmem:[#allocation11 + $0x930] sm:$0xff]
    %v653 = vld [vmem:[#allocation11 + $0x938] sm:$0xff]
    %v654 = vld [vmem:[#allocation11 + $0x940] sm:$0xff]
    %v655 = vld [vmem:[#allocation11 + $0x948] sm:$0xff]
    %v656 = vld [vmem:[#allocation11 + $0x950] sm:$0xff]
    %v657 = vld [vmem:[#allocation11 + $0x958] sm:$0xff]
    %v658 = vld [vmem:[#allocation11 + $0x960] sm:$0xff]
    %v659 = vld [vmem:[#allocation11 + $0x968] sm:$0xff]
    %v660 = vld [vmem:[#allocation11 + $0x970] sm:$0xff]
    %v661 = vld [vmem:[#allocation11 + $0x978] sm:$0xff]
    %v662 = vld [vmem:[#allocation11 + $0x980] sm:$0xff]
    %v663 = vld [vmem:[#allocation11 + $0x988] sm:$0xff]
    %v664 = vld [vmem:[#allocation11 + $0x990] sm:$0xff]
    %v665 = vld [vmem:[#allocation11 + $0x998] sm:$0xff]
    %v666 = vld [vmem:[#allocation11 + $0x9a0] sm:$0xff]
    %v667 = vld [vmem:[#allocation11 + $0x9a8] sm:$0xff]
    %v668 = vld [vmem:[#allocation11 + $0x9b0] sm:$0xff]
    %v669 = vld [vmem:[#allocation11 + $0x9b8] sm:$0xff]
    %v670 = vld [vmem:[#allocation11 + $0x9c0] sm:$0xff]
    %v671 = vld [vmem:[#allocation11 + $0x9c8] sm:$0xff]
    %v672 = vld [vmem:[#allocation11 + $0x9d0] sm:$0xff]
    %v673 = vld [vmem:[#allocation11 + $0x9d8] sm:$0xff]
    %v674 = vld [vmem:[#allocation11 + $0x9e0] sm:$0xff]
    %v675 = vld [vmem:[#allocation11 + $0x9e8] sm:$0xff]
    %v676 = vld [vmem:[#allocation11 + $0x9f0] sm:$0xff]
    %v677 = vld [vmem:[#allocation11 + $0x9f8] sm:$0xff]
    %v678 = vld [vmem:[#allocation11 + $0xa00] sm:$0xff]
    %v679 = vld [vmem:[#allocation11 + $0xa08] sm:$0xff]
    %v680 = vld [vmem:[#allocation11 + $0xa10] sm:$0xff]
    %v681 = vld [vmem:[#allocation11 + $0xa18] sm:$0xff]
    %v682 = vld [vmem:[#allocation11 + $0xa20] sm:$0xff]
    %v683 = vld [vmem:[#allocation11 + $0xa28] sm:$0xff]
    %v684 = vld [vmem:[#allocation11 + $0xa30] sm:$0xff]
    %v685 = vld [vmem:[#allocation11 + $0xa38] sm:$0xff]
    %v686 = vld [vmem:[#allocation11 + $0xa40] sm:$0xff]
    %v687 = vld [vmem:[#allocation11 + $0xa48] sm:$0xff]
    %v688 = vld [vmem:[#allocation11 + $0xa50] sm:$0xff]
    %v689 = vld [vmem:[#allocation11 + $0xa58] sm:$0xff]
    %v690 = vld [vmem:[#allocation11 + $0xa60] sm:$0xff]
    %v691 = vld [vmem:[#allocation11 + $0xa68] sm:$0xff]
    %v692 = vld [vmem:[#allocation11 + $0xa70] sm:$0xff]
    %v693 = vld [vmem:[#allocation11 + $0xa78] sm:$0xff]
    %v694 = vld [vmem:[#allocation11 + $0xa80] sm:$0xff]
    %v695 = vld [vmem:[#allocation11 + $0xa88] sm:$0xff]
    %v696 = vld [vmem:[#allocation11 + $0xa90] sm:$0xff]
    %v697 = vld [vmem:[#allocation11 + $0xa98] sm:$0xff]
    %v698 = vld [vmem:[#allocation11 + $0xaa0] sm:$0xff]
    %v699 = vld [vmem:[#allocation11 + $0xaa8] sm:$0xff]
    %v700 = vld [vmem:[#allocation11 + $0xab0] sm:$0xff]
    %v701 = vld [vmem:[#allocation11 + $0xab8] sm:$0xff]
    %v702 = vld [vmem:[#allocation11 + $0xac0] sm:$0xff]
    %v703 = vld [vmem:[#allocation11 + $0xac8] sm:$0xff]
    %v704 = vld [vmem:[#allocation11 + $0xad0] sm:$0xff]
    %v705 = vld [vmem:[#allocation11 + $0xad8] sm:$0xff]
    %v706 = vld [vmem:[#allocation11 + $0xae0] sm:$0xff]
    %v707 = vld [vmem:[#allocation11 + $0xae8] sm:$0xff]
    %v708 = vld [vmem:[#allocation11 + $0xaf0] sm:$0xff]
    %v709 = vld [vmem:[#allocation11 + $0xaf8] sm:$0xff]
    %v710 = vld [vmem:[#allocation11 + $0xb00] sm:$0xff]
    %v711 = vld [vmem:[#allocation11 + $0xb08] sm:$0xff]
    %v712 = vld [vmem:[#allocation11 + $0xb10] sm:$0xff]
    %v713 = vld [vmem:[#allocation11 + $0xb18] sm:$0xff]
    %v714 = vld [vmem:[#allocation11 + $0xb20] sm:$0xff]
    %v715 = vld [vmem:[#allocation11 + $0xb28] sm:$0xff]
    %v716 = vld [vmem:[#allocation11 + $0xb30] sm:$0xff]
    %v717 = vld [vmem:[#allocation11 + $0xb38] sm:$0xff]
    %v718 = vld [vmem:[#allocation11 + $0xb40] sm:$0xff]
    %v719 = vld [vmem:[#allocation11 + $0xb48] sm:$0xff]
    %v720 = vld [vmem:[#allocation11 + $0xb50] sm:$0xff]
    %v721 = vld [vmem:[#allocation11 + $0xb58] sm:$0xff]
    %v722 = vld [vmem:[#allocation11 + $0xb60] sm:$0xff]
    %v723 = vld [vmem:[#allocation11 + $0xb68] sm:$0xff]
    %v724 = vld [vmem:[#allocation11 + $0xb70] sm:$0xff]
    %v725 = vld [vmem:[#allocation11 + $0xb78] sm:$0xff]
    %v726 = vld [vmem:[#allocation11 + $0xb80] sm:$0xff]
    %v727 = vld [vmem:[#allocation11 + $0xb88] sm:$0xff]
    %v728 = vld [vmem:[#allocation11 + $0xb90] sm:$0xff]
    %v729 = vld [vmem:[#allocation11 + $0xb98] sm:$0xff]
    %v730 = vld [vmem:[#allocation11 + $0xba0] sm:$0xff]
    %v731 = vld [vmem:[#allocation11 + $0xba8] sm:$0xff]
    %v732 = vld [vmem:[#allocation11 + $0xbb0] sm:$0xff]
    %v733 = vld [vmem:[#allocation11 + $0xbb8] sm:$0xff]
    %v734 = vld [vmem:[#allocation11 + $0xbc0] sm:$0xff]
    %v735 = vld [vmem:[#allocation11 + $0xbc8] sm:$0xff]
    %v736 = vld [vmem:[#allocation11 + $0xbd0] sm:$0xff]
    %v737 = vld [vmem:[#allocation11 + $0xbd8] sm:$0xff]
    %v738 = vld [vmem:[#allocation11 + $0xbe0] sm:$0xff]
    %v739 = vld [vmem:[#allocation11 + $0xbe8] sm:$0xff]
    %v740 = vld [vmem:[#allocation11 + $0xbf0] sm:$0xff]
    %v741 = vld [vmem:[#allocation11 + $0xbf8] sm:$0xff]
    %v742 = vld [vmem:[#allocation11 + $0xc00] sm:$0xff]
    %v743 = vld [vmem:[#allocation11 + $0xc08] sm:$0xff]
    %v744 = vld [vmem:[#allocation11 + $0xc10] sm:$0xff]
    %v745 = vld [vmem:[#allocation11 + $0xc18] sm:$0xff]
    %v746 = vld [vmem:[#allocation11 + $0xc20] sm:$0xff]
    %v747 = vld [vmem:[#allocation11 + $0xc28] sm:$0xff]
    %v748 = vld [vmem:[#allocation11 + $0xc30] sm:$0xff]
    %v749 = vld [vmem:[#allocation11 + $0xc38] sm:$0xff]
    %v750 = vld [vmem:[#allocation11 + $0xc40] sm:$0xff]
    %v751 = vld [vmem:[#allocation11 + $0xc48] sm:$0xff]
    %v752 = vld [vmem:[#allocation11 + $0xc50] sm:$0xff]
    %v753 = vld [vmem:[#allocation11 + $0xc58] sm:$0xff]
    %v754 = vld [vmem:[#allocation11 + $0xc60] sm:$0xff]
    %v755 = vld [vmem:[#allocation11 + $0xc68] sm:$0xff]
    %v756 = vld [vmem:[#allocation11 + $0xc70] sm:$0xff]
    %v757 = vld [vmem:[#allocation11 + $0xc78] sm:$0xff]
    %v758 = vld [vmem:[#allocation11 + $0xc80] sm:$0xff]
    %v759 = vld [vmem:[#allocation11 + $0xc88] sm:$0xff]
    %v760 = vld [vmem:[#allocation11 + $0xc90] sm:$0xff]
    %v761 = vld [vmem:[#allocation11 + $0xc98] sm:$0xff]
    %v762 = vld [vmem:[#allocation11 + $0xca0] sm:$0xff]
    %v763 = vld [vmem:[#allocation11 + $0xca8] sm:$0xff]
    %v764 = vld [vmem:[#allocation11 + $0xcb0] sm:$0xff]
    %v765 = vld [vmem:[#allocation11 + $0xcb8] sm:$0xff]
    %v766 = vld [vmem:[#allocation11 + $0xcc0] sm:$0xff]
    %v767 = vld [vmem:[#allocation11 + $0xcc8] sm:$0xff]
    %v768 = vld [vmem:[#allocation11 + $0xcd0] sm:$0xff]
    %v769 = vld [vmem:[#allocation11 + $0xcd8] sm:$0xff]
    %v770 = vld [vmem:[#allocation11 + $0xce0] sm:$0xff]
    %v771 = vld [vmem:[#allocation11 + $0xce8] sm:$0xff]
    %v772 = vld [vmem:[#allocation11 + $0xcf0] sm:$0xff]
    %v773 = vld [vmem:[#allocation11 + $0xcf8] sm:$0xff]
    %v774 = vld [vmem:[#allocation11 + $0xd00] sm:$0xff]
    %v775 = vld [vmem:[#allocation11 + $0xd08] sm:$0xff]
    %v776 = vld [vmem:[#allocation11 + $0xd10] sm:$0xff]
    %v777 = vld [vmem:[#allocation11 + $0xd18] sm:$0xff]
    %v778 = vld [vmem:[#allocation11 + $0xd20] sm:$0xff]
    %v779 = vld [vmem:[#allocation11 + $0xd28] sm:$0xff]
    %v780 = vld [vmem:[#allocation11 + $0xd30] sm:$0xff]
    %v781 = vld [vmem:[#allocation11 + $0xd38] sm:$0xff]
    %v782 = vld [vmem:[#allocation11 + $0xd40] sm:$0xff]
    %v783 = vld [vmem:[#allocation11 + $0xd48] sm:$0xff]
    %v784 = vld [vmem:[#allocation11 + $0xd50] sm:$0xff]
    %v785 = vld [vmem:[#allocation11 + $0xd58] sm:$0xff]
    %v786 = vld [vmem:[#allocation11 + $0xd60] sm:$0xff]
    %v787 = vld [vmem:[#allocation11 + $0xd68] sm:$0xff]
    %v788 = vld [vmem:[#allocation11 + $0xd70] sm:$0xff]
    %v789 = vld [vmem:[#allocation11 + $0xd78] sm:$0xff]
    %v790 = vld [vmem:[#allocation11 + $0xd80] sm:$0xff]
    %v791 = vld [vmem:[#allocation11 + $0xd88] sm:$0xff]
    %v792 = vld [vmem:[#allocation11 + $0xd90] sm:$0xff]
    %v793 = vld [vmem:[#allocation11 + $0xd98] sm:$0xff]
    %v794 = vld [vmem:[#allocation11 + $0xda0] sm:$0xff]
    %v795 = vld [vmem:[#allocation11 + $0xda8] sm:$0xff]
    %v796 = vld [vmem:[#allocation11 + $0xdb0] sm:$0xff]
    %v797 = vld [vmem:[#allocation11 + $0xdb8] sm:$0xff]
    %v798 = vld [vmem:[#allocation11 + $0xdc0] sm:$0xff]
    %v799 = vld [vmem:[#allocation11 + $0xdc8] sm:$0xff]
    %v800 = vld [vmem:[#allocation11 + $0xdd0] sm:$0xff]
    %v801 = vld [vmem:[#allocation11 + $0xdd8] sm:$0xff]
    %v802 = vld [vmem:[#allocation11 + $0xde0] sm:$0xff]
    %v803 = vld [vmem:[#allocation11 + $0xde8] sm:$0xff]
    %v804 = vld [vmem:[#allocation11 + $0xdf0] sm:$0xff]
    %v805 = vld [vmem:[#allocation11 + $0xdf8] sm:$0xff]
    %v806 = vld [vmem:[#allocation11 + $0xe00] sm:$0xff]
    %v807 = vld [vmem:[#allocation11 + $0xe08] sm:$0xff]
    %v808 = vld [vmem:[#allocation11 + $0xe10] sm:$0xff]
    %v809 = vld [vmem:[#allocation11 + $0xe18] sm:$0xff]
    %v810 = vld [vmem:[#allocation11 + $0xe20] sm:$0xff]
    %v811 = vld [vmem:[#allocation11 + $0xe28] sm:$0xff]
    %v812 = vld [vmem:[#allocation11 + $0xe30] sm:$0xff]
    %v813 = vld [vmem:[#allocation11 + $0xe38] sm:$0xff]
    %v814 = vld [vmem:[#allocation11 + $0xe40] sm:$0xff]
    %v815 = vld [vmem:[#allocation11 + $0xe48] sm:$0xff]
    %v816 = vld [vmem:[#allocation11 + $0xe50] sm:$0xff]
    %v817 = vld [vmem:[#allocation11 + $0xe58] sm:$0xff]
    %v818 = vld [vmem:[#allocation11 + $0xe60] sm:$0xff]
    %v819 = vld [vmem:[#allocation11 + $0xe68] sm:$0xff]
    %v820 = vld [vmem:[#allocation11 + $0xe70] sm:$0xff]
    %v821 = vld [vmem:[#allocation11 + $0xe78] sm:$0xff]
    %v822 = vld [vmem:[#allocation11 + $0xe80] sm:$0xff]
    %v823 = vld [vmem:[#allocation11 + $0xe88] sm:$0xff]
    %v824 = vld [vmem:[#allocation11 + $0xe90] sm:$0xff]
    %v825 = vld [vmem:[#allocation11 + $0xe98] sm:$0xff]
    %v826 = vld [vmem:[#allocation11 + $0xea0] sm:$0xff]
    %v827 = vld [vmem:[#allocation11 + $0xea8] sm:$0xff]
    %v828 = vld [vmem:[#allocation11 + $0xeb0] sm:$0xff]
    %v829 = vld [vmem:[#allocation11 + $0xeb8] sm:$0xff]
    %v830 = vld [vmem:[#allocation11 + $0xec0] sm:$0xff]
    %v831 = vld [vmem:[#allocation11 + $0xec8] sm:$0xff]
    %v832 = vld [vmem:[#allocation11 + $0xed0] sm:$0xff]
    %v833 = vld [vmem:[#allocation11 + $0xed8] sm:$0xff]
    %v834 = vld [vmem:[#allocation11 + $0xee0] sm:$0xff]
    %v835 = vld [vmem:[#allocation11 + $0xee8] sm:$0xff]
    %v836 = vld [vmem:[#allocation11 + $0xef0] sm:$0xff]
    %v837 = vld [vmem:[#allocation11 + $0xef8] sm:$0xff]
    %v838 = vld [vmem:[#allocation11 + $0xf00] sm:$0xff]
    %v839 = vld [vmem:[#allocation11 + $0xf08] sm:$0xff]
    %v840 = vld [vmem:[#allocation11 + $0xf10] sm:$0xff]
    %v841 = vld [vmem:[#allocation11 + $0xf18] sm:$0xff]
    %v842 = vld [vmem:[#allocation11 + $0xf20] sm:$0xff]
    %v843 = vld [vmem:[#allocation11 + $0xf28] sm:$0xff]
    %v844 = vld [vmem:[#allocation11 + $0xf30] sm:$0xff]
    %v845 = vld [vmem:[#allocation11 + $0xf38] sm:$0xff]
    %v846 = vld [vmem:[#allocation11 + $0xf40] sm:$0xff]
    %v847 = vld [vmem:[#allocation11 + $0xf48] sm:$0xff]
    %v848 = vld [vmem:[#allocation11 + $0xf50] sm:$0xff]
    %v849 = vld [vmem:[#allocation11 + $0xf58] sm:$0xff]
    %v850 = vld [vmem:[#allocation11 + $0xf60] sm:$0xff]
    %v851 = vld [vmem:[#allocation11 + $0xf68] sm:$0xff]
    %v852 = vld [vmem:[#allocation11 + $0xf70] sm:$0xff]
    %v853 = vld [vmem:[#allocation11 + $0xf78] sm:$0xff]
    %v854 = vld [vmem:[#allocation11 + $0xf80] sm:$0xff]
    %v855 = vld [vmem:[#allocation11 + $0xf88] sm:$0xff]
    %v856 = vld [vmem:[#allocation11 + $0xf90] sm:$0xff]
    %v857 = vld [vmem:[#allocation11 + $0xf98] sm:$0xff]
    %v858 = vld [vmem:[#allocation11 + $0xfa0] sm:$0xff]
    %v859 = vld [vmem:[#allocation11 + $0xfa8] sm:$0xff]
    %v860 = vld [vmem:[#allocation11 + $0xfb0] sm:$0xff]
    %v861 = vld [vmem:[#allocation11 + $0xfb8] sm:$0xff]
    %v862 = vld [vmem:[#allocation11 + $0xfc0] sm:$0xff]
    %v863 = vld [vmem:[#allocation11 + $0xfc8] sm:$0xff]
    %v864 = vld [vmem:[#allocation11 + $0xfd0] sm:$0xff]
    %v865 = vld [vmem:[#allocation11 + $0xfd8] sm:$0xff]
    %v866 = vld [vmem:[#allocation11 + $0xfe0] sm:$0xff]
    %v867 = vld [vmem:[#allocation11 + $0xfe8] sm:$0xff]
    %v868 = vld [vmem:[#allocation11 + $0xff0] sm:$0xff]
    %v869 = vld [vmem:[#allocation11 + $0xff8] sm:$0xff]
    %v870 = vld [vmem:[#allocation13] sm:$0xff]
    %v871 = vld [vmem:[#allocation13 + $0x8] sm:$0xff]
    %v874 = vlaneseq
    %v875 = vshrl.u32 %v874, 7
    %v876 = vsub.s32 0, %v875
    %v877 = vrot.slane %v870, %v876
    %v878 = vlaneseq
    %v879 = vshrl.u32 %v878, 7
    %v880 = vsub.s32 1, %v879
    %v881 = vrot.slane %v870, %v880
    %v882 = vlaneseq
    %v883 = vshrl.u32 %v882, 7
    %v884 = vsub.s32 2, %v883
    %v885 = vrot.slane %v870, %v884
    %v886 = vlaneseq
    %v887 = vshrl.u32 %v886, 7
    %v888 = vsub.s32 3, %v887
    %v889 = vrot.slane %v870, %v888
    %v890 = vlaneseq
    %v891 = vshrl.u32 %v890, 7
    %v892 = vsub.s32 4, %v891
    %v893 = vrot.slane %v870, %v892
    %v894 = vlaneseq
    %v895 = vshrl.u32 %v894, 7
    %v896 = vsub.s32 5, %v895
    %v897 = vrot.slane %v870, %v896
    %v898 = vlaneseq
    %v899 = vshrl.u32 %v898, 7
    %v900 = vsub.s32 6, %v899
    %v901 = vrot.slane %v870, %v900
    %v902 = vlaneseq
    %v903 = vshrl.u32 %v902, 7
    %v904 = vsub.s32 7, %v903
    %v905 = vrot.slane %v870, %v904
    %v906 = vlaneseq
    %v907 = vshrl.u32 %v906, 7
    %v908 = vsub.s32 0, %v907
    %v909 = vrot.slane %v871, %v908
    %v910 = vlaneseq
    %v911 = vshrl.u32 %v910, 7
    %v912 = vsub.s32 1, %v911
    %v913 = vrot.slane %v871, %v912
    %v914 = vlaneseq
    %v915 = vshrl.u32 %v914, 7
    %v916 = vsub.s32 2, %v915
    %v917 = vrot.slane %v871, %v916
    %v918 = vlaneseq
    %v919 = vshrl.u32 %v918, 7
    %v920 = vsub.s32 3, %v919
    %v921 = vrot.slane %v871, %v920
    %v922 = vlaneseq
    %v923 = vshrl.u32 %v922, 7
    %v924 = vsub.s32 4, %v923
    %v925 = vrot.slane %v871, %v924
    %v926 = vlaneseq
    %v927 = vshrl.u32 %v926, 7
    %v928 = vsub.s32 5, %v927
    %v929 = vrot.slane %v871, %v928
    %v930 = vlaneseq
    %v931 = vshrl.u32 %v930, 7
    %v932 = vsub.s32 6, %v931
    %v933 = vrot.slane %v871, %v932
    %v934 = vlaneseq
    %v935 = vshrl.u32 %v934, 7
    %v936 = vsub.s32 7, %v935
    %v937 = vrot.slane %v871, %v936
    %v1466 = vunpack.c.l.b16 %v358
    %v1467 = vunpack.c.h.b16 %v358
    %v1468 = vunpack.c.l.b16 %v359
    %v1469 = vunpack.c.h.b16 %v359
    %v1470 = vunpack.c.l.b16 %v360
    %v1471 = vunpack.c.h.b16 %v360
    %v1472 = vunpack.c.l.b16 %v361
    %v1473 = vunpack.c.h.b16 %v361
    %v1474 = vunpack.c.l.b16 %v362
    %v1475 = vunpack.c.h.b16 %v362
    %v1476 = vunpack.c.l.b16 %v363
    %v1477 = vunpack.c.h.b16 %v363
    %v1478 = vunpack.c.l.b16 %v364
    %v1479 = vunpack.c.h.b16 %v364
    %v1480 = vunpack.c.l.b16 %v365
    %v1481 = vunpack.c.h.b16 %v365
    %v1482 = vunpack.c.l.b16 %v366
    %v1483 = vunpack.c.h.b16 %v366
    %v1484 = vunpack.c.l.b16 %v367
    %v1485 = vunpack.c.h.b16 %v367
    %v1486 = vunpack.c.l.b16 %v368
    %v1487 = vunpack.c.h.b16 %v368
    %v1488 = vunpack.c.l.b16 %v369
    %v1489 = vunpack.c.h.b16 %v369
    %v1490 = vunpack.c.l.b16 %v370
    %v1491 = vunpack.c.h.b16 %v370
    %v1492 = vunpack.c.l.b16 %v371
    %v1493 = vunpack.c.h.b16 %v371
    %v1494 = vunpack.c.l.b16 %v372
    %v1495 = vunpack.c.h.b16 %v372
    %v1496 = vunpack.c.l.b16 %v373
    %v1497 = vunpack.c.h.b16 %v373
    %v1498 = vunpack.c.l.b16 %v374
    %v1499 = vunpack.c.h.b16 %v374
    %v1500 = vunpack.c.l.b16 %v375
    %v1501 = vunpack.c.h.b16 %v375
    %v1502 = vunpack.c.l.b16 %v376
    %v1503 = vunpack.c.h.b16 %v376
    %v1504 = vunpack.c.l.b16 %v377
    %v1505 = vunpack.c.h.b16 %v377
    %v1506 = vunpack.c.l.b16 %v378
    %v1507 = vunpack.c.h.b16 %v378
    %v1508 = vunpack.c.l.b16 %v379
    %v1509 = vunpack.c.h.b16 %v379
    %v1510 = vunpack.c.l.b16 %v380
    %v1511 = vunpack.c.h.b16 %v380
    %v1512 = vunpack.c.l.b16 %v381
    %v1513 = vunpack.c.h.b16 %v381
    %v1514 = vunpack.c.l.b16 %v382
    %v1515 = vunpack.c.h.b16 %v382
    %v1516 = vunpack.c.l.b16 %v383
    %v1517 = vunpack.c.h.b16 %v383
    %v1518 = vunpack.c.l.b16 %v384
    %v1519 = vunpack.c.h.b16 %v384
    %v1520 = vunpack.c.l.b16 %v385
    %v1521 = vunpack.c.h.b16 %v385
    %v1522 = vunpack.c.l.b16 %v386
    %v1523 = vunpack.c.h.b16 %v386
    %v1524 = vunpack.c.l.b16 %v387
    %v1525 = vunpack.c.h.b16 %v387
    %v1526 = vunpack.c.l.b16 %v388
    %v1527 = vunpack.c.h.b16 %v388
    %v1528 = vunpack.c.l.b16 %v389
    %v1529 = vunpack.c.h.b16 %v389
    %v1530 = vunpack.c.l.b16 %v390
    %v1531 = vunpack.c.h.b16 %v390
    %v1532 = vunpack.c.l.b16 %v391
    %v1533 = vunpack.c.h.b16 %v391
    %v1534 = vunpack.c.l.b16 %v392
    %v1535 = vunpack.c.h.b16 %v392
    %v1536 = vunpack.c.l.b16 %v393
    %v1537 = vunpack.c.h.b16 %v393
    %v1538 = vunpack.c.l.b16 %v394
    %v1539 = vunpack.c.h.b16 %v394
    %v1540 = vunpack.c.l.b16 %v395
    %v1541 = vunpack.c.h.b16 %v395
    %v1542 = vunpack.c.l.b16 %v396
    %v1543 = vunpack.c.h.b16 %v396
    %v1544 = vunpack.c.l.b16 %v397
    %v1545 = vunpack.c.h.b16 %v397
    %v1546 = vunpack.c.l.b16 %v398
    %v1547 = vunpack.c.h.b16 %v398
    %v1548 = vunpack.c.l.b16 %v399
    %v1549 = vunpack.c.h.b16 %v399
    %v1550 = vunpack.c.l.b16 %v400
    %v1551 = vunpack.c.h.b16 %v400
    %v1552 = vunpack.c.l.b16 %v401
    %v1553 = vunpack.c.h.b16 %v401
    %v1554 = vunpack.c.l.b16 %v402
    %v1555 = vunpack.c.h.b16 %v402
    %v1556 = vunpack.c.l.b16 %v403
    %v1557 = vunpack.c.h.b16 %v403
    %v1558 = vunpack.c.l.b16 %v404
    %v1559 = vunpack.c.h.b16 %v404
    %v1560 = vunpack.c.l.b16 %v405
    %v1561 = vunpack.c.h.b16 %v405
    %v1562 = vunpack.c.l.b16 %v406
    %v1563 = vunpack.c.h.b16 %v406
    %v1564 = vunpack.c.l.b16 %v407
    %v1565 = vunpack.c.h.b16 %v407
    %v1566 = vunpack.c.l.b16 %v408
    %v1567 = vunpack.c.h.b16 %v408
    %v1568 = vunpack.c.l.b16 %v409
    %v1569 = vunpack.c.h.b16 %v409
    %v1570 = vunpack.c.l.b16 %v410
    %v1571 = vunpack.c.h.b16 %v410
    %v1572 = vunpack.c.l.b16 %v411
    %v1573 = vunpack.c.h.b16 %v411
    %v1574 = vunpack.c.l.b16 %v412
    %v1575 = vunpack.c.h.b16 %v412
    %v1576 = vunpack.c.l.b16 %v413
    %v1577 = vunpack.c.h.b16 %v413
    %v1578 = vunpack.c.l.b16 %v414
    %v1579 = vunpack.c.h.b16 %v414
    %v1580 = vunpack.c.l.b16 %v415
    %v1581 = vunpack.c.h.b16 %v415
    %v1582 = vunpack.c.l.b16 %v416
    %v1583 = vunpack.c.h.b16 %v416
    %v1584 = vunpack.c.l.b16 %v417
    %v1585 = vunpack.c.h.b16 %v417
    %v1586 = vunpack.c.l.b16 %v418
    %v1587 = vunpack.c.h.b16 %v418
    %v1588 = vunpack.c.l.b16 %v419
    %v1589 = vunpack.c.h.b16 %v419
    %v1590 = vunpack.c.l.b16 %v420
    %v1591 = vunpack.c.h.b16 %v420
    %v1592 = vunpack.c.l.b16 %v421
    %v1593 = vunpack.c.h.b16 %v421
    %v1594 = vunpack.c.l.b16 %v422
    %v1595 = vunpack.c.h.b16 %v422
    %v1596 = vunpack.c.l.b16 %v423
    %v1597 = vunpack.c.h.b16 %v423
    %v1598 = vunpack.c.l.b16 %v424
    %v1599 = vunpack.c.h.b16 %v424
    %v1600 = vunpack.c.l.b16 %v425
    %v1601 = vunpack.c.h.b16 %v425
    %v1602 = vunpack.c.l.b16 %v426
    %v1603 = vunpack.c.h.b16 %v426
    %v1604 = vunpack.c.l.b16 %v427
    %v1605 = vunpack.c.h.b16 %v427
    %v1606 = vunpack.c.l.b16 %v428
    %v1607 = vunpack.c.h.b16 %v428
    %v1608 = vunpack.c.l.b16 %v429
    %v1609 = vunpack.c.h.b16 %v429
    %v1610 = vunpack.c.l.b16 %v430
    %v1611 = vunpack.c.h.b16 %v430
    %v1612 = vunpack.c.l.b16 %v431
    %v1613 = vunpack.c.h.b16 %v431
    %v1614 = vunpack.c.l.b16 %v432
    %v1615 = vunpack.c.h.b16 %v432
    %v1616 = vunpack.c.l.b16 %v433
    %v1617 = vunpack.c.h.b16 %v433
    %v1618 = vunpack.c.l.b16 %v434
    %v1619 = vunpack.c.h.b16 %v434
    %v1620 = vunpack.c.l.b16 %v435
    %v1621 = vunpack.c.h.b16 %v435
    %v1622 = vunpack.c.l.b16 %v436
    %v1623 = vunpack.c.h.b16 %v436
    %v1624 = vunpack.c.l.b16 %v437
    %v1625 = vunpack.c.h.b16 %v437
    %v1626 = vunpack.c.l.b16 %v438
    %v1627 = vunpack.c.h.b16 %v438
    %v1628 = vunpack.c.l.b16 %v439
    %v1629 = vunpack.c.h.b16 %v439
    %v1630 = vunpack.c.l.b16 %v440
    %v1631 = vunpack.c.h.b16 %v440
    %v1632 = vunpack.c.l.b16 %v441
    %v1633 = vunpack.c.h.b16 %v441
    %v1634 = vunpack.c.l.b16 %v442
    %v1635 = vunpack.c.h.b16 %v442
    %v1636 = vunpack.c.l.b16 %v443
    %v1637 = vunpack.c.h.b16 %v443
    %v1638 = vunpack.c.l.b16 %v444
    %v1639 = vunpack.c.h.b16 %v444
    %v1640 = vunpack.c.l.b16 %v445
    %v1641 = vunpack.c.h.b16 %v445
    %v1642 = vunpack.c.l.b16 %v446
    %v1643 = vunpack.c.h.b16 %v446
    %v1644 = vunpack.c.l.b16 %v447
    %v1645 = vunpack.c.h.b16 %v447
    %v1646 = vunpack.c.l.b16 %v448
    %v1647 = vunpack.c.h.b16 %v448
    %v1648 = vunpack.c.l.b16 %v449
    %v1649 = vunpack.c.h.b16 %v449
    %v1650 = vunpack.c.l.b16 %v450
    %v1651 = vunpack.c.h.b16 %v450
    %v1652 = vunpack.c.l.b16 %v451
    %v1653 = vunpack.c.h.b16 %v451
    %v1654 = vunpack.c.l.b16 %v452
    %v1655 = vunpack.c.h.b16 %v452
    %v1656 = vunpack.c.l.b16 %v453
    %v1657 = vunpack.c.h.b16 %v453
    %v1658 = vunpack.c.l.b16 %v454
    %v1659 = vunpack.c.h.b16 %v454
    %v1660 = vunpack.c.l.b16 %v455
    %v1661 = vunpack.c.h.b16 %v455
    %v1662 = vunpack.c.l.b16 %v456
    %v1663 = vunpack.c.h.b16 %v456
    %v1664 = vunpack.c.l.b16 %v457
    %v1665 = vunpack.c.h.b16 %v457
    %v1666 = vunpack.c.l.b16 %v458
    %v1667 = vunpack.c.h.b16 %v458
    %v1668 = vunpack.c.l.b16 %v459
    %v1669 = vunpack.c.h.b16 %v459
    %v1670 = vunpack.c.l.b16 %v460
    %v1671 = vunpack.c.h.b16 %v460
    %v1672 = vunpack.c.l.b16 %v461
    %v1673 = vunpack.c.h.b16 %v461
    %v1674 = vunpack.c.l.b16 %v462
    %v1675 = vunpack.c.h.b16 %v462
    %v1676 = vunpack.c.l.b16 %v463
    %v1677 = vunpack.c.h.b16 %v463
    %v1678 = vunpack.c.l.b16 %v464
    %v1679 = vunpack.c.h.b16 %v464
    %v1680 = vunpack.c.l.b16 %v465
    %v1681 = vunpack.c.h.b16 %v465
    %v1682 = vunpack.c.l.b16 %v466
    %v1683 = vunpack.c.h.b16 %v466
    %v1684 = vunpack.c.l.b16 %v467
    %v1685 = vunpack.c.h.b16 %v467
    %v1686 = vunpack.c.l.b16 %v468
    %v1687 = vunpack.c.h.b16 %v468
    %v1688 = vunpack.c.l.b16 %v469
    %v1689 = vunpack.c.h.b16 %v469
    %v1690 = vunpack.c.l.b16 %v470
    %v1691 = vunpack.c.h.b16 %v470
    %v1692 = vunpack.c.l.b16 %v471
    %v1693 = vunpack.c.h.b16 %v471
    %v1694 = vunpack.c.l.b16 %v472
    %v1695 = vunpack.c.h.b16 %v472
    %v1696 = vunpack.c.l.b16 %v473
    %v1697 = vunpack.c.h.b16 %v473
    %v1698 = vunpack.c.l.b16 %v474
    %v1699 = vunpack.c.h.b16 %v474
    %v1700 = vunpack.c.l.b16 %v475
    %v1701 = vunpack.c.h.b16 %v475
    %v1702 = vunpack.c.l.b16 %v476
    %v1703 = vunpack.c.h.b16 %v476
    %v1704 = vunpack.c.l.b16 %v477
    %v1705 = vunpack.c.h.b16 %v477
    %v1706 = vunpack.c.l.b16 %v478
    %v1707 = vunpack.c.h.b16 %v478
    %v1708 = vunpack.c.l.b16 %v479
    %v1709 = vunpack.c.h.b16 %v479
    %v1710 = vunpack.c.l.b16 %v480
    %v1711 = vunpack.c.h.b16 %v480
    %v1712 = vunpack.c.l.b16 %v481
    %v1713 = vunpack.c.h.b16 %v481
    %v1714 = vunpack.c.l.b16 %v482
    %v1715 = vunpack.c.h.b16 %v482
    %v1716 = vunpack.c.l.b16 %v483
    %v1717 = vunpack.c.h.b16 %v483
    %v1718 = vunpack.c.l.b16 %v484
    %v1719 = vunpack.c.h.b16 %v484
    %v1720 = vunpack.c.l.b16 %v485
    %v1721 = vunpack.c.h.b16 %v485
    %v1722 = vunpack.c.l.b16 %v486
    %v1723 = vunpack.c.h.b16 %v486
    %v1724 = vunpack.c.l.b16 %v487
    %v1725 = vunpack.c.h.b16 %v487
    %v1726 = vunpack.c.l.b16 %v488
    %v1727 = vunpack.c.h.b16 %v488
    %v1728 = vunpack.c.l.b16 %v489
    %v1729 = vunpack.c.h.b16 %v489
    %v1730 = vunpack.c.l.b16 %v490
    %v1731 = vunpack.c.h.b16 %v490
    %v1732 = vunpack.c.l.b16 %v491
    %v1733 = vunpack.c.h.b16 %v491
    %v1734 = vunpack.c.l.b16 %v492
    %v1735 = vunpack.c.h.b16 %v492
    %v1736 = vunpack.c.l.b16 %v493
    %v1737 = vunpack.c.h.b16 %v493
    %v1738 = vunpack.c.l.b16 %v494
    %v1739 = vunpack.c.h.b16 %v494
    %v1740 = vunpack.c.l.b16 %v495
    %v1741 = vunpack.c.h.b16 %v495
    %v1742 = vunpack.c.l.b16 %v496
    %v1743 = vunpack.c.h.b16 %v496
    %v1744 = vunpack.c.l.b16 %v497
    %v1745 = vunpack.c.h.b16 %v497
    %v1746 = vunpack.c.l.b16 %v498
    %v1747 = vunpack.c.h.b16 %v498
    %v1748 = vunpack.c.l.b16 %v499
    %v1749 = vunpack.c.h.b16 %v499
    %v1750 = vunpack.c.l.b16 %v500
    %v1751 = vunpack.c.h.b16 %v500
    %v1752 = vunpack.c.l.b16 %v501
    %v1753 = vunpack.c.h.b16 %v501
    %v1754 = vunpack.c.l.b16 %v502
    %v1755 = vunpack.c.h.b16 %v502
    %v1756 = vunpack.c.l.b16 %v503
    %v1757 = vunpack.c.h.b16 %v503
    %v1758 = vunpack.c.l.b16 %v504
    %v1759 = vunpack.c.h.b16 %v504
    %v1760 = vunpack.c.l.b16 %v505
    %v1761 = vunpack.c.h.b16 %v505
    %v1762 = vunpack.c.l.b16 %v506
    %v1763 = vunpack.c.h.b16 %v506
    %v1764 = vunpack.c.l.b16 %v507
    %v1765 = vunpack.c.h.b16 %v507
    %v1766 = vunpack.c.l.b16 %v508
    %v1767 = vunpack.c.h.b16 %v508
    %v1768 = vunpack.c.l.b16 %v509
    %v1769 = vunpack.c.h.b16 %v509
    %v1770 = vunpack.c.l.b16 %v510
    %v1771 = vunpack.c.h.b16 %v510
    %v1772 = vunpack.c.l.b16 %v511
    %v1773 = vunpack.c.h.b16 %v511
    %v1774 = vunpack.c.l.b16 %v512
    %v1775 = vunpack.c.h.b16 %v512
    %v1776 = vunpack.c.l.b16 %v513
    %v1777 = vunpack.c.h.b16 %v513
    %v1778 = vunpack.c.l.b16 %v514
    %v1779 = vunpack.c.h.b16 %v514
    %v1780 = vunpack.c.l.b16 %v515
    %v1781 = vunpack.c.h.b16 %v515
    %v1782 = vunpack.c.l.b16 %v516
    %v1783 = vunpack.c.h.b16 %v516
    %v1784 = vunpack.c.l.b16 %v517
    %v1785 = vunpack.c.h.b16 %v517
    %v1786 = vunpack.c.l.b16 %v518
    %v1787 = vunpack.c.h.b16 %v518
    %v1788 = vunpack.c.l.b16 %v519
    %v1789 = vunpack.c.h.b16 %v519
    %v1790 = vunpack.c.l.b16 %v520
    %v1791 = vunpack.c.h.b16 %v520
    %v1792 = vunpack.c.l.b16 %v521
    %v1793 = vunpack.c.h.b16 %v521
    %v1794 = vunpack.c.l.b16 %v522
    %v1795 = vunpack.c.h.b16 %v522
    %v1796 = vunpack.c.l.b16 %v523
    %v1797 = vunpack.c.h.b16 %v523
    %v1798 = vunpack.c.l.b16 %v524
    %v1799 = vunpack.c.h.b16 %v524
    %v1800 = vunpack.c.l.b16 %v525
    %v1801 = vunpack.c.h.b16 %v525
    %v1802 = vunpack.c.l.b16 %v526
    %v1803 = vunpack.c.h.b16 %v526
    %v1804 = vunpack.c.l.b16 %v527
    %v1805 = vunpack.c.h.b16 %v527
    %v1806 = vunpack.c.l.b16 %v528
    %v1807 = vunpack.c.h.b16 %v528
    %v1808 = vunpack.c.l.b16 %v529
    %v1809 = vunpack.c.h.b16 %v529
    %v1810 = vunpack.c.l.b16 %v530
    %v1811 = vunpack.c.h.b16 %v530
    %v1812 = vunpack.c.l.b16 %v531
    %v1813 = vunpack.c.h.b16 %v531
    %v1814 = vunpack.c.l.b16 %v532
    %v1815 = vunpack.c.h.b16 %v532
    %v1816 = vunpack.c.l.b16 %v533
    %v1817 = vunpack.c.h.b16 %v533
    %v1818 = vunpack.c.l.b16 %v534
    %v1819 = vunpack.c.h.b16 %v534
    %v1820 = vunpack.c.l.b16 %v535
    %v1821 = vunpack.c.h.b16 %v535
    %v1822 = vunpack.c.l.b16 %v536
    %v1823 = vunpack.c.h.b16 %v536
    %v1824 = vunpack.c.l.b16 %v537
    %v1825 = vunpack.c.h.b16 %v537
    %v1826 = vunpack.c.l.b16 %v538
    %v1827 = vunpack.c.h.b16 %v538
    %v1828 = vunpack.c.l.b16 %v539
    %v1829 = vunpack.c.h.b16 %v539
    %v1830 = vunpack.c.l.b16 %v540
    %v1831 = vunpack.c.h.b16 %v540
    %v1832 = vunpack.c.l.b16 %v541
    %v1833 = vunpack.c.h.b16 %v541
    %v1834 = vunpack.c.l.b16 %v542
    %v1835 = vunpack.c.h.b16 %v542
    %v1836 = vunpack.c.l.b16 %v543
    %v1837 = vunpack.c.h.b16 %v543
    %v1838 = vunpack.c.l.b16 %v544
    %v1839 = vunpack.c.h.b16 %v544
    %v1840 = vunpack.c.l.b16 %v545
    %v1841 = vunpack.c.h.b16 %v545
    %v1842 = vunpack.c.l.b16 %v546
    %v1843 = vunpack.c.h.b16 %v546
    %v1844 = vunpack.c.l.b16 %v547
    %v1845 = vunpack.c.h.b16 %v547
    %v1846 = vunpack.c.l.b16 %v548
    %v1847 = vunpack.c.h.b16 %v548
    %v1848 = vunpack.c.l.b16 %v549
    %v1849 = vunpack.c.h.b16 %v549
    %v1850 = vunpack.c.l.b16 %v550
    %v1851 = vunpack.c.h.b16 %v550
    %v1852 = vunpack.c.l.b16 %v551
    %v1853 = vunpack.c.h.b16 %v551
    %v1854 = vunpack.c.l.b16 %v552
    %v1855 = vunpack.c.h.b16 %v552
    %v1856 = vunpack.c.l.b16 %v553
    %v1857 = vunpack.c.h.b16 %v553
    %v1858 = vunpack.c.l.b16 %v554
    %v1859 = vunpack.c.h.b16 %v554
    %v1860 = vunpack.c.l.b16 %v555
    %v1861 = vunpack.c.h.b16 %v555
    %v1862 = vunpack.c.l.b16 %v556
    %v1863 = vunpack.c.h.b16 %v556
    %v1864 = vunpack.c.l.b16 %v557
    %v1865 = vunpack.c.h.b16 %v557
    %v1866 = vunpack.c.l.b16 %v558
    %v1867 = vunpack.c.h.b16 %v558
    %v1868 = vunpack.c.l.b16 %v559
    %v1869 = vunpack.c.h.b16 %v559
    %v1870 = vunpack.c.l.b16 %v560
    %v1871 = vunpack.c.h.b16 %v560
    %v1872 = vunpack.c.l.b16 %v561
    %v1873 = vunpack.c.h.b16 %v561
    %v1874 = vunpack.c.l.b16 %v562
    %v1875 = vunpack.c.h.b16 %v562
    %v1876 = vunpack.c.l.b16 %v563
    %v1877 = vunpack.c.h.b16 %v563
    %v1878 = vunpack.c.l.b16 %v564
    %v1879 = vunpack.c.h.b16 %v564
    %v1880 = vunpack.c.l.b16 %v565
    %v1881 = vunpack.c.h.b16 %v565
    %v1882 = vunpack.c.l.b16 %v566
    %v1883 = vunpack.c.h.b16 %v566
    %v1884 = vunpack.c.l.b16 %v567
    %v1885 = vunpack.c.h.b16 %v567
    %v1886 = vunpack.c.l.b16 %v568
    %v1887 = vunpack.c.h.b16 %v568
    %v1888 = vunpack.c.l.b16 %v569
    %v1889 = vunpack.c.h.b16 %v569
    %v1890 = vunpack.c.l.b16 %v570
    %v1891 = vunpack.c.h.b16 %v570
    %v1892 = vunpack.c.l.b16 %v571
    %v1893 = vunpack.c.h.b16 %v571
    %v1894 = vunpack.c.l.b16 %v572
    %v1895 = vunpack.c.h.b16 %v572
    %v1896 = vunpack.c.l.b16 %v573
    %v1897 = vunpack.c.h.b16 %v573
    %v1898 = vunpack.c.l.b16 %v574
    %v1899 = vunpack.c.h.b16 %v574
    %v1900 = vunpack.c.l.b16 %v575
    %v1901 = vunpack.c.h.b16 %v575
    %v1902 = vunpack.c.l.b16 %v576
    %v1903 = vunpack.c.h.b16 %v576
    %v1904 = vunpack.c.l.b16 %v577
    %v1905 = vunpack.c.h.b16 %v577
    %v1906 = vunpack.c.l.b16 %v578
    %v1907 = vunpack.c.h.b16 %v578
    %v1908 = vunpack.c.l.b16 %v579
    %v1909 = vunpack.c.h.b16 %v579
    %v1910 = vunpack.c.l.b16 %v580
    %v1911 = vunpack.c.h.b16 %v580
    %v1912 = vunpack.c.l.b16 %v581
    %v1913 = vunpack.c.h.b16 %v581
    %v1914 = vunpack.c.l.b16 %v582
    %v1915 = vunpack.c.h.b16 %v582
    %v1916 = vunpack.c.l.b16 %v583
    %v1917 = vunpack.c.h.b16 %v583
    %v1918 = vunpack.c.l.b16 %v584
    %v1919 = vunpack.c.h.b16 %v584
    %v1920 = vunpack.c.l.b16 %v585
    %v1921 = vunpack.c.h.b16 %v585
    %v1922 = vunpack.c.l.b16 %v586
    %v1923 = vunpack.c.h.b16 %v586
    %v1924 = vunpack.c.l.b16 %v587
    %v1925 = vunpack.c.h.b16 %v587
    %v1926 = vunpack.c.l.b16 %v588
    %v1927 = vunpack.c.h.b16 %v588
    %v1928 = vunpack.c.l.b16 %v589
    %v1929 = vunpack.c.h.b16 %v589
    %v1930 = vunpack.c.l.b16 %v590
    %v1931 = vunpack.c.h.b16 %v590
    %v1932 = vunpack.c.l.b16 %v591
    %v1933 = vunpack.c.h.b16 %v591
    %v1934 = vunpack.c.l.b16 %v592
    %v1935 = vunpack.c.h.b16 %v592
    %v1936 = vunpack.c.l.b16 %v593
    %v1937 = vunpack.c.h.b16 %v593
    %v1938 = vunpack.c.l.b16 %v594
    %v1939 = vunpack.c.h.b16 %v594
    %v1940 = vunpack.c.l.b16 %v595
    %v1941 = vunpack.c.h.b16 %v595
    %v1942 = vunpack.c.l.b16 %v596
    %v1943 = vunpack.c.h.b16 %v596
    %v1944 = vunpack.c.l.b16 %v597
    %v1945 = vunpack.c.h.b16 %v597
    %v1946 = vunpack.c.l.b16 %v598
    %v1947 = vunpack.c.h.b16 %v598
    %v1948 = vunpack.c.l.b16 %v599
    %v1949 = vunpack.c.h.b16 %v599
    %v1950 = vunpack.c.l.b16 %v600
    %v1951 = vunpack.c.h.b16 %v600
    %v1952 = vunpack.c.l.b16 %v601
    %v1953 = vunpack.c.h.b16 %v601
    %v1954 = vunpack.c.l.b16 %v602
    %v1955 = vunpack.c.h.b16 %v602
    %v1956 = vunpack.c.l.b16 %v603
    %v1957 = vunpack.c.h.b16 %v603
    %v1958 = vunpack.c.l.b16 %v604
    %v1959 = vunpack.c.h.b16 %v604
    %v1960 = vunpack.c.l.b16 %v605
    %v1961 = vunpack.c.h.b16 %v605
    %v1962 = vunpack.c.l.b16 %v606
    %v1963 = vunpack.c.h.b16 %v606
    %v1964 = vunpack.c.l.b16 %v607
    %v1965 = vunpack.c.h.b16 %v607
    %v1966 = vunpack.c.l.b16 %v608
    %v1967 = vunpack.c.h.b16 %v608
    %v1968 = vunpack.c.l.b16 %v609
    %v1969 = vunpack.c.h.b16 %v609
    %v1970 = vunpack.c.l.b16 %v610
    %v1971 = vunpack.c.h.b16 %v610
    %v1972 = vunpack.c.l.b16 %v611
    %v1973 = vunpack.c.h.b16 %v611
    %v1974 = vunpack.c.l.b16 %v612
    %v1975 = vunpack.c.h.b16 %v612
    %v1976 = vunpack.c.l.b16 %v613
    %v1977 = vunpack.c.h.b16 %v613
    %v1978 = vunpack.c.l.b16 %v614
    %v1979 = vunpack.c.h.b16 %v614
    %v1980 = vunpack.c.l.b16 %v615
    %v1981 = vunpack.c.h.b16 %v615
    %v1982 = vunpack.c.l.b16 %v616
    %v1983 = vunpack.c.h.b16 %v616
    %v1984 = vunpack.c.l.b16 %v617
    %v1985 = vunpack.c.h.b16 %v617
    %v1986 = vunpack.c.l.b16 %v618
    %v1987 = vunpack.c.h.b16 %v618
    %v1988 = vunpack.c.l.b16 %v619
    %v1989 = vunpack.c.h.b16 %v619
    %v1990 = vunpack.c.l.b16 %v620
    %v1991 = vunpack.c.h.b16 %v620
    %v1992 = vunpack.c.l.b16 %v621
    %v1993 = vunpack.c.h.b16 %v621
    %v1994 = vunpack.c.l.b16 %v622
    %v1995 = vunpack.c.h.b16 %v622
    %v1996 = vunpack.c.l.b16 %v623
    %v1997 = vunpack.c.h.b16 %v623
    %v1998 = vunpack.c.l.b16 %v624
    %v1999 = vunpack.c.h.b16 %v624
    %v2000 = vunpack.c.l.b16 %v625
    %v2001 = vunpack.c.h.b16 %v625
    %v2002 = vunpack.c.l.b16 %v626
    %v2003 = vunpack.c.h.b16 %v626
    %v2004 = vunpack.c.l.b16 %v627
    %v2005 = vunpack.c.h.b16 %v627
    %v2006 = vunpack.c.l.b16 %v628
    %v2007 = vunpack.c.h.b16 %v628
    %v2008 = vunpack.c.l.b16 %v629
    %v2009 = vunpack.c.h.b16 %v629
    %v2010 = vunpack.c.l.b16 %v630
    %v2011 = vunpack.c.h.b16 %v630
    %v2012 = vunpack.c.l.b16 %v631
    %v2013 = vunpack.c.h.b16 %v631
    %v2014 = vunpack.c.l.b16 %v632
    %v2015 = vunpack.c.h.b16 %v632
    %v2016 = vunpack.c.l.b16 %v633
    %v2017 = vunpack.c.h.b16 %v633
    %v2018 = vunpack.c.l.b16 %v634
    %v2019 = vunpack.c.h.b16 %v634
    %v2020 = vunpack.c.l.b16 %v635
    %v2021 = vunpack.c.h.b16 %v635
    %v2022 = vunpack.c.l.b16 %v636
    %v2023 = vunpack.c.h.b16 %v636
    %v2024 = vunpack.c.l.b16 %v637
    %v2025 = vunpack.c.h.b16 %v637
    %v2026 = vunpack.c.l.b16 %v638
    %v2027 = vunpack.c.h.b16 %v638
    %v2028 = vunpack.c.l.b16 %v639
    %v2029 = vunpack.c.h.b16 %v639
    %v2030 = vunpack.c.l.b16 %v640
    %v2031 = vunpack.c.h.b16 %v640
    %v2032 = vunpack.c.l.b16 %v641
    %v2033 = vunpack.c.h.b16 %v641
    %v2034 = vunpack.c.l.b16 %v642
    %v2035 = vunpack.c.h.b16 %v642
    %v2036 = vunpack.c.l.b16 %v643
    %v2037 = vunpack.c.h.b16 %v643
    %v2038 = vunpack.c.l.b16 %v644
    %v2039 = vunpack.c.h.b16 %v644
    %v2040 = vunpack.c.l.b16 %v645
    %v2041 = vunpack.c.h.b16 %v645
    %v2042 = vunpack.c.l.b16 %v646
    %v2043 = vunpack.c.h.b16 %v646
    %v2044 = vunpack.c.l.b16 %v647
    %v2045 = vunpack.c.h.b16 %v647
    %v2046 = vunpack.c.l.b16 %v648
    %v2047 = vunpack.c.h.b16 %v648
    %v2048 = vunpack.c.l.b16 %v649
    %v2049 = vunpack.c.h.b16 %v649
    %v2050 = vunpack.c.l.b16 %v650
    %v2051 = vunpack.c.h.b16 %v650
    %v2052 = vunpack.c.l.b16 %v651
    %v2053 = vunpack.c.h.b16 %v651
    %v2054 = vunpack.c.l.b16 %v652
    %v2055 = vunpack.c.h.b16 %v652
    %v2056 = vunpack.c.l.b16 %v653
    %v2057 = vunpack.c.h.b16 %v653
    %v2058 = vunpack.c.l.b16 %v654
    %v2059 = vunpack.c.h.b16 %v654
    %v2060 = vunpack.c.l.b16 %v655
    %v2061 = vunpack.c.h.b16 %v655
    %v2062 = vunpack.c.l.b16 %v656
    %v2063 = vunpack.c.h.b16 %v656
    %v2064 = vunpack.c.l.b16 %v657
    %v2065 = vunpack.c.h.b16 %v657
    %v2066 = vunpack.c.l.b16 %v658
    %v2067 = vunpack.c.h.b16 %v658
    %v2068 = vunpack.c.l.b16 %v659
    %v2069 = vunpack.c.h.b16 %v659
    %v2070 = vunpack.c.l.b16 %v660
    %v2071 = vunpack.c.h.b16 %v660
    %v2072 = vunpack.c.l.b16 %v661
    %v2073 = vunpack.c.h.b16 %v661
    %v2074 = vunpack.c.l.b16 %v662
    %v2075 = vunpack.c.h.b16 %v662
    %v2076 = vunpack.c.l.b16 %v663
    %v2077 = vunpack.c.h.b16 %v663
    %v2078 = vunpack.c.l.b16 %v664
    %v2079 = vunpack.c.h.b16 %v664
    %v2080 = vunpack.c.l.b16 %v665
    %v2081 = vunpack.c.h.b16 %v665
    %v2082 = vunpack.c.l.b16 %v666
    %v2083 = vunpack.c.h.b16 %v666
    %v2084 = vunpack.c.l.b16 %v667
    %v2085 = vunpack.c.h.b16 %v667
    %v2086 = vunpack.c.l.b16 %v668
    %v2087 = vunpack.c.h.b16 %v668
    %v2088 = vunpack.c.l.b16 %v669
    %v2089 = vunpack.c.h.b16 %v669
    %v2090 = vunpack.c.l.b16 %v670
    %v2091 = vunpack.c.h.b16 %v670
    %v2092 = vunpack.c.l.b16 %v671
    %v2093 = vunpack.c.h.b16 %v671
    %v2094 = vunpack.c.l.b16 %v672
    %v2095 = vunpack.c.h.b16 %v672
    %v2096 = vunpack.c.l.b16 %v673
    %v2097 = vunpack.c.h.b16 %v673
    %v2098 = vunpack.c.l.b16 %v674
    %v2099 = vunpack.c.h.b16 %v674
    %v2100 = vunpack.c.l.b16 %v675
    %v2101 = vunpack.c.h.b16 %v675
    %v2102 = vunpack.c.l.b16 %v676
    %v2103 = vunpack.c.h.b16 %v676
    %v2104 = vunpack.c.l.b16 %v677
    %v2105 = vunpack.c.h.b16 %v677
    %v2106 = vunpack.c.l.b16 %v678
    %v2107 = vunpack.c.h.b16 %v678
    %v2108 = vunpack.c.l.b16 %v679
    %v2109 = vunpack.c.h.b16 %v679
    %v2110 = vunpack.c.l.b16 %v680
    %v2111 = vunpack.c.h.b16 %v680
    %v2112 = vunpack.c.l.b16 %v681
    %v2113 = vunpack.c.h.b16 %v681
    %v2114 = vunpack.c.l.b16 %v682
    %v2115 = vunpack.c.h.b16 %v682
    %v2116 = vunpack.c.l.b16 %v683
    %v2117 = vunpack.c.h.b16 %v683
    %v2118 = vunpack.c.l.b16 %v684
    %v2119 = vunpack.c.h.b16 %v684
    %v2120 = vunpack.c.l.b16 %v685
    %v2121 = vunpack.c.h.b16 %v685
    %v2122 = vunpack.c.l.b16 %v686
    %v2123 = vunpack.c.h.b16 %v686
    %v2124 = vunpack.c.l.b16 %v687
    %v2125 = vunpack.c.h.b16 %v687
    %v2126 = vunpack.c.l.b16 %v688
    %v2127 = vunpack.c.h.b16 %v688
    %v2128 = vunpack.c.l.b16 %v689
    %v2129 = vunpack.c.h.b16 %v689
    %v2130 = vunpack.c.l.b16 %v690
    %v2131 = vunpack.c.h.b16 %v690
    %v2132 = vunpack.c.l.b16 %v691
    %v2133 = vunpack.c.h.b16 %v691
    %v2134 = vunpack.c.l.b16 %v692
    %v2135 = vunpack.c.h.b16 %v692
    %v2136 = vunpack.c.l.b16 %v693
    %v2137 = vunpack.c.h.b16 %v693
    %v2138 = vunpack.c.l.b16 %v694
    %v2139 = vunpack.c.h.b16 %v694
    %v2140 = vunpack.c.l.b16 %v695
    %v2141 = vunpack.c.h.b16 %v695
    %v2142 = vunpack.c.l.b16 %v696
    %v2143 = vunpack.c.h.b16 %v696
    %v2144 = vunpack.c.l.b16 %v697
    %v2145 = vunpack.c.h.b16 %v697
    %v2146 = vunpack.c.l.b16 %v698
    %v2147 = vunpack.c.h.b16 %v698
    %v2148 = vunpack.c.l.b16 %v699
    %v2149 = vunpack.c.h.b16 %v699
    %v2150 = vunpack.c.l.b16 %v700
    %v2151 = vunpack.c.h.b16 %v700
    %v2152 = vunpack.c.l.b16 %v701
    %v2153 = vunpack.c.h.b16 %v701
    %v2154 = vunpack.c.l.b16 %v702
    %v2155 = vunpack.c.h.b16 %v702
    %v2156 = vunpack.c.l.b16 %v703
    %v2157 = vunpack.c.h.b16 %v703
    %v2158 = vunpack.c.l.b16 %v704
    %v2159 = vunpack.c.h.b16 %v704
    %v2160 = vunpack.c.l.b16 %v705
    %v2161 = vunpack.c.h.b16 %v705
    %v2162 = vunpack.c.l.b16 %v706
    %v2163 = vunpack.c.h.b16 %v706
    %v2164 = vunpack.c.l.b16 %v707
    %v2165 = vunpack.c.h.b16 %v707
    %v2166 = vunpack.c.l.b16 %v708
    %v2167 = vunpack.c.h.b16 %v708
    %v2168 = vunpack.c.l.b16 %v709
    %v2169 = vunpack.c.h.b16 %v709
    %v2170 = vunpack.c.l.b16 %v710
    %v2171 = vunpack.c.h.b16 %v710
    %v2172 = vunpack.c.l.b16 %v711
    %v2173 = vunpack.c.h.b16 %v711
    %v2174 = vunpack.c.l.b16 %v712
    %v2175 = vunpack.c.h.b16 %v712
    %v2176 = vunpack.c.l.b16 %v713
    %v2177 = vunpack.c.h.b16 %v713
    %v2178 = vunpack.c.l.b16 %v714
    %v2179 = vunpack.c.h.b16 %v714
    %v2180 = vunpack.c.l.b16 %v715
    %v2181 = vunpack.c.h.b16 %v715
    %v2182 = vunpack.c.l.b16 %v716
    %v2183 = vunpack.c.h.b16 %v716
    %v2184 = vunpack.c.l.b16 %v717
    %v2185 = vunpack.c.h.b16 %v717
    %v2186 = vunpack.c.l.b16 %v718
    %v2187 = vunpack.c.h.b16 %v718
    %v2188 = vunpack.c.l.b16 %v719
    %v2189 = vunpack.c.h.b16 %v719
    %v2190 = vunpack.c.l.b16 %v720
    %v2191 = vunpack.c.h.b16 %v720
    %v2192 = vunpack.c.l.b16 %v721
    %v2193 = vunpack.c.h.b16 %v721
    %v2194 = vunpack.c.l.b16 %v722
    %v2195 = vunpack.c.h.b16 %v722
    %v2196 = vunpack.c.l.b16 %v723
    %v2197 = vunpack.c.h.b16 %v723
    %v2198 = vunpack.c.l.b16 %v724
    %v2199 = vunpack.c.h.b16 %v724
    %v2200 = vunpack.c.l.b16 %v725
    %v2201 = vunpack.c.h.b16 %v725
    %v2202 = vunpack.c.l.b16 %v726
    %v2203 = vunpack.c.h.b16 %v726
    %v2204 = vunpack.c.l.b16 %v727
    %v2205 = vunpack.c.h.b16 %v727
    %v2206 = vunpack.c.l.b16 %v728
    %v2207 = vunpack.c.h.b16 %v728
    %v2208 = vunpack.c.l.b16 %v729
    %v2209 = vunpack.c.h.b16 %v729
    %v2210 = vunpack.c.l.b16 %v730
    %v2211 = vunpack.c.h.b16 %v730
    %v2212 = vunpack.c.l.b16 %v731
    %v2213 = vunpack.c.h.b16 %v731
    %v2214 = vunpack.c.l.b16 %v732
    %v2215 = vunpack.c.h.b16 %v732
    %v2216 = vunpack.c.l.b16 %v733
    %v2217 = vunpack.c.h.b16 %v733
    %v2218 = vunpack.c.l.b16 %v734
    %v2219 = vunpack.c.h.b16 %v734
    %v2220 = vunpack.c.l.b16 %v735
    %v2221 = vunpack.c.h.b16 %v735
    %v2222 = vunpack.c.l.b16 %v736
    %v2223 = vunpack.c.h.b16 %v736
    %v2224 = vunpack.c.l.b16 %v737
    %v2225 = vunpack.c.h.b16 %v737
    %v2226 = vunpack.c.l.b16 %v738
    %v2227 = vunpack.c.h.b16 %v738
    %v2228 = vunpack.c.l.b16 %v739
    %v2229 = vunpack.c.h.b16 %v739
    %v2230 = vunpack.c.l.b16 %v740
    %v2231 = vunpack.c.h.b16 %v740
    %v2232 = vunpack.c.l.b16 %v741
    %v2233 = vunpack.c.h.b16 %v741
    %v2234 = vunpack.c.l.b16 %v742
    %v2235 = vunpack.c.h.b16 %v742
    %v2236 = vunpack.c.l.b16 %v743
    %v2237 = vunpack.c.h.b16 %v743
    %v2238 = vunpack.c.l.b16 %v744
    %v2239 = vunpack.c.h.b16 %v744
    %v2240 = vunpack.c.l.b16 %v745
    %v2241 = vunpack.c.h.b16 %v745
    %v2242 = vunpack.c.l.b16 %v746
    %v2243 = vunpack.c.h.b16 %v746
    %v2244 = vunpack.c.l.b16 %v747
    %v2245 = vunpack.c.h.b16 %v747
    %v2246 = vunpack.c.l.b16 %v748
    %v2247 = vunpack.c.h.b16 %v748
    %v2248 = vunpack.c.l.b16 %v749
    %v2249 = vunpack.c.h.b16 %v749
    %v2250 = vunpack.c.l.b16 %v750
    %v2251 = vunpack.c.h.b16 %v750
    %v2252 = vunpack.c.l.b16 %v751
    %v2253 = vunpack.c.h.b16 %v751
    %v2254 = vunpack.c.l.b16 %v752
    %v2255 = vunpack.c.h.b16 %v752
    %v2256 = vunpack.c.l.b16 %v753
    %v2257 = vunpack.c.h.b16 %v753
    %v2258 = vunpack.c.l.b16 %v754
    %v2259 = vunpack.c.h.b16 %v754
    %v2260 = vunpack.c.l.b16 %v755
    %v2261 = vunpack.c.h.b16 %v755
    %v2262 = vunpack.c.l.b16 %v756
    %v2263 = vunpack.c.h.b16 %v756
    %v2264 = vunpack.c.l.b16 %v757
    %v2265 = vunpack.c.h.b16 %v757
    %v2266 = vunpack.c.l.b16 %v758
    %v2267 = vunpack.c.h.b16 %v758
    %v2268 = vunpack.c.l.b16 %v759
    %v2269 = vunpack.c.h.b16 %v759
    %v2270 = vunpack.c.l.b16 %v760
    %v2271 = vunpack.c.h.b16 %v760
    %v2272 = vunpack.c.l.b16 %v761
    %v2273 = vunpack.c.h.b16 %v761
    %v2274 = vunpack.c.l.b16 %v762
    %v2275 = vunpack.c.h.b16 %v762
    %v2276 = vunpack.c.l.b16 %v763
    %v2277 = vunpack.c.h.b16 %v763
    %v2278 = vunpack.c.l.b16 %v764
    %v2279 = vunpack.c.h.b16 %v764
    %v2280 = vunpack.c.l.b16 %v765
    %v2281 = vunpack.c.h.b16 %v765
    %v2282 = vunpack.c.l.b16 %v766
    %v2283 = vunpack.c.h.b16 %v766
    %v2284 = vunpack.c.l.b16 %v767
    %v2285 = vunpack.c.h.b16 %v767
    %v2286 = vunpack.c.l.b16 %v768
    %v2287 = vunpack.c.h.b16 %v768
    %v2288 = vunpack.c.l.b16 %v769
    %v2289 = vunpack.c.h.b16 %v769
    %v2290 = vunpack.c.l.b16 %v770
    %v2291 = vunpack.c.h.b16 %v770
    %v2292 = vunpack.c.l.b16 %v771
    %v2293 = vunpack.c.h.b16 %v771
    %v2294 = vunpack.c.l.b16 %v772
    %v2295 = vunpack.c.h.b16 %v772
    %v2296 = vunpack.c.l.b16 %v773
    %v2297 = vunpack.c.h.b16 %v773
    %v2298 = vunpack.c.l.b16 %v774
    %v2299 = vunpack.c.h.b16 %v774
    %v2300 = vunpack.c.l.b16 %v775
    %v2301 = vunpack.c.h.b16 %v775
    %v2302 = vunpack.c.l.b16 %v776
    %v2303 = vunpack.c.h.b16 %v776
    %v2304 = vunpack.c.l.b16 %v777
    %v2305 = vunpack.c.h.b16 %v777
    %v2306 = vunpack.c.l.b16 %v778
    %v2307 = vunpack.c.h.b16 %v778
    %v2308 = vunpack.c.l.b16 %v779
    %v2309 = vunpack.c.h.b16 %v779
    %v2310 = vunpack.c.l.b16 %v780
    %v2311 = vunpack.c.h.b16 %v780
    %v2312 = vunpack.c.l.b16 %v781
    %v2313 = vunpack.c.h.b16 %v781
    %v2314 = vunpack.c.l.b16 %v782
    %v2315 = vunpack.c.h.b16 %v782
    %v2316 = vunpack.c.l.b16 %v783
    %v2317 = vunpack.c.h.b16 %v783
    %v2318 = vunpack.c.l.b16 %v784
    %v2319 = vunpack.c.h.b16 %v784
    %v2320 = vunpack.c.l.b16 %v785
    %v2321 = vunpack.c.h.b16 %v785
    %v2322 = vunpack.c.l.b16 %v786
    %v2323 = vunpack.c.h.b16 %v786
    %v2324 = vunpack.c.l.b16 %v787
    %v2325 = vunpack.c.h.b16 %v787
    %v2326 = vunpack.c.l.b16 %v788
    %v2327 = vunpack.c.h.b16 %v788
    %v2328 = vunpack.c.l.b16 %v789
    %v2329 = vunpack.c.h.b16 %v789
    %v2330 = vunpack.c.l.b16 %v790
    %v2331 = vunpack.c.h.b16 %v790
    %v2332 = vunpack.c.l.b16 %v791
    %v2333 = vunpack.c.h.b16 %v791
    %v2334 = vunpack.c.l.b16 %v792
    %v2335 = vunpack.c.h.b16 %v792
    %v2336 = vunpack.c.l.b16 %v793
    %v2337 = vunpack.c.h.b16 %v793
    %v2338 = vunpack.c.l.b16 %v794
    %v2339 = vunpack.c.h.b16 %v794
    %v2340 = vunpack.c.l.b16 %v795
    %v2341 = vunpack.c.h.b16 %v795
    %v2342 = vunpack.c.l.b16 %v796
    %v2343 = vunpack.c.h.b16 %v796
    %v2344 = vunpack.c.l.b16 %v797
    %v2345 = vunpack.c.h.b16 %v797
    %v2346 = vunpack.c.l.b16 %v798
    %v2347 = vunpack.c.h.b16 %v798
    %v2348 = vunpack.c.l.b16 %v799
    %v2349 = vunpack.c.h.b16 %v799
    %v2350 = vunpack.c.l.b16 %v800
    %v2351 = vunpack.c.h.b16 %v800
    %v2352 = vunpack.c.l.b16 %v801
    %v2353 = vunpack.c.h.b16 %v801
    %v2354 = vunpack.c.l.b16 %v802
    %v2355 = vunpack.c.h.b16 %v802
    %v2356 = vunpack.c.l.b16 %v803
    %v2357 = vunpack.c.h.b16 %v803
    %v2358 = vunpack.c.l.b16 %v804
    %v2359 = vunpack.c.h.b16 %v804
    %v2360 = vunpack.c.l.b16 %v805
    %v2361 = vunpack.c.h.b16 %v805
    %v2362 = vunpack.c.l.b16 %v806
    %v2363 = vunpack.c.h.b16 %v806
    %v2364 = vunpack.c.l.b16 %v807
    %v2365 = vunpack.c.h.b16 %v807
    %v2366 = vunpack.c.l.b16 %v808
    %v2367 = vunpack.c.h.b16 %v808
    %v2368 = vunpack.c.l.b16 %v809
    %v2369 = vunpack.c.h.b16 %v809
    %v2370 = vunpack.c.l.b16 %v810
    %v2371 = vunpack.c.h.b16 %v810
    %v2372 = vunpack.c.l.b16 %v811
    %v2373 = vunpack.c.h.b16 %v811
    %v2374 = vunpack.c.l.b16 %v812
    %v2375 = vunpack.c.h.b16 %v812
    %v2376 = vunpack.c.l.b16 %v813
    %v2377 = vunpack.c.h.b16 %v813
    %v2378 = vunpack.c.l.b16 %v814
    %v2379 = vunpack.c.h.b16 %v814
    %v2380 = vunpack.c.l.b16 %v815
    %v2381 = vunpack.c.h.b16 %v815
    %v2382 = vunpack.c.l.b16 %v816
    %v2383 = vunpack.c.h.b16 %v816
    %v2384 = vunpack.c.l.b16 %v817
    %v2385 = vunpack.c.h.b16 %v817
    %v2386 = vunpack.c.l.b16 %v818
    %v2387 = vunpack.c.h.b16 %v818
    %v2388 = vunpack.c.l.b16 %v819
    %v2389 = vunpack.c.h.b16 %v819
    %v2390 = vunpack.c.l.b16 %v820
    %v2391 = vunpack.c.h.b16 %v820
    %v2392 = vunpack.c.l.b16 %v821
    %v2393 = vunpack.c.h.b16 %v821
    %v2394 = vunpack.c.l.b16 %v822
    %v2395 = vunpack.c.h.b16 %v822
    %v2396 = vunpack.c.l.b16 %v823
    %v2397 = vunpack.c.h.b16 %v823
    %v2398 = vunpack.c.l.b16 %v824
    %v2399 = vunpack.c.h.b16 %v824
    %v2400 = vunpack.c.l.b16 %v825
    %v2401 = vunpack.c.h.b16 %v825
    %v2402 = vunpack.c.l.b16 %v826
    %v2403 = vunpack.c.h.b16 %v826
    %v2404 = vunpack.c.l.b16 %v827
    %v2405 = vunpack.c.h.b16 %v827
    %v2406 = vunpack.c.l.b16 %v828
    %v2407 = vunpack.c.h.b16 %v828
    %v2408 = vunpack.c.l.b16 %v829
    %v2409 = vunpack.c.h.b16 %v829
    %v2410 = vunpack.c.l.b16 %v830
    %v2411 = vunpack.c.h.b16 %v830
    %v2412 = vunpack.c.l.b16 %v831
    %v2413 = vunpack.c.h.b16 %v831
    %v2414 = vunpack.c.l.b16 %v832
    %v2415 = vunpack.c.h.b16 %v832
    %v2416 = vunpack.c.l.b16 %v833
    %v2417 = vunpack.c.h.b16 %v833
    %v2418 = vunpack.c.l.b16 %v834
    %v2419 = vunpack.c.h.b16 %v834
    %v2420 = vunpack.c.l.b16 %v835
    %v2421 = vunpack.c.h.b16 %v835
    %v2422 = vunpack.c.l.b16 %v836
    %v2423 = vunpack.c.h.b16 %v836
    %v2424 = vunpack.c.l.b16 %v837
    %v2425 = vunpack.c.h.b16 %v837
    %v2426 = vunpack.c.l.b16 %v838
    %v2427 = vunpack.c.h.b16 %v838
    %v2428 = vunpack.c.l.b16 %v839
    %v2429 = vunpack.c.h.b16 %v839
    %v2430 = vunpack.c.l.b16 %v840
    %v2431 = vunpack.c.h.b16 %v840
    %v2432 = vunpack.c.l.b16 %v841
    %v2433 = vunpack.c.h.b16 %v841
    %v2434 = vunpack.c.l.b16 %v842
    %v2435 = vunpack.c.h.b16 %v842
    %v2436 = vunpack.c.l.b16 %v843
    %v2437 = vunpack.c.h.b16 %v843
    %v2438 = vunpack.c.l.b16 %v844
    %v2439 = vunpack.c.h.b16 %v844
    %v2440 = vunpack.c.l.b16 %v845
    %v2441 = vunpack.c.h.b16 %v845
    %v2442 = vunpack.c.l.b16 %v846
    %v2443 = vunpack.c.h.b16 %v846
    %v2444 = vunpack.c.l.b16 %v847
    %v2445 = vunpack.c.h.b16 %v847
    %v2446 = vunpack.c.l.b16 %v848
    %v2447 = vunpack.c.h.b16 %v848
    %v2448 = vunpack.c.l.b16 %v849
    %v2449 = vunpack.c.h.b16 %v849
    %v2450 = vunpack.c.l.b16 %v850
    %v2451 = vunpack.c.h.b16 %v850
    %v2452 = vunpack.c.l.b16 %v851
    %v2453 = vunpack.c.h.b16 %v851
    %v2454 = vunpack.c.l.b16 %v852
    %v2455 = vunpack.c.h.b16 %v852
    %v2456 = vunpack.c.l.b16 %v853
    %v2457 = vunpack.c.h.b16 %v853
    %v2458 = vunpack.c.l.b16 %v854
    %v2459 = vunpack.c.h.b16 %v854
    %v2460 = vunpack.c.l.b16 %v855
    %v2461 = vunpack.c.h.b16 %v855
    %v2462 = vunpack.c.l.b16 %v856
    %v2463 = vunpack.c.h.b16 %v856
    %v2464 = vunpack.c.l.b16 %v857
    %v2465 = vunpack.c.h.b16 %v857
    %v2466 = vunpack.c.l.b16 %v858
    %v2467 = vunpack.c.h.b16 %v858
    %v2468 = vunpack.c.l.b16 %v859
    %v2469 = vunpack.c.h.b16 %v859
    %v2470 = vunpack.c.l.b16 %v860
    %v2471 = vunpack.c.h.b16 %v860
    %v2472 = vunpack.c.l.b16 %v861
    %v2473 = vunpack.c.h.b16 %v861
    %v2474 = vunpack.c.l.b16 %v862
    %v2475 = vunpack.c.h.b16 %v862
    %v2476 = vunpack.c.l.b16 %v863
    %v2477 = vunpack.c.h.b16 %v863
    %v2478 = vunpack.c.l.b16 %v864
    %v2479 = vunpack.c.h.b16 %v864
    %v2480 = vunpack.c.l.b16 %v865
    %v2481 = vunpack.c.h.b16 %v865
    %v2482 = vunpack.c.l.b16 %v866
    %v2483 = vunpack.c.h.b16 %v866
    %v2484 = vunpack.c.l.b16 %v867
    %v2485 = vunpack.c.h.b16 %v867
    %v2486 = vunpack.c.l.b16 %v868
    %v2487 = vunpack.c.h.b16 %v868
    %v2488 = vunpack.c.l.b16 %v869
    %v2489 = vunpack.c.h.b16 %v869
    %v2490 = vpack.c.b16 %v1482, %v1466
    %v2491 = vpack.c.b16 %v1483, %v1467
    %v2492 = vpack.c.b16 %v1484, %v1468
    %v2493 = vpack.c.b16 %v1485, %v1469
    %v2494 = vpack.c.b16 %v1486, %v1470
    %v2495 = vpack.c.b16 %v1487, %v1471
    %v2496 = vpack.c.b16 %v1488, %v1472
    %v2497 = vpack.c.b16 %v1489, %v1473
    %v2498 = vpack.c.b16 %v1490, %v1474
    %v2499 = vpack.c.b16 %v1491, %v1475
    %v2500 = vpack.c.b16 %v1492, %v1476
    %v2501 = vpack.c.b16 %v1493, %v1477
    %v2502 = vpack.c.b16 %v1494, %v1478
    %v2503 = vpack.c.b16 %v1495, %v1479
    %v2504 = vpack.c.b16 %v1496, %v1480
    %v2505 = vpack.c.b16 %v1497, %v1481
    %v2506 = vpack.c.b16 %v1514, %v1498
    %v2507 = vpack.c.b16 %v1515, %v1499
    %v2508 = vpack.c.b16 %v1516, %v1500
    %v2509 = vpack.c.b16 %v1517, %v1501
    %v2510 = vpack.c.b16 %v1518, %v1502
    %v2511 = vpack.c.b16 %v1519, %v1503
    %v2512 = vpack.c.b16 %v1520, %v1504
    %v2513 = vpack.c.b16 %v1521, %v1505
    %v2514 = vpack.c.b16 %v1522, %v1506
    %v2515 = vpack.c.b16 %v1523, %v1507
    %v2516 = vpack.c.b16 %v1524, %v1508
    %v2517 = vpack.c.b16 %v1525, %v1509
    %v2518 = vpack.c.b16 %v1526, %v1510
    %v2519 = vpack.c.b16 %v1527, %v1511
    %v2520 = vpack.c.b16 %v1528, %v1512
    %v2521 = vpack.c.b16 %v1529, %v1513
    %v2522 = vpack.c.b16 %v1546, %v1530
    %v2523 = vpack.c.b16 %v1547, %v1531
    %v2524 = vpack.c.b16 %v1548, %v1532
    %v2525 = vpack.c.b16 %v1549, %v1533
    %v2526 = vpack.c.b16 %v1550, %v1534
    %v2527 = vpack.c.b16 %v1551, %v1535
    %v2528 = vpack.c.b16 %v1552, %v1536
    %v2529 = vpack.c.b16 %v1553, %v1537
    %v2530 = vpack.c.b16 %v1554, %v1538
    %v2531 = vpack.c.b16 %v1555, %v1539
    %v2532 = vpack.c.b16 %v1556, %v1540
    %v2533 = vpack.c.b16 %v1557, %v1541
    %v2534 = vpack.c.b16 %v1558, %v1542
    %v2535 = vpack.c.b16 %v1559, %v1543
    %v2536 = vpack.c.b16 %v1560, %v1544
    %v2537 = vpack.c.b16 %v1561, %v1545
    %v2538 = vpack.c.b16 %v1578, %v1562
    %v2539 = vpack.c.b16 %v1579, %v1563
    %v2540 = vpack.c.b16 %v1580, %v1564
    %v2541 = vpack.c.b16 %v1581, %v1565
    %v2542 = vpack.c.b16 %v1582, %v1566
    %v2543 = vpack.c.b16 %v1583, %v1567
    %v2544 = vpack.c.b16 %v1584, %v1568
    %v2545 = vpack.c.b16 %v1585, %v1569
    %v2546 = vpack.c.b16 %v1586, %v1570
    %v2547 = vpack.c.b16 %v1587, %v1571
    %v2548 = vpack.c.b16 %v1588, %v1572
    %v2549 = vpack.c.b16 %v1589, %v1573
    %v2550 = vpack.c.b16 %v1590, %v1574
    %v2551 = vpack.c.b16 %v1591, %v1575
    %v2552 = vpack.c.b16 %v1592, %v1576
    %v2553 = vpack.c.b16 %v1593, %v1577
    %v2554 = vpack.c.b16 %v1610, %v1594
    %v2555 = vpack.c.b16 %v1611, %v1595
    %v2556 = vpack.c.b16 %v1612, %v1596
    %v2557 = vpack.c.b16 %v1613, %v1597
    %v2558 = vpack.c.b16 %v1614, %v1598
    %v2559 = vpack.c.b16 %v1615, %v1599
    %v2560 = vpack.c.b16 %v1616, %v1600
    %v2561 = vpack.c.b16 %v1617, %v1601
    %v2562 = vpack.c.b16 %v1618, %v1602
    %v2563 = vpack.c.b16 %v1619, %v1603
    %v2564 = vpack.c.b16 %v1620, %v1604
    %v2565 = vpack.c.b16 %v1621, %v1605
    %v2566 = vpack.c.b16 %v1622, %v1606
    %v2567 = vpack.c.b16 %v1623, %v1607
    %v2568 = vpack.c.b16 %v1624, %v1608
    %v2569 = vpack.c.b16 %v1625, %v1609
    %v2570 = vpack.c.b16 %v1642, %v1626
    %v2571 = vpack.c.b16 %v1643, %v1627
    %v2572 = vpack.c.b16 %v1644, %v1628
    %v2573 = vpack.c.b16 %v1645, %v1629
    %v2574 = vpack.c.b16 %v1646, %v1630
    %v2575 = vpack.c.b16 %v1647, %v1631
    %v2576 = vpack.c.b16 %v1648, %v1632
    %v2577 = vpack.c.b16 %v1649, %v1633
    %v2578 = vpack.c.b16 %v1650, %v1634
    %v2579 = vpack.c.b16 %v1651, %v1635
    %v2580 = vpack.c.b16 %v1652, %v1636
    %v2581 = vpack.c.b16 %v1653, %v1637
    %v2582 = vpack.c.b16 %v1654, %v1638
    %v2583 = vpack.c.b16 %v1655, %v1639
    %v2584 = vpack.c.b16 %v1656, %v1640
    %v2585 = vpack.c.b16 %v1657, %v1641
    %v2586 = vpack.c.b16 %v1674, %v1658
    %v2587 = vpack.c.b16 %v1675, %v1659
    %v2588 = vpack.c.b16 %v1676, %v1660
    %v2589 = vpack.c.b16 %v1677, %v1661
    %v2590 = vpack.c.b16 %v1678, %v1662
    %v2591 = vpack.c.b16 %v1679, %v1663
    %v2592 = vpack.c.b16 %v1680, %v1664
    %v2593 = vpack.c.b16 %v1681, %v1665
    %v2594 = vpack.c.b16 %v1682, %v1666
    %v2595 = vpack.c.b16 %v1683, %v1667
    %v2596 = vpack.c.b16 %v1684, %v1668
    %v2597 = vpack.c.b16 %v1685, %v1669
    %v2598 = vpack.c.b16 %v1686, %v1670
    %v2599 = vpack.c.b16 %v1687, %v1671
    %v2600 = vpack.c.b16 %v1688, %v1672
    %v2601 = vpack.c.b16 %v1689, %v1673
    %v2602 = vpack.c.b16 %v1706, %v1690
    %v2603 = vpack.c.b16 %v1707, %v1691
    %v2604 = vpack.c.b16 %v1708, %v1692
    %v2605 = vpack.c.b16 %v1709, %v1693
    %v2606 = vpack.c.b16 %v1710, %v1694
    %v2607 = vpack.c.b16 %v1711, %v1695
    %v2608 = vpack.c.b16 %v1712, %v1696
    %v2609 = vpack.c.b16 %v1713, %v1697
    %v2610 = vpack.c.b16 %v1714, %v1698
    %v2611 = vpack.c.b16 %v1715, %v1699
    %v2612 = vpack.c.b16 %v1716, %v1700
    %v2613 = vpack.c.b16 %v1717, %v1701
    %v2614 = vpack.c.b16 %v1718, %v1702
    %v2615 = vpack.c.b16 %v1719, %v1703
    %v2616 = vpack.c.b16 %v1720, %v1704
    %v2617 = vpack.c.b16 %v1721, %v1705
    %v2618 = vpack.c.b16 %v1738, %v1722
    %v2619 = vpack.c.b16 %v1739, %v1723
    %v2620 = vpack.c.b16 %v1740, %v1724
    %v2621 = vpack.c.b16 %v1741, %v1725
    %v2622 = vpack.c.b16 %v1742, %v1726
    %v2623 = vpack.c.b16 %v1743, %v1727
    %v2624 = vpack.c.b16 %v1744, %v1728
    %v2625 = vpack.c.b16 %v1745, %v1729
    %v2626 = vpack.c.b16 %v1746, %v1730
    %v2627 = vpack.c.b16 %v1747, %v1731
    %v2628 = vpack.c.b16 %v1748, %v1732
    %v2629 = vpack.c.b16 %v1749, %v1733
    %v2630 = vpack.c.b16 %v1750, %v1734
    %v2631 = vpack.c.b16 %v1751, %v1735
    %v2632 = vpack.c.b16 %v1752, %v1736
    %v2633 = vpack.c.b16 %v1753, %v1737
    %v2634 = vpack.c.b16 %v1770, %v1754
    %v2635 = vpack.c.b16 %v1771, %v1755
    %v2636 = vpack.c.b16 %v1772, %v1756
    %v2637 = vpack.c.b16 %v1773, %v1757
    %v2638 = vpack.c.b16 %v1774, %v1758
    %v2639 = vpack.c.b16 %v1775, %v1759
    %v2640 = vpack.c.b16 %v1776, %v1760
    %v2641 = vpack.c.b16 %v1777, %v1761
    %v2642 = vpack.c.b16 %v1778, %v1762
    %v2643 = vpack.c.b16 %v1779, %v1763
    %v2644 = vpack.c.b16 %v1780, %v1764
    %v2645 = vpack.c.b16 %v1781, %v1765
    %v2646 = vpack.c.b16 %v1782, %v1766
    %v2647 = vpack.c.b16 %v1783, %v1767
    %v2648 = vpack.c.b16 %v1784, %v1768
    %v2649 = vpack.c.b16 %v1785, %v1769
    %v2650 = vpack.c.b16 %v1802, %v1786
    %v2651 = vpack.c.b16 %v1803, %v1787
    %v2652 = vpack.c.b16 %v1804, %v1788
    %v2653 = vpack.c.b16 %v1805, %v1789
    %v2654 = vpack.c.b16 %v1806, %v1790
    %v2655 = vpack.c.b16 %v1807, %v1791
    %v2656 = vpack.c.b16 %v1808, %v1792
    %v2657 = vpack.c.b16 %v1809, %v1793
    %v2658 = vpack.c.b16 %v1810, %v1794
    %v2659 = vpack.c.b16 %v1811, %v1795
    %v2660 = vpack.c.b16 %v1812, %v1796
    %v2661 = vpack.c.b16 %v1813, %v1797
    %v2662 = vpack.c.b16 %v1814, %v1798
    %v2663 = vpack.c.b16 %v1815, %v1799
    %v2664 = vpack.c.b16 %v1816, %v1800
    %v2665 = vpack.c.b16 %v1817, %v1801
    %v2666 = vpack.c.b16 %v1834, %v1818
    %v2667 = vpack.c.b16 %v1835, %v1819
    %v2668 = vpack.c.b16 %v1836, %v1820
    %v2669 = vpack.c.b16 %v1837, %v1821
    %v2670 = vpack.c.b16 %v1838, %v1822
    %v2671 = vpack.c.b16 %v1839, %v1823
    %v2672 = vpack.c.b16 %v1840, %v1824
    %v2673 = vpack.c.b16 %v1841, %v1825
    %v2674 = vpack.c.b16 %v1842, %v1826
    %v2675 = vpack.c.b16 %v1843, %v1827
    %v2676 = vpack.c.b16 %v1844, %v1828
    %v2677 = vpack.c.b16 %v1845, %v1829
    %v2678 = vpack.c.b16 %v1846, %v1830
    %v2679 = vpack.c.b16 %v1847, %v1831
    %v2680 = vpack.c.b16 %v1848, %v1832
    %v2681 = vpack.c.b16 %v1849, %v1833
    %v2682 = vpack.c.b16 %v1866, %v1850
    %v2683 = vpack.c.b16 %v1867, %v1851
    %v2684 = vpack.c.b16 %v1868, %v1852
    %v2685 = vpack.c.b16 %v1869, %v1853
    %v2686 = vpack.c.b16 %v1870, %v1854
    %v2687 = vpack.c.b16 %v1871, %v1855
    %v2688 = vpack.c.b16 %v1872, %v1856
    %v2689 = vpack.c.b16 %v1873, %v1857
    %v2690 = vpack.c.b16 %v1874, %v1858
    %v2691 = vpack.c.b16 %v1875, %v1859
    %v2692 = vpack.c.b16 %v1876, %v1860
    %v2693 = vpack.c.b16 %v1877, %v1861
    %v2694 = vpack.c.b16 %v1878, %v1862
    %v2695 = vpack.c.b16 %v1879, %v1863
    %v2696 = vpack.c.b16 %v1880, %v1864
    %v2697 = vpack.c.b16 %v1881, %v1865
    %v2698 = vpack.c.b16 %v1898, %v1882
    %v2699 = vpack.c.b16 %v1899, %v1883
    %v2700 = vpack.c.b16 %v1900, %v1884
    %v2701 = vpack.c.b16 %v1901, %v1885
    %v2702 = vpack.c.b16 %v1902, %v1886
    %v2703 = vpack.c.b16 %v1903, %v1887
    %v2704 = vpack.c.b16 %v1904, %v1888
    %v2705 = vpack.c.b16 %v1905, %v1889
    %v2706 = vpack.c.b16 %v1906, %v1890
    %v2707 = vpack.c.b16 %v1907, %v1891
    %v2708 = vpack.c.b16 %v1908, %v1892
    %v2709 = vpack.c.b16 %v1909, %v1893
    %v2710 = vpack.c.b16 %v1910, %v1894
    %v2711 = vpack.c.b16 %v1911, %v1895
    %v2712 = vpack.c.b16 %v1912, %v1896
    %v2713 = vpack.c.b16 %v1913, %v1897
    %v2714 = vpack.c.b16 %v1930, %v1914
    %v2715 = vpack.c.b16 %v1931, %v1915
    %v2716 = vpack.c.b16 %v1932, %v1916
    %v2717 = vpack.c.b16 %v1933, %v1917
    %v2718 = vpack.c.b16 %v1934, %v1918
    %v2719 = vpack.c.b16 %v1935, %v1919
    %v2720 = vpack.c.b16 %v1936, %v1920
    %v2721 = vpack.c.b16 %v1937, %v1921
    %v2722 = vpack.c.b16 %v1938, %v1922
    %v2723 = vpack.c.b16 %v1939, %v1923
    %v2724 = vpack.c.b16 %v1940, %v1924
    %v2725 = vpack.c.b16 %v1941, %v1925
    %v2726 = vpack.c.b16 %v1942, %v1926
    %v2727 = vpack.c.b16 %v1943, %v1927
    %v2728 = vpack.c.b16 %v1944, %v1928
    %v2729 = vpack.c.b16 %v1945, %v1929
    %v2730 = vpack.c.b16 %v1962, %v1946
    %v2731 = vpack.c.b16 %v1963, %v1947
    %v2732 = vpack.c.b16 %v1964, %v1948
    %v2733 = vpack.c.b16 %v1965, %v1949
    %v2734 = vpack.c.b16 %v1966, %v1950
    %v2735 = vpack.c.b16 %v1967, %v1951
    %v2736 = vpack.c.b16 %v1968, %v1952
    %v2737 = vpack.c.b16 %v1969, %v1953
    %v2738 = vpack.c.b16 %v1970, %v1954
    %v2739 = vpack.c.b16 %v1971, %v1955
    %v2740 = vpack.c.b16 %v1972, %v1956
    %v2741 = vpack.c.b16 %v1973, %v1957
    %v2742 = vpack.c.b16 %v1974, %v1958
    %v2743 = vpack.c.b16 %v1975, %v1959
    %v2744 = vpack.c.b16 %v1976, %v1960
    %v2745 = vpack.c.b16 %v1977, %v1961
    %v2746 = vpack.c.b16 %v1994, %v1978
    %v2747 = vpack.c.b16 %v1995, %v1979
    %v2748 = vpack.c.b16 %v1996, %v1980
    %v2749 = vpack.c.b16 %v1997, %v1981
    %v2750 = vpack.c.b16 %v1998, %v1982
    %v2751 = vpack.c.b16 %v1999, %v1983
    %v2752 = vpack.c.b16 %v2000, %v1984
    %v2753 = vpack.c.b16 %v2001, %v1985
    %v2754 = vpack.c.b16 %v2002, %v1986
    %v2755 = vpack.c.b16 %v2003, %v1987
    %v2756 = vpack.c.b16 %v2004, %v1988
    %v2757 = vpack.c.b16 %v2005, %v1989
    %v2758 = vpack.c.b16 %v2006, %v1990
    %v2759 = vpack.c.b16 %v2007, %v1991
    %v2760 = vpack.c.b16 %v2008, %v1992
    %v2761 = vpack.c.b16 %v2009, %v1993
    %v2762 = vpack.c.b16 %v2026, %v2010
    %v2763 = vpack.c.b16 %v2027, %v2011
    %v2764 = vpack.c.b16 %v2028, %v2012
    %v2765 = vpack.c.b16 %v2029, %v2013
    %v2766 = vpack.c.b16 %v2030, %v2014
    %v2767 = vpack.c.b16 %v2031, %v2015
    %v2768 = vpack.c.b16 %v2032, %v2016
    %v2769 = vpack.c.b16 %v2033, %v2017
    %v2770 = vpack.c.b16 %v2034, %v2018
    %v2771 = vpack.c.b16 %v2035, %v2019
    %v2772 = vpack.c.b16 %v2036, %v2020
    %v2773 = vpack.c.b16 %v2037, %v2021
    %v2774 = vpack.c.b16 %v2038, %v2022
    %v2775 = vpack.c.b16 %v2039, %v2023
    %v2776 = vpack.c.b16 %v2040, %v2024
    %v2777 = vpack.c.b16 %v2041, %v2025
    %v2778 = vpack.c.b16 %v2058, %v2042
    %v2779 = vpack.c.b16 %v2059, %v2043
    %v2780 = vpack.c.b16 %v2060, %v2044
    %v2781 = vpack.c.b16 %v2061, %v2045
    %v2782 = vpack.c.b16 %v2062, %v2046
    %v2783 = vpack.c.b16 %v2063, %v2047
    %v2784 = vpack.c.b16 %v2064, %v2048
    %v2785 = vpack.c.b16 %v2065, %v2049
    %v2786 = vpack.c.b16 %v2066, %v2050
    %v2787 = vpack.c.b16 %v2067, %v2051
    %v2788 = vpack.c.b16 %v2068, %v2052
    %v2789 = vpack.c.b16 %v2069, %v2053
    %v2790 = vpack.c.b16 %v2070, %v2054
    %v2791 = vpack.c.b16 %v2071, %v2055
    %v2792 = vpack.c.b16 %v2072, %v2056
    %v2793 = vpack.c.b16 %v2073, %v2057
    %v2794 = vpack.c.b16 %v2090, %v2074
    %v2795 = vpack.c.b16 %v2091, %v2075
    %v2796 = vpack.c.b16 %v2092, %v2076
    %v2797 = vpack.c.b16 %v2093, %v2077
    %v2798 = vpack.c.b16 %v2094, %v2078
    %v2799 = vpack.c.b16 %v2095, %v2079
    %v2800 = vpack.c.b16 %v2096, %v2080
    %v2801 = vpack.c.b16 %v2097, %v2081
    %v2802 = vpack.c.b16 %v2098, %v2082
    %v2803 = vpack.c.b16 %v2099, %v2083
    %v2804 = vpack.c.b16 %v2100, %v2084
    %v2805 = vpack.c.b16 %v2101, %v2085
    %v2806 = vpack.c.b16 %v2102, %v2086
    %v2807 = vpack.c.b16 %v2103, %v2087
    %v2808 = vpack.c.b16 %v2104, %v2088
    %v2809 = vpack.c.b16 %v2105, %v2089
    %v2810 = vpack.c.b16 %v2122, %v2106
    %v2811 = vpack.c.b16 %v2123, %v2107
    %v2812 = vpack.c.b16 %v2124, %v2108
    %v2813 = vpack.c.b16 %v2125, %v2109
    %v2814 = vpack.c.b16 %v2126, %v2110
    %v2815 = vpack.c.b16 %v2127, %v2111
    %v2816 = vpack.c.b16 %v2128, %v2112
    %v2817 = vpack.c.b16 %v2129, %v2113
    %v2818 = vpack.c.b16 %v2130, %v2114
    %v2819 = vpack.c.b16 %v2131, %v2115
    %v2820 = vpack.c.b16 %v2132, %v2116
    %v2821 = vpack.c.b16 %v2133, %v2117
    %v2822 = vpack.c.b16 %v2134, %v2118
    %v2823 = vpack.c.b16 %v2135, %v2119
    %v2824 = vpack.c.b16 %v2136, %v2120
    %v2825 = vpack.c.b16 %v2137, %v2121
    %v2826 = vpack.c.b16 %v2154, %v2138
    %v2827 = vpack.c.b16 %v2155, %v2139
    %v2828 = vpack.c.b16 %v2156, %v2140
    %v2829 = vpack.c.b16 %v2157, %v2141
    %v2830 = vpack.c.b16 %v2158, %v2142
    %v2831 = vpack.c.b16 %v2159, %v2143
    %v2832 = vpack.c.b16 %v2160, %v2144
    %v2833 = vpack.c.b16 %v2161, %v2145
    %v2834 = vpack.c.b16 %v2162, %v2146
    %v2835 = vpack.c.b16 %v2163, %v2147
    %v2836 = vpack.c.b16 %v2164, %v2148
    %v2837 = vpack.c.b16 %v2165, %v2149
    %v2838 = vpack.c.b16 %v2166, %v2150
    %v2839 = vpack.c.b16 %v2167, %v2151
    %v2840 = vpack.c.b16 %v2168, %v2152
    %v2841 = vpack.c.b16 %v2169, %v2153
    %v2842 = vpack.c.b16 %v2186, %v2170
    %v2843 = vpack.c.b16 %v2187, %v2171
    %v2844 = vpack.c.b16 %v2188, %v2172
    %v2845 = vpack.c.b16 %v2189, %v2173
    %v2846 = vpack.c.b16 %v2190, %v2174
    %v2847 = vpack.c.b16 %v2191, %v2175
    %v2848 = vpack.c.b16 %v2192, %v2176
    %v2849 = vpack.c.b16 %v2193, %v2177
    %v2850 = vpack.c.b16 %v2194, %v2178
    %v2851 = vpack.c.b16 %v2195, %v2179
    %v2852 = vpack.c.b16 %v2196, %v2180
    %v2853 = vpack.c.b16 %v2197, %v2181
    %v2854 = vpack.c.b16 %v2198, %v2182
    %v2855 = vpack.c.b16 %v2199, %v2183
    %v2856 = vpack.c.b16 %v2200, %v2184
    %v2857 = vpack.c.b16 %v2201, %v2185
    %v2858 = vpack.c.b16 %v2218, %v2202
    %v2859 = vpack.c.b16 %v2219, %v2203
    %v2860 = vpack.c.b16 %v2220, %v2204
    %v2861 = vpack.c.b16 %v2221, %v2205
    %v2862 = vpack.c.b16 %v2222, %v2206
    %v2863 = vpack.c.b16 %v2223, %v2207
    %v2864 = vpack.c.b16 %v2224, %v2208
    %v2865 = vpack.c.b16 %v2225, %v2209
    %v2866 = vpack.c.b16 %v2226, %v2210
    %v2867 = vpack.c.b16 %v2227, %v2211
    %v2868 = vpack.c.b16 %v2228, %v2212
    %v2869 = vpack.c.b16 %v2229, %v2213
    %v2870 = vpack.c.b16 %v2230, %v2214
    %v2871 = vpack.c.b16 %v2231, %v2215
    %v2872 = vpack.c.b16 %v2232, %v2216
    %v2873 = vpack.c.b16 %v2233, %v2217
    %v2874 = vpack.c.b16 %v2250, %v2234
    %v2875 = vpack.c.b16 %v2251, %v2235
    %v2876 = vpack.c.b16 %v2252, %v2236
    %v2877 = vpack.c.b16 %v2253, %v2237
    %v2878 = vpack.c.b16 %v2254, %v2238
    %v2879 = vpack.c.b16 %v2255, %v2239
    %v2880 = vpack.c.b16 %v2256, %v2240
    %v2881 = vpack.c.b16 %v2257, %v2241
    %v2882 = vpack.c.b16 %v2258, %v2242
    %v2883 = vpack.c.b16 %v2259, %v2243
    %v2884 = vpack.c.b16 %v2260, %v2244
    %v2885 = vpack.c.b16 %v2261, %v2245
    %v2886 = vpack.c.b16 %v2262, %v2246
    %v2887 = vpack.c.b16 %v2263, %v2247
    %v2888 = vpack.c.b16 %v2264, %v2248
    %v2889 = vpack.c.b16 %v2265, %v2249
    %v2890 = vpack.c.b16 %v2282, %v2266
    %v2891 = vpack.c.b16 %v2283, %v2267
    %v2892 = vpack.c.b16 %v2284, %v2268
    %v2893 = vpack.c.b16 %v2285, %v2269
    %v2894 = vpack.c.b16 %v2286, %v2270
    %v2895 = vpack.c.b16 %v2287, %v2271
    %v2896 = vpack.c.b16 %v2288, %v2272
    %v2897 = vpack.c.b16 %v2289, %v2273
    %v2898 = vpack.c.b16 %v2290, %v2274
    %v2899 = vpack.c.b16 %v2291, %v2275
    %v2900 = vpack.c.b16 %v2292, %v2276
    %v2901 = vpack.c.b16 %v2293, %v2277
    %v2902 = vpack.c.b16 %v2294, %v2278
    %v2903 = vpack.c.b16 %v2295, %v2279
    %v2904 = vpack.c.b16 %v2296, %v2280
    %v2905 = vpack.c.b16 %v2297, %v2281
    %v2906 = vpack.c.b16 %v2314, %v2298
    %v2907 = vpack.c.b16 %v2315, %v2299
    %v2908 = vpack.c.b16 %v2316, %v2300
    %v2909 = vpack.c.b16 %v2317, %v2301
    %v2910 = vpack.c.b16 %v2318, %v2302
    %v2911 = vpack.c.b16 %v2319, %v2303
    %v2912 = vpack.c.b16 %v2320, %v2304
    %v2913 = vpack.c.b16 %v2321, %v2305
    %v2914 = vpack.c.b16 %v2322, %v2306
    %v2915 = vpack.c.b16 %v2323, %v2307
    %v2916 = vpack.c.b16 %v2324, %v2308
    %v2917 = vpack.c.b16 %v2325, %v2309
    %v2918 = vpack.c.b16 %v2326, %v2310
    %v2919 = vpack.c.b16 %v2327, %v2311
    %v2920 = vpack.c.b16 %v2328, %v2312
    %v2921 = vpack.c.b16 %v2329, %v2313
    %v2922 = vpack.c.b16 %v2346, %v2330
    %v2923 = vpack.c.b16 %v2347, %v2331
    %v2924 = vpack.c.b16 %v2348, %v2332
    %v2925 = vpack.c.b16 %v2349, %v2333
    %v2926 = vpack.c.b16 %v2350, %v2334
    %v2927 = vpack.c.b16 %v2351, %v2335
    %v2928 = vpack.c.b16 %v2352, %v2336
    %v2929 = vpack.c.b16 %v2353, %v2337
    %v2930 = vpack.c.b16 %v2354, %v2338
    %v2931 = vpack.c.b16 %v2355, %v2339
    %v2932 = vpack.c.b16 %v2356, %v2340
    %v2933 = vpack.c.b16 %v2357, %v2341
    %v2934 = vpack.c.b16 %v2358, %v2342
    %v2935 = vpack.c.b16 %v2359, %v2343
    %v2936 = vpack.c.b16 %v2360, %v2344
    %v2937 = vpack.c.b16 %v2361, %v2345
    %v2938 = vpack.c.b16 %v2378, %v2362
    %v2939 = vpack.c.b16 %v2379, %v2363
    %v2940 = vpack.c.b16 %v2380, %v2364
    %v2941 = vpack.c.b16 %v2381, %v2365
    %v2942 = vpack.c.b16 %v2382, %v2366
    %v2943 = vpack.c.b16 %v2383, %v2367
    %v2944 = vpack.c.b16 %v2384, %v2368
    %v2945 = vpack.c.b16 %v2385, %v2369
    %v2946 = vpack.c.b16 %v2386, %v2370
    %v2947 = vpack.c.b16 %v2387, %v2371
    %v2948 = vpack.c.b16 %v2388, %v2372
    %v2949 = vpack.c.b16 %v2389, %v2373
    %v2950 = vpack.c.b16 %v2390, %v2374
    %v2951 = vpack.c.b16 %v2391, %v2375
    %v2952 = vpack.c.b16 %v2392, %v2376
    %v2953 = vpack.c.b16 %v2393, %v2377
    %v2954 = vpack.c.b16 %v2410, %v2394
    %v2955 = vpack.c.b16 %v2411, %v2395
    %v2956 = vpack.c.b16 %v2412, %v2396
    %v2957 = vpack.c.b16 %v2413, %v2397
    %v2958 = vpack.c.b16 %v2414, %v2398
    %v2959 = vpack.c.b16 %v2415, %v2399
    %v2960 = vpack.c.b16 %v2416, %v2400
    %v2961 = vpack.c.b16 %v2417, %v2401
    %v2962 = vpack.c.b16 %v2418, %v2402
    %v2963 = vpack.c.b16 %v2419, %v2403
    %v2964 = vpack.c.b16 %v2420, %v2404
    %v2965 = vpack.c.b16 %v2421, %v2405
    %v2966 = vpack.c.b16 %v2422, %v2406
    %v2967 = vpack.c.b16 %v2423, %v2407
    %v2968 = vpack.c.b16 %v2424, %v2408
    %v2969 = vpack.c.b16 %v2425, %v2409
    %v2970 = vpack.c.b16 %v2442, %v2426
    %v2971 = vpack.c.b16 %v2443, %v2427
    %v2972 = vpack.c.b16 %v2444, %v2428
    %v2973 = vpack.c.b16 %v2445, %v2429
    %v2974 = vpack.c.b16 %v2446, %v2430
    %v2975 = vpack.c.b16 %v2447, %v2431
    %v2976 = vpack.c.b16 %v2448, %v2432
    %v2977 = vpack.c.b16 %v2449, %v2433
    %v2978 = vpack.c.b16 %v2450, %v2434
    %v2979 = vpack.c.b16 %v2451, %v2435
    %v2980 = vpack.c.b16 %v2452, %v2436
    %v2981 = vpack.c.b16 %v2453, %v2437
    %v2982 = vpack.c.b16 %v2454, %v2438
    %v2983 = vpack.c.b16 %v2455, %v2439
    %v2984 = vpack.c.b16 %v2456, %v2440
    %v2985 = vpack.c.b16 %v2457, %v2441
    %v2986 = vpack.c.b16 %v2474, %v2458
    %v2987 = vpack.c.b16 %v2475, %v2459
    %v2988 = vpack.c.b16 %v2476, %v2460
    %v2989 = vpack.c.b16 %v2477, %v2461
    %v2990 = vpack.c.b16 %v2478, %v2462
    %v2991 = vpack.c.b16 %v2479, %v2463
    %v2992 = vpack.c.b16 %v2480, %v2464
    %v2993 = vpack.c.b16 %v2481, %v2465
    %v2994 = vpack.c.b16 %v2482, %v2466
    %v2995 = vpack.c.b16 %v2483, %v2467
    %v2996 = vpack.c.b16 %v2484, %v2468
    %v2997 = vpack.c.b16 %v2485, %v2469
    %v2998 = vpack.c.b16 %v2486, %v2470
    %v2999 = vpack.c.b16 %v2487, %v2471
    %v3000 = vpack.c.b16 %v2488, %v2472
    %v3001 = vpack.c.b16 %v2489, %v2473
    %3514 = vmatprep.subr.bf16.mxu0 %v2491
    %3515 = vmatpush1.bf16.msra.mxu0 %v2490
    %3516 = vmatprep.subr.bf16.mxu0 %v2507
    %3517 = vmatpush1.bf16.msra.mxu0 %v2506
    %3518 = vmatprep.subr.bf16.mxu0 %v2523
    %3519 = vmatpush1.bf16.msra.mxu0 %v2522
    %3520 = vmatprep.subr.bf16.mxu0 %v2539
    %3521 = vmatpush1.bf16.msra.mxu0 %v2538
    %3522 = vmatprep.subr.bf16.mxu0 %v2555
    %3523 = vmatpush1.bf16.msra.mxu0 %v2554
    %3524 = vmatprep.subr.bf16.mxu0 %v2571
    %3525 = vmatpush1.bf16.msra.mxu0 %v2570
    %3526 = vmatprep.subr.bf16.mxu0 %v2587
    %3527 = vmatpush1.bf16.msra.mxu0 %v2586
    %3528 = vmatprep.subr.bf16.mxu0 %v2603
    %3529 = vmatpush1.bf16.msra.mxu0 %v2602
    %3530 = vmatprep.subr.bf16.mxu0 %v2619
    %3531 = vmatpush1.bf16.msra.mxu0 %v2618
    %3532 = vmatprep.subr.bf16.mxu0 %v2635
    %3533 = vmatpush1.bf16.msra.mxu0 %v2634
    %3534 = vmatprep.subr.bf16.mxu0 %v2651
    %3535 = vmatpush1.bf16.msra.mxu0 %v2650
    %3536 = vmatprep.subr.bf16.mxu0 %v2667
    %3537 = vmatpush1.bf16.msra.mxu0 %v2666
    %3538 = vmatprep.subr.bf16.mxu0 %v2683
    %3539 = vmatpush1.bf16.msra.mxu0 %v2682
    %3540 = vmatprep.subr.bf16.mxu0 %v2699
    %3541 = vmatpush1.bf16.msra.mxu0 %v2698
    %3542 = vmatprep.subr.bf16.mxu0 %v2715
    %3543 = vmatpush1.bf16.msra.mxu0 %v2714
    %3544 = vmatprep.subr.bf16.mxu0 %v2731
    %3545 = vmatpush1.bf16.msra.mxu0 %v2730
    %3546 = vmatprep.mubr.bf16.mxu0 %v355
    %3547 = vmatmul.mubr.bf16.gmra.mrb[0].mxu0 %v354
    %v3548 = vpop.f32.mrb[0].mxu0
    %v3549 = vadd.f32 %v877, %v3548
    %v3550 = vpop.f32.mrb[0].mxu0
    %v3551 = vadd.f32 %v881, %v3550
    %v3552 = vpop.f32.mrb[0].mxu0
    %v3553 = vpop.f32.mrb[0].mxu0
    %3554 = vdwg.mxu0
    %3555 = vmatprep.subr.bf16.mxu0 %v2747
    %3556 = vmatpush1.bf16.msra.mxu0 %v2746
    %3557 = vmatprep.subr.bf16.mxu0 %v2763
    %3558 = vmatpush1.bf16.msra.mxu0 %v2762
    %3559 = vmatprep.subr.bf16.mxu0 %v2779
    %3560 = vmatpush1.bf16.msra.mxu0 %v2778
    %3561 = vmatprep.subr.bf16.mxu0 %v2795
    %3562 = vmatpush1.bf16.msra.mxu0 %v2794
    %3563 = vmatprep.subr.bf16.mxu0 %v2811
    %3564 = vmatpush1.bf16.msra.mxu0 %v2810
    %3565 = vmatprep.subr.bf16.mxu0 %v2827
    %3566 = vmatpush1.bf16.msra.mxu0 %v2826
    %3567 = vmatprep.subr.bf16.mxu0 %v2843
    %3568 = vmatpush1.bf16.msra.mxu0 %v2842
    %3569 = vmatprep.subr.bf16.mxu0 %v2859
    %3570 = vmatpush1.bf16.msra.mxu0 %v2858
    %3571 = vmatprep.subr.bf16.mxu0 %v2875
    %3572 = vmatpush1.bf16.msra.mxu0 %v2874
    %3573 = vmatprep.subr.bf16.mxu0 %v2891
    %3574 = vmatpush1.bf16.msra.mxu0 %v2890
    %3575 = vmatprep.subr.bf16.mxu0 %v2907
    %3576 = vmatpush1.bf16.msra.mxu0 %v2906
    %3577 = vmatprep.subr.bf16.mxu0 %v2923
    %3578 = vmatpush1.bf16.msra.mxu0 %v2922
    %3579 = vmatprep.subr.bf16.mxu0 %v2939
    %3580 = vmatpush1.bf16.msra.mxu0 %v2938
    %3581 = vmatprep.subr.bf16.mxu0 %v2955
    %3582 = vmatpush1.bf16.msra.mxu0 %v2954
    %3583 = vmatprep.subr.bf16.mxu0 %v2971
    %3584 = vmatpush1.bf16.msra.mxu0 %v2970
    %3585 = vmatprep.subr.bf16.mxu0 %v2987
    %3586 = vmatpush1.bf16.msra.mxu0 %v2986
    %3587 = vmatprep.mubr.bf16.mxu0 %v357
    %3588 = vmatmul.mubr.bf16.gmra.mrb[0].mxu0 %v356
    %v3589 = vpop.f32.mrb[0].mxu0
    %v3590 = vadd.f32 %v3549, %v3589
    %v3591 = vpop.f32.mrb[0].mxu0
    %v3592 = vadd.f32 %v3551, %v3591
    %v3593 = vpop.f32.mrb[0].mxu0
    %v3594 = vpop.f32.mrb[0].mxu0
    %3595 = vdwg.mxu0
    %3596 = vmatprep.subr.bf16.mxu0 %v2493
    %3597 = vmatpush1.bf16.msra.mxu0 %v2492
    %3598 = vmatprep.subr.bf16.mxu0 %v2509
    %3599 = vmatpush1.bf16.msra.mxu0 %v2508
    %3600 = vmatprep.subr.bf16.mxu0 %v2525
    %3601 = vmatpush1.bf16.msra.mxu0 %v2524
    %3602 = vmatprep.subr.bf16.mxu0 %v2541
    %3603 = vmatpush1.bf16.msra.mxu0 %v2540
    %3604 = vmatprep.subr.bf16.mxu0 %v2557
    %3605 = vmatpush1.bf16.msra.mxu0 %v2556
    %3606 = vmatprep.subr.bf16.mxu0 %v2573
    %3607 = vmatpush1.bf16.msra.mxu0 %v2572
    %3608 = vmatprep.subr.bf16.mxu0 %v2589
    %3609 = vmatpush1.bf16.msra.mxu0 %v2588
    %3610 = vmatprep.subr.bf16.mxu0 %v2605
    %3611 = vmatpush1.bf16.msra.mxu0 %v2604
    %3612 = vmatprep.subr.bf16.mxu0 %v2621
    %3613 = vmatpush1.bf16.msra.mxu0 %v2620
    %3614 = vmatprep.subr.bf16.mxu0 %v2637
    %3615 = vmatpush1.bf16.msra.mxu0 %v2636
    %3616 = vmatprep.subr.bf16.mxu0 %v2653
    %3617 = vmatpush1.bf16.msra.mxu0 %v2652
    %3618 = vmatprep.subr.bf16.mxu0 %v2669
    %3619 = vmatpush1.bf16.msra.mxu0 %v2668
    %3620 = vmatprep.subr.bf16.mxu0 %v2685
    %3621 = vmatpush1.bf16.msra.mxu0 %v2684
    %3622 = vmatprep.subr.bf16.mxu0 %v2701
    %3623 = vmatpush1.bf16.msra.mxu0 %v2700
    %3624 = vmatprep.subr.bf16.mxu0 %v2717
    %3625 = vmatpush1.bf16.msra.mxu0 %v2716
    %3626 = vmatprep.subr.bf16.mxu0 %v2733
    %3627 = vmatpush1.bf16.msra.mxu0 %v2732
    %3628 = vmatprep.mubr.bf16.mxu0 %v355
    %3629 = vmatmul.mubr.bf16.gmra.mrb[0].mxu0 %v354
    %v3630 = vpop.f32.mrb[0].mxu0
    %v3631 = vadd.f32 %v885, %v3630
    %v3632 = vpop.f32.mrb[0].mxu0
    %v3633 = vadd.f32 %v889, %v3632
    %v3634 = vpop.f32.mrb[0].mxu0
    %v3635 = vpop.f32.mrb[0].mxu0
    %3636 = vdwg.mxu0
    %3637 = vmatprep.subr.bf16.mxu0 %v2749
    %3638 = vmatpush1.bf16.msra.mxu0 %v2748
    %3639 = vmatprep.subr.bf16.mxu0 %v2765
    %3640 = vmatpush1.bf16.msra.mxu0 %v2764
    %3641 = vmatprep.subr.bf16.mxu0 %v2781
    %3642 = vmatpush1.bf16.msra.mxu0 %v2780
    %3643 = vmatprep.subr.bf16.mxu0 %v2797
    %3644 = vmatpush1.bf16.msra.mxu0 %v2796
    %3645 = vmatprep.subr.bf16.mxu0 %v2813
    %3646 = vmatpush1.bf16.msra.mxu0 %v2812
    %3647 = vmatprep.subr.bf16.mxu0 %v2829
    %3648 = vmatpush1.bf16.msra.mxu0 %v2828
    %3649 = vmatprep.subr.bf16.mxu0 %v2845
    %3650 = vmatpush1.bf16.msra.mxu0 %v2844
    %3651 = vmatprep.subr.bf16.mxu0 %v2861
    %3652 = vmatpush1.bf16.msra.mxu0 %v2860
    %3653 = vmatprep.subr.bf16.mxu0 %v2877
    %3654 = vmatpush1.bf16.msra.mxu0 %v2876
    %3655 = vmatprep.subr.bf16.mxu0 %v2893
    %3656 = vmatpush1.bf16.msra.mxu0 %v2892
    %3657 = vmatprep.subr.bf16.mxu0 %v2909
    %3658 = vmatpush1.bf16.msra.mxu0 %v2908
    %3659 = vmatprep.subr.bf16.mxu0 %v2925
    %3660 = vmatpush1.bf16.msra.mxu0 %v2924
    %3661 = vmatprep.subr.bf16.mxu0 %v2941
    %3662 = vmatpush1.bf16.msra.mxu0 %v2940
    %3663 = vmatprep.subr.bf16.mxu0 %v2957
    %3664 = vmatpush1.bf16.msra.mxu0 %v2956
    %3665 = vmatprep.subr.bf16.mxu0 %v2973
    %3666 = vmatpush1.bf16.msra.mxu0 %v2972
    %3667 = vmatprep.subr.bf16.mxu0 %v2989
    %3668 = vmatpush1.bf16.msra.mxu0 %v2988
    %3669 = vmatprep.mubr.bf16.mxu0 %v357
    %3670 = vmatmul.mubr.bf16.gmra.mrb[0].mxu0 %v356
    %v3671 = vpop.f32.mrb[0].mxu0
    %v3672 = vadd.f32 %v3631, %v3671
    %v3673 = vpop.f32.mrb[0].mxu0
    %v3674 = vadd.f32 %v3633, %v3673
    %v3675 = vpop.f32.mrb[0].mxu0
    %v3676 = vpop.f32.mrb[0].mxu0
    %3677 = vdwg.mxu0
    %3678 = vmatprep.subr.bf16.mxu0 %v2495
    %3679 = vmatpush1.bf16.msra.mxu0 %v2494
    %3680 = vmatprep.subr.bf16.mxu0 %v2511
    %3681 = vmatpush1.bf16.msra.mxu0 %v2510
    %3682 = vmatprep.subr.bf16.mxu0 %v2527
    %3683 = vmatpush1.bf16.msra.mxu0 %v2526
    %3684 = vmatprep.subr.bf16.mxu0 %v2543
    %3685 = vmatpush1.bf16.msra.mxu0 %v2542
    %3686 = vmatprep.subr.bf16.mxu0 %v2559
    %3687 = vmatpush1.bf16.msra.mxu0 %v2558
    %3688 = vmatprep.subr.bf16.mxu0 %v2575
    %3689 = vmatpush1.bf16.msra.mxu0 %v2574
    %3690 = vmatprep.subr.bf16.mxu0 %v2591
    %3691 = vmatpush1.bf16.msra.mxu0 %v2590
    %3692 = vmatprep.subr.bf16.mxu0 %v2607
    %3693 = vmatpush1.bf16.msra.mxu0 %v2606
    %3694 = vmatprep.subr.bf16.mxu0 %v2623
    %3695 = vmatpush1.bf16.msra.mxu0 %v2622
    %3696 = vmatprep.subr.bf16.mxu0 %v2639
    %3697 = vmatpush1.bf16.msra.mxu0 %v2638
    %3698 = vmatprep.subr.bf16.mxu0 %v2655
    %3699 = vmatpush1.bf16.msra.mxu0 %v2654
    %3700 = vmatprep.subr.bf16.mxu0 %v2671
    %3701 = vmatpush1.bf16.msra.mxu0 %v2670
    %3702 = vmatprep.subr.bf16.mxu0 %v2687
    %3703 = vmatpush1.bf16.msra.mxu0 %v2686
    %3704 = vmatprep.subr.bf16.mxu0 %v2703
    %3705 = vmatpush1.bf16.msra.mxu0 %v2702
    %3706 = vmatprep.subr.bf16.mxu0 %v2719
    %3707 = vmatpush1.bf16.msra.mxu0 %v2718
    %3708 = vmatprep.subr.bf16.mxu0 %v2735
    %3709 = vmatpush1.bf16.msra.mxu0 %v2734
    %3710 = vmatprep.mubr.bf16.mxu0 %v355
    %3711 = vmatmul.mubr.bf16.gmra.mrb[0].mxu0 %v354
    %v3712 = vpop.f32.mrb[0].mxu0
    %v3713 = vadd.f32 %v893, %v3712
    %v3714 = vpop.f32.mrb[0].mxu0
    %v3715 = vadd.f32 %v897, %v3714
    %v3716 = vpop.f32.mrb[0].mxu0
    %v3717 = vpop.f32.mrb[0].mxu0
    %3718 = vdwg.mxu0
    %3719 = vmatprep.subr.bf16.mxu0 %v2751
    %3720 = vmatpush1.bf16.msra.mxu0 %v2750
    %3721 = vmatprep.subr.bf16.mxu0 %v2767
    %3722 = vmatpush1.bf16.msra.mxu0 %v2766
    %3723 = vmatprep.subr.bf16.mxu0 %v2783
    %3724 = vmatpush1.bf16.msra.mxu0 %v2782
    %3725 = vmatprep.subr.bf16.mxu0 %v2799
    %3726 = vmatpush1.bf16.msra.mxu0 %v2798
    %3727 = vmatprep.subr.bf16.mxu0 %v2815
    %3728 = vmatpush1.bf16.msra.mxu0 %v2814
    %3729 = vmatprep.subr.bf16.mxu0 %v2831
    %3730 = vmatpush1.bf16.msra.mxu0 %v2830
    %3731 = vmatprep.subr.bf16.mxu0 %v2847
    %3732 = vmatpush1.bf16.msra.mxu0 %v2846
    %3733 = vmatprep.subr.bf16.mxu0 %v2863
    %3734 = vmatpush1.bf16.msra.mxu0 %v2862
    %3735 = vmatprep.subr.bf16.mxu0 %v2879
    %3736 = vmatpush1.bf16.msra.mxu0 %v2878
    %3737 = vmatprep.subr.bf16.mxu0 %v2895
    %3738 = vmatpush1.bf16.msra.mxu0 %v2894
    %3739 = vmatprep.subr.bf16.mxu0 %v2911
    %3740 = vmatpush1.bf16.msra.mxu0 %v2910
    %3741 = vmatprep.subr.bf16.mxu0 %v2927
    %3742 = vmatpush1.bf16.msra.mxu0 %v2926
    %3743 = vmatprep.subr.bf16.mxu0 %v2943
    %3744 = vmatpush1.bf16.msra.mxu0 %v2942
    %3745 = vmatprep.subr.bf16.mxu0 %v2959
    %3746 = vmatpush1.bf16.msra.mxu0 %v2958
    %3747 = vmatprep.subr.bf16.mxu0 %v2975
    %3748 = vmatpush1.bf16.msra.mxu0 %v2974
    %3749 = vmatprep.subr.bf16.mxu0 %v2991
    %3750 = vmatpush1.bf16.msra.mxu0 %v2990
    %3751 = vmatprep.mubr.bf16.mxu0 %v357
    %3752 = vmatmul.mubr.bf16.gmra.mrb[0].mxu0 %v356
    %v3753 = vpop.f32.mrb[0].mxu0
    %v3754 = vadd.f32 %v3713, %v3753
    %v3755 = vpop.f32.mrb[0].mxu0
    %v3756 = vadd.f32 %v3715, %v3755
    %v3757 = vpop.f32.mrb[0].mxu0
    %v3758 = vpop.f32.mrb[0].mxu0
    %3759 = vdwg.mxu0
    %3760 = vmatprep.subr.bf16.mxu0 %v2497
    %3761 = vmatpush1.bf16.msra.mxu0 %v2496
    %3762 = vmatprep.subr.bf16.mxu0 %v2513
    %3763 = vmatpush1.bf16.msra.mxu0 %v2512
    %3764 = vmatprep.subr.bf16.mxu0 %v2529
    %3765 = vmatpush1.bf16.msra.mxu0 %v2528
    %3766 = vmatprep.subr.bf16.mxu0 %v2545
    %3767 = vmatpush1.bf16.msra.mxu0 %v2544
    %3768 = vmatprep.subr.bf16.mxu0 %v2561
    %3769 = vmatpush1.bf16.msra.mxu0 %v2560
    %3770 = vmatprep.subr.bf16.mxu0 %v2577
    %3771 = vmatpush1.bf16.msra.mxu0 %v2576
    %3772 = vmatprep.subr.bf16.mxu0 %v2593
    %3773 = vmatpush1.bf16.msra.mxu0 %v2592
    %3774 = vmatprep.subr.bf16.mxu0 %v2609
    %3775 = vmatpush1.bf16.msra.mxu0 %v2608
    %3776 = vmatprep.subr.bf16.mxu0 %v2625
    %3777 = vmatpush1.bf16.msra.mxu0 %v2624
    %3778 = vmatprep.subr.bf16.mxu0 %v2641
    %3779 = vmatpush1.bf16.msra.mxu0 %v2640
    %3780 = vmatprep.subr.bf16.mxu0 %v2657
    %3781 = vmatpush1.bf16.msra.mxu0 %v2656
    %3782 = vmatprep.subr.bf16.mxu0 %v2673
    %3783 = vmatpush1.bf16.msra.mxu0 %v2672
    %3784 = vmatprep.subr.bf16.mxu0 %v2689
    %3785 = vmatpush1.bf16.msra.mxu0 %v2688
    %3786 = vmatprep.subr.bf16.mxu0 %v2705
    %3787 = vmatpush1.bf16.msra.mxu0 %v2704
    %3788 = vmatprep.subr.bf16.mxu0 %v2721
    %3789 = vmatpush1.bf16.msra.mxu0 %v2720
    %3790 = vmatprep.subr.bf16.mxu0 %v2737
    %3791 = vmatpush1.bf16.msra.mxu0 %v2736
    %3792 = vmatprep.mubr.bf16.mxu0 %v355
    %3793 = vmatmul.mubr.bf16.gmra.mrb[0].mxu0 %v354
    %v3794 = vpop.f32.mrb[0].mxu0
    %v3795 = vadd.f32 %v901, %v3794
    %v3796 = vpop.f32.mrb[0].mxu0
    %v3797 = vadd.f32 %v905, %v3796
    %v3798 = vpop.f32.mrb[0].mxu0
    %v3799 = vpop.f32.mrb[0].mxu0
    %3800 = vdwg.mxu0
    %3801 = vmatprep.subr.bf16.mxu0 %v2753
    %3802 = vmatpush1.bf16.msra.mxu0 %v2752
    %3803 = vmatprep.subr.bf16.mxu0 %v2769
    %3804 = vmatpush1.bf16.msra.mxu0 %v2768
    %3805 = vmatprep.subr.bf16.mxu0 %v2785
    %3806 = vmatpush1.bf16.msra.mxu0 %v2784
    %3807 = vmatprep.subr.bf16.mxu0 %v2801
    %3808 = vmatpush1.bf16.msra.mxu0 %v2800
    %3809 = vmatprep.subr.bf16.mxu0 %v2817
    %3810 = vmatpush1.bf16.msra.mxu0 %v2816
    %3811 = vmatprep.subr.bf16.mxu0 %v2833
    %3812 = vmatpush1.bf16.msra.mxu0 %v2832
    %3813 = vmatprep.subr.bf16.mxu0 %v2849
    %3814 = vmatpush1.bf16.msra.mxu0 %v2848
    %3815 = vmatprep.subr.bf16.mxu0 %v2865
    %3816 = vmatpush1.bf16.msra.mxu0 %v2864
    %3817 = vmatprep.subr.bf16.mxu0 %v2881
    %3818 = vmatpush1.bf16.msra.mxu0 %v2880
    %3819 = vmatprep.subr.bf16.mxu0 %v2897
    %3820 = vmatpush1.bf16.msra.mxu0 %v2896
    %3821 = vmatprep.subr.bf16.mxu0 %v2913
    %3822 = vmatpush1.bf16.msra.mxu0 %v2912
    %3823 = vmatprep.subr.bf16.mxu0 %v2929
    %3824 = vmatpush1.bf16.msra.mxu0 %v2928
    %3825 = vmatprep.subr.bf16.mxu0 %v2945
    %3826 = vmatpush1.bf16.msra.mxu0 %v2944
    %3827 = vmatprep.subr.bf16.mxu0 %v2961
    %3828 = vmatpush1.bf16.msra.mxu0 %v2960
    %3829 = vmatprep.subr.bf16.mxu0 %v2977
    %3830 = vmatpush1.bf16.msra.mxu0 %v2976
    %3831 = vmatprep.subr.bf16.mxu0 %v2993
    %3832 = vmatpush1.bf16.msra.mxu0 %v2992
    %3833 = vmatprep.mubr.bf16.mxu0 %v357
    %3834 = vmatmul.mubr.bf16.gmra.mrb[0].mxu0 %v356
    %v3835 = vpop.f32.mrb[0].mxu0
    %v3836 = vadd.f32 %v3795, %v3835
    %v3837 = vpop.f32.mrb[0].mxu0
    %v3838 = vadd.f32 %v3797, %v3837
    %v3839 = vpop.f32.mrb[0].mxu0
    %v3840 = vpop.f32.mrb[0].mxu0
    %3841 = vdwg.mxu0
    %3842 = vmatprep.subr.bf16.mxu0 %v2499
    %3843 = vmatpush1.bf16.msra.mxu0 %v2498
    %3844 = vmatprep.subr.bf16.mxu0 %v2515
    %3845 = vmatpush1.bf16.msra.mxu0 %v2514
    %3846 = vmatprep.subr.bf16.mxu0 %v2531
    %3847 = vmatpush1.bf16.msra.mxu0 %v2530
    %3848 = vmatprep.subr.bf16.mxu0 %v2547
    %3849 = vmatpush1.bf16.msra.mxu0 %v2546
    %3850 = vmatprep.subr.bf16.mxu0 %v2563
    %3851 = vmatpush1.bf16.msra.mxu0 %v2562
    %3852 = vmatprep.subr.bf16.mxu0 %v2579
    %3853 = vmatpush1.bf16.msra.mxu0 %v2578
    %3854 = vmatprep.subr.bf16.mxu0 %v2595
    %3855 = vmatpush1.bf16.msra.mxu0 %v2594
    %3856 = vmatprep.subr.bf16.mxu0 %v2611
    %3857 = vmatpush1.bf16.msra.mxu0 %v2610
    %3858 = vmatprep.subr.bf16.mxu0 %v2627
    %3859 = vmatpush1.bf16.msra.mxu0 %v2626
    %3860 = vmatprep.subr.bf16.mxu0 %v2643
    %3861 = vmatpush1.bf16.msra.mxu0 %v2642
    %3862 = vmatprep.subr.bf16.mxu0 %v2659
    %3863 = vmatpush1.bf16.msra.mxu0 %v2658
    %3864 = vmatprep.subr.bf16.mxu0 %v2675
    %3865 = vmatpush1.bf16.msra.mxu0 %v2674
    %3866 = vmatprep.subr.bf16.mxu0 %v2691
    %3867 = vmatpush1.bf16.msra.mxu0 %v2690
    %3868 = vmatprep.subr.bf16.mxu0 %v2707
    %3869 = vmatpush1.bf16.msra.mxu0 %v2706
    %3870 = vmatprep.subr.bf16.mxu0 %v2723
    %3871 = vmatpush1.bf16.msra.mxu0 %v2722
    %3872 = vmatprep.subr.bf16.mxu0 %v2739
    %3873 = vmatpush1.bf16.msra.mxu0 %v2738
    %3874 = vmatprep.mubr.bf16.mxu0 %v355
    %3875 = vmatmul.mubr.bf16.gmra.mrb[0].mxu0 %v354
    %v3876 = vpop.f32.mrb[0].mxu0
    %v3877 = vadd.f32 %v909, %v3876
    %v3878 = vpop.f32.mrb[0].mxu0
    %v3879 = vadd.f32 %v913, %v3878
    %v3880 = vpop.f32.mrb[0].mxu0
    %v3881 = vpop.f32.mrb[0].mxu0
    %3882 = vdwg.mxu0
    %3883 = vmatprep.subr.bf16.mxu0 %v2755
    %3884 = vmatpush1.bf16.msra.mxu0 %v2754
    %3885 = vmatprep.subr.bf16.mxu0 %v2771
    %3886 = vmatpush1.bf16.msra.mxu0 %v2770
    %3887 = vmatprep.subr.bf16.mxu0 %v2787
    %3888 = vmatpush1.bf16.msra.mxu0 %v2786
    %3889 = vmatprep.subr.bf16.mxu0 %v2803
    %3890 = vmatpush1.bf16.msra.mxu0 %v2802
    %3891 = vmatprep.subr.bf16.mxu0 %v2819
    %3892 = vmatpush1.bf16.msra.mxu0 %v2818
    %3893 = vmatprep.subr.bf16.mxu0 %v2835
    %3894 = vmatpush1.bf16.msra.mxu0 %v2834
    %3895 = vmatprep.subr.bf16.mxu0 %v2851
    %3896 = vmatpush1.bf16.msra.mxu0 %v2850
    %3897 = vmatprep.subr.bf16.mxu0 %v2867
    %3898 = vmatpush1.bf16.msra.mxu0 %v2866
    %3899 = vmatprep.subr.bf16.mxu0 %v2883
    %3900 = vmatpush1.bf16.msra.mxu0 %v2882
    %3901 = vmatprep.subr.bf16.mxu0 %v2899
    %3902 = vmatpush1.bf16.msra.mxu0 %v2898
    %3903 = vmatprep.subr.bf16.mxu0 %v2915
    %3904 = vmatpush1.bf16.msra.mxu0 %v2914
    %3905 = vmatprep.subr.bf16.mxu0 %v2931
    %3906 = vmatpush1.bf16.msra.mxu0 %v2930
    %3907 = vmatprep.subr.bf16.mxu0 %v2947
    %3908 = vmatpush1.bf16.msra.mxu0 %v2946
    %3909 = vmatprep.subr.bf16.mxu0 %v2963
    %3910 = vmatpush1.bf16.msra.mxu0 %v2962
    %3911 = vmatprep.subr.bf16.mxu0 %v2979
    %3912 = vmatpush1.bf16.msra.mxu0 %v2978
    %3913 = vmatprep.subr.bf16.mxu0 %v2995
    %3914 = vmatpush1.bf16.msra.mxu0 %v2994
    %3915 = vmatprep.mubr.bf16.mxu0 %v357
    %3916 = vmatmul.mubr.bf16.gmra.mrb[0].mxu0 %v356
    %v3917 = vpop.f32.mrb[0].mxu0
    %v3918 = vadd.f32 %v3877, %v3917
    %v3919 = vpop.f32.mrb[0].mxu0
    %v3920 = vadd.f32 %v3879, %v3919
    %v3921 = vpop.f32.mrb[0].mxu0
    %v3922 = vpop.f32.mrb[0].mxu0
    %3923 = vdwg.mxu0
    %3924 = vmatprep.subr.bf16.mxu0 %v2501
    %3925 = vmatpush1.bf16.msra.mxu0 %v2500
    %3926 = vmatprep.subr.bf16.mxu0 %v2517
    %3927 = vmatpush1.bf16.msra.mxu0 %v2516
    %3928 = vmatprep.subr.bf16.mxu0 %v2533
    %3929 = vmatpush1.bf16.msra.mxu0 %v2532
    %3930 = vmatprep.subr.bf16.mxu0 %v2549
    %3931 = vmatpush1.bf16.msra.mxu0 %v2548
    %3932 = vmatprep.subr.bf16.mxu0 %v2565
    %3933 = vmatpush1.bf16.msra.mxu0 %v2564
    %3934 = vmatprep.subr.bf16.mxu0 %v2581
    %3935 = vmatpush1.bf16.msra.mxu0 %v2580
    %3936 = vmatprep.subr.bf16.mxu0 %v2597
    %3937 = vmatpush1.bf16.msra.mxu0 %v2596
    %3938 = vmatprep.subr.bf16.mxu0 %v2613
    %3939 = vmatpush1.bf16.msra.mxu0 %v2612
    %3940 = vmatprep.subr.bf16.mxu0 %v2629
    %3941 = vmatpush1.bf16.msra.mxu0 %v2628
    %3942 = vmatprep.subr.bf16.mxu0 %v2645
    %3943 = vmatpush1.bf16.msra.mxu0 %v2644
    %3944 = vmatprep.subr.bf16.mxu0 %v2661
    %3945 = vmatpush1.bf16.msra.mxu0 %v2660
    %3946 = vmatprep.subr.bf16.mxu0 %v2677
    %3947 = vmatpush1.bf16.msra.mxu0 %v2676
    %3948 = vmatprep.subr.bf16.mxu0 %v2693
    %3949 = vmatpush1.bf16.msra.mxu0 %v2692
    %3950 = vmatprep.subr.bf16.mxu0 %v2709
    %3951 = vmatpush1.bf16.msra.mxu0 %v2708
    %3952 = vmatprep.subr.bf16.mxu0 %v2725
    %3953 = vmatpush1.bf16.msra.mxu0 %v2724
    %3954 = vmatprep.subr.bf16.mxu0 %v2741
    %3955 = vmatpush1.bf16.msra.mxu0 %v2740
    %3956 = vmatprep.mubr.bf16.mxu0 %v355
    %3957 = vmatmul.mubr.bf16.gmra.mrb[0].mxu0 %v354
    %v3958 = vpop.f32.mrb[0].mxu0
    %v3959 = vadd.f32 %v917, %v3958
    %v3960 = vpop.f32.mrb[0].mxu0
    %v3961 = vadd.f32 %v921, %v3960
    %v3962 = vpop.f32.mrb[0].mxu0
    %v3963 = vpop.f32.mrb[0].mxu0
    %3964 = vdwg.mxu0
    %3965 = vmatprep.subr.bf16.mxu0 %v2757
    %3966 = vmatpush1.bf16.msra.mxu0 %v2756
    %3967 = vmatprep.subr.bf16.mxu0 %v2773
    %3968 = vmatpush1.bf16.msra.mxu0 %v2772
    %3969 = vmatprep.subr.bf16.mxu0 %v2789
    %3970 = vmatpush1.bf16.msra.mxu0 %v2788
    %3971 = vmatprep.subr.bf16.mxu0 %v2805
    %3972 = vmatpush1.bf16.msra.mxu0 %v2804
    %3973 = vmatprep.subr.bf16.mxu0 %v2821
    %3974 = vmatpush1.bf16.msra.mxu0 %v2820
    %3975 = vmatprep.subr.bf16.mxu0 %v2837
    %3976 = vmatpush1.bf16.msra.mxu0 %v2836
    %3977 = vmatprep.subr.bf16.mxu0 %v2853
    %3978 = vmatpush1.bf16.msra.mxu0 %v2852
    %3979 = vmatprep.subr.bf16.mxu0 %v2869
    %3980 = vmatpush1.bf16.msra.mxu0 %v2868
    %3981 = vmatprep.subr.bf16.mxu0 %v2885
    %3982 = vmatpush1.bf16.msra.mxu0 %v2884
    %3983 = vmatprep.subr.bf16.mxu0 %v2901
    %3984 = vmatpush1.bf16.msra.mxu0 %v2900
    %3985 = vmatprep.subr.bf16.mxu0 %v2917
    %3986 = vmatpush1.bf16.msra.mxu0 %v2916
    %3987 = vmatprep.subr.bf16.mxu0 %v2933
    %3988 = vmatpush1.bf16.msra.mxu0 %v2932
    %3989 = vmatprep.subr.bf16.mxu0 %v2949
    %3990 = vmatpush1.bf16.msra.mxu0 %v2948
    %3991 = vmatprep.subr.bf16.mxu0 %v2965
    %3992 = vmatpush1.bf16.msra.mxu0 %v2964
    %3993 = vmatprep.subr.bf16.mxu0 %v2981
    %3994 = vmatpush1.bf16.msra.mxu0 %v2980
    %3995 = vmatprep.subr.bf16.mxu0 %v2997
    %3996 = vmatpush1.bf16.msra.mxu0 %v2996
    %3997 = vmatprep.mubr.bf16.mxu0 %v357
    %3998 = vmatmul.mubr.bf16.gmra.mrb[0].mxu0 %v356
    %v3999 = vpop.f32.mrb[0].mxu0
    %v4000 = vadd.f32 %v3959, %v3999
    %v4001 = vpop.f32.mrb[0].mxu0
    %v4002 = vadd.f32 %v3961, %v4001
    %v4003 = vpop.f32.mrb[0].mxu0
    %v4004 = vpop.f32.mrb[0].mxu0
    %4005 = vdwg.mxu0
    %4006 = vmatprep.subr.bf16.mxu0 %v2503
    %4007 = vmatpush1.bf16.msra.mxu0 %v2502
    %4008 = vmatprep.subr.bf16.mxu0 %v2519
    %4009 = vmatpush1.bf16.msra.mxu0 %v2518
    %4010 = vmatprep.subr.bf16.mxu0 %v2535
    %4011 = vmatpush1.bf16.msra.mxu0 %v2534
    %4012 = vmatprep.subr.bf16.mxu0 %v2551
    %4013 = vmatpush1.bf16.msra.mxu0 %v2550
    %4014 = vmatprep.subr.bf16.mxu0 %v2567
    %4015 = vmatpush1.bf16.msra.mxu0 %v2566
    %4016 = vmatprep.subr.bf16.mxu0 %v2583
    %4017 = vmatpush1.bf16.msra.mxu0 %v2582
    %4018 = vmatprep.subr.bf16.mxu0 %v2599
    %4019 = vmatpush1.bf16.msra.mxu0 %v2598
    %4020 = vmatprep.subr.bf16.mxu0 %v2615
    %4021 = vmatpush1.bf16.msra.mxu0 %v2614
    %4022 = vmatprep.subr.bf16.mxu0 %v2631
    %4023 = vmatpush1.bf16.msra.mxu0 %v2630
    %4024 = vmatprep.subr.bf16.mxu0 %v2647
    %4025 = vmatpush1.bf16.msra.mxu0 %v2646
    %4026 = vmatprep.subr.bf16.mxu0 %v2663
    %4027 = vmatpush1.bf16.msra.mxu0 %v2662
    %4028 = vmatprep.subr.bf16.mxu0 %v2679
    %4029 = vmatpush1.bf16.msra.mxu0 %v2678
    %4030 = vmatprep.subr.bf16.mxu0 %v2695
    %4031 = vmatpush1.bf16.msra.mxu0 %v2694
    %4032 = vmatprep.subr.bf16.mxu0 %v2711
    %4033 = vmatpush1.bf16.msra.mxu0 %v2710
    %4034 = vmatprep.subr.bf16.mxu0 %v2727
    %4035 = vmatpush1.bf16.msra.mxu0 %v2726
    %4036 = vmatprep.subr.bf16.mxu0 %v2743
    %4037 = vmatpush1.bf16.msra.mxu0 %v2742
    %4038 = vmatprep.mubr.bf16.mxu0 %v355
    %4039 = vmatmul.mubr.bf16.gmra.mrb[0].mxu0 %v354
    %v4040 = vpop.f32.mrb[0].mxu0
    %v4041 = vadd.f32 %v925, %v4040
    %v4042 = vpop.f32.mrb[0].mxu0
    %v4043 = vadd.f32 %v929, %v4042
    %v4044 = vpop.f32.mrb[0].mxu0
    %v4045 = vpop.f32.mrb[0].mxu0
    %4046 = vdwg.mxu0
    %4047 = vmatprep.subr.bf16.mxu0 %v2759
    %4048 = vmatpush1.bf16.msra.mxu0 %v2758
    %4049 = vmatprep.subr.bf16.mxu0 %v2775
    %4050 = vmatpush1.bf16.msra.mxu0 %v2774
    %4051 = vmatprep.subr.bf16.mxu0 %v2791
    %4052 = vmatpush1.bf16.msra.mxu0 %v2790
    %4053 = vmatprep.subr.bf16.mxu0 %v2807
    %4054 = vmatpush1.bf16.msra.mxu0 %v2806
    %4055 = vmatprep.subr.bf16.mxu0 %v2823
    %4056 = vmatpush1.bf16.msra.mxu0 %v2822
    %4057 = vmatprep.subr.bf16.mxu0 %v2839
    %4058 = vmatpush1.bf16.msra.mxu0 %v2838
    %4059 = vmatprep.subr.bf16.mxu0 %v2855
    %4060 = vmatpush1.bf16.msra.mxu0 %v2854
    %4061 = vmatprep.subr.bf16.mxu0 %v2871
    %4062 = vmatpush1.bf16.msra.mxu0 %v2870
    %4063 = vmatprep.subr.bf16.mxu0 %v2887
    %4064 = vmatpush1.bf16.msra.mxu0 %v2886
    %4065 = vmatprep.subr.bf16.mxu0 %v2903
    %4066 = vmatpush1.bf16.msra.mxu0 %v2902
    %4067 = vmatprep.subr.bf16.mxu0 %v2919
    %4068 = vmatpush1.bf16.msra.mxu0 %v2918
    %4069 = vmatprep.subr.bf16.mxu0 %v2935
    %4070 = vmatpush1.bf16.msra.mxu0 %v2934
    %4071 = vmatprep.subr.bf16.mxu0 %v2951
    %4072 = vmatpush1.bf16.msra.mxu0 %v2950
    %4073 = vmatprep.subr.bf16.mxu0 %v2967
    %4074 = vmatpush1.bf16.msra.mxu0 %v2966
    %4075 = vmatprep.subr.bf16.mxu0 %v2983
    %4076 = vmatpush1.bf16.msra.mxu0 %v2982
    %4077 = vmatprep.subr.bf16.mxu0 %v2999
    %4078 = vmatpush1.bf16.msra.mxu0 %v2998
    %4079 = vmatprep.mubr.bf16.mxu0 %v357
    %4080 = vmatmul.mubr.bf16.gmra.mrb[0].mxu0 %v356
    %v4081 = vpop.f32.mrb[0].mxu0
    %v4082 = vadd.f32 %v4041, %v4081
    %v4083 = vpop.f32.mrb[0].mxu0
    %v4084 = vadd.f32 %v4043, %v4083
    %v4085 = vpop.f32.mrb[0].mxu0
    %v4086 = vpop.f32.mrb[0].mxu0
    %4087 = vdwg.mxu0
    %4088 = vmatprep.subr.bf16.mxu0 %v2505
    %4089 = vmatpush1.bf16.msra.mxu0 %v2504
    %4090 = vmatprep.subr.bf16.mxu0 %v2521
    %4091 = vmatpush1.bf16.msra.mxu0 %v2520
    %4092 = vmatprep.subr.bf16.mxu0 %v2537
    %4093 = vmatpush1.bf16.msra.mxu0 %v2536
    %4094 = vmatprep.subr.bf16.mxu0 %v2553
    %4095 = vmatpush1.bf16.msra.mxu0 %v2552
    %4096 = vmatprep.subr.bf16.mxu0 %v2569
    %4097 = vmatpush1.bf16.msra.mxu0 %v2568
    %4098 = vmatprep.subr.bf16.mxu0 %v2585
    %4099 = vmatpush1.bf16.msra.mxu0 %v2584
    %4100 = vmatprep.subr.bf16.mxu0 %v2601
    %4101 = vmatpush1.bf16.msra.mxu0 %v2600
    %4102 = vmatprep.subr.bf16.mxu0 %v2617
    %4103 = vmatpush1.bf16.msra.mxu0 %v2616
    %4104 = vmatprep.subr.bf16.mxu0 %v2633
    %4105 = vmatpush1.bf16.msra.mxu0 %v2632
    %4106 = vmatprep.subr.bf16.mxu0 %v2649
    %4107 = vmatpush1.bf16.msra.mxu0 %v2648
    %4108 = vmatprep.subr.bf16.mxu0 %v2665
    %4109 = vmatpush1.bf16.msra.mxu0 %v2664
    %4110 = vmatprep.subr.bf16.mxu0 %v2681
    %4111 = vmatpush1.bf16.msra.mxu0 %v2680
    %4112 = vmatprep.subr.bf16.mxu0 %v2697
    %4113 = vmatpush1.bf16.msra.mxu0 %v2696
    %4114 = vmatprep.subr.bf16.mxu0 %v2713
    %4115 = vmatpush1.bf16.msra.mxu0 %v2712
    %4116 = vmatprep.subr.bf16.mxu0 %v2729
    %4117 = vmatpush1.bf16.msra.mxu0 %v2728
    %4118 = vmatprep.subr.bf16.mxu0 %v2745
    %4119 = vmatpush1.bf16.msra.mxu0 %v2744
    %4120 = vmatprep.mubr.bf16.mxu0 %v355
    %4121 = vmatmul.mubr.bf16.gmra.mrb[0].mxu0 %v354
    %v4122 = vpop.f32.mrb[0].mxu0
    %v4123 = vadd.f32 %v933, %v4122
    %v4124 = vpop.f32.mrb[0].mxu0
    %v4125 = vadd.f32 %v937, %v4124
    %v4126 = vpop.f32.mrb[0].mxu0
    %v4127 = vpop.f32.mrb[0].mxu0
    %4128 = vdwg.mxu0
    %4129 = vmatprep.subr.bf16.mxu0 %v2761
    %4130 = vmatpush1.bf16.msra.mxu0 %v2760
    %4131 = vmatprep.subr.bf16.mxu0 %v2777
    %4132 = vmatpush1.bf16.msra.mxu0 %v2776
    %4133 = vmatprep.subr.bf16.mxu0 %v2793
    %4134 = vmatpush1.bf16.msra.mxu0 %v2792
    %4135 = vmatprep.subr.bf16.mxu0 %v2809
    %4136 = vmatpush1.bf16.msra.mxu0 %v2808
    %4137 = vmatprep.subr.bf16.mxu0 %v2825
    %4138 = vmatpush1.bf16.msra.mxu0 %v2824
    %4139 = vmatprep.subr.bf16.mxu0 %v2841
    %4140 = vmatpush1.bf16.msra.mxu0 %v2840
    %4141 = vmatprep.subr.bf16.mxu0 %v2857
    %4142 = vmatpush1.bf16.msra.mxu0 %v2856
    %4143 = vmatprep.subr.bf16.mxu0 %v2873
    %4144 = vmatpush1.bf16.msra.mxu0 %v2872
    %4145 = vmatprep.subr.bf16.mxu0 %v2889
    %4146 = vmatpush1.bf16.msra.mxu0 %v2888
    %4147 = vmatprep.subr.bf16.mxu0 %v2905
    %4148 = vmatpush1.bf16.msra.mxu0 %v2904
    %4149 = vmatprep.subr.bf16.mxu0 %v2921
    %4150 = vmatpush1.bf16.msra.mxu0 %v2920
    %4151 = vmatprep.subr.bf16.mxu0 %v2937
    %4152 = vmatpush1.bf16.msra.mxu0 %v2936
    %4153 = vmatprep.subr.bf16.mxu0 %v2953
    %4154 = vmatpush1.bf16.msra.mxu0 %v2952
    %4155 = vmatprep.subr.bf16.mxu0 %v2969
    %4156 = vmatpush1.bf16.msra.mxu0 %v2968
    %4157 = vmatprep.subr.bf16.mxu0 %v2985
    %4158 = vmatpush1.bf16.msra.mxu0 %v2984
    %4159 = vmatprep.subr.bf16.mxu0 %v3001
    %4160 = vmatpush1.bf16.msra.mxu0 %v3000
    %4161 = vmatprep.mubr.bf16.mxu0 %v357
    %4162 = vmatmul.mubr.bf16.gmra.mrb[0].mxu0 %v356
    %v4163 = vpop.f32.mrb[0].mxu0
    %v4164 = vadd.f32 %v4123, %v4163
    %v4165 = vpop.f32.mrb[0].mxu0
    %v4166 = vadd.f32 %v4125, %v4165
    %v4167 = vpop.f32.mrb[0].mxu0
    %v4168 = vpop.f32.mrb[0].mxu0
    %4169 = vdwg.mxu0
    %v4170 = vpack.c.bf16 %v3590, %v3590
    %v4171 = vpack.c.bf16 %v3592, %v3592
    %v4172 = vpack.c.bf16 %v3672, %v3672
    %v4173 = vpack.c.bf16 %v3674, %v3674
    %v4174 = vpack.c.bf16 %v3754, %v3754
    %v4175 = vpack.c.bf16 %v3756, %v3756
    %v4176 = vpack.c.bf16 %v3836, %v3836
    %v4177 = vpack.c.bf16 %v3838, %v3838
    %v4178 = vpack.c.bf16 %v3918, %v3918
    %v4179 = vpack.c.bf16 %v3920, %v3920
    %v4180 = vpack.c.bf16 %v4000, %v4000
    %v4181 = vpack.c.bf16 %v4002, %v4002
    %v4182 = vpack.c.bf16 %v4082, %v4082
    %v4183 = vpack.c.bf16 %v4084, %v4084
    %v4184 = vpack.c.bf16 %v4164, %v4164
    %v4185 = vpack.c.bf16 %v4166, %v4166
    %v4186 = vld [vmem:[%s7] sm:$0xf]
    %v4187 = vld [vmem:[%s7 + $0x4] sm:$0xf]
    %v4188 = vld [vmem:[%s7 + $0x8] sm:$0xf]
    %v4189 = vld [vmem:[%s7 + $0xc] sm:$0xf]
    %v4190 = vld [vmem:[%s7 + $0x10] sm:$0xf]
    %v4191 = vld [vmem:[%s7 + $0x14] sm:$0xf]
    %v4192 = vld [vmem:[%s7 + $0x18] sm:$0xf]
    %v4193 = vld [vmem:[%s7 + $0x1c] sm:$0xf]
    %v4194 = vld [vmem:[%s7 + $0x20] sm:$0xf]
    %v4195 = vld [vmem:[%s7 + $0x24] sm:$0xf]
    %v4196 = vld [vmem:[%s7 + $0x28] sm:$0xf]
    %v4197 = vld [vmem:[%s7 + $0x2c] sm:$0xf]
    %v4198 = vld [vmem:[%s7 + $0x30] sm:$0xf]
    %v4199 = vld [vmem:[%s7 + $0x34] sm:$0xf]
    %v4200 = vld [vmem:[%s7 + $0x38] sm:$0xf]
    %v4201 = vld [vmem:[%s7 + $0x3c] sm:$0xf]
    %v4202 = vld [vmem:[%s7 + $0x40] sm:$0xf]
    %v4203 = vld [vmem:[%s7 + $0x44] sm:$0xf]
    %v4204 = vld [vmem:[%s7 + $0x48] sm:$0xf]
    %v4205 = vld [vmem:[%s7 + $0x4c] sm:$0xf]
    %v4206 = vld [vmem:[%s7 + $0x50] sm:$0xf]
    %v4207 = vld [vmem:[%s7 + $0x54] sm:$0xf]
    %v4208 = vld [vmem:[%s7 + $0x58] sm:$0xf]
    %v4209 = vld [vmem:[%s7 + $0x5c] sm:$0xf]
    %v4210 = vld [vmem:[%s7 + $0x60] sm:$0xf]
    %v4211 = vld [vmem:[%s7 + $0x64] sm:$0xf]
    %v4212 = vld [vmem:[%s7 + $0x68] sm:$0xf]
    %v4213 = vld [vmem:[%s7 + $0x6c] sm:$0xf]
    %v4214 = vld [vmem:[%s7 + $0x70] sm:$0xf]
    %v4215 = vld [vmem:[%s7 + $0x74] sm:$0xf]
    %v4216 = vld [vmem:[%s7 + $0x78] sm:$0xf]
    %v4217 = vld [vmem:[%s7 + $0x7c] sm:$0xf]
    %v4218 = vld [vmem:[%s7 + $0x80] sm:$0xf]
    %v4219 = vld [vmem:[%s7 + $0x84] sm:$0xf]
    %v4220 = vld [vmem:[%s7 + $0x88] sm:$0xf]
    %v4221 = vld [vmem:[%s7 + $0x8c] sm:$0xf]
    %v4222 = vld [vmem:[%s7 + $0x90] sm:$0xf]
    %v4223 = vld [vmem:[%s7 + $0x94] sm:$0xf]
    %v4224 = vld [vmem:[%s7 + $0x98] sm:$0xf]
    %v4225 = vld [vmem:[%s7 + $0x9c] sm:$0xf]
    %v4226 = vld [vmem:[%s7 + $0xa0] sm:$0xf]
    %v4227 = vld [vmem:[%s7 + $0xa4] sm:$0xf]
    %v4228 = vld [vmem:[%s7 + $0xa8] sm:$0xf]
    %v4229 = vld [vmem:[%s7 + $0xac] sm:$0xf]
    %v4230 = vld [vmem:[%s7 + $0xb0] sm:$0xf]
    %v4231 = vld [vmem:[%s7 + $0xb4] sm:$0xf]
    %v4232 = vld [vmem:[%s7 + $0xb8] sm:$0xf]
    %v4233 = vld [vmem:[%s7 + $0xbc] sm:$0xf]
    %v4234 = vld [vmem:[%s7 + $0xc0] sm:$0xf]
    %v4235 = vld [vmem:[%s7 + $0xc4] sm:$0xf]
    %v4236 = vld [vmem:[%s7 + $0xc8] sm:$0xf]
    %v4237 = vld [vmem:[%s7 + $0xcc] sm:$0xf]
    %v4238 = vld [vmem:[%s7 + $0xd0] sm:$0xf]
    %v4239 = vld [vmem:[%s7 + $0xd4] sm:$0xf]
    %v4240 = vld [vmem:[%s7 + $0xd8] sm:$0xf]
    %v4241 = vld [vmem:[%s7 + $0xdc] sm:$0xf]
    %v4242 = vld [vmem:[%s7 + $0xe0] sm:$0xf]
    %v4243 = vld [vmem:[%s7 + $0xe4] sm:$0xf]
    %v4244 = vld [vmem:[%s7 + $0xe8] sm:$0xf]
    %v4245 = vld [vmem:[%s7 + $0xec] sm:$0xf]
    %v4246 = vld [vmem:[%s7 + $0xf0] sm:$0xf]
    %v4247 = vld [vmem:[%s7 + $0xf4] sm:$0xf]
    %v4248 = vld [vmem:[%s7 + $0xf8] sm:$0xf]
    %v4249 = vld [vmem:[%s7 + $0xfc] sm:$0xf]
    %v4250 = vld [vmem:[%s7 + $0x100] sm:$0xf]
    %v4251 = vld [vmem:[%s7 + $0x104] sm:$0xf]
    %v4252 = vld [vmem:[%s7 + $0x108] sm:$0xf]
    %v4253 = vld [vmem:[%s7 + $0x10c] sm:$0xf]
    %v4254 = vld [vmem:[%s7 + $0x110] sm:$0xf]
    %v4255 = vld [vmem:[%s7 + $0x114] sm:$0xf]
    %v4256 = vld [vmem:[%s7 + $0x118] sm:$0xf]
    %v4257 = vld [vmem:[%s7 + $0x11c] sm:$0xf]
    %v4258 = vld [vmem:[%s7 + $0x120] sm:$0xf]
    %v4259 = vld [vmem:[%s7 + $0x124] sm:$0xf]
    %v4260 = vld [vmem:[%s7 + $0x128] sm:$0xf]
    %v4261 = vld [vmem:[%s7 + $0x12c] sm:$0xf]
    %v4262 = vld [vmem:[%s7 + $0x130] sm:$0xf]
    %v4263 = vld [vmem:[%s7 + $0x134] sm:$0xf]
    %v4264 = vld [vmem:[%s7 + $0x138] sm:$0xf]
    %v4265 = vld [vmem:[%s7 + $0x13c] sm:$0xf]
    %v4266 = vld [vmem:[%s7 + $0x140] sm:$0xf]
    %v4267 = vld [vmem:[%s7 + $0x144] sm:$0xf]
    %v4268 = vld [vmem:[%s7 + $0x148] sm:$0xf]
    %v4269 = vld [vmem:[%s7 + $0x14c] sm:$0xf]
    %v4270 = vld [vmem:[%s7 + $0x150] sm:$0xf]
    %v4271 = vld [vmem:[%s7 + $0x154] sm:$0xf]
    %v4272 = vld [vmem:[%s7 + $0x158] sm:$0xf]
    %v4273 = vld [vmem:[%s7 + $0x15c] sm:$0xf]
    %v4274 = vld [vmem:[%s7 + $0x160] sm:$0xf]
    %v4275 = vld [vmem:[%s7 + $0x164] sm:$0xf]
    %v4276 = vld [vmem:[%s7 + $0x168] sm:$0xf]
    %v4277 = vld [vmem:[%s7 + $0x16c] sm:$0xf]
    %v4278 = vld [vmem:[%s7 + $0x170] sm:$0xf]
    %v4279 = vld [vmem:[%s7 + $0x174] sm:$0xf]
    %v4280 = vld [vmem:[%s7 + $0x178] sm:$0xf]
    %v4281 = vld [vmem:[%s7 + $0x17c] sm:$0xf]
    %v4282 = vld [vmem:[%s7 + $0x180] sm:$0xf]
    %v4283 = vld [vmem:[%s7 + $0x184] sm:$0xf]
    %v4284 = vld [vmem:[%s7 + $0x188] sm:$0xf]
    %v4285 = vld [vmem:[%s7 + $0x18c] sm:$0xf]
    %v4286 = vld [vmem:[%s7 + $0x190] sm:$0xf]
    %v4287 = vld [vmem:[%s7 + $0x194] sm:$0xf]
    %v4288 = vld [vmem:[%s7 + $0x198] sm:$0xf]
    %v4289 = vld [vmem:[%s7 + $0x19c] sm:$0xf]
    %v4290 = vld [vmem:[%s7 + $0x1a0] sm:$0xf]
    %v4291 = vld [vmem:[%s7 + $0x1a4] sm:$0xf]
    %v4292 = vld [vmem:[%s7 + $0x1a8] sm:$0xf]
    %v4293 = vld [vmem:[%s7 + $0x1ac] sm:$0xf]
    %v4294 = vld [vmem:[%s7 + $0x1b0] sm:$0xf]
    %v4295 = vld [vmem:[%s7 + $0x1b4] sm:$0xf]
    %v4296 = vld [vmem:[%s7 + $0x1b8] sm:$0xf]
    %v4297 = vld [vmem:[%s7 + $0x1bc] sm:$0xf]
    %v4298 = vld [vmem:[%s7 + $0x1c0] sm:$0xf]
    %v4299 = vld [vmem:[%s7 + $0x1c4] sm:$0xf]
    %v4300 = vld [vmem:[%s7 + $0x1c8] sm:$0xf]
    %v4301 = vld [vmem:[%s7 + $0x1cc] sm:$0xf]
    %v4302 = vld [vmem:[%s7 + $0x1d0] sm:$0xf]
    %v4303 = vld [vmem:[%s7 + $0x1d4] sm:$0xf]
    %v4304 = vld [vmem:[%s7 + $0x1d8] sm:$0xf]
    %v4305 = vld [vmem:[%s7 + $0x1dc] sm:$0xf]
    %v4306 = vld [vmem:[%s7 + $0x1e0] sm:$0xf]
    %v4307 = vld [vmem:[%s7 + $0x1e4] sm:$0xf]
    %v4308 = vld [vmem:[%s7 + $0x1e8] sm:$0xf]
    %v4309 = vld [vmem:[%s7 + $0x1ec] sm:$0xf]
    %v4310 = vld [vmem:[%s7 + $0x1f0] sm:$0xf]
    %v4311 = vld [vmem:[%s7 + $0x1f4] sm:$0xf]
    %v4312 = vld [vmem:[%s7 + $0x1f8] sm:$0xf]
    %v4313 = vld [vmem:[%s7 + $0x1fc] sm:$0xf]
    %v4314 = vld [vmem:[%s7 + $0x200] sm:$0xf]
    %v4315 = vld [vmem:[%s7 + $0x204] sm:$0xf]
    %v4316 = vld [vmem:[%s7 + $0x208] sm:$0xf]
    %v4317 = vld [vmem:[%s7 + $0x20c] sm:$0xf]
    %v4318 = vld [vmem:[%s7 + $0x210] sm:$0xf]
    %v4319 = vld [vmem:[%s7 + $0x214] sm:$0xf]
    %v4320 = vld [vmem:[%s7 + $0x218] sm:$0xf]
    %v4321 = vld [vmem:[%s7 + $0x21c] sm:$0xf]
    %v4322 = vld [vmem:[%s7 + $0x220] sm:$0xf]
    %v4323 = vld [vmem:[%s7 + $0x224] sm:$0xf]
    %v4324 = vld [vmem:[%s7 + $0x228] sm:$0xf]
    %v4325 = vld [vmem:[%s7 + $0x22c] sm:$0xf]
    %v4326 = vld [vmem:[%s7 + $0x230] sm:$0xf]
    %v4327 = vld [vmem:[%s7 + $0x234] sm:$0xf]
    %v4328 = vld [vmem:[%s7 + $0x238] sm:$0xf]
    %v4329 = vld [vmem:[%s7 + $0x23c] sm:$0xf]
    %v4330 = vld [vmem:[%s7 + $0x240] sm:$0xf]
    %v4331 = vld [vmem:[%s7 + $0x244] sm:$0xf]
    %v4332 = vld [vmem:[%s7 + $0x248] sm:$0xf]
    %v4333 = vld [vmem:[%s7 + $0x24c] sm:$0xf]
    %v4334 = vld [vmem:[%s7 + $0x250] sm:$0xf]
    %v4335 = vld [vmem:[%s7 + $0x254] sm:$0xf]
    %v4336 = vld [vmem:[%s7 + $0x258] sm:$0xf]
    %v4337 = vld [vmem:[%s7 + $0x25c] sm:$0xf]
    %v4338 = vld [vmem:[%s7 + $0x260] sm:$0xf]
    %v4339 = vld [vmem:[%s7 + $0x264] sm:$0xf]
    %v4340 = vld [vmem:[%s7 + $0x268] sm:$0xf]
    %v4341 = vld [vmem:[%s7 + $0x26c] sm:$0xf]
    %v4342 = vld [vmem:[%s7 + $0x270] sm:$0xf]
    %v4343 = vld [vmem:[%s7 + $0x274] sm:$0xf]
    %v4344 = vld [vmem:[%s7 + $0x278] sm:$0xf]
    %v4345 = vld [vmem:[%s7 + $0x27c] sm:$0xf]
    %v4346 = vld [vmem:[%s7 + $0x280] sm:$0xf]
    %v4347 = vld [vmem:[%s7 + $0x284] sm:$0xf]
    %v4348 = vld [vmem:[%s7 + $0x288] sm:$0xf]
    %v4349 = vld [vmem:[%s7 + $0x28c] sm:$0xf]
    %v4350 = vld [vmem:[%s7 + $0x290] sm:$0xf]
    %v4351 = vld [vmem:[%s7 + $0x294] sm:$0xf]
    %v4352 = vld [vmem:[%s7 + $0x298] sm:$0xf]
    %v4353 = vld [vmem:[%s7 + $0x29c] sm:$0xf]
    %v4354 = vld [vmem:[%s7 + $0x2a0] sm:$0xf]
    %v4355 = vld [vmem:[%s7 + $0x2a4] sm:$0xf]
    %v4356 = vld [vmem:[%s7 + $0x2a8] sm:$0xf]
    %v4357 = vld [vmem:[%s7 + $0x2ac] sm:$0xf]
    %v4358 = vld [vmem:[%s7 + $0x2b0] sm:$0xf]
    %v4359 = vld [vmem:[%s7 + $0x2b4] sm:$0xf]
    %v4360 = vld [vmem:[%s7 + $0x2b8] sm:$0xf]
    %v4361 = vld [vmem:[%s7 + $0x2bc] sm:$0xf]
    %v4362 = vld [vmem:[%s7 + $0x2c0] sm:$0xf]
    %v4363 = vld [vmem:[%s7 + $0x2c4] sm:$0xf]
    %v4364 = vld [vmem:[%s7 + $0x2c8] sm:$0xf]
    %v4365 = vld [vmem:[%s7 + $0x2cc] sm:$0xf]
    %v4366 = vld [vmem:[%s7 + $0x2d0] sm:$0xf]
    %v4367 = vld [vmem:[%s7 + $0x2d4] sm:$0xf]
    %v4368 = vld [vmem:[%s7 + $0x2d8] sm:$0xf]
    %v4369 = vld [vmem:[%s7 + $0x2dc] sm:$0xf]
    %v4370 = vld [vmem:[%s7 + $0x2e0] sm:$0xf]
    %v4371 = vld [vmem:[%s7 + $0x2e4] sm:$0xf]
    %v4372 = vld [vmem:[%s7 + $0x2e8] sm:$0xf]
    %v4373 = vld [vmem:[%s7 + $0x2ec] sm:$0xf]
    %v4374 = vld [vmem:[%s7 + $0x2f0] sm:$0xf]
    %v4375 = vld [vmem:[%s7 + $0x2f4] sm:$0xf]
    %v4376 = vld [vmem:[%s7 + $0x2f8] sm:$0xf]
    %v4377 = vld [vmem:[%s7 + $0x2fc] sm:$0xf]
    %v4378 = vld [vmem:[%s7 + $0x300] sm:$0xf]
    %v4379 = vld [vmem:[%s7 + $0x304] sm:$0xf]
    %v4380 = vld [vmem:[%s7 + $0x308] sm:$0xf]
    %v4381 = vld [vmem:[%s7 + $0x30c] sm:$0xf]
    %v4382 = vld [vmem:[%s7 + $0x310] sm:$0xf]
    %v4383 = vld [vmem:[%s7 + $0x314] sm:$0xf]
    %v4384 = vld [vmem:[%s7 + $0x318] sm:$0xf]
    %v4385 = vld [vmem:[%s7 + $0x31c] sm:$0xf]
    %v4386 = vld [vmem:[%s7 + $0x320] sm:$0xf]
    %v4387 = vld [vmem:[%s7 + $0x324] sm:$0xf]
    %v4388 = vld [vmem:[%s7 + $0x328] sm:$0xf]
    %v4389 = vld [vmem:[%s7 + $0x32c] sm:$0xf]
    %v4390 = vld [vmem:[%s7 + $0x330] sm:$0xf]
    %v4391 = vld [vmem:[%s7 + $0x334] sm:$0xf]
    %v4392 = vld [vmem:[%s7 + $0x338] sm:$0xf]
    %v4393 = vld [vmem:[%s7 + $0x33c] sm:$0xf]
    %v4394 = vld [vmem:[%s7 + $0x340] sm:$0xf]
    %v4395 = vld [vmem:[%s7 + $0x344] sm:$0xf]
    %v4396 = vld [vmem:[%s7 + $0x348] sm:$0xf]
    %v4397 = vld [vmem:[%s7 + $0x34c] sm:$0xf]
    %v4398 = vld [vmem:[%s7 + $0x350] sm:$0xf]
    %v4399 = vld [vmem:[%s7 + $0x354] sm:$0xf]
    %v4400 = vld [vmem:[%s7 + $0x358] sm:$0xf]
    %v4401 = vld [vmem:[%s7 + $0x35c] sm:$0xf]
    %v4402 = vld [vmem:[%s7 + $0x360] sm:$0xf]
    %v4403 = vld [vmem:[%s7 + $0x364] sm:$0xf]
    %v4404 = vld [vmem:[%s7 + $0x368] sm:$0xf]
    %v4405 = vld [vmem:[%s7 + $0x36c] sm:$0xf]
    %v4406 = vld [vmem:[%s7 + $0x370] sm:$0xf]
    %v4407 = vld [vmem:[%s7 + $0x374] sm:$0xf]
    %v4408 = vld [vmem:[%s7 + $0x378] sm:$0xf]
    %v4409 = vld [vmem:[%s7 + $0x37c] sm:$0xf]
    %v4410 = vld [vmem:[%s7 + $0x380] sm:$0xf]
    %v4411 = vld [vmem:[%s7 + $0x384] sm:$0xf]
    %v4412 = vld [vmem:[%s7 + $0x388] sm:$0xf]
    %v4413 = vld [vmem:[%s7 + $0x38c] sm:$0xf]
    %v4414 = vld [vmem:[%s7 + $0x390] sm:$0xf]
    %v4415 = vld [vmem:[%s7 + $0x394] sm:$0xf]
    %v4416 = vld [vmem:[%s7 + $0x398] sm:$0xf]
    %v4417 = vld [vmem:[%s7 + $0x39c] sm:$0xf]
    %v4418 = vld [vmem:[%s7 + $0x3a0] sm:$0xf]
    %v4419 = vld [vmem:[%s7 + $0x3a4] sm:$0xf]
    %v4420 = vld [vmem:[%s7 + $0x3a8] sm:$0xf]
    %v4421 = vld [vmem:[%s7 + $0x3ac] sm:$0xf]
    %v4422 = vld [vmem:[%s7 + $0x3b0] sm:$0xf]
    %v4423 = vld [vmem:[%s7 + $0x3b4] sm:$0xf]
    %v4424 = vld [vmem:[%s7 + $0x3b8] sm:$0xf]
    %v4425 = vld [vmem:[%s7 + $0x3bc] sm:$0xf]
    %v4426 = vld [vmem:[%s7 + $0x3c0] sm:$0xf]
    %v4427 = vld [vmem:[%s7 + $0x3c4] sm:$0xf]
    %v4428 = vld [vmem:[%s7 + $0x3c8] sm:$0xf]
    %v4429 = vld [vmem:[%s7 + $0x3cc] sm:$0xf]
    %v4430 = vld [vmem:[%s7 + $0x3d0] sm:$0xf]
    %v4431 = vld [vmem:[%s7 + $0x3d4] sm:$0xf]
    %v4432 = vld [vmem:[%s7 + $0x3d8] sm:$0xf]
    %v4433 = vld [vmem:[%s7 + $0x3dc] sm:$0xf]
    %v4434 = vld [vmem:[%s7 + $0x3e0] sm:$0xf]
    %v4435 = vld [vmem:[%s7 + $0x3e4] sm:$0xf]
    %v4436 = vld [vmem:[%s7 + $0x3e8] sm:$0xf]
    %v4437 = vld [vmem:[%s7 + $0x3ec] sm:$0xf]
    %v4438 = vld [vmem:[%s7 + $0x3f0] sm:$0xf]
    %v4439 = vld [vmem:[%s7 + $0x3f4] sm:$0xf]
    %v4440 = vld [vmem:[%s7 + $0x3f8] sm:$0xf]
    %v4441 = vld [vmem:[%s7 + $0x3fc] sm:$0xf]
    %v4442 = vld [vmem:[#allocation14] sm:$0x1]
    %v4444 = vlaneseq
    %v4445 = vshrl.u32 %v4444, 7
    %v4446 = vsub.s32 0, %v4445
    %v4447 = vrot.slane %v4442, %v4446
    %v4705 = vunpack.c.l.b16 %v4186
    %v4706 = vunpack.c.l.b16 %v4187
    %v4707 = vunpack.c.l.b16 %v4188
    %v4708 = vunpack.c.l.b16 %v4189
    %v4709 = vunpack.c.l.b16 %v4190
    %v4710 = vunpack.c.l.b16 %v4191
    %v4711 = vunpack.c.l.b16 %v4192
    %v4712 = vunpack.c.l.b16 %v4193
    %v4713 = vunpack.c.l.b16 %v4194
    %v4714 = vunpack.c.l.b16 %v4195
    %v4715 = vunpack.c.l.b16 %v4196
    %v4716 = vunpack.c.l.b16 %v4197
    %v4717 = vunpack.c.l.b16 %v4198
    %v4718 = vunpack.c.l.b16 %v4199
    %v4719 = vunpack.c.l.b16 %v4200
    %v4720 = vunpack.c.l.b16 %v4201
    %v4721 = vunpack.c.l.b16 %v4202
    %v4722 = vunpack.c.l.b16 %v4203
    %v4723 = vunpack.c.l.b16 %v4204
    %v4724 = vunpack.c.l.b16 %v4205
    %v4725 = vunpack.c.l.b16 %v4206
    %v4726 = vunpack.c.l.b16 %v4207
    %v4727 = vunpack.c.l.b16 %v4208
    %v4728 = vunpack.c.l.b16 %v4209
    %v4729 = vunpack.c.l.b16 %v4210
    %v4730 = vunpack.c.l.b16 %v4211
    %v4731 = vunpack.c.l.b16 %v4212
    %v4732 = vunpack.c.l.b16 %v4213
    %v4733 = vunpack.c.l.b16 %v4214
    %v4734 = vunpack.c.l.b16 %v4215
    %v4735 = vunpack.c.l.b16 %v4216
    %v4736 = vunpack.c.l.b16 %v4217
    %v4737 = vunpack.c.l.b16 %v4218
    %v4738 = vunpack.c.l.b16 %v4219
    %v4739 = vunpack.c.l.b16 %v4220
    %v4740 = vunpack.c.l.b16 %v4221
    %v4741 = vunpack.c.l.b16 %v4222
    %v4742 = vunpack.c.l.b16 %v4223
    %v4743 = vunpack.c.l.b16 %v4224
    %v4744 = vunpack.c.l.b16 %v4225
    %v4745 = vunpack.c.l.b16 %v4226
    %v4746 = vunpack.c.l.b16 %v4227
    %v4747 = vunpack.c.l.b16 %v4228
    %v4748 = vunpack.c.l.b16 %v4229
    %v4749 = vunpack.c.l.b16 %v4230
    %v4750 = vunpack.c.l.b16 %v4231
    %v4751 = vunpack.c.l.b16 %v4232
    %v4752 = vunpack.c.l.b16 %v4233
    %v4753 = vunpack.c.l.b16 %v4234
    %v4754 = vunpack.c.l.b16 %v4235
    %v4755 = vunpack.c.l.b16 %v4236
    %v4756 = vunpack.c.l.b16 %v4237
    %v4757 = vunpack.c.l.b16 %v4238
    %v4758 = vunpack.c.l.b16 %v4239
    %v4759 = vunpack.c.l.b16 %v4240
    %v4760 = vunpack.c.l.b16 %v4241
    %v4761 = vunpack.c.l.b16 %v4242
    %v4762 = vunpack.c.l.b16 %v4243
    %v4763 = vunpack.c.l.b16 %v4244
    %v4764 = vunpack.c.l.b16 %v4245
    %v4765 = vunpack.c.l.b16 %v4246
    %v4766 = vunpack.c.l.b16 %v4247
    %v4767 = vunpack.c.l.b16 %v4248
    %v4768 = vunpack.c.l.b16 %v4249
    %v4769 = vunpack.c.l.b16 %v4250
    %v4770 = vunpack.c.l.b16 %v4251
    %v4771 = vunpack.c.l.b16 %v4252
    %v4772 = vunpack.c.l.b16 %v4253
    %v4773 = vunpack.c.l.b16 %v4254
    %v4774 = vunpack.c.l.b16 %v4255
    %v4775 = vunpack.c.l.b16 %v4256
    %v4776 = vunpack.c.l.b16 %v4257
    %v4777 = vunpack.c.l.b16 %v4258
    %v4778 = vunpack.c.l.b16 %v4259
    %v4779 = vunpack.c.l.b16 %v4260
    %v4780 = vunpack.c.l.b16 %v4261
    %v4781 = vunpack.c.l.b16 %v4262
    %v4782 = vunpack.c.l.b16 %v4263
    %v4783 = vunpack.c.l.b16 %v4264
    %v4784 = vunpack.c.l.b16 %v4265
    %v4785 = vunpack.c.l.b16 %v4266
    %v4786 = vunpack.c.l.b16 %v4267
    %v4787 = vunpack.c.l.b16 %v4268
    %v4788 = vunpack.c.l.b16 %v4269
    %v4789 = vunpack.c.l.b16 %v4270
    %v4790 = vunpack.c.l.b16 %v4271
    %v4791 = vunpack.c.l.b16 %v4272
    %v4792 = vunpack.c.l.b16 %v4273
    %v4793 = vunpack.c.l.b16 %v4274
    %v4794 = vunpack.c.l.b16 %v4275
    %v4795 = vunpack.c.l.b16 %v4276
    %v4796 = vunpack.c.l.b16 %v4277
    %v4797 = vunpack.c.l.b16 %v4278
    %v4798 = vunpack.c.l.b16 %v4279
    %v4799 = vunpack.c.l.b16 %v4280
    %v4800 = vunpack.c.l.b16 %v4281
    %v4801 = vunpack.c.l.b16 %v4282
    %v4802 = vunpack.c.l.b16 %v4283
    %v4803 = vunpack.c.l.b16 %v4284
    %v4804 = vunpack.c.l.b16 %v4285
    %v4805 = vunpack.c.l.b16 %v4286
    %v4806 = vunpack.c.l.b16 %v4287
    %v4807 = vunpack.c.l.b16 %v4288
    %v4808 = vunpack.c.l.b16 %v4289
    %v4809 = vunpack.c.l.b16 %v4290
    %v4810 = vunpack.c.l.b16 %v4291
    %v4811 = vunpack.c.l.b16 %v4292
    %v4812 = vunpack.c.l.b16 %v4293
    %v4813 = vunpack.c.l.b16 %v4294
    %v4814 = vunpack.c.l.b16 %v4295
    %v4815 = vunpack.c.l.b16 %v4296
    %v4816 = vunpack.c.l.b16 %v4297
    %v4817 = vunpack.c.l.b16 %v4298
    %v4818 = vunpack.c.l.b16 %v4299
    %v4819 = vunpack.c.l.b16 %v4300
    %v4820 = vunpack.c.l.b16 %v4301
    %v4821 = vunpack.c.l.b16 %v4302
    %v4822 = vunpack.c.l.b16 %v4303
    %v4823 = vunpack.c.l.b16 %v4304
    %v4824 = vunpack.c.l.b16 %v4305
    %v4825 = vunpack.c.l.b16 %v4306
    %v4826 = vunpack.c.l.b16 %v4307
    %v4827 = vunpack.c.l.b16 %v4308
    %v4828 = vunpack.c.l.b16 %v4309
    %v4829 = vunpack.c.l.b16 %v4310
    %v4830 = vunpack.c.l.b16 %v4311
    %v4831 = vunpack.c.l.b16 %v4312
    %v4832 = vunpack.c.l.b16 %v4313
    %v4833 = vunpack.c.l.b16 %v4314
    %v4834 = vunpack.c.l.b16 %v4315
    %v4835 = vunpack.c.l.b16 %v4316
    %v4836 = vunpack.c.l.b16 %v4317
    %v4837 = vunpack.c.l.b16 %v4318
    %v4838 = vunpack.c.l.b16 %v4319
    %v4839 = vunpack.c.l.b16 %v4320
    %v4840 = vunpack.c.l.b16 %v4321
    %v4841 = vunpack.c.l.b16 %v4322
    %v4842 = vunpack.c.l.b16 %v4323
    %v4843 = vunpack.c.l.b16 %v4324
    %v4844 = vunpack.c.l.b16 %v4325
    %v4845 = vunpack.c.l.b16 %v4326
    %v4846 = vunpack.c.l.b16 %v4327
    %v4847 = vunpack.c.l.b16 %v4328
    %v4848 = vunpack.c.l.b16 %v4329
    %v4849 = vunpack.c.l.b16 %v4330
    %v4850 = vunpack.c.l.b16 %v4331
    %v4851 = vunpack.c.l.b16 %v4332
    %v4852 = vunpack.c.l.b16 %v4333
    %v4853 = vunpack.c.l.b16 %v4334
    %v4854 = vunpack.c.l.b16 %v4335
    %v4855 = vunpack.c.l.b16 %v4336
    %v4856 = vunpack.c.l.b16 %v4337
    %v4857 = vunpack.c.l.b16 %v4338
    %v4858 = vunpack.c.l.b16 %v4339
    %v4859 = vunpack.c.l.b16 %v4340
    %v4860 = vunpack.c.l.b16 %v4341
    %v4861 = vunpack.c.l.b16 %v4342
    %v4862 = vunpack.c.l.b16 %v4343
    %v4863 = vunpack.c.l.b16 %v4344
    %v4864 = vunpack.c.l.b16 %v4345
    %v4865 = vunpack.c.l.b16 %v4346
    %v4866 = vunpack.c.l.b16 %v4347
    %v4867 = vunpack.c.l.b16 %v4348
    %v4868 = vunpack.c.l.b16 %v4349
    %v4869 = vunpack.c.l.b16 %v4350
    %v4870 = vunpack.c.l.b16 %v4351
    %v4871 = vunpack.c.l.b16 %v4352
    %v4872 = vunpack.c.l.b16 %v4353
    %v4873 = vunpack.c.l.b16 %v4354
    %v4874 = vunpack.c.l.b16 %v4355
    %v4875 = vunpack.c.l.b16 %v4356
    %v4876 = vunpack.c.l.b16 %v4357
    %v4877 = vunpack.c.l.b16 %v4358
    %v4878 = vunpack.c.l.b16 %v4359
    %v4879 = vunpack.c.l.b16 %v4360
    %v4880 = vunpack.c.l.b16 %v4361
    %v4881 = vunpack.c.l.b16 %v4362
    %v4882 = vunpack.c.l.b16 %v4363
    %v4883 = vunpack.c.l.b16 %v4364
    %v4884 = vunpack.c.l.b16 %v4365
    %v4885 = vunpack.c.l.b16 %v4366
    %v4886 = vunpack.c.l.b16 %v4367
    %v4887 = vunpack.c.l.b16 %v4368
    %v4888 = vunpack.c.l.b16 %v4369
    %v4889 = vunpack.c.l.b16 %v4370
    %v4890 = vunpack.c.l.b16 %v4371
    %v4891 = vunpack.c.l.b16 %v4372
    %v4892 = vunpack.c.l.b16 %v4373
    %v4893 = vunpack.c.l.b16 %v4374
    %v4894 = vunpack.c.l.b16 %v4375
    %v4895 = vunpack.c.l.b16 %v4376
    %v4896 = vunpack.c.l.b16 %v4377
    %v4897 = vunpack.c.l.b16 %v4378
    %v4898 = vunpack.c.l.b16 %v4379
    %v4899 = vunpack.c.l.b16 %v4380
    %v4900 = vunpack.c.l.b16 %v4381
    %v4901 = vunpack.c.l.b16 %v4382
    %v4902 = vunpack.c.l.b16 %v4383
    %v4903 = vunpack.c.l.b16 %v4384
    %v4904 = vunpack.c.l.b16 %v4385
    %v4905 = vunpack.c.l.b16 %v4386
    %v4906 = vunpack.c.l.b16 %v4387
    %v4907 = vunpack.c.l.b16 %v4388
    %v4908 = vunpack.c.l.b16 %v4389
    %v4909 = vunpack.c.l.b16 %v4390
    %v4910 = vunpack.c.l.b16 %v4391
    %v4911 = vunpack.c.l.b16 %v4392
    %v4912 = vunpack.c.l.b16 %v4393
    %v4913 = vunpack.c.l.b16 %v4394
    %v4914 = vunpack.c.l.b16 %v4395
    %v4915 = vunpack.c.l.b16 %v4396
    %v4916 = vunpack.c.l.b16 %v4397
    %v4917 = vunpack.c.l.b16 %v4398
    %v4918 = vunpack.c.l.b16 %v4399
    %v4919 = vunpack.c.l.b16 %v4400
    %v4920 = vunpack.c.l.b16 %v4401
    %v4921 = vunpack.c.l.b16 %v4402
    %v4922 = vunpack.c.l.b16 %v4403
    %v4923 = vunpack.c.l.b16 %v4404
    %v4924 = vunpack.c.l.b16 %v4405
    %v4925 = vunpack.c.l.b16 %v4406
    %v4926 = vunpack.c.l.b16 %v4407
    %v4927 = vunpack.c.l.b16 %v4408
    %v4928 = vunpack.c.l.b16 %v4409
    %v4929 = vunpack.c.l.b16 %v4410
    %v4930 = vunpack.c.l.b16 %v4411
    %v4931 = vunpack.c.l.b16 %v4412
    %v4932 = vunpack.c.l.b16 %v4413
    %v4933 = vunpack.c.l.b16 %v4414
    %v4934 = vunpack.c.l.b16 %v4415
    %v4935 = vunpack.c.l.b16 %v4416
    %v4936 = vunpack.c.l.b16 %v4417
    %v4937 = vunpack.c.l.b16 %v4418
    %v4938 = vunpack.c.l.b16 %v4419
    %v4939 = vunpack.c.l.b16 %v4420
    %v4940 = vunpack.c.l.b16 %v4421
    %v4941 = vunpack.c.l.b16 %v4422
    %v4942 = vunpack.c.l.b16 %v4423
    %v4943 = vunpack.c.l.b16 %v4424
    %v4944 = vunpack.c.l.b16 %v4425
    %v4945 = vunpack.c.l.b16 %v4426
    %v4946 = vunpack.c.l.b16 %v4427
    %v4947 = vunpack.c.l.b16 %v4428
    %v4948 = vunpack.c.l.b16 %v4429
    %v4949 = vunpack.c.l.b16 %v4430
    %v4950 = vunpack.c.l.b16 %v4431
    %v4951 = vunpack.c.l.b16 %v4432
    %v4952 = vunpack.c.l.b16 %v4433
    %v4953 = vunpack.c.l.b16 %v4434
    %v4954 = vunpack.c.l.b16 %v4435
    %v4955 = vunpack.c.l.b16 %v4436
    %v4956 = vunpack.c.l.b16 %v4437
    %v4957 = vunpack.c.l.b16 %v4438
    %v4958 = vunpack.c.l.b16 %v4439
    %v4959 = vunpack.c.l.b16 %v4440
    %v4960 = vunpack.c.l.b16 %v4441
    %v4961 = vpack.c.b16 %v4706, %v4705
    %v4962 = vpack.c.b16 %v4708, %v4707
    %v4963 = vpack.c.b16 %v4710, %v4709
    %v4964 = vpack.c.b16 %v4712, %v4711
    %v4965 = vpack.c.b16 %v4714, %v4713
    %v4966 = vpack.c.b16 %v4716, %v4715
    %v4967 = vpack.c.b16 %v4718, %v4717
    %v4968 = vpack.c.b16 %v4720, %v4719
    %v4969 = vpack.c.b16 %v4722, %v4721
    %v4970 = vpack.c.b16 %v4724, %v4723
    %v4971 = vpack.c.b16 %v4726, %v4725
    %v4972 = vpack.c.b16 %v4728, %v4727
    %v4973 = vpack.c.b16 %v4730, %v4729
    %v4974 = vpack.c.b16 %v4732, %v4731
    %v4975 = vpack.c.b16 %v4734, %v4733
    %v4976 = vpack.c.b16 %v4736, %v4735
    %v4977 = vpack.c.b16 %v4738, %v4737
    %v4978 = vpack.c.b16 %v4740, %v4739
    %v4979 = vpack.c.b16 %v4742, %v4741
    %v4980 = vpack.c.b16 %v4744, %v4743
    %v4981 = vpack.c.b16 %v4746, %v4745
    %v4982 = vpack.c.b16 %v4748, %v4747
    %v4983 = vpack.c.b16 %v4750, %v4749
    %v4984 = vpack.c.b16 %v4752, %v4751
    %v4985 = vpack.c.b16 %v4754, %v4753
    %v4986 = vpack.c.b16 %v4756, %v4755
    %v4987 = vpack.c.b16 %v4758, %v4757
    %v4988 = vpack.c.b16 %v4760, %v4759
    %v4989 = vpack.c.b16 %v4762, %v4761
    %v4990 = vpack.c.b16 %v4764, %v4763
    %v4991 = vpack.c.b16 %v4766, %v4765
    %v4992 = vpack.c.b16 %v4768, %v4767
    %v4993 = vpack.c.b16 %v4770, %v4769
    %v4994 = vpack.c.b16 %v4772, %v4771
    %v4995 = vpack.c.b16 %v4774, %v4773
    %v4996 = vpack.c.b16 %v4776, %v4775
    %v4997 = vpack.c.b16 %v4778, %v4777
    %v4998 = vpack.c.b16 %v4780, %v4779
    %v4999 = vpack.c.b16 %v4782, %v4781
    %v5000 = vpack.c.b16 %v4784, %v4783
    %v5001 = vpack.c.b16 %v4786, %v4785
    %v5002 = vpack.c.b16 %v4788, %v4787
    %v5003 = vpack.c.b16 %v4790, %v4789
    %v5004 = vpack.c.b16 %v4792, %v4791
    %v5005 = vpack.c.b16 %v4794, %v4793
    %v5006 = vpack.c.b16 %v4796, %v4795
    %v5007 = vpack.c.b16 %v4798, %v4797
    %v5008 = vpack.c.b16 %v4800, %v4799
    %v5009 = vpack.c.b16 %v4802, %v4801
    %v5010 = vpack.c.b16 %v4804, %v4803
    %v5011 = vpack.c.b16 %v4806, %v4805
    %v5012 = vpack.c.b16 %v4808, %v4807
    %v5013 = vpack.c.b16 %v4810, %v4809
    %v5014 = vpack.c.b16 %v4812, %v4811
    %v5015 = vpack.c.b16 %v4814, %v4813
    %v5016 = vpack.c.b16 %v4816, %v4815
    %v5017 = vpack.c.b16 %v4818, %v4817
    %v5018 = vpack.c.b16 %v4820, %v4819
    %v5019 = vpack.c.b16 %v4822, %v4821
    %v5020 = vpack.c.b16 %v4824, %v4823
    %v5021 = vpack.c.b16 %v4826, %v4825
    %v5022 = vpack.c.b16 %v4828, %v4827
    %v5023 = vpack.c.b16 %v4830, %v4829
    %v5024 = vpack.c.b16 %v4832, %v4831
    %v5025 = vpack.c.b16 %v4834, %v4833
    %v5026 = vpack.c.b16 %v4836, %v4835
    %v5027 = vpack.c.b16 %v4838, %v4837
    %v5028 = vpack.c.b16 %v4840, %v4839
    %v5029 = vpack.c.b16 %v4842, %v4841
    %v5030 = vpack.c.b16 %v4844, %v4843
    %v5031 = vpack.c.b16 %v4846, %v4845
    %v5032 = vpack.c.b16 %v4848, %v4847
    %v5033 = vpack.c.b16 %v4850, %v4849
    %v5034 = vpack.c.b16 %v4852, %v4851
    %v5035 = vpack.c.b16 %v4854, %v4853
    %v5036 = vpack.c.b16 %v4856, %v4855
    %v5037 = vpack.c.b16 %v4858, %v4857
    %v5038 = vpack.c.b16 %v4860, %v4859
    %v5039 = vpack.c.b16 %v4862, %v4861
    %v5040 = vpack.c.b16 %v4864, %v4863
    %v5041 = vpack.c.b16 %v4866, %v4865
    %v5042 = vpack.c.b16 %v4868, %v4867
    %v5043 = vpack.c.b16 %v4870, %v4869
    %v5044 = vpack.c.b16 %v4872, %v4871
    %v5045 = vpack.c.b16 %v4874, %v4873
    %v5046 = vpack.c.b16 %v4876, %v4875
    %v5047 = vpack.c.b16 %v4878, %v4877
    %v5048 = vpack.c.b16 %v4880, %v4879
    %v5049 = vpack.c.b16 %v4882, %v4881
    %v5050 = vpack.c.b16 %v4884, %v4883
    %v5051 = vpack.c.b16 %v4886, %v4885
    %v5052 = vpack.c.b16 %v4888, %v4887
    %v5053 = vpack.c.b16 %v4890, %v4889
    %v5054 = vpack.c.b16 %v4892, %v4891
    %v5055 = vpack.c.b16 %v4894, %v4893
    %v5056 = vpack.c.b16 %v4896, %v4895
    %v5057 = vpack.c.b16 %v4898, %v4897
    %v5058 = vpack.c.b16 %v4900, %v4899
    %v5059 = vpack.c.b16 %v4902, %v4901
    %v5060 = vpack.c.b16 %v4904, %v4903
    %v5061 = vpack.c.b16 %v4906, %v4905
    %v5062 = vpack.c.b16 %v4908, %v4907
    %v5063 = vpack.c.b16 %v4910, %v4909
    %v5064 = vpack.c.b16 %v4912, %v4911
    %v5065 = vpack.c.b16 %v4914, %v4913
    %v5066 = vpack.c.b16 %v4916, %v4915
    %v5067 = vpack.c.b16 %v4918, %v4917
    %v5068 = vpack.c.b16 %v4920, %v4919
    %v5069 = vpack.c.b16 %v4922, %v4921
    %v5070 = vpack.c.b16 %v4924, %v4923
    %v5071 = vpack.c.b16 %v4926, %v4925
    %v5072 = vpack.c.b16 %v4928, %v4927
    %v5073 = vpack.c.b16 %v4930, %v4929
    %v5074 = vpack.c.b16 %v4932, %v4931
    %v5075 = vpack.c.b16 %v4934, %v4933
    %v5076 = vpack.c.b16 %v4936, %v4935
    %v5077 = vpack.c.b16 %v4938, %v4937
    %v5078 = vpack.c.b16 %v4940, %v4939
    %v5079 = vpack.c.b16 %v4942, %v4941
    %v5080 = vpack.c.b16 %v4944, %v4943
    %v5081 = vpack.c.b16 %v4946, %v4945
    %v5082 = vpack.c.b16 %v4948, %v4947
    %v5083 = vpack.c.b16 %v4950, %v4949
    %v5084 = vpack.c.b16 %v4952, %v4951
    %v5085 = vpack.c.b16 %v4954, %v4953
    %v5086 = vpack.c.b16 %v4956, %v4955
    %v5087 = vpack.c.b16 %v4958, %v4957
    %v5088 = vpack.c.b16 %v4960, %v4959
    %5217 = vmatprep.subr.bf16.mxu0 0
    %5218 = vmatpush1.bf16.msra.mxu0 %v4961
    %5219 = vmatprep.subr.bf16.mxu0 0
    %5220 = vmatpush1.bf16.msra.mxu0 %v4962
    %5221 = vmatprep.subr.bf16.mxu0 0
    %5222 = vmatpush1.bf16.msra.mxu0 %v4963
    %5223 = vmatprep.subr.bf16.mxu0 0
    %5224 = vmatpush1.bf16.msra.mxu0 %v4964
    %5225 = vmatprep.subr.bf16.mxu0 0
    %5226 = vmatpush1.bf16.msra.mxu0 %v4965
    %5227 = vmatprep.subr.bf16.mxu0 0
    %5228 = vmatpush1.bf16.msra.mxu0 %v4966
    %5229 = vmatprep.subr.bf16.mxu0 0
    %5230 = vmatpush1.bf16.msra.mxu0 %v4967
    %5231 = vmatprep.subr.bf16.mxu0 0
    %5232 = vmatpush1.bf16.msra.mxu0 %v4968
    %5233 = vmatprep.subr.bf16.mxu0 0
    %5234 = vmatpush1.bf16.msra.mxu0 %v4969
    %5235 = vmatprep.subr.bf16.mxu0 0
    %5236 = vmatpush1.bf16.msra.mxu0 %v4970
    %5237 = vmatprep.subr.bf16.mxu0 0
    %5238 = vmatpush1.bf16.msra.mxu0 %v4971
    %5239 = vmatprep.subr.bf16.mxu0 0
    %5240 = vmatpush1.bf16.msra.mxu0 %v4972
    %5241 = vmatprep.subr.bf16.mxu0 0
    %5242 = vmatpush1.bf16.msra.mxu0 %v4973
    %5243 = vmatprep.subr.bf16.mxu0 0
    %5244 = vmatpush1.bf16.msra.mxu0 %v4974
    %5245 = vmatprep.subr.bf16.mxu0 0
    %5246 = vmatpush1.bf16.msra.mxu0 %v4975
    %5247 = vmatprep.subr.bf16.mxu0 0
    %5248 = vmatpush1.bf16.msra.mxu0 %v4976
    %5249 = vmatprep.mubr.bf16.mxu0 %v4171
    %5250 = vmatmul.mubr.bf16.gmra.mrb[0].mxu0 %v4170
    %v5251 = vpop.f32.mrb[0].mxu0
    %v5252 = vadd.f32 %v4447, %v5251
    %v5253 = vpop.f32.mrb[0].mxu0
    %v5254 = vpop.f32.mrb[0].mxu0
    %v5255 = vpop.f32.mrb[0].mxu0
    %5256 = vdwg.mxu0
    %5257 = vmatprep.subr.bf16.mxu0 0
    %5258 = vmatpush1.bf16.msra.mxu0 %v4977
    %5259 = vmatprep.subr.bf16.mxu0 0
    %5260 = vmatpush1.bf16.msra.mxu0 %v4978
    %5261 = vmatprep.subr.bf16.mxu0 0
    %5262 = vmatpush1.bf16.msra.mxu0 %v4979
    %5263 = vmatprep.subr.bf16.mxu0 0
    %5264 = vmatpush1.bf16.msra.mxu0 %v4980
    %5265 = vmatprep.subr.bf16.mxu0 0
    %5266 = vmatpush1.bf16.msra.mxu0 %v4981
    %5267 = vmatprep.subr.bf16.mxu0 0
    %5268 = vmatpush1.bf16.msra.mxu0 %v4982
    %5269 = vmatprep.subr.bf16.mxu0 0
    %5270 = vmatpush1.bf16.msra.mxu0 %v4983
    %5271 = vmatprep.subr.bf16.mxu0 0
    %5272 = vmatpush1.bf16.msra.mxu0 %v4984
    %5273 = vmatprep.subr.bf16.mxu0 0
    %5274 = vmatpush1.bf16.msra.mxu0 %v4985
    %5275 = vmatprep.subr.bf16.mxu0 0
    %5276 = vmatpush1.bf16.msra.mxu0 %v4986
    %5277 = vmatprep.subr.bf16.mxu0 0
    %5278 = vmatpush1.bf16.msra.mxu0 %v4987
    %5279 = vmatprep.subr.bf16.mxu0 0
    %5280 = vmatpush1.bf16.msra.mxu0 %v4988
    %5281 = vmatprep.subr.bf16.mxu0 0
    %5282 = vmatpush1.bf16.msra.mxu0 %v4989
    %5283 = vmatprep.subr.bf16.mxu0 0
    %5284 = vmatpush1.bf16.msra.mxu0 %v4990
    %5285 = vmatprep.subr.bf16.mxu0 0
    %5286 = vmatpush1.bf16.msra.mxu0 %v4991
    %5287 = vmatprep.subr.bf16.mxu0 0
    %5288 = vmatpush1.bf16.msra.mxu0 %v4992
    %5289 = vmatprep.mubr.bf16.mxu0 %v4173
    %5290 = vmatmul.mubr.bf16.gmra.mrb[0].mxu0 %v4172
    %v5291 = vpop.f32.mrb[0].mxu0
    %v5292 = vadd.f32 %v5252, %v5291
    %v5293 = vpop.f32.mrb[0].mxu0
    %v5294 = vpop.f32.mrb[0].mxu0
    %v5295 = vpop.f32.mrb[0].mxu0
    %5296 = vdwg.mxu0
    %5297 = vmatprep.subr.bf16.mxu0 0
    %5298 = vmatpush1.bf16.msra.mxu0 %v4993
    %5299 = vmatprep.subr.bf16.mxu0 0
    %5300 = vmatpush1.bf16.msra.mxu0 %v4994
    %5301 = vmatprep.subr.bf16.mxu0 0
    %5302 = vmatpush1.bf16.msra.mxu0 %v4995
    %5303 = vmatprep.subr.bf16.mxu0 0
    %5304 = vmatpush1.bf16.msra.mxu0 %v4996
    %5305 = vmatprep.subr.bf16.mxu0 0
    %5306 = vmatpush1.bf16.msra.mxu0 %v4997
    %5307 = vmatprep.subr.bf16.mxu0 0
    %5308 = vmatpush1.bf16.msra.mxu0 %v4998
    %5309 = vmatprep.subr.bf16.mxu0 0
    %5310 = vmatpush1.bf16.msra.mxu0 %v4999
    %5311 = vmatprep.subr.bf16.mxu0 0
    %5312 = vmatpush1.bf16.msra.mxu0 %v5000
    %5313 = vmatprep.subr.bf16.mxu0 0
    %5314 = vmatpush1.bf16.msra.mxu0 %v5001
    %5315 = vmatprep.subr.bf16.mxu0 0
    %5316 = vmatpush1.bf16.msra.mxu0 %v5002
    %5317 = vmatprep.subr.bf16.mxu0 0
    %5318 = vmatpush1.bf16.msra.mxu0 %v5003
    %5319 = vmatprep.subr.bf16.mxu0 0
    %5320 = vmatpush1.bf16.msra.mxu0 %v5004
    %5321 = vmatprep.subr.bf16.mxu0 0
    %5322 = vmatpush1.bf16.msra.mxu0 %v5005
    %5323 = vmatprep.subr.bf16.mxu0 0
    %5324 = vmatpush1.bf16.msra.mxu0 %v5006
    %5325 = vmatprep.subr.bf16.mxu0 0
    %5326 = vmatpush1.bf16.msra.mxu0 %v5007
    %5327 = vmatprep.subr.bf16.mxu0 0
    %5328 = vmatpush1.bf16.msra.mxu0 %v5008
    %5329 = vmatprep.mubr.bf16.mxu0 %v4175
    %5330 = vmatmul.mubr.bf16.gmra.mrb[0].mxu0 %v4174
    %v5331 = vpop.f32.mrb[0].mxu0
    %v5332 = vadd.f32 %v5292, %v5331
    %v5333 = vpop.f32.mrb[0].mxu0
    %v5334 = vpop.f32.mrb[0].mxu0
    %v5335 = vpop.f32.mrb[0].mxu0
    %5336 = vdwg.mxu0
    %5337 = vmatprep.subr.bf16.mxu0 0
    %5338 = vmatpush1.bf16.msra.mxu0 %v5009
    %5339 = vmatprep.subr.bf16.mxu0 0
    %5340 = vmatpush1.bf16.msra.mxu0 %v5010
    %5341 = vmatprep.subr.bf16.mxu0 0
    %5342 = vmatpush1.bf16.msra.mxu0 %v5011
    %5343 = vmatprep.subr.bf16.mxu0 0
    %5344 = vmatpush1.bf16.msra.mxu0 %v5012
    %5345 = vmatprep.subr.bf16.mxu0 0
    %5346 = vmatpush1.bf16.msra.mxu0 %v5013
    %5347 = vmatprep.subr.bf16.mxu0 0
    %5348 = vmatpush1.bf16.msra.mxu0 %v5014
    %5349 = vmatprep.subr.bf16.mxu0 0
    %5350 = vmatpush1.bf16.msra.mxu0 %v5015
    %5351 = vmatprep.subr.bf16.mxu0 0
    %5352 = vmatpush1.bf16.msra.mxu0 %v5016
    %5353 = vmatprep.subr.bf16.mxu0 0
    %5354 = vmatpush1.bf16.msra.mxu0 %v5017
    %5355 = vmatprep.subr.bf16.mxu0 0
    %5356 = vmatpush1.bf16.msra.mxu0 %v5018
    %5357 = vmatprep.subr.bf16.mxu0 0
    %5358 = vmatpush1.bf16.msra.mxu0 %v5019
    %5359 = vmatprep.subr.bf16.mxu0 0
    %5360 = vmatpush1.bf16.msra.mxu0 %v5020
    %5361 = vmatprep.subr.bf16.mxu0 0
    %5362 = vmatpush1.bf16.msra.mxu0 %v5021
    %5363 = vmatprep.subr.bf16.mxu0 0
    %5364 = vmatpush1.bf16.msra.mxu0 %v5022
    %5365 = vmatprep.subr.bf16.mxu0 0
    %5366 = vmatpush1.bf16.msra.mxu0 %v5023
    %5367 = vmatprep.subr.bf16.mxu0 0
    %5368 = vmatpush1.bf16.msra.mxu0 %v5024
    %5369 = vmatprep.mubr.bf16.mxu0 %v4177
    %5370 = vmatmul.mubr.bf16.gmra.mrb[0].mxu0 %v4176
    %v5371 = vpop.f32.mrb[0].mxu0
    %v5372 = vadd.f32 %v5332, %v5371
    %v5373 = vpop.f32.mrb[0].mxu0
    %v5374 = vpop.f32.mrb[0].mxu0
    %v5375 = vpop.f32.mrb[0].mxu0
    %5376 = vdwg.mxu0
    %5377 = vmatprep.subr.bf16.mxu0 0
    %5378 = vmatpush1.bf16.msra.mxu0 %v5025
    %5379 = vmatprep.subr.bf16.mxu0 0
    %5380 = vmatpush1.bf16.msra.mxu0 %v5026
    %5381 = vmatprep.subr.bf16.mxu0 0
    %5382 = vmatpush1.bf16.msra.mxu0 %v5027
    %5383 = vmatprep.subr.bf16.mxu0 0
    %5384 = vmatpush1.bf16.msra.mxu0 %v5028
    %5385 = vmatprep.subr.bf16.mxu0 0
    %5386 = vmatpush1.bf16.msra.mxu0 %v5029
    %5387 = vmatprep.subr.bf16.mxu0 0
    %5388 = vmatpush1.bf16.msra.mxu0 %v5030
    %5389 = vmatprep.subr.bf16.mxu0 0
    %5390 = vmatpush1.bf16.msra.mxu0 %v5031
    %5391 = vmatprep.subr.bf16.mxu0 0
    %5392 = vmatpush1.bf16.msra.mxu0 %v5032
    %5393 = vmatprep.subr.bf16.mxu0 0
    %5394 = vmatpush1.bf16.msra.mxu0 %v5033
    %5395 = vmatprep.subr.bf16.mxu0 0
    %5396 = vmatpush1.bf16.msra.mxu0 %v5034
    %5397 = vmatprep.subr.bf16.mxu0 0
    %5398 = vmatpush1.bf16.msra.mxu0 %v5035
    %5399 = vmatprep.subr.bf16.mxu0 0
    %5400 = vmatpush1.bf16.msra.mxu0 %v5036
    %5401 = vmatprep.subr.bf16.mxu0 0
    %5402 = vmatpush1.bf16.msra.mxu0 %v5037
    %5403 = vmatprep.subr.bf16.mxu0 0
    %5404 = vmatpush1.bf16.msra.mxu0 %v5038
    %5405 = vmatprep.subr.bf16.mxu0 0
    %5406 = vmatpush1.bf16.msra.mxu0 %v5039
    %5407 = vmatprep.subr.bf16.mxu0 0
    %5408 = vmatpush1.bf16.msra.mxu0 %v5040
    %5409 = vmatprep.mubr.bf16.mxu0 %v4179
    %5410 = vmatmul.mubr.bf16.gmra.mrb[0].mxu0 %v4178
    %v5411 = vpop.f32.mrb[0].mxu0
    %v5412 = vadd.f32 %v5372, %v5411
    %v5413 = vpop.f32.mrb[0].mxu0
    %v5414 = vpop.f32.mrb[0].mxu0
    %v5415 = vpop.f32.mrb[0].mxu0
    %5416 = vdwg.mxu0
    %5417 = vmatprep.subr.bf16.mxu0 0
    %5418 = vmatpush1.bf16.msra.mxu0 %v5041
    %5419 = vmatprep.subr.bf16.mxu0 0
    %5420 = vmatpush1.bf16.msra.mxu0 %v5042
    %5421 = vmatprep.subr.bf16.mxu0 0
    %5422 = vmatpush1.bf16.msra.mxu0 %v5043
    %5423 = vmatprep.subr.bf16.mxu0 0
    %5424 = vmatpush1.bf16.msra.mxu0 %v5044
    %5425 = vmatprep.subr.bf16.mxu0 0
    %5426 = vmatpush1.bf16.msra.mxu0 %v5045
    %5427 = vmatprep.subr.bf16.mxu0 0
    %5428 = vmatpush1.bf16.msra.mxu0 %v5046
    %5429 = vmatprep.subr.bf16.mxu0 0
    %5430 = vmatpush1.bf16.msra.mxu0 %v5047
    %5431 = vmatprep.subr.bf16.mxu0 0
    %5432 = vmatpush1.bf16.msra.mxu0 %v5048
    %5433 = vmatprep.subr.bf16.mxu0 0
    %5434 = vmatpush1.bf16.msra.mxu0 %v5049
    %5435 = vmatprep.subr.bf16.mxu0 0
    %5436 = vmatpush1.bf16.msra.mxu0 %v5050
    %5437 = vmatprep.subr.bf16.mxu0 0
    %5438 = vmatpush1.bf16.msra.mxu0 %v5051
    %5439 = vmatprep.subr.bf16.mxu0 0
    %5440 = vmatpush1.bf16.msra.mxu0 %v5052
    %5441 = vmatprep.subr.bf16.mxu0 0
    %5442 = vmatpush1.bf16.msra.mxu0 %v5053
    %5443 = vmatprep.subr.bf16.mxu0 0
    %5444 = vmatpush1.bf16.msra.mxu0 %v5054
    %5445 = vmatprep.subr.bf16.mxu0 0
    %5446 = vmatpush1.bf16.msra.mxu0 %v5055
    %5447 = vmatprep.subr.bf16.mxu0 0
    %5448 = vmatpush1.bf16.msra.mxu0 %v5056
    %5449 = vmatprep.mubr.bf16.mxu0 %v4181
    %5450 = vmatmul.mubr.bf16.gmra.mrb[0].mxu0 %v4180
    %v5451 = vpop.f32.mrb[0].mxu0
    %v5452 = vadd.f32 %v5412, %v5451
    %v5453 = vpop.f32.mrb[0].mxu0
    %v5454 = vpop.f32.mrb[0].mxu0
    %v5455 = vpop.f32.mrb[0].mxu0
    %5456 = vdwg.mxu0
    %5457 = vmatprep.subr.bf16.mxu0 0
    %5458 = vmatpush1.bf16.msra.mxu0 %v5057
    %5459 = vmatprep.subr.bf16.mxu0 0
    %5460 = vmatpush1.bf16.msra.mxu0 %v5058
    %5461 = vmatprep.subr.bf16.mxu0 0
    %5462 = vmatpush1.bf16.msra.mxu0 %v5059
    %5463 = vmatprep.subr.bf16.mxu0 0
    %5464 = vmatpush1.bf16.msra.mxu0 %v5060
    %5465 = vmatprep.subr.bf16.mxu0 0
    %5466 = vmatpush1.bf16.msra.mxu0 %v5061
    %5467 = vmatprep.subr.bf16.mxu0 0
    %5468 = vmatpush1.bf16.msra.mxu0 %v5062
    %5469 = vmatprep.subr.bf16.mxu0 0
    %5470 = vmatpush1.bf16.msra.mxu0 %v5063
    %5471 = vmatprep.subr.bf16.mxu0 0
    %5472 = vmatpush1.bf16.msra.mxu0 %v5064
    %5473 = vmatprep.subr.bf16.mxu0 0
    %5474 = vmatpush1.bf16.msra.mxu0 %v5065
    %5475 = vmatprep.subr.bf16.mxu0 0
    %5476 = vmatpush1.bf16.msra.mxu0 %v5066
    %5477 = vmatprep.subr.bf16.mxu0 0
    %5478 = vmatpush1.bf16.msra.mxu0 %v5067
    %5479 = vmatprep.subr.bf16.mxu0 0
    %5480 = vmatpush1.bf16.msra.mxu0 %v5068
    %5481 = vmatprep.subr.bf16.mxu0 0
    %5482 = vmatpush1.bf16.msra.mxu0 %v5069
    %5483 = vmatprep.subr.bf16.mxu0 0
    %5484 = vmatpush1.bf16.msra.mxu0 %v5070
    %5485 = vmatprep.subr.bf16.mxu0 0
    %5486 = vmatpush1.bf16.msra.mxu0 %v5071
    %5487 = vmatprep.subr.bf16.mxu0 0
    %5488 = vmatpush1.bf16.msra.mxu0 %v5072
    %5489 = vmatprep.mubr.bf16.mxu0 %v4183
    %5490 = vmatmul.mubr.bf16.gmra.mrb[0].mxu0 %v4182
    %v5491 = vpop.f32.mrb[0].mxu0
    %v5492 = vadd.f32 %v5452, %v5491
    %v5493 = vpop.f32.mrb[0].mxu0
    %v5494 = vpop.f32.mrb[0].mxu0
    %v5495 = vpop.f32.mrb[0].mxu0
    %5496 = vdwg.mxu0
    %5497 = vmatprep.subr.bf16.mxu0 0
    %5498 = vmatpush1.bf16.msra.mxu0 %v5073
    %5499 = vmatprep.subr.bf16.mxu0 0
    %5500 = vmatpush1.bf16.msra.mxu0 %v5074
    %5501 = vmatprep.subr.bf16.mxu0 0
    %5502 = vmatpush1.bf16.msra.mxu0 %v5075
    %5503 = vmatprep.subr.bf16.mxu0 0
    %5504 = vmatpush1.bf16.msra.mxu0 %v5076
    %5505 = vmatprep.subr.bf16.mxu0 0
    %5506 = vmatpush1.bf16.msra.mxu0 %v5077
    %5507 = vmatprep.subr.bf16.mxu0 0
    %5508 = vmatpush1.bf16.msra.mxu0 %v5078
    %5509 = vmatprep.subr.bf16.mxu0 0
    %5510 = vmatpush1.bf16.msra.mxu0 %v5079
    %5511 = vmatprep.subr.bf16.mxu0 0
    %5512 = vmatpush1.bf16.msra.mxu0 %v5080
    %5513 = vmatprep.subr.bf16.mxu0 0
    %5514 = vmatpush1.bf16.msra.mxu0 %v5081
    %5515 = vmatprep.subr.bf16.mxu0 0
    %5516 = vmatpush1.bf16.msra.mxu0 %v5082
    %5517 = vmatprep.subr.bf16.mxu0 0
    %5518 = vmatpush1.bf16.msra.mxu0 %v5083
    %5519 = vmatprep.subr.bf16.mxu0 0
    %5520 = vmatpush1.bf16.msra.mxu0 %v5084
    %5521 = vmatprep.subr.bf16.mxu0 0
    %5522 = vmatpush1.bf16.msra.mxu0 %v5085
    %5523 = vmatprep.subr.bf16.mxu0 0
    %5524 = vmatpush1.bf16.msra.mxu0 %v5086
    %5525 = vmatprep.subr.bf16.mxu0 0
    %5526 = vmatpush1.bf16.msra.mxu0 %v5087
    %5527 = vmatprep.subr.bf16.mxu0 0
    %5528 = vmatpush1.bf16.msra.mxu0 %v5088
    %5529 = vmatprep.mubr.bf16.mxu0 %v4185
    %5530 = vmatmul.mubr.bf16.gmra.mrb[0].mxu0 %v4184
    %v5531 = vpop.f32.mrb[0].mxu0
    %v5532 = vadd.f32 %v5492, %v5531
    %v5533 = vpop.f32.mrb[0].mxu0
    %v5534 = vpop.f32.mrb[0].mxu0
    %v5535 = vpop.f32.mrb[0].mxu0
    %5536 = vdwg.mxu0
    %v5537 = vtanh.pop %v5532
    %5539 = vrot.lane.b32.xlu0 %v148, 64
    %v5540 = vpop.permute.xlu0 %5539
    %v5542 = vsel %vm268, %v5537, %v5540
    %5543 = vst [vmem:[#allocation16] sm:$0xff] %v5542
    // Predicated region
    $region70: #{tpu_custom_call.1} parent=1 // pred_check
      _
    $region71: #{tpu_custom_call.1} parent=1 // pred_check_branch
      %5545 = sbr.rel (0) target = $region73
    $region72: #{tpu_custom_call.1} parent=1 // pred_region
      %s5547 = ssub.s32 128, 128
      %5548 = vsyncadd [#allocation4], %s5547
      %s5550 = sshll.u32 [#allocation16], 4
      %s5551 = int_to_ptr.vmem [resolvable:$true] %s5550
      %5553 = dma.vmem_to_hbm [thread:$0]  %s5551, 128, %s9, [#allocation4]
    $region73: #{tpu_custom_call.1} parent=1 // pred_fallthru
      _
    // Predicated region
    $region74: #{tpu_custom_call.1} parent=1 // pred_check
      _
    $region75: #{tpu_custom_call.1} parent=1 // pred_check_branch
      %5555 = sbr.rel (0) target = $region77
    $region76: #{tpu_custom_call.1} parent=1 // pred_region
      %5556 = dma.done [#allocation4], 128
    $region77: #{tpu_custom_call.1} parent=1 // pred_fallthru
      _
    %5557 = vsyncpa [#allocation3], 1
    %5558 = vsyncpa [#allocation6], 1
    %5559 = vsyncpa [#allocation9], 1
    %5560 = vsyncpa [#allocation12], 1
    %5561 = vsyncpa [#allocation15], 1
    %5562 = vsyncpa [#allocation4], 1

</llo_original>
